<compile_context>
chip_gen: v6e
topology: v6e:2x2x1
jax: 0.10.0
libtpu: 0.0.40
codegen_flags: <defaults>
</compile_context>

<pallas_src>
import jax
import jax.numpy as jnp
from jax.experimental import pallas as pl
from jax.experimental.pallas import tpu as pltpu

# ------------------------- model hyper-parameters ---------------------------
BATCH = 2
C_IN = 3
IMG = 16
PATCH = 4
PATCH_DIM = C_IN * PATCH * PATCH                   # 48
NUM_PATCHES = (IMG // PATCH) * (IMG // PATCH)      # 16
VIS_TOKENS = 1 + NUM_PATCHES                       # 17 (cls + patches)
D_MODEL = 32
NUM_HEADS = 4
HEAD_DIM = D_MODEL // NUM_HEADS                    # 8
FF_DIM = 64
NUM_QUERIES = 4
ENC_LEN = NUM_QUERIES + VIS_TOKENS                 # 21
VOCAB = 64
SEQ_LEN = 8
LN_EPS = 1e-5
SCALE = HEAD_DIM ** -0.5

# ------------------------- weight-slab layouts -------------------------------
# Slab R  [D_MODEL, WR]  -- matrices used as  act[*, D] @ W  (column-concat).
VIS_QKV_C = 0                              # [D, 3D] q|k|v, head-major columns
DEC_QKV_C = VIS_QKV_C + 3 * D_MODEL        # 96
DEC_XQ_C = DEC_QKV_C + 3 * D_MODEL         # 192  cross-attn query proj [D, D]
DEC_XKV_C = DEC_XQ_C + D_MODEL             # 224  cross-attn k|v proj   [D, 2D]
VIS_W1_C = DEC_XKV_C + 2 * D_MODEL         # 288  vision FFN up  [D, F]
DEC_W1_C = VIS_W1_C + FF_DIM               # 352  decoder FFN up [D, F]
WR = DEC_W1_C + FF_DIM                     # 416

# Slab C  [RC, D_MODEL]  -- matrices / row tables whose columns = D (row-concat).
PATCH_W_R = 0                              # [48, D] patch embedding
VIS_WO_R = PATCH_W_R + PATCH_DIM           # 48   vision attn out proj [D, D]
VIS_W2_R = VIS_WO_R + D_MODEL              # 80   vision FFN down [F, D]
DEC_WO_R = VIS_W2_R + FF_DIM               # 144  decoder attn out proj
DEC_XWO_R = DEC_WO_R + D_MODEL             # 176  cross-attn out proj
DEC_W2_R = DEC_XWO_R + D_MODEL             # 208  decoder FFN down
TOK_EMB_R = DEC_W2_R + FF_DIM              # 272  token embedding [VOCAB, D]
POS_EMB_R = TOK_EMB_R + VOCAB              # 336  decoder pos emb [T, D]
CLS_R = POS_EMB_R + SEQ_LEN                # 344  cls token (1 row, padded to 8)
POS_VIS_R = CLS_R + 8                      # 352  vision pos emb (17 rows, pad 24)
QUERIES_R = POS_VIS_R + 24                 # 376  learnable queries (4 rows, pad 8)
RC = QUERIES_R + 8                         # 384

# Slab V  [NV, 3*D_MODEL]  -- LN gains/betas and bias vectors, one per row.
(V_LN1G, V_LN1B, V_BQKV, V_BO, V_LN2G, V_LN2B, V_B1, V_B2, V_LNFG, V_LNFB,
 V_PBIAS,
 D_LN1G, D_LN1B, D_BQKV, D_BO, D_LNXG, D_LNXB, D_XBQ, D_XBKV, D_XBO,
 D_LN2G, D_LN2B, D_B1, D_B2, D_LNFG, D_LNFB) = range(26)
NV = 26
VW = 3 * D_MODEL                           # 96


# --------------------------- in-kernel helpers --------------------------------
def _vrow(vec_ref, r, w):
    """Row r of the vector slab, first w columns, as a [1, w] f32 value."""
    return vec_ref[r:r + 1, 0:w]


def _bdot(a, b):
    """MXU matmul with bf16 operands, f32 accumulation."""
    return jnp.dot(a.astype(jnp.bfloat16), b.astype(jnp.bfloat16),
                   preferred_element_type=jnp.float32)


def _ln(x, g, b):
    """LayerNorm over the last axis, single-pass variance. g/b are [1, D]."""
    mean = jnp.mean(x, axis=-1, keepdims=True)
    msq = jnp.mean(x * x, axis=-1, keepdims=True)
    var = msq - mean * mean
    return (x - mean) * jax.lax.rsqrt(var + LN_EPS) * g + b


def _proj_heads(x, wr_ref, col, vec_ref, brow, boff):
    """Project x [T, D] into head-major [H, T, Dh].

    Weights are column-sliced per head from the [D, *] slab (static ref
    slices); no lane-slicing of activations feeds the MXU.
    """
    xb = x.astype(jnp.bfloat16)
    parts = []
    for h in range(NUM_HEADS):
        c0 = col + h * HEAD_DIM
        w = wr_ref[:, c0:c0 + HEAD_DIM]                            # [D, Dh]
        bias = vec_ref[brow:brow + 1,
                       boff + h * HEAD_DIM:boff + (h + 1) * HEAD_DIM]  # [1, Dh]
        parts.append(jnp.dot(xb, w.astype(jnp.bfloat16),
                             preferred_element_type=jnp.float32) + bias)
    return jnp.stack(parts, axis=0)                                # [H, T, Dh]


def _attend(qh, kh, vh, bias):
    """Batched attention over all heads: ONE softmax for the whole [H,Tq,Tk]."""
    s = jax.lax.dot_general(qh.astype(jnp.bfloat16), kh.astype(jnp.bfloat16),
                            (((2,), (2,)), ((0,), (0,))),
                            preferred_element_type=jnp.float32) * SCALE
    if bias is not None:
        s = s + bias[None, :, :]
    s = s - jnp.max(s, axis=-1, keepdims=True)
    p = jnp.exp(s)
    p = p * pl.reciprocal(jnp.sum(p, axis=-1, keepdims=True), approx=True)
    return jax.lax.dot_general(p.astype(jnp.bfloat16), vh.astype(jnp.bfloat16),
                               (((2,), (1,)), ((0,), (0,))),
                               preferred_element_type=jnp.float32)  # [H, Tq, Dh]


def _out_proj(o, wc_ref, wo_row, vec_ref, bo_row):
    """Head-merge folded into the output projection: sum_h o_h @ Wo_h."""
    wo = wc_ref[wo_row:wo_row + D_MODEL, :]                        # [D, D]
    wo_h = wo.reshape(NUM_HEADS, HEAD_DIM, D_MODEL)                # [H, Dh, D]
    y = jax.lax.dot_general(o.astype(jnp.bfloat16), wo_h.astype(jnp.bfloat16),
                            (((2,), (1,)), ((0,), (0,))),
                            preferred_element_type=jnp.float32)    # [H, T, D]
    return jnp.sum(y, axis=0) + _vrow(vec_ref, bo_row, D_MODEL)    # [T, D]


def _self_attn_block(x, wr_ref, wc_ref, vec_ref, *, qkv_col, bqkv_row,
                     lng_row, lnb_row, wo_row, bo_row, bias):
    h = _ln(x, _vrow(vec_ref, lng_row, D_MODEL), _vrow(vec_ref, lnb_row, D_MODEL))
    qh = _proj_heads(h, wr_ref, qkv_col, vec_ref, bqkv_row, 0)
    kh = _proj_heads(h, wr_ref, qkv_col + D_MODEL, vec_ref, bqkv_row, D_MODEL)
    vh = _proj_heads(h, wr_ref, qkv_col + 2 * D_MODEL, vec_ref, bqkv_row,
                     2 * D_MODEL)
    o = _attend(qh, kh, vh, bias)
    return x + _out_proj(o, wc_ref, wo_row, vec_ref, bo_row)


def _ffn_block(x, wr_ref, wc_ref, vec_ref, *, lng_row, lnb_row,
               w1_col, b1_row, w2_row, b2_row):
    h = _ln(x, _vrow(vec_ref, lng_row, D_MODEL), _vrow(vec_ref, lnb_row, D_MODEL))
    w1 = wr_ref[:, w1_col:w1_col + FF_DIM]                         # [D, F]
    h = _bdot(h, w1) + _vrow(vec_ref, b1_row, FF_DIM)
    # TODO(synk): tanh-approx GELU; PyTorch nn.GELU defaults to the exact erf form.
    h = jax.nn.gelu(h, approximate=True)
    w2 = wc_ref[w2_row:w2_row + FF_DIM, :]                         # [F, D]
    return x + _bdot(h, w2) + _vrow(vec_ref, b2_row, D_MODEL)


# ------------------------------ fused VLM kernel -------------------------------
def _vlm_kernel(ids_ref,                  # SMEM [B, T] int32 (scalar prefetch)
                patches_ref,              # VMEM [Np, 48]   (per-batch block)
                mask_ref,                 # VMEM [1, T] f32 (per-batch block)
                wr_ref, wc_ref, vec_ref,  # weight slabs (resident)
                out_ref,                  # VMEM [T, D]     (per-batch block)
                vis_ref, enc_ref, tok_ref):
    b = pl.program_id(0)

    # ======================== vision encoder ========================
    # patch embedding (conv(stride=PATCH) == patchify + matmul)
    # TODO(synk): a real Conv2d checkpoint would need its [D, C, P, P] weight
    # permuted to [C*P*P, D] in exactly the (C, P, P) patchify order.
    pe = _bdot(patches_ref[...], wc_ref[PATCH_W_R:PATCH_W_R + PATCH_DIM, :]) \
        + _vrow(vec_ref, V_PBIAS, D_MODEL)                         # [Np, D]
    # cls + positional embeddings assembled in scratch rows (no sublane concat)
    vis_ref[0:1, :] = wc_ref[CLS_R:CLS_R + 1, :] + \
        wc_ref[POS_VIS_R:POS_VIS_R + 1, :]
    vis_ref[1:VIS_TOKENS, :] = pe + \
        wc_ref[POS_VIS_R + 1:POS_VIS_R + VIS_TOKENS, :]
    xv = vis_ref[...]                                              # [17, D]

    xv = _self_attn_block(xv, wr_ref, wc_ref, vec_ref,
                          qkv_col=VIS_QKV_C, bqkv_row=V_BQKV,
                          lng_row=V_LN1G, lnb_row=V_LN1B,
                          wo_row=VIS_WO_R, bo_row=V_BO, bias=None)
    xv = _ffn_block(xv, wr_ref, wc_ref, vec_ref,
                    lng_row=V_LN2G, lnb_row=V_LN2B,
                    w1_col=VIS_W1_C, b1_row=V_B1,
                    w2_row=VIS_W2_R, b2_row=V_B2)
    xv = _ln(xv, _vrow(vec_ref, V_LNFG, D_MODEL),
             _vrow(vec_ref, V_LNFB, D_MODEL))                      # visual feats

    # ============ encoder_hidden_states = [queries ; visual_features] =========
    enc_ref[0:NUM_QUERIES, :] = wc_ref[QUERIES_R:QUERIES_R + NUM_QUERIES, :]
    enc_ref[NUM_QUERIES:ENC_LEN, :] = xv
    enc = enc_ref[...]                                             # [21, D]

    # =============== decoder input embeddings (in-kernel gather) ==============
    for t in range(SEQ_LEN):
        tok = ids_ref[b, t]
        tok_ref[t:t + 1, :] = (wc_ref[pl.ds(TOK_EMB_R + tok, 1), :] +
                               wc_ref[POS_EMB_R + t:POS_EMB_R + t + 1, :])
    xd = tok_ref[...]                                              # [T, D]

    # causal + key-padding mask built in-kernel (no HBM bias tensor)
    row = jax.lax.broadcasted_iota(jnp.int32, (SEQ_LEN, SEQ_LEN), 0)
    col = jax.lax.broadcasted_iota(jnp.int32, (SEQ_LEN, SEQ_LEN), 1)
    keep = (col <= row) & (mask_ref[...] > 0.5)
    bias = jnp.where(keep, 0.0, -1e9).astype(jnp.float32)          # [T, T]

    # masked self-attention
    xd = _self_attn_block(xd, wr_ref, wc_ref, vec_ref,
                          qkv_col=DEC_QKV_C, bqkv_row=D_BQKV,
                          lng_row=D_LN1G, lnb_row=D_LN1B,
                          wo_row=DEC_WO_R, bo_row=D_BO, bias=bias)

    # cross-attention (encoder_attention_mask is all-ones by construction)
    hx = _ln(xd, _vrow(vec_ref, D_LNXG, D_MODEL), _vrow(vec_ref, D_LNXB, D_MODEL))
    qh = _proj_heads(hx, wr_ref, DEC_XQ_C, vec_ref, D_XBQ, 0)
    kh = _proj_heads(enc, wr_ref, DEC_XKV_C, vec_ref, D_XBKV, 0)
    vh = _proj_heads(enc, wr_ref, DEC_XKV_C + D_MODEL, vec_ref, D_XBKV, D_MODEL)
    o = _attend(qh, kh, vh, bias=None)
    xd = xd + _out_proj(o, wc_ref, DEC_XWO_R, vec_ref, D_XBO)

    # FFN + final LayerNorm -> last_hidden_state
    xd = _ffn_block(xd, wr_ref, wc_ref, vec_ref,
                    lng_row=D_LN2G, lnb_row=D_LN2B,
                    w1_col=DEC_W1_C, b1_row=D_B1,
                    w2_row=DEC_W2_R, b2_row=D_B2)
    out_ref[...] = _ln(xd, _vrow(vec_ref, D_LNFG, D_MODEL),
                       _vrow(vec_ref, D_LNFB, D_MODEL)).astype(out_ref.dtype)


# ------------------------------- model wrapper --------------------------------
def forward(params, images, input_ids, attention_mask):
    B, C, H, W = images.shape
    ph, pw = H // PATCH, W // PATCH
    # Patchify in XLA (layout prep only); everything else runs in the kernel.
    patches = images.reshape(B, C, ph, PATCH, pw, PATCH)
    patches = patches.transpose(0, 2, 4, 1, 3, 5).reshape(
        B, ph * pw, C * PATCH * PATCH)
    mask = attention_mask.astype(jnp.float32).reshape(B, 1, SEQ_LEN)

    grid_spec = pltpu.PrefetchScalarGridSpec(
        num_scalar_prefetch=1,
        grid=(B,),
        in_specs=[
            pl.BlockSpec((None, NUM_PATCHES, PATCH_DIM),
                         lambda b, ids: (b, 0, 0)),
            pl.BlockSpec((None, 1, SEQ_LEN), lambda b, ids: (b, 0, 0)),
            pl.BlockSpec((D_MODEL, WR), lambda b, ids: (0, 0)),
            pl.BlockSpec((RC, D_MODEL), lambda b, ids: (0, 0)),
            pl.BlockSpec((NV, VW), lambda b, ids: (0, 0)),
        ],
        out_specs=pl.BlockSpec((None, SEQ_LEN, D_MODEL),
                               lambda b, ids: (b, 0, 0)),
        scratch_shapes=[
            pltpu.VMEM((VIS_TOKENS, D_MODEL), jnp.float32),
            pltpu.VMEM((ENC_LEN, D_MODEL), jnp.float32),
            pltpu.VMEM((SEQ_LEN, D_MODEL), jnp.float32),
        ],
    )
    return pl.pallas_call(
        _vlm_kernel,
        out_shape=jax.ShapeDtypeStruct((B, SEQ_LEN, D_MODEL), jnp.float32),
        grid_spec=grid_spec,
        compiler_params=pltpu.CompilerParams(
            dimension_semantics=("parallel",)),
    )(input_ids.astype(jnp.int32), patches, mask,
      params["slab_r"], params["slab_c"], params["slab_v"])


# ------------------------------ parameter init --------------------------------
def init_params(key):
    """Synthetic stand-in weights, pre-packed into the three kernel slabs."""
    # TODO(synk): pretrained HF ViT / LM checkpoints are not loadable here.
    ks = iter(jax.random.split(key, 24))
    nrm = lambda shape: 0.02 * jax.random.normal(next(ks), shape, jnp.float32)

    patch_w = nrm((PATCH_DIM, D_MODEL))
    cls = nrm((1, D_MODEL))
    pos_vis = nrm((VIS_TOKENS, D_MODEL))
    v_wqkv = nrm((D_MODEL, 3 * D_MODEL))
    v_wo = nrm((D_MODEL, D_MODEL))
    v_w1 = nrm((D_MODEL, FF_DIM))
    v_w2 = nrm((FF_DIM, D_MODEL))
    tok_emb = nrm((VOCAB, D_MODEL))
    pos_emb = nrm((SEQ_LEN, D_MODEL))
    queries = nrm((NUM_QUERIES, D_MODEL))
    d_wqkv = nrm((D_MODEL, 3 * D_MODEL))
    d_wo = nrm((D_MODEL, D_MODEL))
    d_xwq = nrm((D_MODEL, D_MODEL))
    d_xwkv = nrm((D_MODEL, 2 * D_MODEL))
    d_xwo = nrm((D_MODEL, D_MODEL))
    d_w1 = nrm((D_MODEL, FF_DIM))
    d_w2 = nrm((FF_DIM, D_MODEL))

    # Slab R: column-concatenated "act @ W" matrices.
    slab_r = jnp.concatenate([v_wqkv, d_wqkv, d_xwq, d_xwkv, v_w1, d_w1], axis=1)
    assert slab_r.shape == (D_MODEL, WR)

    # Slab C: row-concatenated matrices / row tables with D columns.
    def rpad(x, rows):
        return jnp.pad(x, ((0, rows - x.shape[0]), (0, 0)))

    slab_c = jnp.concatenate([
        patch_w,                 # 0:48
        v_wo,                    # 48:80
        v_w2,                    # 80:144
        d_wo,                    # 144:176
        d_xwo,                   # 176:208
        d_w2,                    # 208:272
        tok_emb,                 # 272:336
        pos_emb,                 # 336:344
        rpad(cls, 8),            # 344:352
        rpad(pos_vis, 24),       # 352:376
        rpad(queries, 8),        # 376:384
    ], axis=0)
    assert slab_c.shape == (RC, D_MODEL)

    # Slab V: LN gains/betas and bias vectors, each padded to width 3*D.
    def vrow(x):
        x = jnp.asarray(x, jnp.float32).reshape(1, -1)
        return jnp.pad(x, ((0, 0), (0, VW - x.shape[1])))

    one_d = jnp.ones((D_MODEL,))
    zero_d = jnp.zeros((D_MODEL,))
    zero_f = jnp.zeros((FF_DIM,))
    zero_3d = jnp.zeros((3 * D_MODEL,))
    zero_2d = jnp.zeros((2 * D_MODEL,))
    rows = [
        vrow(one_d), vrow(zero_d),            # V_LN1G, V_LN1B
        vrow(zero_3d), vrow(zero_d),          # V_BQKV, V_BO
        vrow(one_d), vrow(zero_d),            # V_LN2G, V_LN2B
        vrow(zero_f), vrow(zero_d),           # V_B1, V_B2
        vrow(one_d), vrow(zero_d),            # V_LNFG, V_LNFB
        vrow(zero_d),                         # V_PBIAS
        vrow(one_d), vrow(zero_d),            # D_LN1G, D_LN1B
        vrow(zero_3d), vrow(zero_d),          # D_BQKV, D_BO
        vrow(one_d), vrow(zero_d),            # D_LNXG, D_LNXB
        vrow(zero_d), vrow(zero_2d),          # D_XBQ, D_XBKV
        vrow(zero_d),                         # D_XBO
        vrow(one_d), vrow(zero_d),            # D_LN2G, D_LN2B
        vrow(zero_f), vrow(zero_d),           # D_B1, D_B2
        vrow(one_d), vrow(zero_d),            # D_LNFG, D_LNFB
    ]
    slab_v = jnp.concatenate(rows, axis=0)
    assert slab_v.shape == (NV, VW)

    return dict(slab_r=slab_r, slab_c=slab_c, slab_v=slab_v)


# ------------------------------------ main ------------------------------------
if __name__ == "__main__":
    root = jax.random.PRNGKey(0)
    kp, ki, kt = jax.random.split(root, 3)

    params = init_params(kp)
    images = jax.random.normal(ki, (BATCH, C_IN, IMG, IMG), jnp.float32)
    input_ids = jax.random.randint(kt, (BATCH, SEQ_LEN), 0, VOCAB, dtype=jnp.int32)
    attention_mask = jnp.ones((BATCH, SEQ_LEN), jnp.int32)

    out = jax.jit(forward)(params, images, input_ids, attention_mask)
    out = jax.block_until_ready(out)

    assert out.shape == (BATCH, SEQ_LEN, D_MODEL), out.shape
    assert bool(jnp.all(jnp.isfinite(out)))
    print("KERNEL_OK")
</pallas_src>

<mosaic_0001>
module attributes {stable_mosaic.version = 11 : i64} {
  func.func @_vlm_kernel(%arg0: i32, %arg1: memref<2x8xi32, #tpu.memory_space<smem>>, %arg2: memref<1x16x48xf32, #tpu.memory_space<vmem>>, %arg3: memref<1x1x8xf32, #tpu.memory_space<vmem>>, %arg4: memref<32x416xf32, #tpu.memory_space<vmem>>, %arg5: memref<384x32xf32, #tpu.memory_space<vmem>>, %arg6: memref<26x96xf32, #tpu.memory_space<vmem>>, %arg7: memref<1x8x32xf32, #tpu.memory_space<vmem>>, %arg8: memref<17x32xf32, #tpu.memory_space<vmem>>, %arg9: memref<21x32xf32, #tpu.memory_space<vmem>>, %arg10: memref<8x32xf32, #tpu.memory_space<vmem>>) attributes {dimension_semantics = [#tpu.dimension_semantics<parallel>], iteration_bounds = array<i64: 2>, scalar_prefetch = 1 : i64, scratch_operands = 3 : i64, tpu.core_type = #tpu.core_type<tc>, window_params = [{transform_indices = @transform_0, window_bounds = array<i64: 1, 16, 48>}, {transform_indices = @transform_1, window_bounds = array<i64: 1, 1, 8>}, {pipeline_mode = #tpu.pipeline_mode<synchronous>, transform_indices = @transform_2, window_bounds = array<i64: 32, 416>}, {pipeline_mode = #tpu.pipeline_mode<synchronous>, transform_indices = @transform_3, window_bounds = array<i64: 384, 32>}, {pipeline_mode = #tpu.pipeline_mode<synchronous>, transform_indices = @transform_4, window_bounds = array<i64: 26, 96>}, {transform_indices = @transform_5, window_bounds = array<i64: 1, 8, 32>}]} {
    %c0 = arith.constant 0 : index
    %c0_0 = arith.constant 0 : index
    %c0_1 = arith.constant 0 : index
    %0 = vector.load %arg2[%c0, %c0_0, %c0_1] : memref<1x16x48xf32, #tpu.memory_space<vmem>>, vector<1x16x48xf32>
    %1 = vector.shape_cast %0 : vector<1x16x48xf32> to vector<16x48xf32>
    %c0_2 = arith.constant 0 : index
    %c0_3 = arith.constant 0 : index
    %2 = vector.load %arg5[%c0_2, %c0_3] : memref<384x32xf32, #tpu.memory_space<vmem>>, vector<48x32xf32>
    %3 = arith.truncf %1 : vector<16x48xf32> to vector<16x48xbf16>
    %4 = arith.truncf %2 : vector<48x32xf32> to vector<48x32xbf16>
    %cst = arith.constant dense<0.000000e+00> : vector<16x32xf32>
    %5 = tpu.matmul %3, %4, %cst {dimension_numbers = #tpu.dot_dimension_numbers<[1], [0], [0], [1], [0, 0, 1, 1], [], []>} : vector<16x48xbf16>, vector<48x32xbf16>, vector<16x32xf32> -> vector<16x32xf32>
    %c10 = arith.constant 10 : index
    %c0_4 = arith.constant 0 : index
    %6 = vector.load %arg6[%c10, %c0_4] : memref<26x96xf32, #tpu.memory_space<vmem>>, vector<1x32xf32>
    %7 = vector.broadcast %6 : vector<1x32xf32> to vector<16x32xf32>
    %8 = arith.addf %5, %7 : vector<16x32xf32>
    %c344 = arith.constant 344 : index
    %c0_5 = arith.constant 0 : index
    %9 = vector.load %arg5[%c344, %c0_5] : memref<384x32xf32, #tpu.memory_space<vmem>>, vector<1x32xf32>
    %c352 = arith.constant 352 : index
    %c0_6 = arith.constant 0 : index
    %10 = vector.load %arg5[%c352, %c0_6] : memref<384x32xf32, #tpu.memory_space<vmem>>, vector<1x32xf32>
    %11 = arith.addf %9, %10 : vector<1x32xf32>
    %c0_7 = arith.constant 0 : index
    %c0_8 = arith.constant 0 : index
    %12 = vector.load %arg8[%c0_7, %c0_8] : memref<17x32xf32, #tpu.memory_space<vmem>>, vector<1x32xf32>
    tpu.vector_store %arg8[%c0_7, %c0_8], %11 {strides = array<i32>} : memref<17x32xf32, #tpu.memory_space<vmem>>, vector<1x32xf32>,
    %c353 = arith.constant 353 : index
    %c0_9 = arith.constant 0 : index
    %13 = vector.load %arg5[%c353, %c0_9] : memref<384x32xf32, #tpu.memory_space<vmem>>, vector<16x32xf32>
    %14 = arith.addf %8, %13 : vector<16x32xf32>
    %c1 = arith.constant 1 : index
    %c0_10 = arith.constant 0 : index
    %15 = vector.load %arg8[%c1, %c0_10] : memref<17x32xf32, #tpu.memory_space<vmem>>, vector<16x32xf32>
    tpu.vector_store %arg8[%c1, %c0_10], %14 {strides = array<i32>} : memref<17x32xf32, #tpu.memory_space<vmem>>, vector<16x32xf32>,
    %c0_11 = arith.constant 0 : index
    %c0_12 = arith.constant 0 : index
    %16 = vector.load %arg8[%c0_11, %c0_12] : memref<17x32xf32, #tpu.memory_space<vmem>>, vector<17x32xf32>
    %c0_13 = arith.constant 0 : index
    %c0_14 = arith.constant 0 : index
    %17 = vector.load %arg6[%c0_13, %c0_14] : memref<26x96xf32, #tpu.memory_space<vmem>>, vector<1x32xf32>
    %c1_15 = arith.constant 1 : index
    %c0_16 = arith.constant 0 : index
    %18 = vector.load %arg6[%c1_15, %c0_16] : memref<26x96xf32, #tpu.memory_space<vmem>>, vector<1x32xf32>
    %cst_17 = arith.constant dense<0.000000e+00> : vector<17xf32>
    %19 = vector.multi_reduction <add>, %16, %cst_17 [1] : vector<17x32xf32> to vector<17xf32>
    %20 = vector.shape_cast %19 : vector<17xf32> to vector<17x1xf32>
    %cst_18 = arith.constant 3.200000e+01 : f32
    %21 = vector.broadcast %cst_18 : f32 to vector<17x1xf32>
    %22 = arith.divf %20, %21 : vector<17x1xf32>
    %23 = arith.mulf %16, %16 : vector<17x32xf32>
    %cst_19 = arith.constant dense<0.000000e+00> : vector<17xf32>
    %24 = vector.multi_reduction <add>, %23, %cst_19 [1] : vector<17x32xf32> to vector<17xf32>
    %25 = vector.shape_cast %24 : vector<17xf32> to vector<17x1xf32>
    %cst_20 = arith.constant 3.200000e+01 : f32
    %26 = vector.broadcast %cst_20 : f32 to vector<17x1xf32>
    %27 = arith.divf %25, %26 : vector<17x1xf32>
    %28 = arith.mulf %22, %22 : vector<17x1xf32>
    %29 = arith.subf %27, %28 : vector<17x1xf32>
    %30 = vector.broadcast %22 : vector<17x1xf32> to vector<17x32xf32>
    %31 = arith.subf %16, %30 : vector<17x32xf32>
    %cst_21 = arith.constant 9.99999974E-6 : f32
    %32 = vector.broadcast %cst_21 : f32 to vector<17x1xf32>
    %33 = arith.addf %29, %32 : vector<17x1xf32>
    %34 = math.rsqrt %33 : vector<17x1xf32>
    %35 = vector.broadcast %34 : vector<17x1xf32> to vector<17x32xf32>
    %36 = arith.mulf %31, %35 : vector<17x32xf32>
    %37 = vector.broadcast %17 : vector<1x32xf32> to vector<17x32xf32>
    %38 = arith.mulf %36, %37 : vector<17x32xf32>
    %39 = vector.broadcast %18 : vector<1x32xf32> to vector<17x32xf32>
    %40 = arith.addf %38, %39 : vector<17x32xf32>
    %41 = arith.truncf %40 : vector<17x32xf32> to vector<17x32xbf16>
    %c0_22 = arith.constant 0 : index
    %c0_23 = arith.constant 0 : index
    %42 = vector.load %arg4[%c0_22, %c0_23] : memref<32x416xf32, #tpu.memory_space<vmem>>, vector<32x8xf32>
    %c2 = arith.constant 2 : index
    %c0_24 = arith.constant 0 : index
    %43 = vector.load %arg6[%c2, %c0_24] : memref<26x96xf32, #tpu.memory_space<vmem>>, vector<1x8xf32>
    %44 = arith.truncf %42 : vector<32x8xf32> to vector<32x8xbf16>
    %cst_25 = arith.constant dense<0.000000e+00> : vector<17x8xf32>
    %45 = tpu.matmul %41, %44, %cst_25 {dimension_numbers = #tpu.dot_dimension_numbers<[1], [0], [0], [1], [0, 0, 1, 1], [], []>} : vector<17x32xbf16>, vector<32x8xbf16>, vector<17x8xf32> -> vector<17x8xf32>
    %46 = vector.broadcast %43 : vector<1x8xf32> to vector<17x8xf32>
    %47 = arith.addf %45, %46 : vector<17x8xf32>
    %c0_26 = arith.constant 0 : index
    %c8 = arith.constant 8 : index
    %48 = vector.load %arg4[%c0_26, %c8] : memref<32x416xf32, #tpu.memory_space<vmem>>, vector<32x8xf32>
    %c2_27 = arith.constant 2 : index
    %c8_28 = arith.constant 8 : index
    %49 = vector.load %arg6[%c2_27, %c8_28] : memref<26x96xf32, #tpu.memory_space<vmem>>, vector<1x8xf32>
    %50 = arith.truncf %48 : vector<32x8xf32> to vector<32x8xbf16>
    %cst_29 = arith.constant dense<0.000000e+00> : vector<17x8xf32>
    %51 = tpu.matmul %41, %50, %cst_29 {dimension_numbers = #tpu.dot_dimension_numbers<[1], [0], [0], [1], [0, 0, 1, 1], [], []>} : vector<17x32xbf16>, vector<32x8xbf16>, vector<17x8xf32> -> vector<17x8xf32>
    %52 = vector.broadcast %49 : vector<1x8xf32> to vector<17x8xf32>
    %53 = arith.addf %51, %52 : vector<17x8xf32>
    %c0_30 = arith.constant 0 : index
    %c16 = arith.constant 16 : index
    %54 = vector.load %arg4[%c0_30, %c16] : memref<32x416xf32, #tpu.memory_space<vmem>>, vector<32x8xf32>
    %c2_31 = arith.constant 2 : index
    %c16_32 = arith.constant 16 : index
    %55 = vector.load %arg6[%c2_31, %c16_32] : memref<26x96xf32, #tpu.memory_space<vmem>>, vector<1x8xf32>
    %56 = arith.truncf %54 : vector<32x8xf32> to vector<32x8xbf16>
    %cst_33 = arith.constant dense<0.000000e+00> : vector<17x8xf32>
    %57 = tpu.matmul %41, %56, %cst_33 {dimension_numbers = #tpu.dot_dimension_numbers<[1], [0], [0], [1], [0, 0, 1, 1], [], []>} : vector<17x32xbf16>, vector<32x8xbf16>, vector<17x8xf32> -> vector<17x8xf32>
    %58 = vector.broadcast %55 : vector<1x8xf32> to vector<17x8xf32>
    %59 = arith.addf %57, %58 : vector<17x8xf32>
    %c0_34 = arith.constant 0 : index
    %c24 = arith.constant 24 : index
    %60 = vector.load %arg4[%c0_34, %c24] : memref<32x416xf32, #tpu.memory_space<vmem>>, vector<32x8xf32>
    %c2_35 = arith.constant 2 : index
    %c24_36 = arith.constant 24 : index
    %61 = vector.load %arg6[%c2_35, %c24_36] : memref<26x96xf32, #tpu.memory_space<vmem>>, vector<1x8xf32>
    %62 = arith.truncf %60 : vector<32x8xf32> to vector<32x8xbf16>
    %cst_37 = arith.constant dense<0.000000e+00> : vector<17x8xf32>
    %63 = tpu.matmul %41, %62, %cst_37 {dimension_numbers = #tpu.dot_dimension_numbers<[1], [0], [0], [1], [0, 0, 1, 1], [], []>} : vector<17x32xbf16>, vector<32x8xbf16>, vector<17x8xf32> -> vector<17x8xf32>
    %64 = vector.broadcast %61 : vector<1x8xf32> to vector<17x8xf32>
    %65 = arith.addf %63, %64 : vector<17x8xf32>
    %66 = vector.shape_cast %47 : vector<17x8xf32> to vector<1x17x8xf32>
    %67 = vector.shape_cast %53 : vector<17x8xf32> to vector<1x17x8xf32>
    %68 = vector.shape_cast %59 : vector<17x8xf32> to vector<1x17x8xf32>
    %69 = vector.shape_cast %65 : vector<17x8xf32> to vector<1x17x8xf32>
    %70 = tpu.concatenate %66, %67, %68, %69 in 0 : vector<1x17x8xf32>, vector<1x17x8xf32>, vector<1x17x8xf32>, vector<1x17x8xf32> -> vector<4x17x8xf32>
    %71 = arith.truncf %40 : vector<17x32xf32> to vector<17x32xbf16>
    %c0_38 = arith.constant 0 : index
    %c32 = arith.constant 32 : index
    %72 = vector.load %arg4[%c0_38, %c32] : memref<32x416xf32, #tpu.memory_space<vmem>>, vector<32x8xf32>
    %c2_39 = arith.constant 2 : index
    %c32_40 = arith.constant 32 : index
    %73 = vector.load %arg6[%c2_39, %c32_40] : memref<26x96xf32, #tpu.memory_space<vmem>>, vector<1x8xf32>
    %74 = arith.truncf %72 : vector<32x8xf32> to vector<32x8xbf16>
    %cst_41 = arith.constant dense<0.000000e+00> : vector<17x8xf32>
    %75 = tpu.matmul %71, %74, %cst_41 {dimension_numbers = #tpu.dot_dimension_numbers<[1], [0], [0], [1], [0, 0, 1, 1], [], []>} : vector<17x32xbf16>, vector<32x8xbf16>, vector<17x8xf32> -> vector<17x8xf32>
    %76 = vector.broadcast %73 : vector<1x8xf32> to vector<17x8xf32>
    %77 = arith.addf %75, %76 : vector<17x8xf32>
    %c0_42 = arith.constant 0 : index
    %c40 = arith.constant 40 : index
    %78 = vector.load %arg4[%c0_42, %c40] : memref<32x416xf32, #tpu.memory_space<vmem>>, vector<32x8xf32>
    %c2_43 = arith.constant 2 : index
    %c40_44 = arith.constant 40 : index
    %79 = vector.load %arg6[%c2_43, %c40_44] : memref<26x96xf32, #tpu.memory_space<vmem>>, vector<1x8xf32>
    %80 = arith.truncf %78 : vector<32x8xf32> to vector<32x8xbf16>
    %cst_45 = arith.constant dense<0.000000e+00> : vector<17x8xf32>
    %81 = tpu.matmul %71, %80, %cst_45 {dimension_numbers = #tpu.dot_dimension_numbers<[1], [0], [0], [1], [0, 0, 1, 1], [], []>} : vector<17x32xbf16>, vector<32x8xbf16>, vector<17x8xf32> -> vector<17x8xf32>
    %82 = vector.broadcast %79 : vector<1x8xf32> to vector<17x8xf32>
    %83 = arith.addf %81, %82 : vector<17x8xf32>
    %c0_46 = arith.constant 0 : index
    %c48 = arith.constant 48 : index
    %84 = vector.load %arg4[%c0_46, %c48] : memref<32x416xf32, #tpu.memory_space<vmem>>, vector<32x8xf32>
    %c2_47 = arith.constant 2 : index
    %c48_48 = arith.constant 48 : index
    %85 = vector.load %arg6[%c2_47, %c48_48] : memref<26x96xf32, #tpu.memory_space<vmem>>, vector<1x8xf32>
    %86 = arith.truncf %84 : vector<32x8xf32> to vector<32x8xbf16>
    %cst_49 = arith.constant dense<0.000000e+00> : vector<17x8xf32>
    %87 = tpu.matmul %71, %86, %cst_49 {dimension_numbers = #tpu.dot_dimension_numbers<[1], [0], [0], [1], [0, 0, 1, 1], [], []>} : vector<17x32xbf16>, vector<32x8xbf16>, vector<17x8xf32> -> vector<17x8xf32>
    %88 = vector.broadcast %85 : vector<1x8xf32> to vector<17x8xf32>
    %89 = arith.addf %87, %88 : vector<17x8xf32>
    %c0_50 = arith.constant 0 : index
    %c56 = arith.constant 56 : index
    %90 = vector.load %arg4[%c0_50, %c56] : memref<32x416xf32, #tpu.memory_space<vmem>>, vector<32x8xf32>
    %c2_51 = arith.constant 2 : index
    %c56_52 = arith.constant 56 : index
    %91 = vector.load %arg6[%c2_51, %c56_52] : memref<26x96xf32, #tpu.memory_space<vmem>>, vector<1x8xf32>
    %92 = arith.truncf %90 : vector<32x8xf32> to vector<32x8xbf16>
    %cst_53 = arith.constant dense<0.000000e+00> : vector<17x8xf32>
    %93 = tpu.matmul %71, %92, %cst_53 {dimension_numbers = #tpu.dot_dimension_numbers<[1], [0], [0], [1], [0, 0, 1, 1], [], []>} : vector<17x32xbf16>, vector<32x8xbf16>, vector<17x8xf32> -> vector<17x8xf32>
    %94 = vector.broadcast %91 : vector<1x8xf32> to vector<17x8xf32>
    %95 = arith.addf %93, %94 : vector<17x8xf32>
    %96 = vector.shape_cast %77 : vector<17x8xf32> to vector<1x17x8xf32>
    %97 = vector.shape_cast %83 : vector<17x8xf32> to vector<1x17x8xf32>
    %98 = vector.shape_cast %89 : vector<17x8xf32> to vector<1x17x8xf32>
    %99 = vector.shape_cast %95 : vector<17x8xf32> to vector<1x17x8xf32>
    %100 = tpu.concatenate %96, %97, %98, %99 in 0 : vector<1x17x8xf32>, vector<1x17x8xf32>, vector<1x17x8xf32>, vector<1x17x8xf32> -> vector<4x17x8xf32>
    %101 = arith.truncf %40 : vector<17x32xf32> to vector<17x32xbf16>
    %c0_54 = arith.constant 0 : index
    %c64 = arith.constant 64 : index
    %102 = vector.load %arg4[%c0_54, %c64] : memref<32x416xf32, #tpu.memory_space<vmem>>, vector<32x8xf32>
    %c2_55 = arith.constant 2 : index
    %c64_56 = arith.constant 64 : index
    %103 = vector.load %arg6[%c2_55, %c64_56] : memref<26x96xf32, #tpu.memory_space<vmem>>, vector<1x8xf32>
    %104 = arith.truncf %102 : vector<32x8xf32> to vector<32x8xbf16>
    %cst_57 = arith.constant dense<0.000000e+00> : vector<17x8xf32>
    %105 = tpu.matmul %101, %104, %cst_57 {dimension_numbers = #tpu.dot_dimension_numbers<[1], [0], [0], [1], [0, 0, 1, 1], [], []>} : vector<17x32xbf16>, vector<32x8xbf16>, vector<17x8xf32> -> vector<17x8xf32>
    %106 = vector.broadcast %103 : vector<1x8xf32> to vector<17x8xf32>
    %107 = arith.addf %105, %106 : vector<17x8xf32>
    %c0_58 = arith.constant 0 : index
    %c72 = arith.constant 72 : index
    %108 = vector.load %arg4[%c0_58, %c72] : memref<32x416xf32, #tpu.memory_space<vmem>>, vector<32x8xf32>
    %c2_59 = arith.constant 2 : index
    %c72_60 = arith.constant 72 : index
    %109 = vector.load %arg6[%c2_59, %c72_60] : memref<26x96xf32, #tpu.memory_space<vmem>>, vector<1x8xf32>
    %110 = arith.truncf %108 : vector<32x8xf32> to vector<32x8xbf16>
    %cst_61 = arith.constant dense<0.000000e+00> : vector<17x8xf32>
    %111 = tpu.matmul %101, %110, %cst_61 {dimension_numbers = #tpu.dot_dimension_numbers<[1], [0], [0], [1], [0, 0, 1, 1], [], []>} : vector<17x32xbf16>, vector<32x8xbf16>, vector<17x8xf32> -> vector<17x8xf32>
    %112 = vector.broadcast %109 : vector<1x8xf32> to vector<17x8xf32>
    %113 = arith.addf %111, %112 : vector<17x8xf32>
    %c0_62 = arith.constant 0 : index
    %c80 = arith.constant 80 : index
    %114 = vector.load %arg4[%c0_62, %c80] : memref<32x416xf32, #tpu.memory_space<vmem>>, vector<32x8xf32>
    %c2_63 = arith.constant 2 : index
    %c80_64 = arith.constant 80 : index
    %115 = vector.load %arg6[%c2_63, %c80_64] : memref<26x96xf32, #tpu.memory_space<vmem>>, vector<1x8xf32>
    %116 = arith.truncf %114 : vector<32x8xf32> to vector<32x8xbf16>
    %cst_65 = arith.constant dense<0.000000e+00> : vector<17x8xf32>
    %117 = tpu.matmul %101, %116, %cst_65 {dimension_numbers = #tpu.dot_dimension_numbers<[1], [0], [0], [1], [0, 0, 1, 1], [], []>} : vector<17x32xbf16>, vector<32x8xbf16>, vector<17x8xf32> -> vector<17x8xf32>
    %118 = vector.broadcast %115 : vector<1x8xf32> to vector<17x8xf32>
    %119 = arith.addf %117, %118 : vector<17x8xf32>
    %c0_66 = arith.constant 0 : index
    %c88 = arith.constant 88 : index
    %120 = vector.load %arg4[%c0_66, %c88] : memref<32x416xf32, #tpu.memory_space<vmem>>, vector<32x8xf32>
    %c2_67 = arith.constant 2 : index
    %c88_68 = arith.constant 88 : index
    %121 = vector.load %arg6[%c2_67, %c88_68] : memref<26x96xf32, #tpu.memory_space<vmem>>, vector<1x8xf32>
    %122 = arith.truncf %120 : vector<32x8xf32> to vector<32x8xbf16>
    %cst_69 = arith.constant dense<0.000000e+00> : vector<17x8xf32>
    %123 = tpu.matmul %101, %122, %cst_69 {dimension_numbers = #tpu.dot_dimension_numbers<[1], [0], [0], [1], [0, 0, 1, 1], [], []>} : vector<17x32xbf16>, vector<32x8xbf16>, vector<17x8xf32> -> vector<17x8xf32>
    %124 = vector.broadcast %121 : vector<1x8xf32> to vector<17x8xf32>
    %125 = arith.addf %123, %124 : vector<17x8xf32>
    %126 = vector.shape_cast %107 : vector<17x8xf32> to vector<1x17x8xf32>
    %127 = vector.shape_cast %113 : vector<17x8xf32> to vector<1x17x8xf32>
    %128 = vector.shape_cast %119 : vector<17x8xf32> to vector<1x17x8xf32>
    %129 = vector.shape_cast %125 : vector<17x8xf32> to vector<1x17x8xf32>
    %130 = tpu.concatenate %126, %127, %128, %129 in 0 : vector<1x17x8xf32>, vector<1x17x8xf32>, vector<1x17x8xf32>, vector<1x17x8xf32> -> vector<4x17x8xf32>
    %131 = arith.truncf %70 : vector<4x17x8xf32> to vector<4x17x8xbf16>
    %132 = arith.truncf %100 : vector<4x17x8xf32> to vector<4x17x8xbf16>
    %cst_70 = arith.constant dense<0.000000e+00> : vector<4x17x17xf32>
    %133 = tpu.matmul %131, %132, %cst_70 {dimension_numbers = #tpu.dot_dimension_numbers<[2], [2], [1], [1], [0, 0, 0, 1, 1, 1], [0], [0]>} : vector<4x17x8xbf16>, vector<4x17x8xbf16>, vector<4x17x17xf32> -> vector<4x17x17xf32>
    %cst_71 = arith.constant 0.353553385 : f32
    %134 = vector.broadcast %cst_71 : f32 to vector<4x17x17xf32>
    %135 = arith.mulf %133, %134 : vector<4x17x17xf32>
    %cst_72 = arith.constant dense<0xFF800000> : vector<4x17xf32>
    %136 = vector.multi_reduction <maximumf>, %135, %cst_72 [2] : vector<4x17x17xf32> to vector<4x17xf32>
    %137 = vector.shape_cast %136 : vector<4x17xf32> to vector<4x17x1xf32>
    %138 = vector.broadcast %137 : vector<4x17x1xf32> to vector<4x17x17xf32>
    %139 = arith.subf %135, %138 : vector<4x17x17xf32>
    %140 = math.exp %139 : vector<4x17x17xf32>
    %cst_73 = arith.constant dense<0.000000e+00> : vector<4x17xf32>
    %141 = vector.multi_reduction <add>, %140, %cst_73 [2] : vector<4x17x17xf32> to vector<4x17xf32>
    %142 = vector.shape_cast %141 : vector<4x17xf32> to vector<4x17x1xf32>
    %143 = tpu.reciprocal %142 {approx = true} : vector<4x17x1xf32> -> vector<4x17x1xf32>
    %144 = vector.broadcast %143 : vector<4x17x1xf32> to vector<4x17x17xf32>
    %145 = arith.mulf %140, %144 : vector<4x17x17xf32>
    %146 = arith.truncf %145 : vector<4x17x17xf32> to vector<4x17x17xbf16>
    %147 = arith.truncf %130 : vector<4x17x8xf32> to vector<4x17x8xbf16>
    %cst_74 = arith.constant dense<0.000000e+00> : vector<4x17x8xf32>
    %148 = tpu.matmul %146, %147, %cst_74 {dimension_numbers = #tpu.dot_dimension_numbers<[2], [1], [1], [2], [0, 0, 0, 1, 1, 2], [0], [0]>} : vector<4x17x17xbf16>, vector<4x17x8xbf16>, vector<4x17x8xf32> -> vector<4x17x8xf32>
    %c48_75 = arith.constant 48 : index
    %c0_76 = arith.constant 0 : index
    %149 = vector.load %arg5[%c48_75, %c0_76] : memref<384x32xf32, #tpu.memory_space<vmem>>, vector<32x32xf32>
    %150 = vector.shape_cast %149 : vector<32x32xf32> to vector<4x8x32xf32>
    %151 = arith.truncf %148 : vector<4x17x8xf32> to vector<4x17x8xbf16>
    %152 = arith.truncf %150 : vector<4x8x32xf32> to vector<4x8x32xbf16>
    %cst_77 = arith.constant dense<0.000000e+00> : vector<4x17x32xf32>
    %153 = tpu.matmul %151, %152, %cst_77 {dimension_numbers = #tpu.dot_dimension_numbers<[2], [1], [1], [2], [0, 0, 0, 1, 1, 2], [0], [0]>} : vector<4x17x8xbf16>, vector<4x8x32xbf16>, vector<4x17x32xf32> -> vector<4x17x32xf32>
    %cst_78 = arith.constant dense<0.000000e+00> : vector<17x32xf32>
    %154 = vector.multi_reduction <add>, %153, %cst_78 [0] : vector<4x17x32xf32> to vector<17x32xf32>
    %c3 = arith.constant 3 : index
    %c0_79 = arith.constant 0 : index
    %155 = vector.load %arg6[%c3, %c0_79] : memref<26x96xf32, #tpu.memory_space<vmem>>, vector<1x32xf32>
    %156 = vector.broadcast %155 : vector<1x32xf32> to vector<17x32xf32>
    %157 = arith.addf %154, %156 : vector<17x32xf32>
    %158 = arith.addf %16, %157 : vector<17x32xf32>
    %c4 = arith.constant 4 : index
    %c0_80 = arith.constant 0 : index
    %159 = vector.load %arg6[%c4, %c0_80] : memref<26x96xf32, #tpu.memory_space<vmem>>, vector<1x32xf32>
    %c5 = arith.constant 5 : index
    %c0_81 = arith.constant 0 : index
    %160 = vector.load %arg6[%c5, %c0_81] : memref<26x96xf32, #tpu.memory_space<vmem>>, vector<1x32xf32>
    %cst_82 = arith.constant dense<0.000000e+00> : vector<17xf32>
    %161 = vector.multi_reduction <add>, %158, %cst_82 [1] : vector<17x32xf32> to vector<17xf32>
    %162 = vector.shape_cast %161 : vector<17xf32> to vector<17x1xf32>
    %cst_83 = arith.constant 3.200000e+01 : f32
    %163 = vector.broadcast %cst_83 : f32 to vector<17x1xf32>
    %164 = arith.divf %162, %163 : vector<17x1xf32>
    %165 = arith.mulf %158, %158 : vector<17x32xf32>
    %cst_84 = arith.constant dense<0.000000e+00> : vector<17xf32>
    %166 = vector.multi_reduction <add>, %165, %cst_84 [1] : vector<17x32xf32> to vector<17xf32>
    %167 = vector.shape_cast %166 : vector<17xf32> to vector<17x1xf32>
    %cst_85 = arith.constant 3.200000e+01 : f32
    %168 = vector.broadcast %cst_85 : f32 to vector<17x1xf32>
    %169 = arith.divf %167, %168 : vector<17x1xf32>
    %170 = arith.mulf %164, %164 : vector<17x1xf32>
    %171 = arith.subf %169, %170 : vector<17x1xf32>
    %172 = vector.broadcast %164 : vector<17x1xf32> to vector<17x32xf32>
    %173 = arith.subf %158, %172 : vector<17x32xf32>
    %cst_86 = arith.constant 9.99999974E-6 : f32
    %174 = vector.broadcast %cst_86 : f32 to vector<17x1xf32>
    %175 = arith.addf %171, %174 : vector<17x1xf32>
    %176 = math.rsqrt %175 : vector<17x1xf32>
    %177 = vector.broadcast %176 : vector<17x1xf32> to vector<17x32xf32>
    %178 = arith.mulf %173, %177 : vector<17x32xf32>
    %179 = vector.broadcast %159 : vector<1x32xf32> to vector<17x32xf32>
    %180 = arith.mulf %178, %179 : vector<17x32xf32>
    %181 = vector.broadcast %160 : vector<1x32xf32> to vector<17x32xf32>
    %182 = arith.addf %180, %181 : vector<17x32xf32>
    %c0_87 = arith.constant 0 : index
    %c288 = arith.constant 288 : index
    %183 = vector.load %arg4[%c0_87, %c288] : memref<32x416xf32, #tpu.memory_space<vmem>>, vector<32x64xf32>
    %184 = arith.truncf %182 : vector<17x32xf32> to vector<17x32xbf16>
    %185 = arith.truncf %183 : vector<32x64xf32> to vector<32x64xbf16>
    %cst_88 = arith.constant dense<0.000000e+00> : vector<17x64xf32>
    %186 = tpu.matmul %184, %185, %cst_88 {dimension_numbers = #tpu.dot_dimension_numbers<[1], [0], [0], [1], [0, 0, 1, 1], [], []>} : vector<17x32xbf16>, vector<32x64xbf16>, vector<17x64xf32> -> vector<17x64xf32>
    %c6 = arith.constant 6 : index
    %c0_89 = arith.constant 0 : index
    %187 = vector.load %arg6[%c6, %c0_89] : memref<26x96xf32, #tpu.memory_space<vmem>>, vector<1x64xf32>
    %188 = vector.broadcast %187 : vector<1x64xf32> to vector<17x64xf32>
    %189 = arith.addf %186, %188 : vector<17x64xf32>
    %190 = arith.mulf %189, %189 : vector<17x64xf32>
    %191 = arith.mulf %189, %190 : vector<17x64xf32>
    %cst_90 = arith.constant 4.471500e-02 : f32
    %192 = vector.broadcast %cst_90 : f32 to vector<17x64xf32>
    %193 = arith.mulf %192, %191 : vector<17x64xf32>
    %194 = arith.addf %189, %193 : vector<17x64xf32>
    %cst_91 = arith.constant 0.797884583 : f32
    %195 = vector.broadcast %cst_91 : f32 to vector<17x64xf32>
    %196 = arith.mulf %195, %194 : vector<17x64xf32>
    %197 = math.tanh %196 : vector<17x64xf32>
    %cst_92 = arith.constant 1.000000e+00 : f32
    %198 = vector.broadcast %cst_92 : f32 to vector<17x64xf32>
    %199 = arith.addf %198, %197 : vector<17x64xf32>
    %cst_93 = arith.constant 5.000000e-01 : f32
    %200 = vector.broadcast %cst_93 : f32 to vector<17x64xf32>
    %201 = arith.mulf %200, %199 : vector<17x64xf32>
    %202 = arith.mulf %189, %201 : vector<17x64xf32>
    %c80_94 = arith.constant 80 : index
    %c0_95 = arith.constant 0 : index
    %203 = vector.load %arg5[%c80_94, %c0_95] : memref<384x32xf32, #tpu.memory_space<vmem>>, vector<64x32xf32>
    %204 = arith.truncf %202 : vector<17x64xf32> to vector<17x64xbf16>
    %205 = arith.truncf %203 : vector<64x32xf32> to vector<64x32xbf16>
    %cst_96 = arith.constant dense<0.000000e+00> : vector<17x32xf32>
    %206 = tpu.matmul %204, %205, %cst_96 {dimension_numbers = #tpu.dot_dimension_numbers<[1], [0], [0], [1], [0, 0, 1, 1], [], []>} : vector<17x64xbf16>, vector<64x32xbf16>, vector<17x32xf32> -> vector<17x32xf32>
    %207 = arith.addf %158, %206 : vector<17x32xf32>
    %c7 = arith.constant 7 : index
    %c0_97 = arith.constant 0 : index
    %208 = vector.load %arg6[%c7, %c0_97] : memref<26x96xf32, #tpu.memory_space<vmem>>, vector<1x32xf32>
    %209 = vector.broadcast %208 : vector<1x32xf32> to vector<17x32xf32>
    %210 = arith.addf %207, %209 : vector<17x32xf32>
    %c8_98 = arith.constant 8 : index
    %c0_99 = arith.constant 0 : index
    %211 = vector.load %arg6[%c8_98, %c0_99] : memref<26x96xf32, #tpu.memory_space<vmem>>, vector<1x32xf32>
    %c9 = arith.constant 9 : index
    %c0_100 = arith.constant 0 : index
    %212 = vector.load %arg6[%c9, %c0_100] : memref<26x96xf32, #tpu.memory_space<vmem>>, vector<1x32xf32>
    %cst_101 = arith.constant dense<0.000000e+00> : vector<17xf32>
    %213 = vector.multi_reduction <add>, %210, %cst_101 [1] : vector<17x32xf32> to vector<17xf32>
    %214 = vector.shape_cast %213 : vector<17xf32> to vector<17x1xf32>
    %cst_102 = arith.constant 3.200000e+01 : f32
    %215 = vector.broadcast %cst_102 : f32 to vector<17x1xf32>
    %216 = arith.divf %214, %215 : vector<17x1xf32>
    %217 = arith.mulf %210, %210 : vector<17x32xf32>
    %cst_103 = arith.constant dense<0.000000e+00> : vector<17xf32>
    %218 = vector.multi_reduction <add>, %217, %cst_103 [1] : vector<17x32xf32> to vector<17xf32>
    %219 = vector.shape_cast %218 : vector<17xf32> to vector<17x1xf32>
    %cst_104 = arith.constant 3.200000e+01 : f32
    %220 = vector.broadcast %cst_104 : f32 to vector<17x1xf32>
    %221 = arith.divf %219, %220 : vector<17x1xf32>
    %222 = arith.mulf %216, %216 : vector<17x1xf32>
    %223 = arith.subf %221, %222 : vector<17x1xf32>
    %224 = vector.broadcast %216 : vector<17x1xf32> to vector<17x32xf32>
    %225 = arith.subf %210, %224 : vector<17x32xf32>
    %cst_105 = arith.constant 9.99999974E-6 : f32
    %226 = vector.broadcast %cst_105 : f32 to vector<17x1xf32>
    %227 = arith.addf %223, %226 : vector<17x1xf32>
    %228 = math.rsqrt %227 : vector<17x1xf32>
    %229 = vector.broadcast %228 : vector<17x1xf32> to vector<17x32xf32>
    %230 = arith.mulf %225, %229 : vector<17x32xf32>
    %231 = vector.broadcast %211 : vector<1x32xf32> to vector<17x32xf32>
    %232 = arith.mulf %230, %231 : vector<17x32xf32>
    %233 = vector.broadcast %212 : vector<1x32xf32> to vector<17x32xf32>
    %234 = arith.addf %232, %233 : vector<17x32xf32>
    %c376 = arith.constant 376 : index
    %c0_106 = arith.constant 0 : index
    %235 = vector.load %arg5[%c376, %c0_106] : memref<384x32xf32, #tpu.memory_space<vmem>>, vector<4x32xf32>
    %c0_107 = arith.constant 0 : index
    %c0_108 = arith.constant 0 : index
    %236 = vector.load %arg9[%c0_107, %c0_108] : memref<21x32xf32, #tpu.memory_space<vmem>>, vector<4x32xf32>
    tpu.vector_store %arg9[%c0_107, %c0_108], %235 {strides = array<i32>} : memref<21x32xf32, #tpu.memory_space<vmem>>, vector<4x32xf32>,
    %c4_109 = arith.constant 4 : index
    %c0_110 = arith.constant 0 : index
    %237 = vector.load %arg9[%c4_109, %c0_110] : memref<21x32xf32, #tpu.memory_space<vmem>>, vector<17x32xf32>
    tpu.vector_store %arg9[%c4_109, %c0_110], %234 {strides = array<i32>} : memref<21x32xf32, #tpu.memory_space<vmem>>, vector<17x32xf32>,
    %c0_111 = arith.constant 0 : index
    %c0_112 = arith.constant 0 : index
    %238 = vector.load %arg9[%c0_111, %c0_112] : memref<21x32xf32, #tpu.memory_space<vmem>>, vector<21x32xf32>
    %239 = arith.index_cast %arg0 : i32 to index
    %c0_113 = arith.constant 0 : index
    %240 = memref.load %arg1[%239, %c0_113] : memref<2x8xi32, #tpu.memory_space<smem>>
    %c272_i32 = arith.constant 272 : i32
    %241 = arith.addi %c272_i32, %240 : i32
    %242 = arith.index_cast %241 : i32 to index
    %c0_114 = arith.constant 0 : index
    %243 = vector.load %arg5[%242, %c0_114] : memref<384x32xf32, #tpu.memory_space<vmem>>, vector<1x32xf32>
    %c336 = arith.constant 336 : index
    %c0_115 = arith.constant 0 : index
    %244 = vector.load %arg5[%c336, %c0_115] : memref<384x32xf32, #tpu.memory_space<vmem>>, vector<1x32xf32>
    %245 = arith.addf %243, %244 : vector<1x32xf32>
    %c0_116 = arith.constant 0 : index
    %c0_117 = arith.constant 0 : index
    %246 = vector.load %arg10[%c0_116, %c0_117] : memref<8x32xf32, #tpu.memory_space<vmem>>, vector<1x32xf32>
    tpu.vector_store %arg10[%c0_116, %c0_117], %245 {strides = array<i32>} : memref<8x32xf32, #tpu.memory_space<vmem>>, vector<1x32xf32>,
    %247 = arith.index_cast %arg0 : i32 to index
    %c1_118 = arith.constant 1 : index
    %248 = memref.load %arg1[%247, %c1_118] : memref<2x8xi32, #tpu.memory_space<smem>>
    %c272_i32_119 = arith.constant 272 : i32
    %249 = arith.addi %c272_i32_119, %248 : i32
    %250 = arith.index_cast %249 : i32 to index
    %c0_120 = arith.constant 0 : index
    %251 = vector.load %arg5[%250, %c0_120] : memref<384x32xf32, #tpu.memory_space<vmem>>, vector<1x32xf32>
    %c337 = arith.constant 337 : index
    %c0_121 = arith.constant 0 : index
    %252 = vector.load %arg5[%c337, %c0_121] : memref<384x32xf32, #tpu.memory_space<vmem>>, vector<1x32xf32>
    %253 = arith.addf %251, %252 : vector<1x32xf32>
    %c1_122 = arith.constant 1 : index
    %c0_123 = arith.constant 0 : index
    %254 = vector.load %arg10[%c1_122, %c0_123] : memref<8x32xf32, #tpu.memory_space<vmem>>, vector<1x32xf32>
    tpu.vector_store %arg10[%c1_122, %c0_123], %253 {strides = array<i32>} : memref<8x32xf32, #tpu.memory_space<vmem>>, vector<1x32xf32>,
    %255 = arith.index_cast %arg0 : i32 to index
    %c2_124 = arith.constant 2 : index
    %256 = memref.load %arg1[%255, %c2_124] : memref<2x8xi32, #tpu.memory_space<smem>>
    %c272_i32_125 = arith.constant 272 : i32
    %257 = arith.addi %c272_i32_125, %256 : i32
    %258 = arith.index_cast %257 : i32 to index
    %c0_126 = arith.constant 0 : index
    %259 = vector.load %arg5[%258, %c0_126] : memref<384x32xf32, #tpu.memory_space<vmem>>, vector<1x32xf32>
    %c338 = arith.constant 338 : index
    %c0_127 = arith.constant 0 : index
    %260 = vector.load %arg5[%c338, %c0_127] : memref<384x32xf32, #tpu.memory_space<vmem>>, vector<1x32xf32>
    %261 = arith.addf %259, %260 : vector<1x32xf32>
    %c2_128 = arith.constant 2 : index
    %c0_129 = arith.constant 0 : index
    %262 = vector.load %arg10[%c2_128, %c0_129] : memref<8x32xf32, #tpu.memory_space<vmem>>, vector<1x32xf32>
    tpu.vector_store %arg10[%c2_128, %c0_129], %261 {strides = array<i32>} : memref<8x32xf32, #tpu.memory_space<vmem>>, vector<1x32xf32>,
    %263 = arith.index_cast %arg0 : i32 to index
    %c3_130 = arith.constant 3 : index
    %264 = memref.load %arg1[%263, %c3_130] : memref<2x8xi32, #tpu.memory_space<smem>>
    %c272_i32_131 = arith.constant 272 : i32
    %265 = arith.addi %c272_i32_131, %264 : i32
    %266 = arith.index_cast %265 : i32 to index
    %c0_132 = arith.constant 0 : index
    %267 = vector.load %arg5[%266, %c0_132] : memref<384x32xf32, #tpu.memory_space<vmem>>, vector<1x32xf32>
    %c339 = arith.constant 339 : index
    %c0_133 = arith.constant 0 : index
    %268 = vector.load %arg5[%c339, %c0_133] : memref<384x32xf32, #tpu.memory_space<vmem>>, vector<1x32xf32>
    %269 = arith.addf %267, %268 : vector<1x32xf32>
    %c3_134 = arith.constant 3 : index
    %c0_135 = arith.constant 0 : index
    %270 = vector.load %arg10[%c3_134, %c0_135] : memref<8x32xf32, #tpu.memory_space<vmem>>, vector<1x32xf32>
    tpu.vector_store %arg10[%c3_134, %c0_135], %269 {strides = array<i32>} : memref<8x32xf32, #tpu.memory_space<vmem>>, vector<1x32xf32>,
    %271 = arith.index_cast %arg0 : i32 to index
    %c4_136 = arith.constant 4 : index
    %272 = memref.load %arg1[%271, %c4_136] : memref<2x8xi32, #tpu.memory_space<smem>>
    %c272_i32_137 = arith.constant 272 : i32
    %273 = arith.addi %c272_i32_137, %272 : i32
    %274 = arith.index_cast %273 : i32 to index
    %c0_138 = arith.constant 0 : index
    %275 = vector.load %arg5[%274, %c0_138] : memref<384x32xf32, #tpu.memory_space<vmem>>, vector<1x32xf32>
    %c340 = arith.constant 340 : index
    %c0_139 = arith.constant 0 : index
    %276 = vector.load %arg5[%c340, %c0_139] : memref<384x32xf32, #tpu.memory_space<vmem>>, vector<1x32xf32>
    %277 = arith.addf %275, %276 : vector<1x32xf32>
    %c4_140 = arith.constant 4 : index
    %c0_141 = arith.constant 0 : index
    %278 = vector.load %arg10[%c4_140, %c0_141] : memref<8x32xf32, #tpu.memory_space<vmem>>, vector<1x32xf32>
    tpu.vector_store %arg10[%c4_140, %c0_141], %277 {strides = array<i32>} : memref<8x32xf32, #tpu.memory_space<vmem>>, vector<1x32xf32>,
    %279 = arith.index_cast %arg0 : i32 to index
    %c5_142 = arith.constant 5 : index
    %280 = memref.load %arg1[%279, %c5_142] : memref<2x8xi32, #tpu.memory_space<smem>>
    %c272_i32_143 = arith.constant 272 : i32
    %281 = arith.addi %c272_i32_143, %280 : i32
    %282 = arith.index_cast %281 : i32 to index
    %c0_144 = arith.constant 0 : index
    %283 = vector.load %arg5[%282, %c0_144] : memref<384x32xf32, #tpu.memory_space<vmem>>, vector<1x32xf32>
    %c341 = arith.constant 341 : index
    %c0_145 = arith.constant 0 : index
    %284 = vector.load %arg5[%c341, %c0_145] : memref<384x32xf32, #tpu.memory_space<vmem>>, vector<1x32xf32>
    %285 = arith.addf %283, %284 : vector<1x32xf32>
    %c5_146 = arith.constant 5 : index
    %c0_147 = arith.constant 0 : index
    %286 = vector.load %arg10[%c5_146, %c0_147] : memref<8x32xf32, #tpu.memory_space<vmem>>, vector<1x32xf32>
    tpu.vector_store %arg10[%c5_146, %c0_147], %285 {strides = array<i32>} : memref<8x32xf32, #tpu.memory_space<vmem>>, vector<1x32xf32>,
    %287 = arith.index_cast %arg0 : i32 to index
    %c6_148 = arith.constant 6 : index
    %288 = memref.load %arg1[%287, %c6_148] : memref<2x8xi32, #tpu.memory_space<smem>>
    %c272_i32_149 = arith.constant 272 : i32
    %289 = arith.addi %c272_i32_149, %288 : i32
    %290 = arith.index_cast %289 : i32 to index
    %c0_150 = arith.constant 0 : index
    %291 = vector.load %arg5[%290, %c0_150] : memref<384x32xf32, #tpu.memory_space<vmem>>, vector<1x32xf32>
    %c342 = arith.constant 342 : index
    %c0_151 = arith.constant 0 : index
    %292 = vector.load %arg5[%c342, %c0_151] : memref<384x32xf32, #tpu.memory_space<vmem>>, vector<1x32xf32>
    %293 = arith.addf %291, %292 : vector<1x32xf32>
    %c6_152 = arith.constant 6 : index
    %c0_153 = arith.constant 0 : index
    %294 = vector.load %arg10[%c6_152, %c0_153] : memref<8x32xf32, #tpu.memory_space<vmem>>, vector<1x32xf32>
    tpu.vector_store %arg10[%c6_152, %c0_153], %293 {strides = array<i32>} : memref<8x32xf32, #tpu.memory_space<vmem>>, vector<1x32xf32>,
    %295 = arith.index_cast %arg0 : i32 to index
    %c7_154 = arith.constant 7 : index
    %296 = memref.load %arg1[%295, %c7_154] : memref<2x8xi32, #tpu.memory_space<smem>>
    %c272_i32_155 = arith.constant 272 : i32
    %297 = arith.addi %c272_i32_155, %296 : i32
    %298 = arith.index_cast %297 : i32 to index
    %c0_156 = arith.constant 0 : index
    %299 = vector.load %arg5[%298, %c0_156] : memref<384x32xf32, #tpu.memory_space<vmem>>, vector<1x32xf32>
    %c343 = arith.constant 343 : index
    %c0_157 = arith.constant 0 : index
    %300 = vector.load %arg5[%c343, %c0_157] : memref<384x32xf32, #tpu.memory_space<vmem>>, vector<1x32xf32>
    %301 = arith.addf %299, %300 : vector<1x32xf32>
    %c7_158 = arith.constant 7 : index
    %c0_159 = arith.constant 0 : index
    %302 = vector.load %arg10[%c7_158, %c0_159] : memref<8x32xf32, #tpu.memory_space<vmem>>, vector<1x32xf32>
    tpu.vector_store %arg10[%c7_158, %c0_159], %301 {strides = array<i32>} : memref<8x32xf32, #tpu.memory_space<vmem>>, vector<1x32xf32>,
    %c0_160 = arith.constant 0 : index
    %c0_161 = arith.constant 0 : index
    %303 = vector.load %arg10[%c0_160, %c0_161] : memref<8x32xf32, #tpu.memory_space<vmem>>, vector<8x32xf32>
    %304 = tpu.iota {dimensions = array<i32: 0>} : vector<8x8xi32>
    %305 = tpu.iota {dimensions = array<i32: 1>} : vector<8x8xi32>
    %306 = arith.cmpi sle, %305, %304 : vector<8x8xi32>
    %c0_162 = arith.constant 0 : index
    %c0_163 = arith.constant 0 : index
    %c0_164 = arith.constant 0 : index
    %307 = vector.load %arg3[%c0_162, %c0_163, %c0_164] : memref<1x1x8xf32, #tpu.memory_space<vmem>>, vector<1x1x8xf32>
    %308 = vector.shape_cast %307 : vector<1x1x8xf32> to vector<1x8xf32>
    %cst_165 = arith.constant 5.000000e-01 : f32
    %309 = vector.broadcast %cst_165 : f32 to vector<1x8xf32>
    %310 = arith.cmpf ogt, %308, %309 : vector<1x8xf32>
    %311 = vector.broadcast %310 : vector<1x8xi1> to vector<8x8xi1>
    %312 = arith.andi %306, %311 : vector<8x8xi1>
    %cst_166 = arith.constant 0.000000e+00 : f32
    %cst_167 = arith.constant -1.000000e+09 : f32
    %313 = vector.broadcast %cst_166 : f32 to vector<8x8xf32>
    %314 = vector.broadcast %cst_167 : f32 to vector<8x8xf32>
    %315 = arith.select %312, %313, %314 : vector<8x8xi1>, vector<8x8xf32>
    %c11 = arith.constant 11 : index
    %c0_168 = arith.constant 0 : index
    %316 = vector.load %arg6[%c11, %c0_168] : memref<26x96xf32, #tpu.memory_space<vmem>>, vector<1x32xf32>
    %c12 = arith.constant 12 : index
    %c0_169 = arith.constant 0 : index
    %317 = vector.load %arg6[%c12, %c0_169] : memref<26x96xf32, #tpu.memory_space<vmem>>, vector<1x32xf32>
    %cst_170 = arith.constant dense<0.000000e+00> : vector<8xf32>
    %318 = vector.multi_reduction <add>, %303, %cst_170 [1] : vector<8x32xf32> to vector<8xf32>
    %319 = vector.shape_cast %318 : vector<8xf32> to vector<8x1xf32>
    %cst_171 = arith.constant 3.200000e+01 : f32
    %320 = vector.broadcast %cst_171 : f32 to vector<8x1xf32>
    %321 = arith.divf %319, %320 : vector<8x1xf32>
    %322 = arith.mulf %303, %303 : vector<8x32xf32>
    %cst_172 = arith.constant dense<0.000000e+00> : vector<8xf32>
    %323 = vector.multi_reduction <add>, %322, %cst_172 [1] : vector<8x32xf32> to vector<8xf32>
    %324 = vector.shape_cast %323 : vector<8xf32> to vector<8x1xf32>
    %cst_173 = arith.constant 3.200000e+01 : f32
    %325 = vector.broadcast %cst_173 : f32 to vector<8x1xf32>
    %326 = arith.divf %324, %325 : vector<8x1xf32>
    %327 = arith.mulf %321, %321 : vector<8x1xf32>
    %328 = arith.subf %326, %327 : vector<8x1xf32>
    %329 = vector.broadcast %321 : vector<8x1xf32> to vector<8x32xf32>
    %330 = arith.subf %303, %329 : vector<8x32xf32>
    %cst_174 = arith.constant 9.99999974E-6 : f32
    %331 = vector.broadcast %cst_174 : f32 to vector<8x1xf32>
    %332 = arith.addf %328, %331 : vector<8x1xf32>
    %333 = math.rsqrt %332 : vector<8x1xf32>
    %334 = vector.broadcast %333 : vector<8x1xf32> to vector<8x32xf32>
    %335 = arith.mulf %330, %334 : vector<8x32xf32>
    %336 = vector.broadcast %316 : vector<1x32xf32> to vector<8x32xf32>
    %337 = arith.mulf %335, %336 : vector<8x32xf32>
    %338 = vector.broadcast %317 : vector<1x32xf32> to vector<8x32xf32>
    %339 = arith.addf %337, %338 : vector<8x32xf32>
    %340 = arith.truncf %339 : vector<8x32xf32> to vector<8x32xbf16>
    %c0_175 = arith.constant 0 : index
    %c96 = arith.constant 96 : index
    %341 = vector.load %arg4[%c0_175, %c96] : memref<32x416xf32, #tpu.memory_space<vmem>>, vector<32x8xf32>
    %c13 = arith.constant 13 : index
    %c0_176 = arith.constant 0 : index
    %342 = vector.load %arg6[%c13, %c0_176] : memref<26x96xf32, #tpu.memory_space<vmem>>, vector<1x8xf32>
    %343 = arith.truncf %341 : vector<32x8xf32> to vector<32x8xbf16>
    %cst_177 = arith.constant dense<0.000000e+00> : vector<8x8xf32>
    %344 = tpu.matmul %340, %343, %cst_177 {dimension_numbers = #tpu.dot_dimension_numbers<[1], [0], [0], [1], [0, 0, 1, 1], [], []>} : vector<8x32xbf16>, vector<32x8xbf16>, vector<8x8xf32> -> vector<8x8xf32>
    %345 = vector.broadcast %342 : vector<1x8xf32> to vector<8x8xf32>
    %346 = arith.addf %344, %345 : vector<8x8xf32>
    %c0_178 = arith.constant 0 : index
    %c104 = arith.constant 104 : index
    %347 = vector.load %arg4[%c0_178, %c104] : memref<32x416xf32, #tpu.memory_space<vmem>>, vector<32x8xf32>
    %c13_179 = arith.constant 13 : index
    %c8_180 = arith.constant 8 : index
    %348 = vector.load %arg6[%c13_179, %c8_180] : memref<26x96xf32, #tpu.memory_space<vmem>>, vector<1x8xf32>
    %349 = arith.truncf %347 : vector<32x8xf32> to vector<32x8xbf16>
    %cst_181 = arith.constant dense<0.000000e+00> : vector<8x8xf32>
    %350 = tpu.matmul %340, %349, %cst_181 {dimension_numbers = #tpu.dot_dimension_numbers<[1], [0], [0], [1], [0, 0, 1, 1], [], []>} : vector<8x32xbf16>, vector<32x8xbf16>, vector<8x8xf32> -> vector<8x8xf32>
    %351 = vector.broadcast %348 : vector<1x8xf32> to vector<8x8xf32>
    %352 = arith.addf %350, %351 : vector<8x8xf32>
    %c0_182 = arith.constant 0 : index
    %c112 = arith.constant 112 : index
    %353 = vector.load %arg4[%c0_182, %c112] : memref<32x416xf32, #tpu.memory_space<vmem>>, vector<32x8xf32>
    %c13_183 = arith.constant 13 : index
    %c16_184 = arith.constant 16 : index
    %354 = vector.load %arg6[%c13_183, %c16_184] : memref<26x96xf32, #tpu.memory_space<vmem>>, vector<1x8xf32>
    %355 = arith.truncf %353 : vector<32x8xf32> to vector<32x8xbf16>
    %cst_185 = arith.constant dense<0.000000e+00> : vector<8x8xf32>
    %356 = tpu.matmul %340, %355, %cst_185 {dimension_numbers = #tpu.dot_dimension_numbers<[1], [0], [0], [1], [0, 0, 1, 1], [], []>} : vector<8x32xbf16>, vector<32x8xbf16>, vector<8x8xf32> -> vector<8x8xf32>
    %357 = vector.broadcast %354 : vector<1x8xf32> to vector<8x8xf32>
    %358 = arith.addf %356, %357 : vector<8x8xf32>
    %c0_186 = arith.constant 0 : index
    %c120 = arith.constant 120 : index
    %359 = vector.load %arg4[%c0_186, %c120] : memref<32x416xf32, #tpu.memory_space<vmem>>, vector<32x8xf32>
    %c13_187 = arith.constant 13 : index
    %c24_188 = arith.constant 24 : index
    %360 = vector.load %arg6[%c13_187, %c24_188] : memref<26x96xf32, #tpu.memory_space<vmem>>, vector<1x8xf32>
    %361 = arith.truncf %359 : vector<32x8xf32> to vector<32x8xbf16>
    %cst_189 = arith.constant dense<0.000000e+00> : vector<8x8xf32>
    %362 = tpu.matmul %340, %361, %cst_189 {dimension_numbers = #tpu.dot_dimension_numbers<[1], [0], [0], [1], [0, 0, 1, 1], [], []>} : vector<8x32xbf16>, vector<32x8xbf16>, vector<8x8xf32> -> vector<8x8xf32>
    %363 = vector.broadcast %360 : vector<1x8xf32> to vector<8x8xf32>
    %364 = arith.addf %362, %363 : vector<8x8xf32>
    %365 = vector.shape_cast %346 : vector<8x8xf32> to vector<1x8x8xf32>
    %366 = vector.shape_cast %352 : vector<8x8xf32> to vector<1x8x8xf32>
    %367 = vector.shape_cast %358 : vector<8x8xf32> to vector<1x8x8xf32>
    %368 = vector.shape_cast %364 : vector<8x8xf32> to vector<1x8x8xf32>
    %369 = tpu.concatenate %365, %366, %367, %368 in 0 : vector<1x8x8xf32>, vector<1x8x8xf32>, vector<1x8x8xf32>, vector<1x8x8xf32> -> vector<4x8x8xf32>
    %370 = arith.truncf %339 : vector<8x32xf32> to vector<8x32xbf16>
    %c0_190 = arith.constant 0 : index
    %c128 = arith.constant 128 : index
    %371 = vector.load %arg4[%c0_190, %c128] : memref<32x416xf32, #tpu.memory_space<vmem>>, vector<32x8xf32>
    %c13_191 = arith.constant 13 : index
    %c32_192 = arith.constant 32 : index
    %372 = vector.load %arg6[%c13_191, %c32_192] : memref<26x96xf32, #tpu.memory_space<vmem>>, vector<1x8xf32>
    %373 = arith.truncf %371 : vector<32x8xf32> to vector<32x8xbf16>
    %cst_193 = arith.constant dense<0.000000e+00> : vector<8x8xf32>
    %374 = tpu.matmul %370, %373, %cst_193 {dimension_numbers = #tpu.dot_dimension_numbers<[1], [0], [0], [1], [0, 0, 1, 1], [], []>} : vector<8x32xbf16>, vector<32x8xbf16>, vector<8x8xf32> -> vector<8x8xf32>
    %375 = vector.broadcast %372 : vector<1x8xf32> to vector<8x8xf32>
    %376 = arith.addf %374, %375 : vector<8x8xf32>
    %c0_194 = arith.constant 0 : index
    %c136 = arith.constant 136 : index
    %377 = vector.load %arg4[%c0_194, %c136] : memref<32x416xf32, #tpu.memory_space<vmem>>, vector<32x8xf32>
    %c13_195 = arith.constant 13 : index
    %c40_196 = arith.constant 40 : index
    %378 = vector.load %arg6[%c13_195, %c40_196] : memref<26x96xf32, #tpu.memory_space<vmem>>, vector<1x8xf32>
    %379 = arith.truncf %377 : vector<32x8xf32> to vector<32x8xbf16>
    %cst_197 = arith.constant dense<0.000000e+00> : vector<8x8xf32>
    %380 = tpu.matmul %370, %379, %cst_197 {dimension_numbers = #tpu.dot_dimension_numbers<[1], [0], [0], [1], [0, 0, 1, 1], [], []>} : vector<8x32xbf16>, vector<32x8xbf16>, vector<8x8xf32> -> vector<8x8xf32>
    %381 = vector.broadcast %378 : vector<1x8xf32> to vector<8x8xf32>
    %382 = arith.addf %380, %381 : vector<8x8xf32>
    %c0_198 = arith.constant 0 : index
    %c144 = arith.constant 144 : index
    %383 = vector.load %arg4[%c0_198, %c144] : memref<32x416xf32, #tpu.memory_space<vmem>>, vector<32x8xf32>
    %c13_199 = arith.constant 13 : index
    %c48_200 = arith.constant 48 : index
    %384 = vector.load %arg6[%c13_199, %c48_200] : memref<26x96xf32, #tpu.memory_space<vmem>>, vector<1x8xf32>
    %385 = arith.truncf %383 : vector<32x8xf32> to vector<32x8xbf16>
    %cst_201 = arith.constant dense<0.000000e+00> : vector<8x8xf32>
    %386 = tpu.matmul %370, %385, %cst_201 {dimension_numbers = #tpu.dot_dimension_numbers<[1], [0], [0], [1], [0, 0, 1, 1], [], []>} : vector<8x32xbf16>, vector<32x8xbf16>, vector<8x8xf32> -> vector<8x8xf32>
    %387 = vector.broadcast %384 : vector<1x8xf32> to vector<8x8xf32>
    %388 = arith.addf %386, %387 : vector<8x8xf32>
    %c0_202 = arith.constant 0 : index
    %c152 = arith.constant 152 : index
    %389 = vector.load %arg4[%c0_202, %c152] : memref<32x416xf32, #tpu.memory_space<vmem>>, vector<32x8xf32>
    %c13_203 = arith.constant 13 : index
    %c56_204 = arith.constant 56 : index
    %390 = vector.load %arg6[%c13_203, %c56_204] : memref<26x96xf32, #tpu.memory_space<vmem>>, vector<1x8xf32>
    %391 = arith.truncf %389 : vector<32x8xf32> to vector<32x8xbf16>
    %cst_205 = arith.constant dense<0.000000e+00> : vector<8x8xf32>
    %392 = tpu.matmul %370, %391, %cst_205 {dimension_numbers = #tpu.dot_dimension_numbers<[1], [0], [0], [1], [0, 0, 1, 1], [], []>} : vector<8x32xbf16>, vector<32x8xbf16>, vector<8x8xf32> -> vector<8x8xf32>
    %393 = vector.broadcast %390 : vector<1x8xf32> to vector<8x8xf32>
    %394 = arith.addf %392, %393 : vector<8x8xf32>
    %395 = vector.shape_cast %376 : vector<8x8xf32> to vector<1x8x8xf32>
    %396 = vector.shape_cast %382 : vector<8x8xf32> to vector<1x8x8xf32>
    %397 = vector.shape_cast %388 : vector<8x8xf32> to vector<1x8x8xf32>
    %398 = vector.shape_cast %394 : vector<8x8xf32> to vector<1x8x8xf32>
    %399 = tpu.concatenate %395, %396, %397, %398 in 0 : vector<1x8x8xf32>, vector<1x8x8xf32>, vector<1x8x8xf32>, vector<1x8x8xf32> -> vector<4x8x8xf32>
    %400 = arith.truncf %339 : vector<8x32xf32> to vector<8x32xbf16>
    %c0_206 = arith.constant 0 : index
    %c160 = arith.constant 160 : index
    %401 = vector.load %arg4[%c0_206, %c160] : memref<32x416xf32, #tpu.memory_space<vmem>>, vector<32x8xf32>
    %c13_207 = arith.constant 13 : index
    %c64_208 = arith.constant 64 : index
    %402 = vector.load %arg6[%c13_207, %c64_208] : memref<26x96xf32, #tpu.memory_space<vmem>>, vector<1x8xf32>
    %403 = arith.truncf %401 : vector<32x8xf32> to vector<32x8xbf16>
    %cst_209 = arith.constant dense<0.000000e+00> : vector<8x8xf32>
    %404 = tpu.matmul %400, %403, %cst_209 {dimension_numbers = #tpu.dot_dimension_numbers<[1], [0], [0], [1], [0, 0, 1, 1], [], []>} : vector<8x32xbf16>, vector<32x8xbf16>, vector<8x8xf32> -> vector<8x8xf32>
    %405 = vector.broadcast %402 : vector<1x8xf32> to vector<8x8xf32>
    %406 = arith.addf %404, %405 : vector<8x8xf32>
    %c0_210 = arith.constant 0 : index
    %c168 = arith.constant 168 : index
    %407 = vector.load %arg4[%c0_210, %c168] : memref<32x416xf32, #tpu.memory_space<vmem>>, vector<32x8xf32>
    %c13_211 = arith.constant 13 : index
    %c72_212 = arith.constant 72 : index
    %408 = vector.load %arg6[%c13_211, %c72_212] : memref<26x96xf32, #tpu.memory_space<vmem>>, vector<1x8xf32>
    %409 = arith.truncf %407 : vector<32x8xf32> to vector<32x8xbf16>
    %cst_213 = arith.constant dense<0.000000e+00> : vector<8x8xf32>
    %410 = tpu.matmul %400, %409, %cst_213 {dimension_numbers = #tpu.dot_dimension_numbers<[1], [0], [0], [1], [0, 0, 1, 1], [], []>} : vector<8x32xbf16>, vector<32x8xbf16>, vector<8x8xf32> -> vector<8x8xf32>
    %411 = vector.broadcast %408 : vector<1x8xf32> to vector<8x8xf32>
    %412 = arith.addf %410, %411 : vector<8x8xf32>
    %c0_214 = arith.constant 0 : index
    %c176 = arith.constant 176 : index
    %413 = vector.load %arg4[%c0_214, %c176] : memref<32x416xf32, #tpu.memory_space<vmem>>, vector<32x8xf32>
    %c13_215 = arith.constant 13 : index
    %c80_216 = arith.constant 80 : index
    %414 = vector.load %arg6[%c13_215, %c80_216] : memref<26x96xf32, #tpu.memory_space<vmem>>, vector<1x8xf32>
    %415 = arith.truncf %413 : vector<32x8xf32> to vector<32x8xbf16>
    %cst_217 = arith.constant dense<0.000000e+00> : vector<8x8xf32>
    %416 = tpu.matmul %400, %415, %cst_217 {dimension_numbers = #tpu.dot_dimension_numbers<[1], [0], [0], [1], [0, 0, 1, 1], [], []>} : vector<8x32xbf16>, vector<32x8xbf16>, vector<8x8xf32> -> vector<8x8xf32>
    %417 = vector.broadcast %414 : vector<1x8xf32> to vector<8x8xf32>
    %418 = arith.addf %416, %417 : vector<8x8xf32>
    %c0_218 = arith.constant 0 : index
    %c184 = arith.constant 184 : index
    %419 = vector.load %arg4[%c0_218, %c184] : memref<32x416xf32, #tpu.memory_space<vmem>>, vector<32x8xf32>
    %c13_219 = arith.constant 13 : index
    %c88_220 = arith.constant 88 : index
    %420 = vector.load %arg6[%c13_219, %c88_220] : memref<26x96xf32, #tpu.memory_space<vmem>>, vector<1x8xf32>
    %421 = arith.truncf %419 : vector<32x8xf32> to vector<32x8xbf16>
    %cst_221 = arith.constant dense<0.000000e+00> : vector<8x8xf32>
    %422 = tpu.matmul %400, %421, %cst_221 {dimension_numbers = #tpu.dot_dimension_numbers<[1], [0], [0], [1], [0, 0, 1, 1], [], []>} : vector<8x32xbf16>, vector<32x8xbf16>, vector<8x8xf32> -> vector<8x8xf32>
    %423 = vector.broadcast %420 : vector<1x8xf32> to vector<8x8xf32>
    %424 = arith.addf %422, %423 : vector<8x8xf32>
    %425 = vector.shape_cast %406 : vector<8x8xf32> to vector<1x8x8xf32>
    %426 = vector.shape_cast %412 : vector<8x8xf32> to vector<1x8x8xf32>
    %427 = vector.shape_cast %418 : vector<8x8xf32> to vector<1x8x8xf32>
    %428 = vector.shape_cast %424 : vector<8x8xf32> to vector<1x8x8xf32>
    %429 = tpu.concatenate %425, %426, %427, %428 in 0 : vector<1x8x8xf32>, vector<1x8x8xf32>, vector<1x8x8xf32>, vector<1x8x8xf32> -> vector<4x8x8xf32>
    %430 = arith.truncf %369 : vector<4x8x8xf32> to vector<4x8x8xbf16>
    %431 = arith.truncf %399 : vector<4x8x8xf32> to vector<4x8x8xbf16>
    %cst_222 = arith.constant dense<0.000000e+00> : vector<4x8x8xf32>
    %432 = tpu.matmul %430, %431, %cst_222 {dimension_numbers = #tpu.dot_dimension_numbers<[2], [2], [1], [1], [0, 0, 0, 1, 1, 1], [0], [0]>} : vector<4x8x8xbf16>, vector<4x8x8xbf16>, vector<4x8x8xf32> -> vector<4x8x8xf32>
    %cst_223 = arith.constant 0.353553385 : f32
    %433 = vector.broadcast %cst_223 : f32 to vector<4x8x8xf32>
    %434 = arith.mulf %432, %433 : vector<4x8x8xf32>
    %435 = vector.shape_cast %315 : vector<8x8xf32> to vector<1x8x8xf32>
    %436 = vector.broadcast %435 : vector<1x8x8xf32> to vector<4x8x8xf32>
    %437 = arith.addf %434, %436 : vector<4x8x8xf32>
    %cst_224 = arith.constant dense<0xFF800000> : vector<4x8xf32>
    %438 = vector.multi_reduction <maximumf>, %437, %cst_224 [2] : vector<4x8x8xf32> to vector<4x8xf32>
    %439 = vector.shape_cast %438 : vector<4x8xf32> to vector<4x8x1xf32>
    %440 = vector.broadcast %439 : vector<4x8x1xf32> to vector<4x8x8xf32>
    %441 = arith.subf %437, %440 : vector<4x8x8xf32>
    %442 = math.exp %441 : vector<4x8x8xf32>
    %cst_225 = arith.constant dense<0.000000e+00> : vector<4x8xf32>
    %443 = vector.multi_reduction <add>, %442, %cst_225 [2] : vector<4x8x8xf32> to vector<4x8xf32>
    %444 = vector.shape_cast %443 : vector<4x8xf32> to vector<4x8x1xf32>
    %445 = tpu.reciprocal %444 {approx = true} : vector<4x8x1xf32> -> vector<4x8x1xf32>
    %446 = vector.broadcast %445 : vector<4x8x1xf32> to vector<4x8x8xf32>
    %447 = arith.mulf %442, %446 : vector<4x8x8xf32>
    %448 = arith.truncf %447 : vector<4x8x8xf32> to vector<4x8x8xbf16>
    %449 = arith.truncf %429 : vector<4x8x8xf32> to vector<4x8x8xbf16>
    %cst_226 = arith.constant dense<0.000000e+00> : vector<4x8x8xf32>
    %450 = tpu.matmul %448, %449, %cst_226 {dimension_numbers = #tpu.dot_dimension_numbers<[2], [1], [1], [2], [0, 0, 0, 1, 1, 2], [0], [0]>} : vector<4x8x8xbf16>, vector<4x8x8xbf16>, vector<4x8x8xf32> -> vector<4x8x8xf32>
    %c144_227 = arith.constant 144 : index
    %c0_228 = arith.constant 0 : index
    %451 = vector.load %arg5[%c144_227, %c0_228] : memref<384x32xf32, #tpu.memory_space<vmem>>, vector<32x32xf32>
    %452 = vector.shape_cast %451 : vector<32x32xf32> to vector<4x8x32xf32>
    %453 = arith.truncf %450 : vector<4x8x8xf32> to vector<4x8x8xbf16>
    %454 = arith.truncf %452 : vector<4x8x32xf32> to vector<4x8x32xbf16>
    %cst_229 = arith.constant dense<0.000000e+00> : vector<4x8x32xf32>
    %455 = tpu.matmul %453, %454, %cst_229 {dimension_numbers = #tpu.dot_dimension_numbers<[2], [1], [1], [2], [0, 0, 0, 1, 1, 2], [0], [0]>} : vector<4x8x8xbf16>, vector<4x8x32xbf16>, vector<4x8x32xf32> -> vector<4x8x32xf32>
    %cst_230 = arith.constant dense<0.000000e+00> : vector<8x32xf32>
    %456 = vector.multi_reduction <add>, %455, %cst_230 [0] : vector<4x8x32xf32> to vector<8x32xf32>
    %c14 = arith.constant 14 : index
    %c0_231 = arith.constant 0 : index
    %457 = vector.load %arg6[%c14, %c0_231] : memref<26x96xf32, #tpu.memory_space<vmem>>, vector<1x32xf32>
    %458 = vector.broadcast %457 : vector<1x32xf32> to vector<8x32xf32>
    %459 = arith.addf %456, %458 : vector<8x32xf32>
    %460 = arith.addf %303, %459 : vector<8x32xf32>
    %c15 = arith.constant 15 : index
    %c0_232 = arith.constant 0 : index
    %461 = vector.load %arg6[%c15, %c0_232] : memref<26x96xf32, #tpu.memory_space<vmem>>, vector<1x32xf32>
    %c16_233 = arith.constant 16 : index
    %c0_234 = arith.constant 0 : index
    %462 = vector.load %arg6[%c16_233, %c0_234] : memref<26x96xf32, #tpu.memory_space<vmem>>, vector<1x32xf32>
    %cst_235 = arith.constant dense<0.000000e+00> : vector<8xf32>
    %463 = vector.multi_reduction <add>, %460, %cst_235 [1] : vector<8x32xf32> to vector<8xf32>
    %464 = vector.shape_cast %463 : vector<8xf32> to vector<8x1xf32>
    %cst_236 = arith.constant 3.200000e+01 : f32
    %465 = vector.broadcast %cst_236 : f32 to vector<8x1xf32>
    %466 = arith.divf %464, %465 : vector<8x1xf32>
    %467 = arith.mulf %460, %460 : vector<8x32xf32>
    %cst_237 = arith.constant dense<0.000000e+00> : vector<8xf32>
    %468 = vector.multi_reduction <add>, %467, %cst_237 [1] : vector<8x32xf32> to vector<8xf32>
    %469 = vector.shape_cast %468 : vector<8xf32> to vector<8x1xf32>
    %cst_238 = arith.constant 3.200000e+01 : f32
    %470 = vector.broadcast %cst_238 : f32 to vector<8x1xf32>
    %471 = arith.divf %469, %470 : vector<8x1xf32>
    %472 = arith.mulf %466, %466 : vector<8x1xf32>
    %473 = arith.subf %471, %472 : vector<8x1xf32>
    %474 = vector.broadcast %466 : vector<8x1xf32> to vector<8x32xf32>
    %475 = arith.subf %460, %474 : vector<8x32xf32>
    %cst_239 = arith.constant 9.99999974E-6 : f32
    %476 = vector.broadcast %cst_239 : f32 to vector<8x1xf32>
    %477 = arith.addf %473, %476 : vector<8x1xf32>
    %478 = math.rsqrt %477 : vector<8x1xf32>
    %479 = vector.broadcast %478 : vector<8x1xf32> to vector<8x32xf32>
    %480 = arith.mulf %475, %479 : vector<8x32xf32>
    %481 = vector.broadcast %461 : vector<1x32xf32> to vector<8x32xf32>
    %482 = arith.mulf %480, %481 : vector<8x32xf32>
    %483 = vector.broadcast %462 : vector<1x32xf32> to vector<8x32xf32>
    %484 = arith.addf %482, %483 : vector<8x32xf32>
    %485 = arith.truncf %484 : vector<8x32xf32> to vector<8x32xbf16>
    %c0_240 = arith.constant 0 : index
    %c192 = arith.constant 192 : index
    %486 = vector.load %arg4[%c0_240, %c192] : memref<32x416xf32, #tpu.memory_space<vmem>>, vector<32x8xf32>
    %c17 = arith.constant 17 : index
    %c0_241 = arith.constant 0 : index
    %487 = vector.load %arg6[%c17, %c0_241] : memref<26x96xf32, #tpu.memory_space<vmem>>, vector<1x8xf32>
    %488 = arith.truncf %486 : vector<32x8xf32> to vector<32x8xbf16>
    %cst_242 = arith.constant dense<0.000000e+00> : vector<8x8xf32>
    %489 = tpu.matmul %485, %488, %cst_242 {dimension_numbers = #tpu.dot_dimension_numbers<[1], [0], [0], [1], [0, 0, 1, 1], [], []>} : vector<8x32xbf16>, vector<32x8xbf16>, vector<8x8xf32> -> vector<8x8xf32>
    %490 = vector.broadcast %487 : vector<1x8xf32> to vector<8x8xf32>
    %491 = arith.addf %489, %490 : vector<8x8xf32>
    %c0_243 = arith.constant 0 : index
    %c200 = arith.constant 200 : index
    %492 = vector.load %arg4[%c0_243, %c200] : memref<32x416xf32, #tpu.memory_space<vmem>>, vector<32x8xf32>
    %c17_244 = arith.constant 17 : index
    %c8_245 = arith.constant 8 : index
    %493 = vector.load %arg6[%c17_244, %c8_245] : memref<26x96xf32, #tpu.memory_space<vmem>>, vector<1x8xf32>
    %494 = arith.truncf %492 : vector<32x8xf32> to vector<32x8xbf16>
    %cst_246 = arith.constant dense<0.000000e+00> : vector<8x8xf32>
    %495 = tpu.matmul %485, %494, %cst_246 {dimension_numbers = #tpu.dot_dimension_numbers<[1], [0], [0], [1], [0, 0, 1, 1], [], []>} : vector<8x32xbf16>, vector<32x8xbf16>, vector<8x8xf32> -> vector<8x8xf32>
    %496 = vector.broadcast %493 : vector<1x8xf32> to vector<8x8xf32>
    %497 = arith.addf %495, %496 : vector<8x8xf32>
    %c0_247 = arith.constant 0 : index
    %c208 = arith.constant 208 : index
    %498 = vector.load %arg4[%c0_247, %c208] : memref<32x416xf32, #tpu.memory_space<vmem>>, vector<32x8xf32>
    %c17_248 = arith.constant 17 : index
    %c16_249 = arith.constant 16 : index
    %499 = vector.load %arg6[%c17_248, %c16_249] : memref<26x96xf32, #tpu.memory_space<vmem>>, vector<1x8xf32>
    %500 = arith.truncf %498 : vector<32x8xf32> to vector<32x8xbf16>
    %cst_250 = arith.constant dense<0.000000e+00> : vector<8x8xf32>
    %501 = tpu.matmul %485, %500, %cst_250 {dimension_numbers = #tpu.dot_dimension_numbers<[1], [0], [0], [1], [0, 0, 1, 1], [], []>} : vector<8x32xbf16>, vector<32x8xbf16>, vector<8x8xf32> -> vector<8x8xf32>
    %502 = vector.broadcast %499 : vector<1x8xf32> to vector<8x8xf32>
    %503 = arith.addf %501, %502 : vector<8x8xf32>
    %c0_251 = arith.constant 0 : index
    %c216 = arith.constant 216 : index
    %504 = vector.load %arg4[%c0_251, %c216] : memref<32x416xf32, #tpu.memory_space<vmem>>, vector<32x8xf32>
    %c17_252 = arith.constant 17 : index
    %c24_253 = arith.constant 24 : index
    %505 = vector.load %arg6[%c17_252, %c24_253] : memref<26x96xf32, #tpu.memory_space<vmem>>, vector<1x8xf32>
    %506 = arith.truncf %504 : vector<32x8xf32> to vector<32x8xbf16>
    %cst_254 = arith.constant dense<0.000000e+00> : vector<8x8xf32>
    %507 = tpu.matmul %485, %506, %cst_254 {dimension_numbers = #tpu.dot_dimension_numbers<[1], [0], [0], [1], [0, 0, 1, 1], [], []>} : vector<8x32xbf16>, vector<32x8xbf16>, vector<8x8xf32> -> vector<8x8xf32>
    %508 = vector.broadcast %505 : vector<1x8xf32> to vector<8x8xf32>
    %509 = arith.addf %507, %508 : vector<8x8xf32>
    %510 = vector.shape_cast %491 : vector<8x8xf32> to vector<1x8x8xf32>
    %511 = vector.shape_cast %497 : vector<8x8xf32> to vector<1x8x8xf32>
    %512 = vector.shape_cast %503 : vector<8x8xf32> to vector<1x8x8xf32>
    %513 = vector.shape_cast %509 : vector<8x8xf32> to vector<1x8x8xf32>
    %514 = tpu.concatenate %510, %511, %512, %513 in 0 : vector<1x8x8xf32>, vector<1x8x8xf32>, vector<1x8x8xf32>, vector<1x8x8xf32> -> vector<4x8x8xf32>
    %515 = arith.truncf %238 : vector<21x32xf32> to vector<21x32xbf16>
    %c0_255 = arith.constant 0 : index
    %c224 = arith.constant 224 : index
    %516 = vector.load %arg4[%c0_255, %c224] : memref<32x416xf32, #tpu.memory_space<vmem>>, vector<32x8xf32>
    %c18 = arith.constant 18 : index
    %c0_256 = arith.constant 0 : index
    %517 = vector.load %arg6[%c18, %c0_256] : memref<26x96xf32, #tpu.memory_space<vmem>>, vector<1x8xf32>
    %518 = arith.truncf %516 : vector<32x8xf32> to vector<32x8xbf16>
    %cst_257 = arith.constant dense<0.000000e+00> : vector<21x8xf32>
    %519 = tpu.matmul %515, %518, %cst_257 {dimension_numbers = #tpu.dot_dimension_numbers<[1], [0], [0], [1], [0, 0, 1, 1], [], []>} : vector<21x32xbf16>, vector<32x8xbf16>, vector<21x8xf32> -> vector<21x8xf32>
    %520 = vector.broadcast %517 : vector<1x8xf32> to vector<21x8xf32>
    %521 = arith.addf %519, %520 : vector<21x8xf32>
    %c0_258 = arith.constant 0 : index
    %c232 = arith.constant 232 : index
    %522 = vector.load %arg4[%c0_258, %c232] : memref<32x416xf32, #tpu.memory_space<vmem>>, vector<32x8xf32>
    %c18_259 = arith.constant 18 : index
    %c8_260 = arith.constant 8 : index
    %523 = vector.load %arg6[%c18_259, %c8_260] : memref<26x96xf32, #tpu.memory_space<vmem>>, vector<1x8xf32>
    %524 = arith.truncf %522 : vector<32x8xf32> to vector<32x8xbf16>
    %cst_261 = arith.constant dense<0.000000e+00> : vector<21x8xf32>
    %525 = tpu.matmul %515, %524, %cst_261 {dimension_numbers = #tpu.dot_dimension_numbers<[1], [0], [0], [1], [0, 0, 1, 1], [], []>} : vector<21x32xbf16>, vector<32x8xbf16>, vector<21x8xf32> -> vector<21x8xf32>
    %526 = vector.broadcast %523 : vector<1x8xf32> to vector<21x8xf32>
    %527 = arith.addf %525, %526 : vector<21x8xf32>
    %c0_262 = arith.constant 0 : index
    %c240 = arith.constant 240 : index
    %528 = vector.load %arg4[%c0_262, %c240] : memref<32x416xf32, #tpu.memory_space<vmem>>, vector<32x8xf32>
    %c18_263 = arith.constant 18 : index
    %c16_264 = arith.constant 16 : index
    %529 = vector.load %arg6[%c18_263, %c16_264] : memref<26x96xf32, #tpu.memory_space<vmem>>, vector<1x8xf32>
    %530 = arith.truncf %528 : vector<32x8xf32> to vector<32x8xbf16>
    %cst_265 = arith.constant dense<0.000000e+00> : vector<21x8xf32>
    %531 = tpu.matmul %515, %530, %cst_265 {dimension_numbers = #tpu.dot_dimension_numbers<[1], [0], [0], [1], [0, 0, 1, 1], [], []>} : vector<21x32xbf16>, vector<32x8xbf16>, vector<21x8xf32> -> vector<21x8xf32>
    %532 = vector.broadcast %529 : vector<1x8xf32> to vector<21x8xf32>
    %533 = arith.addf %531, %532 : vector<21x8xf32>
    %c0_266 = arith.constant 0 : index
    %c248 = arith.constant 248 : index
    %534 = vector.load %arg4[%c0_266, %c248] : memref<32x416xf32, #tpu.memory_space<vmem>>, vector<32x8xf32>
    %c18_267 = arith.constant 18 : index
    %c24_268 = arith.constant 24 : index
    %535 = vector.load %arg6[%c18_267, %c24_268] : memref<26x96xf32, #tpu.memory_space<vmem>>, vector<1x8xf32>
    %536 = arith.truncf %534 : vector<32x8xf32> to vector<32x8xbf16>
    %cst_269 = arith.constant dense<0.000000e+00> : vector<21x8xf32>
    %537 = tpu.matmul %515, %536, %cst_269 {dimension_numbers = #tpu.dot_dimension_numbers<[1], [0], [0], [1], [0, 0, 1, 1], [], []>} : vector<21x32xbf16>, vector<32x8xbf16>, vector<21x8xf32> -> vector<21x8xf32>
    %538 = vector.broadcast %535 : vector<1x8xf32> to vector<21x8xf32>
    %539 = arith.addf %537, %538 : vector<21x8xf32>
    %540 = vector.shape_cast %521 : vector<21x8xf32> to vector<1x21x8xf32>
    %541 = vector.shape_cast %527 : vector<21x8xf32> to vector<1x21x8xf32>
    %542 = vector.shape_cast %533 : vector<21x8xf32> to vector<1x21x8xf32>
    %543 = vector.shape_cast %539 : vector<21x8xf32> to vector<1x21x8xf32>
    %544 = tpu.concatenate %540, %541, %542, %543 in 0 : vector<1x21x8xf32>, vector<1x21x8xf32>, vector<1x21x8xf32>, vector<1x21x8xf32> -> vector<4x21x8xf32>
    %545 = arith.truncf %238 : vector<21x32xf32> to vector<21x32xbf16>
    %c0_270 = arith.constant 0 : index
    %c256 = arith.constant 256 : index
    %546 = vector.load %arg4[%c0_270, %c256] : memref<32x416xf32, #tpu.memory_space<vmem>>, vector<32x8xf32>
    %c18_271 = arith.constant 18 : index
    %c32_272 = arith.constant 32 : index
    %547 = vector.load %arg6[%c18_271, %c32_272] : memref<26x96xf32, #tpu.memory_space<vmem>>, vector<1x8xf32>
    %548 = arith.truncf %546 : vector<32x8xf32> to vector<32x8xbf16>
    %cst_273 = arith.constant dense<0.000000e+00> : vector<21x8xf32>
    %549 = tpu.matmul %545, %548, %cst_273 {dimension_numbers = #tpu.dot_dimension_numbers<[1], [0], [0], [1], [0, 0, 1, 1], [], []>} : vector<21x32xbf16>, vector<32x8xbf16>, vector<21x8xf32> -> vector<21x8xf32>
    %550 = vector.broadcast %547 : vector<1x8xf32> to vector<21x8xf32>
    %551 = arith.addf %549, %550 : vector<21x8xf32>
    %c0_274 = arith.constant 0 : index
    %c264 = arith.constant 264 : index
    %552 = vector.load %arg4[%c0_274, %c264] : memref<32x416xf32, #tpu.memory_space<vmem>>, vector<32x8xf32>
    %c18_275 = arith.constant 18 : index
    %c40_276 = arith.constant 40 : index
    %553 = vector.load %arg6[%c18_275, %c40_276] : memref<26x96xf32, #tpu.memory_space<vmem>>, vector<1x8xf32>
    %554 = arith.truncf %552 : vector<32x8xf32> to vector<32x8xbf16>
    %cst_277 = arith.constant dense<0.000000e+00> : vector<21x8xf32>
    %555 = tpu.matmul %545, %554, %cst_277 {dimension_numbers = #tpu.dot_dimension_numbers<[1], [0], [0], [1], [0, 0, 1, 1], [], []>} : vector<21x32xbf16>, vector<32x8xbf16>, vector<21x8xf32> -> vector<21x8xf32>
    %556 = vector.broadcast %553 : vector<1x8xf32> to vector<21x8xf32>
    %557 = arith.addf %555, %556 : vector<21x8xf32>
    %c0_278 = arith.constant 0 : index
    %c272 = arith.constant 272 : index
    %558 = vector.load %arg4[%c0_278, %c272] : memref<32x416xf32, #tpu.memory_space<vmem>>, vector<32x8xf32>
    %c18_279 = arith.constant 18 : index
    %c48_280 = arith.constant 48 : index
    %559 = vector.load %arg6[%c18_279, %c48_280] : memref<26x96xf32, #tpu.memory_space<vmem>>, vector<1x8xf32>
    %560 = arith.truncf %558 : vector<32x8xf32> to vector<32x8xbf16>
    %cst_281 = arith.constant dense<0.000000e+00> : vector<21x8xf32>
    %561 = tpu.matmul %545, %560, %cst_281 {dimension_numbers = #tpu.dot_dimension_numbers<[1], [0], [0], [1], [0, 0, 1, 1], [], []>} : vector<21x32xbf16>, vector<32x8xbf16>, vector<21x8xf32> -> vector<21x8xf32>
    %562 = vector.broadcast %559 : vector<1x8xf32> to vector<21x8xf32>
    %563 = arith.addf %561, %562 : vector<21x8xf32>
    %c0_282 = arith.constant 0 : index
    %c280 = arith.constant 280 : index
    %564 = vector.load %arg4[%c0_282, %c280] : memref<32x416xf32, #tpu.memory_space<vmem>>, vector<32x8xf32>
    %c18_283 = arith.constant 18 : index
    %c56_284 = arith.constant 56 : index
    %565 = vector.load %arg6[%c18_283, %c56_284] : memref<26x96xf32, #tpu.memory_space<vmem>>, vector<1x8xf32>
    %566 = arith.truncf %564 : vector<32x8xf32> to vector<32x8xbf16>
    %cst_285 = arith.constant dense<0.000000e+00> : vector<21x8xf32>
    %567 = tpu.matmul %545, %566, %cst_285 {dimension_numbers = #tpu.dot_dimension_numbers<[1], [0], [0], [1], [0, 0, 1, 1], [], []>} : vector<21x32xbf16>, vector<32x8xbf16>, vector<21x8xf32> -> vector<21x8xf32>
    %568 = vector.broadcast %565 : vector<1x8xf32> to vector<21x8xf32>
    %569 = arith.addf %567, %568 : vector<21x8xf32>
    %570 = vector.shape_cast %551 : vector<21x8xf32> to vector<1x21x8xf32>
    %571 = vector.shape_cast %557 : vector<21x8xf32> to vector<1x21x8xf32>
    %572 = vector.shape_cast %563 : vector<21x8xf32> to vector<1x21x8xf32>
    %573 = vector.shape_cast %569 : vector<21x8xf32> to vector<1x21x8xf32>
    %574 = tpu.concatenate %570, %571, %572, %573 in 0 : vector<1x21x8xf32>, vector<1x21x8xf32>, vector<1x21x8xf32>, vector<1x21x8xf32> -> vector<4x21x8xf32>
    %575 = arith.truncf %514 : vector<4x8x8xf32> to vector<4x8x8xbf16>
    %576 = arith.truncf %544 : vector<4x21x8xf32> to vector<4x21x8xbf16>
    %cst_286 = arith.constant dense<0.000000e+00> : vector<4x8x21xf32>
    %577 = tpu.matmul %575, %576, %cst_286 {dimension_numbers = #tpu.dot_dimension_numbers<[2], [2], [1], [1], [0, 0, 0, 1, 1, 1], [0], [0]>} : vector<4x8x8xbf16>, vector<4x21x8xbf16>, vector<4x8x21xf32> -> vector<4x8x21xf32>
    %cst_287 = arith.constant 0.353553385 : f32
    %578 = vector.broadcast %cst_287 : f32 to vector<4x8x21xf32>
    %579 = arith.mulf %577, %578 : vector<4x8x21xf32>
    %cst_288 = arith.constant dense<0xFF800000> : vector<4x8xf32>
    %580 = vector.multi_reduction <maximumf>, %579, %cst_288 [2] : vector<4x8x21xf32> to vector<4x8xf32>
    %581 = vector.shape_cast %580 : vector<4x8xf32> to vector<4x8x1xf32>
    %582 = vector.broadcast %581 : vector<4x8x1xf32> to vector<4x8x21xf32>
    %583 = arith.subf %579, %582 : vector<4x8x21xf32>
    %584 = math.exp %583 : vector<4x8x21xf32>
    %cst_289 = arith.constant dense<0.000000e+00> : vector<4x8xf32>
    %585 = vector.multi_reduction <add>, %584, %cst_289 [2] : vector<4x8x21xf32> to vector<4x8xf32>
    %586 = vector.shape_cast %585 : vector<4x8xf32> to vector<4x8x1xf32>
    %587 = tpu.reciprocal %586 {approx = true} : vector<4x8x1xf32> -> vector<4x8x1xf32>
    %588 = vector.broadcast %587 : vector<4x8x1xf32> to vector<4x8x21xf32>
    %589 = arith.mulf %584, %588 : vector<4x8x21xf32>
    %590 = arith.truncf %589 : vector<4x8x21xf32> to vector<4x8x21xbf16>
    %591 = arith.truncf %574 : vector<4x21x8xf32> to vector<4x21x8xbf16>
    %cst_290 = arith.constant dense<0.000000e+00> : vector<4x8x8xf32>
    %592 = tpu.matmul %590, %591, %cst_290 {dimension_numbers = #tpu.dot_dimension_numbers<[2], [1], [1], [2], [0, 0, 0, 1, 1, 2], [0], [0]>} : vector<4x8x21xbf16>, vector<4x21x8xbf16>, vector<4x8x8xf32> -> vector<4x8x8xf32>
    %c176_291 = arith.constant 176 : index
    %c0_292 = arith.constant 0 : index
    %593 = vector.load %arg5[%c176_291, %c0_292] : memref<384x32xf32, #tpu.memory_space<vmem>>, vector<32x32xf32>
    %594 = vector.shape_cast %593 : vector<32x32xf32> to vector<4x8x32xf32>
    %595 = arith.truncf %592 : vector<4x8x8xf32> to vector<4x8x8xbf16>
    %596 = arith.truncf %594 : vector<4x8x32xf32> to vector<4x8x32xbf16>
    %cst_293 = arith.constant dense<0.000000e+00> : vector<4x8x32xf32>
    %597 = tpu.matmul %595, %596, %cst_293 {dimension_numbers = #tpu.dot_dimension_numbers<[2], [1], [1], [2], [0, 0, 0, 1, 1, 2], [0], [0]>} : vector<4x8x8xbf16>, vector<4x8x32xbf16>, vector<4x8x32xf32> -> vector<4x8x32xf32>
    %cst_294 = arith.constant dense<0.000000e+00> : vector<8x32xf32>
    %598 = vector.multi_reduction <add>, %597, %cst_294 [0] : vector<4x8x32xf32> to vector<8x32xf32>
    %c19 = arith.constant 19 : index
    %c0_295 = arith.constant 0 : index
    %599 = vector.load %arg6[%c19, %c0_295] : memref<26x96xf32, #tpu.memory_space<vmem>>, vector<1x32xf32>
    %600 = vector.broadcast %599 : vector<1x32xf32> to vector<8x32xf32>
    %601 = arith.addf %598, %600 : vector<8x32xf32>
    %602 = arith.addf %460, %601 : vector<8x32xf32>
    %c20 = arith.constant 20 : index
    %c0_296 = arith.constant 0 : index
    %603 = vector.load %arg6[%c20, %c0_296] : memref<26x96xf32, #tpu.memory_space<vmem>>, vector<1x32xf32>
    %c21 = arith.constant 21 : index
    %c0_297 = arith.constant 0 : index
    %604 = vector.load %arg6[%c21, %c0_297] : memref<26x96xf32, #tpu.memory_space<vmem>>, vector<1x32xf32>
    %cst_298 = arith.constant dense<0.000000e+00> : vector<8xf32>
    %605 = vector.multi_reduction <add>, %602, %cst_298 [1] : vector<8x32xf32> to vector<8xf32>
    %606 = vector.shape_cast %605 : vector<8xf32> to vector<8x1xf32>
    %cst_299 = arith.constant 3.200000e+01 : f32
    %607 = vector.broadcast %cst_299 : f32 to vector<8x1xf32>
    %608 = arith.divf %606, %607 : vector<8x1xf32>
    %609 = arith.mulf %602, %602 : vector<8x32xf32>
    %cst_300 = arith.constant dense<0.000000e+00> : vector<8xf32>
    %610 = vector.multi_reduction <add>, %609, %cst_300 [1] : vector<8x32xf32> to vector<8xf32>
    %611 = vector.shape_cast %610 : vector<8xf32> to vector<8x1xf32>
    %cst_301 = arith.constant 3.200000e+01 : f32
    %612 = vector.broadcast %cst_301 : f32 to vector<8x1xf32>
    %613 = arith.divf %611, %612 : vector<8x1xf32>
    %614 = arith.mulf %608, %608 : vector<8x1xf32>
    %615 = arith.subf %613, %614 : vector<8x1xf32>
    %616 = vector.broadcast %608 : vector<8x1xf32> to vector<8x32xf32>
    %617 = arith.subf %602, %616 : vector<8x32xf32>
    %cst_302 = arith.constant 9.99999974E-6 : f32
    %618 = vector.broadcast %cst_302 : f32 to vector<8x1xf32>
    %619 = arith.addf %615, %618 : vector<8x1xf32>
    %620 = math.rsqrt %619 : vector<8x1xf32>
    %621 = vector.broadcast %620 : vector<8x1xf32> to vector<8x32xf32>
    %622 = arith.mulf %617, %621 : vector<8x32xf32>
    %623 = vector.broadcast %603 : vector<1x32xf32> to vector<8x32xf32>
    %624 = arith.mulf %622, %623 : vector<8x32xf32>
    %625 = vector.broadcast %604 : vector<1x32xf32> to vector<8x32xf32>
    %626 = arith.addf %624, %625 : vector<8x32xf32>
    %c0_303 = arith.constant 0 : index
    %c352_304 = arith.constant 352 : index
    %627 = vector.load %arg4[%c0_303, %c352_304] : memref<32x416xf32, #tpu.memory_space<vmem>>, vector<32x64xf32>
    %628 = arith.truncf %626 : vector<8x32xf32> to vector<8x32xbf16>
    %629 = arith.truncf %627 : vector<32x64xf32> to vector<32x64xbf16>
    %cst_305 = arith.constant dense<0.000000e+00> : vector<8x64xf32>
    %630 = tpu.matmul %628, %629, %cst_305 {dimension_numbers = #tpu.dot_dimension_numbers<[1], [0], [0], [1], [0, 0, 1, 1], [], []>} : vector<8x32xbf16>, vector<32x64xbf16>, vector<8x64xf32> -> vector<8x64xf32>
    %c22 = arith.constant 22 : index
    %c0_306 = arith.constant 0 : index
    %631 = vector.load %arg6[%c22, %c0_306] : memref<26x96xf32, #tpu.memory_space<vmem>>, vector<1x64xf32>
    %632 = vector.broadcast %631 : vector<1x64xf32> to vector<8x64xf32>
    %633 = arith.addf %630, %632 : vector<8x64xf32>
    %634 = arith.mulf %633, %633 : vector<8x64xf32>
    %635 = arith.mulf %633, %634 : vector<8x64xf32>
    %cst_307 = arith.constant 4.471500e-02 : f32
    %636 = vector.broadcast %cst_307 : f32 to vector<8x64xf32>
    %637 = arith.mulf %636, %635 : vector<8x64xf32>
    %638 = arith.addf %633, %637 : vector<8x64xf32>
    %cst_308 = arith.constant 0.797884583 : f32
    %639 = vector.broadcast %cst_308 : f32 to vector<8x64xf32>
    %640 = arith.mulf %639, %638 : vector<8x64xf32>
    %641 = math.tanh %640 : vector<8x64xf32>
    %cst_309 = arith.constant 1.000000e+00 : f32
    %642 = vector.broadcast %cst_309 : f32 to vector<8x64xf32>
    %643 = arith.addf %642, %641 : vector<8x64xf32>
    %cst_310 = arith.constant 5.000000e-01 : f32
    %644 = vector.broadcast %cst_310 : f32 to vector<8x64xf32>
    %645 = arith.mulf %644, %643 : vector<8x64xf32>
    %646 = arith.mulf %633, %645 : vector<8x64xf32>
    %c208_311 = arith.constant 208 : index
    %c0_312 = arith.constant 0 : index
    %647 = vector.load %arg5[%c208_311, %c0_312] : memref<384x32xf32, #tpu.memory_space<vmem>>, vector<64x32xf32>
    %648 = arith.truncf %646 : vector<8x64xf32> to vector<8x64xbf16>
    %649 = arith.truncf %647 : vector<64x32xf32> to vector<64x32xbf16>
    %cst_313 = arith.constant dense<0.000000e+00> : vector<8x32xf32>
    %650 = tpu.matmul %648, %649, %cst_313 {dimension_numbers = #tpu.dot_dimension_numbers<[1], [0], [0], [1], [0, 0, 1, 1], [], []>} : vector<8x64xbf16>, vector<64x32xbf16>, vector<8x32xf32> -> vector<8x32xf32>
    %651 = arith.addf %602, %650 : vector<8x32xf32>
    %c23 = arith.constant 23 : index
    %c0_314 = arith.constant 0 : index
    %652 = vector.load %arg6[%c23, %c0_314] : memref<26x96xf32, #tpu.memory_space<vmem>>, vector<1x32xf32>
    %653 = vector.broadcast %652 : vector<1x32xf32> to vector<8x32xf32>
    %654 = arith.addf %651, %653 : vector<8x32xf32>
    %c24_315 = arith.constant 24 : index
    %c0_316 = arith.constant 0 : index
    %655 = vector.load %arg6[%c24_315, %c0_316] : memref<26x96xf32, #tpu.memory_space<vmem>>, vector<1x32xf32>
    %c25 = arith.constant 25 : index
    %c0_317 = arith.constant 0 : index
    %656 = vector.load %arg6[%c25, %c0_317] : memref<26x96xf32, #tpu.memory_space<vmem>>, vector<1x32xf32>
    %cst_318 = arith.constant dense<0.000000e+00> : vector<8xf32>
    %657 = vector.multi_reduction <add>, %654, %cst_318 [1] : vector<8x32xf32> to vector<8xf32>
    %658 = vector.shape_cast %657 : vector<8xf32> to vector<8x1xf32>
    %cst_319 = arith.constant 3.200000e+01 : f32
    %659 = vector.broadcast %cst_319 : f32 to vector<8x1xf32>
    %660 = arith.divf %658, %659 : vector<8x1xf32>
    %661 = arith.mulf %654, %654 : vector<8x32xf32>
    %cst_320 = arith.constant dense<0.000000e+00> : vector<8xf32>
    %662 = vector.multi_reduction <add>, %661, %cst_320 [1] : vector<8x32xf32> to vector<8xf32>
    %663 = vector.shape_cast %662 : vector<8xf32> to vector<8x1xf32>
    %cst_321 = arith.constant 3.200000e+01 : f32
    %664 = vector.broadcast %cst_321 : f32 to vector<8x1xf32>
    %665 = arith.divf %663, %664 : vector<8x1xf32>
    %666 = arith.mulf %660, %660 : vector<8x1xf32>
    %667 = arith.subf %665, %666 : vector<8x1xf32>
    %668 = vector.broadcast %660 : vector<8x1xf32> to vector<8x32xf32>
    %669 = arith.subf %654, %668 : vector<8x32xf32>
    %cst_322 = arith.constant 9.99999974E-6 : f32
    %670 = vector.broadcast %cst_322 : f32 to vector<8x1xf32>
    %671 = arith.addf %667, %670 : vector<8x1xf32>
    %672 = math.rsqrt %671 : vector<8x1xf32>
    %673 = vector.broadcast %672 : vector<8x1xf32> to vector<8x32xf32>
    %674 = arith.mulf %669, %673 : vector<8x32xf32>
    %675 = vector.broadcast %655 : vector<1x32xf32> to vector<8x32xf32>
    %676 = arith.mulf %674, %675 : vector<8x32xf32>
    %677 = vector.broadcast %656 : vector<1x32xf32> to vector<8x32xf32>
    %678 = arith.addf %676, %677 : vector<8x32xf32>
    %c0_323 = arith.constant 0 : index
    %c0_324 = arith.constant 0 : index
    %c0_325 = arith.constant 0 : index
    %679 = vector.load %arg7[%c0_323, %c0_324, %c0_325] : memref<1x8x32xf32, #tpu.memory_space<vmem>>, vector<1x8x32xf32>
    %680 = vector.shape_cast %679 : vector<1x8x32xf32> to vector<8x32xf32>
    %681 = vector.shape_cast %678 : vector<8x32xf32> to vector<1x8x32xf32>
    tpu.vector_store %arg7[%c0_323, %c0_324, %c0_325], %681 {strides = array<i32>} : memref<1x8x32xf32, #tpu.memory_space<vmem>>, vector<1x8x32xf32>,
    return
  }
  func.func @transform_0(%arg0: i32, %arg1: memref<2x8xi32, #tpu.memory_space<smem>>) -> (i32, i32, i32) {
    %c0_i32 = arith.constant 0 : i32
    %c0_i32_0 = arith.constant 0 : i32
    %c0_i32_1 = arith.constant 0 : i32
    return %arg0, %c0_i32, %c0_i32_0 : i32, i32, i32
  }
  func.func @transform_1(%arg0: i32, %arg1: memref<2x8xi32, #tpu.memory_space<smem>>) -> (i32, i32, i32) {
    %c0_i32 = arith.constant 0 : i32
    %c0_i32_0 = arith.constant 0 : i32
    %c0_i32_1 = arith.constant 0 : i32
    return %arg0, %c0_i32, %c0_i32_0 : i32, i32, i32
  }
  func.func @transform_2(%arg0: i32, %arg1: memref<2x8xi32, #tpu.memory_space<smem>>) -> (i32, i32) {
    %c0_i32 = arith.constant 0 : i32
    %c0_i32_0 = arith.constant 0 : i32
    %c0_i32_1 = arith.constant 0 : i32
    return %c0_i32, %c0_i32_0 : i32, i32
  }
  func.func @transform_3(%arg0: i32, %arg1: memref<2x8xi32, #tpu.memory_space<smem>>) -> (i32, i32) {
    %c0_i32 = arith.constant 0 : i32
    %c0_i32_0 = arith.constant 0 : i32
    %c0_i32_1 = arith.constant 0 : i32
    return %c0_i32, %c0_i32_0 : i32, i32
  }
  func.func @transform_4(%arg0: i32, %arg1: memref<2x8xi32, #tpu.memory_space<smem>>) -> (i32, i32) {
    %c0_i32 = arith.constant 0 : i32
    %c0_i32_0 = arith.constant 0 : i32
    %c0_i32_1 = arith.constant 0 : i32
    return %c0_i32, %c0_i32_0 : i32, i32
  }
  func.func @transform_5(%arg0: i32, %arg1: memref<2x8xi32, #tpu.memory_space<smem>>) -> (i32, i32, i32) {
    %c0_i32 = arith.constant 0 : i32
    %c0_i32_0 = arith.constant 0 : i32
    %c0_i32_1 = arith.constant 0 : i32
    return %arg0, %c0_i32, %c0_i32_0 : i32, i32, i32
  }
}

</mosaic_0001>

<llo_original>
// kernel: forward.1
$region0: #{forward.1}
  #allocation0 [shape = 'u32[]', space=smem, size = 0x4, offset = 0x4, fixed_abs, tag = 'smem constant byte address 0x4 - core index']
  #allocation1 [shape = 'u32[144,128]{1,0:T(1,128)}', space=vmem, size = 0x12000, scoped, tag = 'internal scratch']
  #allocation2 [shape = 'f32[17,32]{1,0:T(8,128)}', space=vmem, size = 0x3000, scoped, tag = 'scratch operand']
  #allocation3 [shape = 'f32[21,32]{1,0:T(8,128)}', space=vmem, size = 0x3000, scoped, tag = 'scratch operand']
  #allocation4 [shape = 'f32[8,32]{1,0:T(8,128)}', space=vmem, size = 0x1000, scoped, tag = 'scratch operand']
  #allocation5 [shape = 's32[1]{0}', space=sflag, size = 0x4, scoped, tag = 'scoped memory for forward.1']
  #allocation6 [shape = 'u8[1024]{0}', space=smem, size = 0x400, scoped, tag = 'prefetched SMEM operand 0']
  %s0 = inlined_call_operand.vmem [shape: s32[2,8], index: 0, kind: input, shape index: {}]
  %s1 = inlined_call_operand.vmem [shape: f32[2,16,48], index: 1, kind: input, shape index: {}]
  %s2 = inlined_call_operand.vmem [shape: f32[2,1,8], index: 2, kind: input, shape index: {}]
  %s3 = inlined_call_operand.vmem [shape: f32[32,416], index: 3, kind: input, shape index: {}]
  %s4 = inlined_call_operand.vmem [shape: f32[384,32], index: 4, kind: input, shape index: {}]
  %s5 = inlined_call_operand.vmem [shape: f32[26,96], index: 5, kind: input, shape index: {}]
  %s6 = inlined_call_operand.hbm [shape: f32[2,8,32], index: 6, kind: output, shape index: {}]
  %s7 = sld [smem:[#allocation0]]
  $region53: #{forward.1} parent=0
    _
  %s9 = ssub.s32 1, %s7
  %s10 = scalar_select 0, %s9, %s7
  %s11 = sshll.u32 %s0, 4
  %s12 = int_to_ptr.vmem [resolvable:$true] %s11
  %14 = dma.vmem_to_smem %s12, 32, [#allocation6], [#allocation5]
  %15 = dma.done [#allocation5], 32
  %16 = sfence
  $region1: #{forward.1} parent=0
    #allocation7 [shape = 'u8[8192]{0}', space=vmem, size = 0x2000, scoped, tag = 'output window, operand 0']
    #allocation8 [shape = 's32[2]{0}', space=sflag, size = 0x8, scoped, tag = 'scoped memory for forward.1']
    %17 = vsyncpa [#allocation8], 0
    %s18 = scalar_lea.sflag [#allocation8], 1
    %19 = vsyncpa %s18, 0
    loop: start=0, step=1, limit=4
    $region2: #{forward.1} parent=1 // loop_pre_header
      _
    $region3: #{forward.1} parent=1 // loop_header
      %s21 = sphi 0, %s25
      %p22 = scmp.ge.s32.totalorder %s21, 4
      %s31 = sphi 0, %s33
      %s34 = sphi 0, %s31
      %s35 = sphi 0, %s34
      %s51 = sphi 0, %s35
      %s57 = sphi 0, %s59
      %s60 = sphi 0, %s57
      %s61 = sphi 0, %s60
      %s77 = sphi 0, %s61
      %s81 = sphi 0, %s81
      %s83 = sphi 0, %s81
      %s84 = sphi 0, %s83
      %s98 = sphi 0, %s84
      %s102 = sphi 0, %s102
      %s104 = sphi 0, %s102
      %s105 = sphi 0, %s104
      %s119 = sphi 0, %s105
      %s123 = sphi 0, %s123
      %s125 = sphi 0, %s123
      %s126 = sphi 0, %s125
      %s140 = sphi 0, %s126
      %s146 = sphi 0, %s148
      %s149 = sphi 0, %s146
      %s150 = sphi 0, %s149
      %s166 = sphi 0, %s150
    $region4: #{forward.1} parent=1 // loop_header_branch
      %24 = sbr.rel (%p22) target = $region8
    $region5: #{forward.1} parent=1 // loop_body
      %s26 = ssub.s32 %s21, 1
      %s27 = ssub.s32 %s21, 2
      %s28 = sadd.s32 %s21, 1
      %s29 = ssub.s32 %s21, %s28
      %p30 = scmp.eq.s32.totalorder %s29, 0
      %s32 = sadd.s32 %s31, 1
      %s33 = scalar_select %p30, %s31, %s32
      %p36 = pneg %p30
      %p37 = scmp.eq.s32.totalorder %s21, 1
      %p38 = por %p36, %p37
      %p39 = scmp.ne.s32.totalorder %s31, %s34
      %p40 = scmp.eq.s32.totalorder %s21, 0
      %p41 = por %p39, %p40
      %p42 = scmp.ne.s32.totalorder %s31, %s34
      %p43 = scmp.eq.s32.totalorder %s26, 1
      %p44 = por %p42, %p43
      %p45 = scmp.ne.s32.totalorder %s34, %s35
      %p46 = scmp.eq.s32.totalorder %s26, 0
      %p47 = por %p45, %p46
      %p48 = scmp.ne.s32.totalorder %s34, %s35
      %p49 = scmp.eq.s32.totalorder %s27, 1
      %p50 = por %p48, %p49
      %p52 = scmp.ne.s32.totalorder %s35, %s51
      %p53 = scmp.eq.s32.totalorder %s27, 0
      %p54 = por %p52, %p53
      %s55 = ssub.s32 %s21, %s28
      %p56 = scmp.eq.s32.totalorder %s55, 0
      %s58 = sadd.s32 %s57, 1
      %s59 = scalar_select %p56, %s57, %s58
      %p62 = pneg %p56
      %p63 = scmp.eq.s32.totalorder %s21, 1
      %p64 = por %p62, %p63
      %p65 = scmp.ne.s32.totalorder %s57, %s60
      %p66 = scmp.eq.s32.totalorder %s21, 0
      %p67 = por %p65, %p66
      %p68 = scmp.ne.s32.totalorder %s57, %s60
      %p69 = scmp.eq.s32.totalorder %s26, 1
      %p70 = por %p68, %p69
      %p71 = scmp.ne.s32.totalorder %s60, %s61
      %p72 = scmp.eq.s32.totalorder %s26, 0
      %p73 = por %p71, %p72
      %p74 = scmp.ne.s32.totalorder %s60, %s61
      %p75 = scmp.eq.s32.totalorder %s27, 1
      %p76 = por %p74, %p75
      %p78 = scmp.ne.s32.totalorder %s61, %s77
      %p79 = scmp.eq.s32.totalorder %s27, 0
      %p80 = por %p78, %p79
      %s82 = sadd.s32 %s81, 1
      %p85 = scmp.eq.s32.totalorder %s21, 1
      %p86 = scmp.ne.s32.totalorder %s81, %s83
      %p87 = scmp.eq.s32.totalorder %s21, 0
      %p88 = por %p86, %p87
      %p89 = scmp.ne.s32.totalorder %s81, %s83
      %p90 = scmp.eq.s32.totalorder %s26, 1
      %p91 = por %p89, %p90
      %p92 = scmp.ne.s32.totalorder %s83, %s84
      %p93 = scmp.eq.s32.totalorder %s26, 0
      %p94 = por %p92, %p93
      %p95 = scmp.ne.s32.totalorder %s83, %s84
      %p96 = scmp.eq.s32.totalorder %s27, 1
      %p97 = por %p95, %p96
      %p99 = scmp.ne.s32.totalorder %s84, %s98
      %p100 = scmp.eq.s32.totalorder %s27, 0
      %p101 = por %p99, %p100
      %s103 = sadd.s32 %s102, 1
      %p106 = scmp.eq.s32.totalorder %s21, 1
      %p107 = scmp.ne.s32.totalorder %s102, %s104
      %p108 = scmp.eq.s32.totalorder %s21, 0
      %p109 = por %p107, %p108
      %p110 = scmp.ne.s32.totalorder %s102, %s104
      %p111 = scmp.eq.s32.totalorder %s26, 1
      %p112 = por %p110, %p111
      %p113 = scmp.ne.s32.totalorder %s104, %s105
      %p114 = scmp.eq.s32.totalorder %s26, 0
      %p115 = por %p113, %p114
      %p116 = scmp.ne.s32.totalorder %s104, %s105
      %p117 = scmp.eq.s32.totalorder %s27, 1
      %p118 = por %p116, %p117
      %p120 = scmp.ne.s32.totalorder %s105, %s119
      %p121 = scmp.eq.s32.totalorder %s27, 0
      %p122 = por %p120, %p121
      %s124 = sadd.s32 %s123, 1
      %p127 = scmp.eq.s32.totalorder %s21, 1
      %p128 = scmp.ne.s32.totalorder %s123, %s125
      %p129 = scmp.eq.s32.totalorder %s21, 0
      %p130 = por %p128, %p129
      %p131 = scmp.ne.s32.totalorder %s123, %s125
      %p132 = scmp.eq.s32.totalorder %s26, 1
      %p133 = por %p131, %p132
      %p134 = scmp.ne.s32.totalorder %s125, %s126
      %p135 = scmp.eq.s32.totalorder %s26, 0
      %p136 = por %p134, %p135
      %p137 = scmp.ne.s32.totalorder %s125, %s126
      %p138 = scmp.eq.s32.totalorder %s27, 1
      %p139 = por %p137, %p138
      %p141 = scmp.ne.s32.totalorder %s126, %s140
      %p142 = scmp.eq.s32.totalorder %s27, 0
      %p143 = por %p141, %p142
      %s144 = ssub.s32 %s21, %s28
      %p145 = scmp.eq.s32.totalorder %s144, 0
      %s147 = sadd.s32 %s146, 1
      %s148 = scalar_select %p145, %s146, %s147
      %p151 = pneg %p145
      %p152 = scmp.eq.s32.totalorder %s21, 1
      %p153 = por %p151, %p152
      %p154 = scmp.ne.s32.totalorder %s146, %s149
      %p155 = scmp.eq.s32.totalorder %s21, 0
      %p156 = por %p154, %p155
      %p157 = scmp.ne.s32.totalorder %s146, %s149
      %p158 = scmp.eq.s32.totalorder %s26, 1
      %p159 = por %p157, %p158
      %p160 = scmp.ne.s32.totalorder %s149, %s150
      %p161 = scmp.eq.s32.totalorder %s26, 0
      %p162 = por %p160, %p161
      %p163 = scmp.ne.s32.totalorder %s149, %s150
      %p164 = scmp.eq.s32.totalorder %s27, 1
      %p165 = por %p163, %p164
      %p167 = scmp.ne.s32.totalorder %s150, %s166
      %p168 = scmp.eq.s32.totalorder %s27, 0
      %p169 = por %p167, %p168
      %p170 = scmp.le.s32.totalorder 1, %s21
      %p171 = scmp.lt.s32.totalorder %s21, 3
      %p172 = pnand %p170, %p171
      %p173 = pneg %p172
      // Predicated region
      $region9: #{forward.1} parent=5 // pred_check
        _
      $region10: #{forward.1} parent=5 // pred_check_branch
        %175 = sbr.rel (%p172) target = $region12
      $region11: #{forward.1} parent=5 // pred_region
        %s176 = ssub.s32 %s21, 1
        // Predicated region
        $region13: #{forward.1} parent=11 // pred_check
          %p177 = pneg %p94
        $region14: #{forward.1} parent=11 // pred_check_branch
          %179 = sbr.rel (%p177) target = $region16
        $region15: #{forward.1} parent=11 // pred_region
          _
        $region16: #{forward.1} parent=11 // pred_fallthru
          _
        // Predicated region
        $region17: #{forward.1} parent=11 // pred_check
          %p180 = pneg %p115
        $region18: #{forward.1} parent=11 // pred_check_branch
          %182 = sbr.rel (%p180) target = $region20
        $region19: #{forward.1} parent=11 // pred_region
          _
        $region20: #{forward.1} parent=11 // pred_fallthru
          _
        // Predicated region
        $region21: #{forward.1} parent=11 // pred_check
          %p183 = pneg %p136
        $region22: #{forward.1} parent=11 // pred_check_branch
          %185 = sbr.rel (%p183) target = $region24
        $region23: #{forward.1} parent=11 // pred_region
          _
        $region24: #{forward.1} parent=11 // pred_fallthru
          _
      $region12: #{forward.1} parent=5 // pred_fallthru
        _
      %p186 = scmp.lt.s32.totalorder %s21, 2
      // Predicated region
      $region25: #{forward.1} parent=5 // pred_check
        %p187 = pneg %p186
      $region26: #{forward.1} parent=5 // pred_check_branch
        %189 = sbr.rel (%p187) target = $region28
      $region27: #{forward.1} parent=5 // pred_region
        // Predicated region
        $region29: #{forward.1} parent=27 // pred_check
          %p190 = pneg %p41
        $region30: #{forward.1} parent=27 // pred_check_branch
          %192 = sbr.rel (%p190) target = $region32
        $region31: #{forward.1} parent=27 // pred_region
          %p193 = scmp.lt.s32.totalorder %s21, 1
          %s194 = scalar_select %p193, %s21, 1
          %s195 = smul.addr %s194, 2
          %s196 = smul.addr %s195, 8
          %s197 = scalar_lea.vmem %s1, %s196
        $region32: #{forward.1} parent=27 // pred_fallthru
          _
        // Predicated region
        $region33: #{forward.1} parent=27 // pred_check
          %p198 = pneg %p67
        $region34: #{forward.1} parent=27 // pred_check_branch
          %200 = sbr.rel (%p198) target = $region36
        $region35: #{forward.1} parent=27 // pred_region
          %p201 = scmp.lt.s32.totalorder %s21, 1
          %s202 = scalar_select %p201, %s21, 1
          %s203 = scalar_lea.vmem %s2, %s202
        $region36: #{forward.1} parent=27 // pred_fallthru
          _
      $region28: #{forward.1} parent=5 // pred_fallthru
        _
      %p204 = scmp.le.s32.totalorder 1, %s21
      %p205 = scmp.lt.s32.totalorder %s21, 3
      %p206 = pnand %p204, %p205
      %p207 = pneg %p206
      // Predicated region
      $region37: #{forward.1} parent=5 // pred_check
        _
      $region38: #{forward.1} parent=5 // pred_check_branch
        %209 = sbr.rel (%p206) target = $region40
      $region39: #{forward.1} parent=5 // pred_region
        %s210 = ssub.s32 %s21, 1
        %p211 = scmp.lt.s32.totalorder %s26, 1
        %s212 = scalar_select %p211, %s26, 1
        %s213 = smul.addr %s212, 2
        %s214 = smul.addr %s213, 8
        %s215 = scalar_lea.vmem %s1, %s214
        %p216 = pneg %p47
        %p217 = pneg %p44
        %p218 = scmp.lt.s32.totalorder %s26, 1
        %s219 = scalar_select %p218, %s26, 1
        %s220 = scalar_lea.vmem %s2, %s219
        %p221 = pneg %p73
        %p222 = pneg %p70
        %p223 = pneg %p94
        %p224 = pneg %p91
        %p225 = pneg %p115
        %p226 = pneg %p112
        %p227 = pneg %p136
        %p228 = pneg %p133
        %p229 = pneg %p162
        %p230 = pneg %p159
        %s231 = sand.u32 %s149, 1
        %s232 = scalar_lea.sflag [#allocation8], %s231
        %s233 = sand.u32 %s149, 1
        %s234 = smul.addr %s233, 8
        %s235 = scalar_lea.vmem [#allocation7], %s234
        %p236 = scmp.lt.s32.totalorder %s26, 1
        %s237 = scalar_select %p236, %s26, 1
        %s238 = smul.addr %s237, 2
        %s239 = smul.addr %s238, 8
        %s240 = scalar_lea.vmem %s1, %s239
        %p241 = scmp.lt.s32.totalorder %s26, 1
        %s242 = scalar_select %p241, %s26, 1
        %s243 = scalar_lea.vmem %s2, %s242
        %v245 = vld [vmem:[%s240] sm:$0xff]
        %v246 = vld [vmem:[%s240 + $0x8] sm:$0xff]
        %v247 = vld [vmem:[%s4] sm:$0xff]
        %v248 = vld [vmem:[%s4 + $0x8] sm:$0xff]
        %v249 = vld [vmem:[%s4 + $0x10] sm:$0xff]
        %v250 = vld [vmem:[%s4 + $0x18] sm:$0xff]
        %v251 = vld [vmem:[%s4 + $0x20] sm:$0xff]
        %v252 = vld [vmem:[%s4 + $0x28] sm:$0xff]
        %v253 = vpack.c.bf16 %v246, %v245
        %v254 = vpack.c.bf16 %v248, %v247
        %v255 = vpack.c.bf16 %v250, %v249
        %v256 = vpack.c.bf16 %v252, %v251
        %v257 = vld [vmem:[%s5 + $0xa] sm:$0x1]
        %v258 = vlaneseq
        %v259 = vshrl.u32 %v258, 7
        %v260 = vsub.s32 0, %v259
        %v261 = vrot.slane %v257, %v260
        %vm262 = vcmask 392192
        %v264 = vsel %vm262, %v253, 0
        %266 = vmatprep.subr.bf16.mxu0 0
        %267 = vmatpush1.bf16.msra.mxu0 0
        %268 = vmatprep.subr.bf16.mxu0 0
        %269 = vmatpush1.bf16.msra.mxu0 0
        %270 = vmatprep.subr.bf16.mxu0 0
        %271 = vmatpush1.bf16.msra.mxu0 0
        %272 = vmatprep.subr.bf16.mxu0 0
        %273 = vmatpush1.bf16.msra.mxu0 0
        %274 = vmatprep.subr.bf16.mxu0 0
        %275 = vmatpush1.bf16.msra.mxu0 0
        %276 = vmatprep.subr.bf16.mxu0 0
        %277 = vmatpush1.bf16.msra.mxu0 %v256
        %278 = vmatprep.subr.bf16.mxu0 0
        %279 = vmatpush1.bf16.msra.mxu0 %v255
        %280 = vmatprep.subr.bf16.mxu0 0
        %281 = vmatpush1.bf16.msra.mxu0 %v254
        %282 = vmatprep.subr.bf16.mxu0 0
        %283 = vmatpush2.bf16.msra.mxu0 0
        %284 = vmatprep.subr.bf16.mxu0 0
        %285 = vmatpush2.bf16.msra.mxu0 0
        %286 = vmatprep.subr.bf16.mxu0 0
        %287 = vmatpush2.bf16.msra.mxu0 0
        %288 = vmatprep.subr.bf16.mxu0 0
        %289 = vmatpush2.bf16.msra.mxu0 0
        %290 = vmatprep.subr.bf16.mxu0 0
        %291 = vmatpush2.bf16.msra.mxu0 0
        %292 = vmatprep.subr.bf16.mxu0 0
        %293 = vmatpush2.bf16.msra.mxu0 0
        %294 = vmatprep.subr.bf16.mxu0 0
        %295 = vmatpush2.bf16.msra.mxu0 0
        %296 = vmatprep.subr.bf16.mxu0 0
        %297 = vmatpush2.bf16.msra.mxu0 0
        %298 = vmatprep.mubr.bf16.mxu0 0
        %299 = vmatmul.mubr.bf16.gmra.mxu0 %v264
        %v300 = vpop.f32.mrf.mxu0
        %v301 = vadd.f32 %v261, %v300
        %v302 = vpop.f32.mrf.mxu0
        %v303 = vpop.f32.mrf.mxu0
        %v304 = vadd.f32 %v261, %v303
        %v305 = vpop.f32.mrf.mxu0
        %306 = vdwg.mxu0
        %v307 = vld [vmem:[%s4 + $0x158] sm:$0x1]
        %v308 = vld [vmem:[%s4 + $0x160] sm:$0x1]
        %v309 = vadd.f32 %v307, %v308
        %vm310 = vcmask 253952
        %311 = vst.msk [vmem:[#allocation2] sm:$0x1] %vm310, %v309
        %v312 = vld [vmem:[%s4 + $0x161] sm:$0xff]
        %v313 = vld [vmem:[%s4 + $0x169] sm:$0xff]
        %v314 = vadd.f32 %v301, %v312
        %v315 = vadd.f32 %v304, %v313
        %vm316 = vcmask 261120
        %317 = vst.msk [vmem:[#allocation2 + $0x1] sm:$0xff] %vm316, %v314
        %318 = vst.msk [vmem:[#allocation2 + $0x9] sm:$0xff] %vm316, %v315
        %v319 = vld [vmem:[#allocation2] sm:$0xff]
        %v320 = vld [vmem:[#allocation2 + $0x8] sm:$0xff]
        %v321 = vld [vmem:[#allocation2 + $0x10] sm:$0x1]
        %v322 = vld [vmem:[%s5] sm:$0x1]
        %v323 = vld [vmem:[%s5 + $0x1] sm:$0x1]
        %v324 = vsel %vm316, %v319, 0.0
        %325 = vadd.xlane.f32.xlu0 %v324
        %v326 = vpop.xlane.xlu0 %325
        %v327 = vsel %vm316, %v320, 0.0
        %328 = vadd.xlane.f32.xlu0 %v327
        %v329 = vpop.xlane.xlu0 %328
        %v330 = vsel %vm310, %v321, 0.0
        %331 = vadd.xlane.f32.xlu0 %v330
        %v332 = vpop.xlane.xlu0 %331
        %v333 = vrcp.pop 32.0
        %v334 = vmul.f32 %v326, %v333
        %v335 = vmul.f32 %v329, %v333
        %v336 = vmul.f32 %v332, %v333
        %v337 = vmul.f32 %v319, %v319
        %v338 = vmul.f32 %v320, %v320
        %v339 = vmul.f32 %v321, %v321
        %v340 = vsel %vm316, %v337, 0.0
        %341 = vadd.xlane.f32.xlu0 %v340
        %v342 = vpop.xlane.xlu0 %341
        %v343 = vsel %vm316, %v338, 0.0
        %344 = vadd.xlane.f32.xlu0 %v343
        %v345 = vpop.xlane.xlu0 %344
        %v346 = vsel %vm310, %v339, 0.0
        %347 = vadd.xlane.f32.xlu0 %v346
        %v348 = vpop.xlane.xlu0 %347
        %v349 = vmul.f32 %v342, %v333
        %v350 = vmul.f32 %v345, %v333
        %v351 = vmul.f32 %v348, %v333
        %v352 = vmul.f32 %v334, %v334
        %v353 = vmul.f32 %v335, %v335
        %v354 = vmul.f32 %v336, %v336
        %v355 = vsub.f32 %v349, %v352
        %v356 = vsub.f32 %v350, %v353
        %v357 = vsub.f32 %v351, %v354
        %v358 = vsub.f32 %v319, %v334
        %v359 = vsub.f32 %v320, %v335
        %v360 = vsub.f32 %v321, %v336
        %v361 = vadd.f32 %v355, 1e-05
        %v362 = vadd.f32 %v356, 1e-05
        %v363 = vadd.f32 %v357, 1e-05
        %v364 = vrsqrt.pop %v361
        %v365 = vrsqrt.pop %v362
        %v366 = vrsqrt.pop %v363
        %v367 = vmul.f32 %v358, %v364
        %v368 = vmul.f32 %v359, %v365
        %v369 = vmul.f32 %v360, %v366
        %v370 = vlaneseq
        %v371 = vshrl.u32 %v370, 7
        %v372 = vsub.s32 0, %v371
        %v373 = vrot.slane %v322, %v372
        %v374 = vmul.f32 %v367, %v373
        %v375 = vmul.f32 %v368, %v373
        %v376 = vmul.f32 %v369, %v373
        %v377 = vlaneseq
        %v378 = vshrl.u32 %v377, 7
        %v379 = vsub.s32 0, %v378
        %v380 = vrot.slane %v323, %v379
        %v381 = vadd.f32 %v374, %v380
        %v382 = vadd.f32 %v375, %v380
        %v383 = vadd.f32 %v376, %v380
        %v384 = vpack.c.bf16 %v382, %v381
        %v385 = vpack.c.bf16 %v383, %v383
        %v386 = vld [vmem:[%s3] sm:$0xff]
        %v387 = vld [vmem:[%s3 + $0x20] sm:$0xff]
        %v388 = vld [vmem:[%s3 + $0x40] sm:$0xff]
        %v389 = vld [vmem:[%s3 + $0x60] sm:$0xff]
        %v390 = vld [vmem:[%s5 + $0x2] sm:$0x1]
        %v391 = vpack.c.bf16 %v387, %v386
        %v392 = vpack.c.bf16 %v389, %v388
        %v393 = vlaneseq
        %v394 = vshrl.u32 %v393, 7
        %v395 = vsub.s32 0, %v394
        %v396 = vrot.slane %v390, %v395
        %v398 = vsel %vm316, %v384, 0
        %v401 = vsel %vm316, %v385, 0
        %403 = vmatprep.subr.bf16.mxu0 0
        %404 = vmatpush1.bf16.msra.mxu0 0
        %405 = vmatprep.subr.bf16.mxu0 0
        %406 = vmatpush1.bf16.msra.mxu0 0
        %407 = vmatprep.subr.bf16.mxu0 0
        %408 = vmatpush1.bf16.msra.mxu0 0
        %409 = vmatprep.subr.bf16.mxu0 0
        %410 = vmatpush1.bf16.msra.mxu0 0
        %411 = vmatprep.subr.bf16.mxu0 0
        %412 = vmatpush1.bf16.msra.mxu0 0
        %413 = vmatprep.subr.bf16.mxu0 0
        %414 = vmatpush1.bf16.msra.mxu0 0
        %415 = vmatprep.subr.bf16.mxu0 0
        %416 = vmatpush1.bf16.msra.mxu0 %v392
        %417 = vmatprep.subr.bf16.mxu0 0
        %418 = vmatpush1.bf16.msra.mxu0 %v391
        %419 = vmatprep.subr.bf16.mxu0 0
        %420 = vmatpush2.bf16.msra.mxu0 0
        %421 = vmatprep.subr.bf16.mxu0 0
        %422 = vmatpush2.bf16.msra.mxu0 0
        %423 = vmatprep.subr.bf16.mxu0 0
        %424 = vmatpush2.bf16.msra.mxu0 0
        %425 = vmatprep.subr.bf16.mxu0 0
        %426 = vmatpush2.bf16.msra.mxu0 0
        %427 = vmatprep.subr.bf16.mxu0 0
        %428 = vmatpush2.bf16.msra.mxu0 0
        %429 = vmatprep.subr.bf16.mxu0 0
        %430 = vmatpush2.bf16.msra.mxu0 0
        %431 = vmatprep.subr.bf16.mxu0 0
        %432 = vmatpush2.bf16.msra.mxu0 0
        %433 = vmatprep.subr.bf16.mxu0 0
        %434 = vmatpush2.bf16.msra.mxu0 0
        %435 = vmatprep.mubr.bf16.mxu0 0
        %436 = vmatmul.mubr.bf16.gmra.mxu0 %v398
        %v437 = vpop.f32.mrf.mxu0
        %v438 = vadd.f32 %v396, %v437
        %v439 = vpop.f32.mrf.mxu0
        %v440 = vpop.f32.mrf.mxu0
        %v441 = vadd.f32 %v396, %v440
        %v442 = vpop.f32.mrf.mxu0
        %443 = vmatprep.mubr.bf16.mxu0 0
        %444 = vmatmul.mubr.bf16.gmra.mxu0 %v401
        %v445 = vpop.f32.mrf.mxu0
        %v446 = vadd.f32 %v396, %v445
        %v447 = vpop.f32.mrf.mxu0
        %v448 = vpop.f32.mrf.mxu0
        %v449 = vpop.f32.mrf.mxu0
        %450 = vdwg.mxu0
        %453 = vrot.lane.b32.xlu0 %v391, 120
        %v454 = vpop.permute.xlu0 %453
        %455 = vrot.lane.b32.xlu0 %v392, 120
        %v456 = vpop.permute.xlu0 %455
        %460 = vrot.lane.b32.xlu0 %v396, 120
        %v461 = vpop.permute.xlu0 %460
        %463 = vmatprep.subr.bf16.mxu0 0
        %464 = vmatpush1.bf16.msra.mxu0 0
        %465 = vmatprep.subr.bf16.mxu0 0
        %466 = vmatpush1.bf16.msra.mxu0 0
        %467 = vmatprep.subr.bf16.mxu0 0
        %468 = vmatpush1.bf16.msra.mxu0 0
        %469 = vmatprep.subr.bf16.mxu0 0
        %470 = vmatpush1.bf16.msra.mxu0 0
        %471 = vmatprep.subr.bf16.mxu0 0
        %472 = vmatpush1.bf16.msra.mxu0 0
        %473 = vmatprep.subr.bf16.mxu0 0
        %474 = vmatpush1.bf16.msra.mxu0 0
        %475 = vmatprep.subr.bf16.mxu0 0
        %476 = vmatpush1.bf16.msra.mxu0 %v456
        %477 = vmatprep.subr.bf16.mxu0 0
        %478 = vmatpush1.bf16.msra.mxu0 %v454
        %479 = vmatprep.subr.bf16.mxu0 0
        %480 = vmatpush2.bf16.msra.mxu0 0
        %481 = vmatprep.subr.bf16.mxu0 0
        %482 = vmatpush2.bf16.msra.mxu0 0
        %483 = vmatprep.subr.bf16.mxu0 0
        %484 = vmatpush2.bf16.msra.mxu0 0
        %485 = vmatprep.subr.bf16.mxu0 0
        %486 = vmatpush2.bf16.msra.mxu0 0
        %487 = vmatprep.subr.bf16.mxu0 0
        %488 = vmatpush2.bf16.msra.mxu0 0
        %489 = vmatprep.subr.bf16.mxu0 0
        %490 = vmatpush2.bf16.msra.mxu0 0
        %491 = vmatprep.subr.bf16.mxu0 0
        %492 = vmatpush2.bf16.msra.mxu0 0
        %493 = vmatprep.subr.bf16.mxu0 0
        %494 = vmatpush2.bf16.msra.mxu0 0
        %495 = vmatprep.mubr.bf16.mxu0 0
        %496 = vmatmul.mubr.bf16.gmra.mxu0 %v398
        %v497 = vpop.f32.mrf.mxu0
        %v498 = vadd.f32 %v461, %v497
        %v499 = vpop.f32.mrf.mxu0
        %v500 = vpop.f32.mrf.mxu0
        %v501 = vadd.f32 %v461, %v500
        %v502 = vpop.f32.mrf.mxu0
        %503 = vmatprep.mubr.bf16.mxu0 0
        %504 = vmatmul.mubr.bf16.gmra.mxu0 %v401
        %v505 = vpop.f32.mrf.mxu0
        %v506 = vadd.f32 %v461, %v505
        %v507 = vpop.f32.mrf.mxu0
        %v508 = vpop.f32.mrf.mxu0
        %v509 = vpop.f32.mrf.mxu0
        %510 = vdwg.mxu0
        %511 = vrot.lane.b32.xlu0 %v391, 112
        %v512 = vpop.permute.xlu0 %511
        %513 = vrot.lane.b32.xlu0 %v392, 112
        %v514 = vpop.permute.xlu0 %513
        %517 = vrot.lane.b32.xlu0 %v396, 112
        %v518 = vpop.permute.xlu0 %517
        %520 = vmatprep.subr.bf16.mxu0 0
        %521 = vmatpush1.bf16.msra.mxu0 0
        %522 = vmatprep.subr.bf16.mxu0 0
        %523 = vmatpush1.bf16.msra.mxu0 0
        %524 = vmatprep.subr.bf16.mxu0 0
        %525 = vmatpush1.bf16.msra.mxu0 0
        %526 = vmatprep.subr.bf16.mxu0 0
        %527 = vmatpush1.bf16.msra.mxu0 0
        %528 = vmatprep.subr.bf16.mxu0 0
        %529 = vmatpush1.bf16.msra.mxu0 0
        %530 = vmatprep.subr.bf16.mxu0 0
        %531 = vmatpush1.bf16.msra.mxu0 0
        %532 = vmatprep.subr.bf16.mxu0 0
        %533 = vmatpush1.bf16.msra.mxu0 %v514
        %534 = vmatprep.subr.bf16.mxu0 0
        %535 = vmatpush1.bf16.msra.mxu0 %v512
        %536 = vmatprep.subr.bf16.mxu0 0
        %537 = vmatpush2.bf16.msra.mxu0 0
        %538 = vmatprep.subr.bf16.mxu0 0
        %539 = vmatpush2.bf16.msra.mxu0 0
        %540 = vmatprep.subr.bf16.mxu0 0
        %541 = vmatpush2.bf16.msra.mxu0 0
        %542 = vmatprep.subr.bf16.mxu0 0
        %543 = vmatpush2.bf16.msra.mxu0 0
        %544 = vmatprep.subr.bf16.mxu0 0
        %545 = vmatpush2.bf16.msra.mxu0 0
        %546 = vmatprep.subr.bf16.mxu0 0
        %547 = vmatpush2.bf16.msra.mxu0 0
        %548 = vmatprep.subr.bf16.mxu0 0
        %549 = vmatpush2.bf16.msra.mxu0 0
        %550 = vmatprep.subr.bf16.mxu0 0
        %551 = vmatpush2.bf16.msra.mxu0 0
        %552 = vmatprep.mubr.bf16.mxu0 0
        %553 = vmatmul.mubr.bf16.gmra.mxu0 %v398
        %v554 = vpop.f32.mrf.mxu0
        %v555 = vadd.f32 %v518, %v554
        %v556 = vpop.f32.mrf.mxu0
        %v557 = vpop.f32.mrf.mxu0
        %v558 = vadd.f32 %v518, %v557
        %v559 = vpop.f32.mrf.mxu0
        %560 = vmatprep.mubr.bf16.mxu0 0
        %561 = vmatmul.mubr.bf16.gmra.mxu0 %v401
        %v562 = vpop.f32.mrf.mxu0
        %v563 = vadd.f32 %v518, %v562
        %v564 = vpop.f32.mrf.mxu0
        %v565 = vpop.f32.mrf.mxu0
        %v566 = vpop.f32.mrf.mxu0
        %567 = vdwg.mxu0
        %568 = vrot.lane.b32.xlu0 %v391, 104
        %v569 = vpop.permute.xlu0 %568
        %570 = vrot.lane.b32.xlu0 %v392, 104
        %v571 = vpop.permute.xlu0 %570
        %574 = vrot.lane.b32.xlu0 %v396, 104
        %v575 = vpop.permute.xlu0 %574
        %577 = vmatprep.subr.bf16.mxu0 0
        %578 = vmatpush1.bf16.msra.mxu0 0
        %579 = vmatprep.subr.bf16.mxu0 0
        %580 = vmatpush1.bf16.msra.mxu0 0
        %581 = vmatprep.subr.bf16.mxu0 0
        %582 = vmatpush1.bf16.msra.mxu0 0
        %583 = vmatprep.subr.bf16.mxu0 0
        %584 = vmatpush1.bf16.msra.mxu0 0
        %585 = vmatprep.subr.bf16.mxu0 0
        %586 = vmatpush1.bf16.msra.mxu0 0
        %587 = vmatprep.subr.bf16.mxu0 0
        %588 = vmatpush1.bf16.msra.mxu0 0
        %589 = vmatprep.subr.bf16.mxu0 0
        %590 = vmatpush1.bf16.msra.mxu0 %v571
        %591 = vmatprep.subr.bf16.mxu0 0
        %592 = vmatpush1.bf16.msra.mxu0 %v569
        %593 = vmatprep.subr.bf16.mxu0 0
        %594 = vmatpush2.bf16.msra.mxu0 0
        %595 = vmatprep.subr.bf16.mxu0 0
        %596 = vmatpush2.bf16.msra.mxu0 0
        %597 = vmatprep.subr.bf16.mxu0 0
        %598 = vmatpush2.bf16.msra.mxu0 0
        %599 = vmatprep.subr.bf16.mxu0 0
        %600 = vmatpush2.bf16.msra.mxu0 0
        %601 = vmatprep.subr.bf16.mxu0 0
        %602 = vmatpush2.bf16.msra.mxu0 0
        %603 = vmatprep.subr.bf16.mxu0 0
        %604 = vmatpush2.bf16.msra.mxu0 0
        %605 = vmatprep.subr.bf16.mxu0 0
        %606 = vmatpush2.bf16.msra.mxu0 0
        %607 = vmatprep.subr.bf16.mxu0 0
        %608 = vmatpush2.bf16.msra.mxu0 0
        %609 = vmatprep.mubr.bf16.mxu0 0
        %610 = vmatmul.mubr.bf16.gmra.mxu0 %v398
        %v611 = vpop.f32.mrf.mxu0
        %v612 = vadd.f32 %v575, %v611
        %v613 = vpop.f32.mrf.mxu0
        %v614 = vpop.f32.mrf.mxu0
        %v615 = vadd.f32 %v575, %v614
        %v616 = vpop.f32.mrf.mxu0
        %617 = vmatprep.mubr.bf16.mxu0 0
        %618 = vmatmul.mubr.bf16.gmra.mxu0 %v401
        %v619 = vpop.f32.mrf.mxu0
        %v620 = vadd.f32 %v575, %v619
        %v621 = vpop.f32.mrf.mxu0
        %v622 = vpop.f32.mrf.mxu0
        %v623 = vpop.f32.mrf.mxu0
        %624 = vdwg.mxu0
        %625 = vrot.lane.b32.xlu0 %v391, 96
        %v626 = vpop.permute.xlu0 %625
        %627 = vrot.lane.b32.xlu0 %v392, 96
        %v628 = vpop.permute.xlu0 %627
        %631 = vrot.lane.b32.xlu0 %v396, 96
        %v632 = vpop.permute.xlu0 %631
        %634 = vmatprep.subr.bf16.mxu0 0
        %635 = vmatpush1.bf16.msra.mxu0 0
        %636 = vmatprep.subr.bf16.mxu0 0
        %637 = vmatpush1.bf16.msra.mxu0 0
        %638 = vmatprep.subr.bf16.mxu0 0
        %639 = vmatpush1.bf16.msra.mxu0 0
        %640 = vmatprep.subr.bf16.mxu0 0
        %641 = vmatpush1.bf16.msra.mxu0 0
        %642 = vmatprep.subr.bf16.mxu0 0
        %643 = vmatpush1.bf16.msra.mxu0 0
        %644 = vmatprep.subr.bf16.mxu0 0
        %645 = vmatpush1.bf16.msra.mxu0 0
        %646 = vmatprep.subr.bf16.mxu0 0
        %647 = vmatpush1.bf16.msra.mxu0 %v628
        %648 = vmatprep.subr.bf16.mxu0 0
        %649 = vmatpush1.bf16.msra.mxu0 %v626
        %650 = vmatprep.subr.bf16.mxu0 0
        %651 = vmatpush2.bf16.msra.mxu0 0
        %652 = vmatprep.subr.bf16.mxu0 0
        %653 = vmatpush2.bf16.msra.mxu0 0
        %654 = vmatprep.subr.bf16.mxu0 0
        %655 = vmatpush2.bf16.msra.mxu0 0
        %656 = vmatprep.subr.bf16.mxu0 0
        %657 = vmatpush2.bf16.msra.mxu0 0
        %658 = vmatprep.subr.bf16.mxu0 0
        %659 = vmatpush2.bf16.msra.mxu0 0
        %660 = vmatprep.subr.bf16.mxu0 0
        %661 = vmatpush2.bf16.msra.mxu0 0
        %662 = vmatprep.subr.bf16.mxu0 0
        %663 = vmatpush2.bf16.msra.mxu0 0
        %664 = vmatprep.subr.bf16.mxu0 0
        %665 = vmatpush2.bf16.msra.mxu0 0
        %666 = vmatprep.mubr.bf16.mxu0 0
        %667 = vmatmul.mubr.bf16.gmra.mxu0 %v398
        %v668 = vpop.f32.mrf.mxu0
        %v669 = vadd.f32 %v632, %v668
        %v670 = vpop.f32.mrf.mxu0
        %v671 = vpop.f32.mrf.mxu0
        %v672 = vadd.f32 %v632, %v671
        %v673 = vpop.f32.mrf.mxu0
        %674 = vmatprep.mubr.bf16.mxu0 0
        %675 = vmatmul.mubr.bf16.gmra.mxu0 %v401
        %v676 = vpop.f32.mrf.mxu0
        %v677 = vadd.f32 %v632, %v676
        %v678 = vpop.f32.mrf.mxu0
        %v679 = vpop.f32.mrf.mxu0
        %v680 = vpop.f32.mrf.mxu0
        %681 = vdwg.mxu0
        %682 = vrot.lane.b32.xlu0 %v391, 88
        %v683 = vpop.permute.xlu0 %682
        %684 = vrot.lane.b32.xlu0 %v392, 88
        %v685 = vpop.permute.xlu0 %684
        %688 = vrot.lane.b32.xlu0 %v396, 88
        %v689 = vpop.permute.xlu0 %688
        %691 = vmatprep.subr.bf16.mxu0 0
        %692 = vmatpush1.bf16.msra.mxu0 0
        %693 = vmatprep.subr.bf16.mxu0 0
        %694 = vmatpush1.bf16.msra.mxu0 0
        %695 = vmatprep.subr.bf16.mxu0 0
        %696 = vmatpush1.bf16.msra.mxu0 0
        %697 = vmatprep.subr.bf16.mxu0 0
        %698 = vmatpush1.bf16.msra.mxu0 0
        %699 = vmatprep.subr.bf16.mxu0 0
        %700 = vmatpush1.bf16.msra.mxu0 0
        %701 = vmatprep.subr.bf16.mxu0 0
        %702 = vmatpush1.bf16.msra.mxu0 0
        %703 = vmatprep.subr.bf16.mxu0 0
        %704 = vmatpush1.bf16.msra.mxu0 %v685
        %705 = vmatprep.subr.bf16.mxu0 0
        %706 = vmatpush1.bf16.msra.mxu0 %v683
        %707 = vmatprep.subr.bf16.mxu0 0
        %708 = vmatpush2.bf16.msra.mxu0 0
        %709 = vmatprep.subr.bf16.mxu0 0
        %710 = vmatpush2.bf16.msra.mxu0 0
        %711 = vmatprep.subr.bf16.mxu0 0
        %712 = vmatpush2.bf16.msra.mxu0 0
        %713 = vmatprep.subr.bf16.mxu0 0
        %714 = vmatpush2.bf16.msra.mxu0 0
        %715 = vmatprep.subr.bf16.mxu0 0
        %716 = vmatpush2.bf16.msra.mxu0 0
        %717 = vmatprep.subr.bf16.mxu0 0
        %718 = vmatpush2.bf16.msra.mxu0 0
        %719 = vmatprep.subr.bf16.mxu0 0
        %720 = vmatpush2.bf16.msra.mxu0 0
        %721 = vmatprep.subr.bf16.mxu0 0
        %722 = vmatpush2.bf16.msra.mxu0 0
        %723 = vmatprep.mubr.bf16.mxu0 0
        %724 = vmatmul.mubr.bf16.gmra.mxu0 %v398
        %v725 = vpop.f32.mrf.mxu0
        %v726 = vadd.f32 %v689, %v725
        %v727 = vpop.f32.mrf.mxu0
        %v728 = vpop.f32.mrf.mxu0
        %v729 = vadd.f32 %v689, %v728
        %v730 = vpop.f32.mrf.mxu0
        %731 = vmatprep.mubr.bf16.mxu0 0
        %732 = vmatmul.mubr.bf16.gmra.mxu0 %v401
        %v733 = vpop.f32.mrf.mxu0
        %v734 = vadd.f32 %v689, %v733
        %v735 = vpop.f32.mrf.mxu0
        %v736 = vpop.f32.mrf.mxu0
        %v737 = vpop.f32.mrf.mxu0
        %738 = vdwg.mxu0
        %739 = vrot.lane.b32.xlu0 %v391, 80
        %v740 = vpop.permute.xlu0 %739
        %741 = vrot.lane.b32.xlu0 %v392, 80
        %v742 = vpop.permute.xlu0 %741
        %745 = vrot.lane.b32.xlu0 %v396, 80
        %v746 = vpop.permute.xlu0 %745
        %748 = vmatprep.subr.bf16.mxu0 0
        %749 = vmatpush1.bf16.msra.mxu0 0
        %750 = vmatprep.subr.bf16.mxu0 0
        %751 = vmatpush1.bf16.msra.mxu0 0
        %752 = vmatprep.subr.bf16.mxu0 0
        %753 = vmatpush1.bf16.msra.mxu0 0
        %754 = vmatprep.subr.bf16.mxu0 0
        %755 = vmatpush1.bf16.msra.mxu0 0
        %756 = vmatprep.subr.bf16.mxu0 0
        %757 = vmatpush1.bf16.msra.mxu0 0
        %758 = vmatprep.subr.bf16.mxu0 0
        %759 = vmatpush1.bf16.msra.mxu0 0
        %760 = vmatprep.subr.bf16.mxu0 0
        %761 = vmatpush1.bf16.msra.mxu0 %v742
        %762 = vmatprep.subr.bf16.mxu0 0
        %763 = vmatpush1.bf16.msra.mxu0 %v740
        %764 = vmatprep.subr.bf16.mxu0 0
        %765 = vmatpush2.bf16.msra.mxu0 0
        %766 = vmatprep.subr.bf16.mxu0 0
        %767 = vmatpush2.bf16.msra.mxu0 0
        %768 = vmatprep.subr.bf16.mxu0 0
        %769 = vmatpush2.bf16.msra.mxu0 0
        %770 = vmatprep.subr.bf16.mxu0 0
        %771 = vmatpush2.bf16.msra.mxu0 0
        %772 = vmatprep.subr.bf16.mxu0 0
        %773 = vmatpush2.bf16.msra.mxu0 0
        %774 = vmatprep.subr.bf16.mxu0 0
        %775 = vmatpush2.bf16.msra.mxu0 0
        %776 = vmatprep.subr.bf16.mxu0 0
        %777 = vmatpush2.bf16.msra.mxu0 0
        %778 = vmatprep.subr.bf16.mxu0 0
        %779 = vmatpush2.bf16.msra.mxu0 0
        %780 = vmatprep.mubr.bf16.mxu0 0
        %781 = vmatmul.mubr.bf16.gmra.mxu0 %v398
        %v782 = vpop.f32.mrf.mxu0
        %v783 = vadd.f32 %v746, %v782
        %v784 = vpop.f32.mrf.mxu0
        %v785 = vpop.f32.mrf.mxu0
        %v786 = vadd.f32 %v746, %v785
        %v787 = vpop.f32.mrf.mxu0
        %788 = vmatprep.mubr.bf16.mxu0 0
        %789 = vmatmul.mubr.bf16.gmra.mxu0 %v401
        %v790 = vpop.f32.mrf.mxu0
        %v791 = vadd.f32 %v746, %v790
        %v792 = vpop.f32.mrf.mxu0
        %v793 = vpop.f32.mrf.mxu0
        %v794 = vpop.f32.mrf.mxu0
        %795 = vdwg.mxu0
        %796 = vrot.lane.b32.xlu0 %v391, 72
        %v797 = vpop.permute.xlu0 %796
        %798 = vrot.lane.b32.xlu0 %v392, 72
        %v799 = vpop.permute.xlu0 %798
        %802 = vrot.lane.b32.xlu0 %v396, 72
        %v803 = vpop.permute.xlu0 %802
        %805 = vmatprep.subr.bf16.mxu0 0
        %806 = vmatpush1.bf16.msra.mxu0 0
        %807 = vmatprep.subr.bf16.mxu0 0
        %808 = vmatpush1.bf16.msra.mxu0 0
        %809 = vmatprep.subr.bf16.mxu0 0
        %810 = vmatpush1.bf16.msra.mxu0 0
        %811 = vmatprep.subr.bf16.mxu0 0
        %812 = vmatpush1.bf16.msra.mxu0 0
        %813 = vmatprep.subr.bf16.mxu0 0
        %814 = vmatpush1.bf16.msra.mxu0 0
        %815 = vmatprep.subr.bf16.mxu0 0
        %816 = vmatpush1.bf16.msra.mxu0 0
        %817 = vmatprep.subr.bf16.mxu0 0
        %818 = vmatpush1.bf16.msra.mxu0 %v799
        %819 = vmatprep.subr.bf16.mxu0 0
        %820 = vmatpush1.bf16.msra.mxu0 %v797
        %821 = vmatprep.subr.bf16.mxu0 0
        %822 = vmatpush2.bf16.msra.mxu0 0
        %823 = vmatprep.subr.bf16.mxu0 0
        %824 = vmatpush2.bf16.msra.mxu0 0
        %825 = vmatprep.subr.bf16.mxu0 0
        %826 = vmatpush2.bf16.msra.mxu0 0
        %827 = vmatprep.subr.bf16.mxu0 0
        %828 = vmatpush2.bf16.msra.mxu0 0
        %829 = vmatprep.subr.bf16.mxu0 0
        %830 = vmatpush2.bf16.msra.mxu0 0
        %831 = vmatprep.subr.bf16.mxu0 0
        %832 = vmatpush2.bf16.msra.mxu0 0
        %833 = vmatprep.subr.bf16.mxu0 0
        %834 = vmatpush2.bf16.msra.mxu0 0
        %835 = vmatprep.subr.bf16.mxu0 0
        %836 = vmatpush2.bf16.msra.mxu0 0
        %837 = vmatprep.mubr.bf16.mxu0 0
        %838 = vmatmul.mubr.bf16.gmra.mxu0 %v398
        %v839 = vpop.f32.mrf.mxu0
        %v840 = vadd.f32 %v803, %v839
        %v841 = vpop.f32.mrf.mxu0
        %v842 = vpop.f32.mrf.mxu0
        %v843 = vadd.f32 %v803, %v842
        %v844 = vpop.f32.mrf.mxu0
        %845 = vmatprep.mubr.bf16.mxu0 0
        %846 = vmatmul.mubr.bf16.gmra.mxu0 %v401
        %v847 = vpop.f32.mrf.mxu0
        %v848 = vadd.f32 %v803, %v847
        %v849 = vpop.f32.mrf.mxu0
        %v850 = vpop.f32.mrf.mxu0
        %v851 = vpop.f32.mrf.mxu0
        %852 = vdwg.mxu0
        %853 = vrot.lane.b32.xlu0 %v391, 64
        %v854 = vpop.permute.xlu0 %853
        %855 = vrot.lane.b32.xlu0 %v392, 64
        %v856 = vpop.permute.xlu0 %855
        %859 = vrot.lane.b32.xlu0 %v396, 64
        %v860 = vpop.permute.xlu0 %859
        %862 = vmatprep.subr.bf16.mxu0 0
        %863 = vmatpush1.bf16.msra.mxu0 0
        %864 = vmatprep.subr.bf16.mxu0 0
        %865 = vmatpush1.bf16.msra.mxu0 0
        %866 = vmatprep.subr.bf16.mxu0 0
        %867 = vmatpush1.bf16.msra.mxu0 0
        %868 = vmatprep.subr.bf16.mxu0 0
        %869 = vmatpush1.bf16.msra.mxu0 0
        %870 = vmatprep.subr.bf16.mxu0 0
        %871 = vmatpush1.bf16.msra.mxu0 0
        %872 = vmatprep.subr.bf16.mxu0 0
        %873 = vmatpush1.bf16.msra.mxu0 0
        %874 = vmatprep.subr.bf16.mxu0 0
        %875 = vmatpush1.bf16.msra.mxu0 %v856
        %876 = vmatprep.subr.bf16.mxu0 0
        %877 = vmatpush1.bf16.msra.mxu0 %v854
        %878 = vmatprep.subr.bf16.mxu0 0
        %879 = vmatpush2.bf16.msra.mxu0 0
        %880 = vmatprep.subr.bf16.mxu0 0
        %881 = vmatpush2.bf16.msra.mxu0 0
        %882 = vmatprep.subr.bf16.mxu0 0
        %883 = vmatpush2.bf16.msra.mxu0 0
        %884 = vmatprep.subr.bf16.mxu0 0
        %885 = vmatpush2.bf16.msra.mxu0 0
        %886 = vmatprep.subr.bf16.mxu0 0
        %887 = vmatpush2.bf16.msra.mxu0 0
        %888 = vmatprep.subr.bf16.mxu0 0
        %889 = vmatpush2.bf16.msra.mxu0 0
        %890 = vmatprep.subr.bf16.mxu0 0
        %891 = vmatpush2.bf16.msra.mxu0 0
        %892 = vmatprep.subr.bf16.mxu0 0
        %893 = vmatpush2.bf16.msra.mxu0 0
        %894 = vmatprep.mubr.bf16.mxu0 0
        %895 = vmatmul.mubr.bf16.gmra.mxu0 %v398
        %v896 = vpop.f32.mrf.mxu0
        %v897 = vadd.f32 %v860, %v896
        %v898 = vpop.f32.mrf.mxu0
        %v899 = vpop.f32.mrf.mxu0
        %v900 = vadd.f32 %v860, %v899
        %v901 = vpop.f32.mrf.mxu0
        %902 = vmatprep.mubr.bf16.mxu0 0
        %903 = vmatmul.mubr.bf16.gmra.mxu0 %v401
        %v904 = vpop.f32.mrf.mxu0
        %v905 = vadd.f32 %v860, %v904
        %v906 = vpop.f32.mrf.mxu0
        %v907 = vpop.f32.mrf.mxu0
        %v908 = vpop.f32.mrf.mxu0
        %909 = vdwg.mxu0
        %910 = vrot.lane.b32.xlu0 %v391, 56
        %v911 = vpop.permute.xlu0 %910
        %912 = vrot.lane.b32.xlu0 %v392, 56
        %v913 = vpop.permute.xlu0 %912
        %916 = vrot.lane.b32.xlu0 %v396, 56
        %v917 = vpop.permute.xlu0 %916
        %919 = vmatprep.subr.bf16.mxu0 0
        %920 = vmatpush1.bf16.msra.mxu0 0
        %921 = vmatprep.subr.bf16.mxu0 0
        %922 = vmatpush1.bf16.msra.mxu0 0
        %923 = vmatprep.subr.bf16.mxu0 0
        %924 = vmatpush1.bf16.msra.mxu0 0
        %925 = vmatprep.subr.bf16.mxu0 0
        %926 = vmatpush1.bf16.msra.mxu0 0
        %927 = vmatprep.subr.bf16.mxu0 0
        %928 = vmatpush1.bf16.msra.mxu0 0
        %929 = vmatprep.subr.bf16.mxu0 0
        %930 = vmatpush1.bf16.msra.mxu0 0
        %931 = vmatprep.subr.bf16.mxu0 0
        %932 = vmatpush1.bf16.msra.mxu0 %v913
        %933 = vmatprep.subr.bf16.mxu0 0
        %934 = vmatpush1.bf16.msra.mxu0 %v911
        %935 = vmatprep.subr.bf16.mxu0 0
        %936 = vmatpush2.bf16.msra.mxu0 0
        %937 = vmatprep.subr.bf16.mxu0 0
        %938 = vmatpush2.bf16.msra.mxu0 0
        %939 = vmatprep.subr.bf16.mxu0 0
        %940 = vmatpush2.bf16.msra.mxu0 0
        %941 = vmatprep.subr.bf16.mxu0 0
        %942 = vmatpush2.bf16.msra.mxu0 0
        %943 = vmatprep.subr.bf16.mxu0 0
        %944 = vmatpush2.bf16.msra.mxu0 0
        %945 = vmatprep.subr.bf16.mxu0 0
        %946 = vmatpush2.bf16.msra.mxu0 0
        %947 = vmatprep.subr.bf16.mxu0 0
        %948 = vmatpush2.bf16.msra.mxu0 0
        %949 = vmatprep.subr.bf16.mxu0 0
        %950 = vmatpush2.bf16.msra.mxu0 0
        %951 = vmatprep.mubr.bf16.mxu0 0
        %952 = vmatmul.mubr.bf16.gmra.mxu0 %v398
        %v953 = vpop.f32.mrf.mxu0
        %v954 = vadd.f32 %v917, %v953
        %v955 = vpop.f32.mrf.mxu0
        %v956 = vpop.f32.mrf.mxu0
        %v957 = vadd.f32 %v917, %v956
        %v958 = vpop.f32.mrf.mxu0
        %959 = vmatprep.mubr.bf16.mxu0 0
        %960 = vmatmul.mubr.bf16.gmra.mxu0 %v401
        %v961 = vpop.f32.mrf.mxu0
        %v962 = vadd.f32 %v917, %v961
        %v963 = vpop.f32.mrf.mxu0
        %v964 = vpop.f32.mrf.mxu0
        %v965 = vpop.f32.mrf.mxu0
        %966 = vdwg.mxu0
        %967 = vrot.lane.b32.xlu0 %v391, 48
        %v968 = vpop.permute.xlu0 %967
        %969 = vrot.lane.b32.xlu0 %v392, 48
        %v970 = vpop.permute.xlu0 %969
        %973 = vrot.lane.b32.xlu0 %v396, 48
        %v974 = vpop.permute.xlu0 %973
        %976 = vmatprep.subr.bf16.mxu0 0
        %977 = vmatpush1.bf16.msra.mxu0 0
        %978 = vmatprep.subr.bf16.mxu0 0
        %979 = vmatpush1.bf16.msra.mxu0 0
        %980 = vmatprep.subr.bf16.mxu0 0
        %981 = vmatpush1.bf16.msra.mxu0 0
        %982 = vmatprep.subr.bf16.mxu0 0
        %983 = vmatpush1.bf16.msra.mxu0 0
        %984 = vmatprep.subr.bf16.mxu0 0
        %985 = vmatpush1.bf16.msra.mxu0 0
        %986 = vmatprep.subr.bf16.mxu0 0
        %987 = vmatpush1.bf16.msra.mxu0 0
        %988 = vmatprep.subr.bf16.mxu0 0
        %989 = vmatpush1.bf16.msra.mxu0 %v970
        %990 = vmatprep.subr.bf16.mxu0 0
        %991 = vmatpush1.bf16.msra.mxu0 %v968
        %992 = vmatprep.subr.bf16.mxu0 0
        %993 = vmatpush2.bf16.msra.mxu0 0
        %994 = vmatprep.subr.bf16.mxu0 0
        %995 = vmatpush2.bf16.msra.mxu0 0
        %996 = vmatprep.subr.bf16.mxu0 0
        %997 = vmatpush2.bf16.msra.mxu0 0
        %998 = vmatprep.subr.bf16.mxu0 0
        %999 = vmatpush2.bf16.msra.mxu0 0
        %1000 = vmatprep.subr.bf16.mxu0 0
        %1001 = vmatpush2.bf16.msra.mxu0 0
        %1002 = vmatprep.subr.bf16.mxu0 0
        %1003 = vmatpush2.bf16.msra.mxu0 0
        %1004 = vmatprep.subr.bf16.mxu0 0
        %1005 = vmatpush2.bf16.msra.mxu0 0
        %1006 = vmatprep.subr.bf16.mxu0 0
        %1007 = vmatpush2.bf16.msra.mxu0 0
        %1008 = vmatprep.mubr.bf16.mxu0 0
        %1009 = vmatmul.mubr.bf16.gmra.mxu0 %v398
        %v1010 = vpop.f32.mrf.mxu0
        %v1011 = vadd.f32 %v974, %v1010
        %v1012 = vpop.f32.mrf.mxu0
        %v1013 = vpop.f32.mrf.mxu0
        %v1014 = vadd.f32 %v974, %v1013
        %v1015 = vpop.f32.mrf.mxu0
        %1016 = vmatprep.mubr.bf16.mxu0 0
        %1017 = vmatmul.mubr.bf16.gmra.mxu0 %v401
        %v1018 = vpop.f32.mrf.mxu0
        %v1019 = vadd.f32 %v974, %v1018
        %v1020 = vpop.f32.mrf.mxu0
        %v1021 = vpop.f32.mrf.mxu0
        %v1022 = vpop.f32.mrf.mxu0
        %1023 = vdwg.mxu0
        %1024 = vrot.lane.b32.xlu0 %v391, 40
        %v1025 = vpop.permute.xlu0 %1024
        %1026 = vrot.lane.b32.xlu0 %v392, 40
        %v1027 = vpop.permute.xlu0 %1026
        %1030 = vrot.lane.b32.xlu0 %v396, 40
        %v1031 = vpop.permute.xlu0 %1030
        %1033 = vmatprep.subr.bf16.mxu0 0
        %1034 = vmatpush1.bf16.msra.mxu0 0
        %1035 = vmatprep.subr.bf16.mxu0 0
        %1036 = vmatpush1.bf16.msra.mxu0 0
        %1037 = vmatprep.subr.bf16.mxu0 0
        %1038 = vmatpush1.bf16.msra.mxu0 0
        %1039 = vmatprep.subr.bf16.mxu0 0
        %1040 = vmatpush1.bf16.msra.mxu0 0
        %1041 = vmatprep.subr.bf16.mxu0 0
        %1042 = vmatpush1.bf16.msra.mxu0 0
        %1043 = vmatprep.subr.bf16.mxu0 0
        %1044 = vmatpush1.bf16.msra.mxu0 0
        %1045 = vmatprep.subr.bf16.mxu0 0
        %1046 = vmatpush1.bf16.msra.mxu0 %v1027
        %1047 = vmatprep.subr.bf16.mxu0 0
        %1048 = vmatpush1.bf16.msra.mxu0 %v1025
        %1049 = vmatprep.subr.bf16.mxu0 0
        %1050 = vmatpush2.bf16.msra.mxu0 0
        %1051 = vmatprep.subr.bf16.mxu0 0
        %1052 = vmatpush2.bf16.msra.mxu0 0
        %1053 = vmatprep.subr.bf16.mxu0 0
        %1054 = vmatpush2.bf16.msra.mxu0 0
        %1055 = vmatprep.subr.bf16.mxu0 0
        %1056 = vmatpush2.bf16.msra.mxu0 0
        %1057 = vmatprep.subr.bf16.mxu0 0
        %1058 = vmatpush2.bf16.msra.mxu0 0
        %1059 = vmatprep.subr.bf16.mxu0 0
        %1060 = vmatpush2.bf16.msra.mxu0 0
        %1061 = vmatprep.subr.bf16.mxu0 0
        %1062 = vmatpush2.bf16.msra.mxu0 0
        %1063 = vmatprep.subr.bf16.mxu0 0
        %1064 = vmatpush2.bf16.msra.mxu0 0
        %1065 = vmatprep.mubr.bf16.mxu0 0
        %1066 = vmatmul.mubr.bf16.gmra.mxu0 %v398
        %v1067 = vpop.f32.mrf.mxu0
        %v1068 = vadd.f32 %v1031, %v1067
        %v1069 = vpop.f32.mrf.mxu0
        %v1070 = vpop.f32.mrf.mxu0
        %v1071 = vadd.f32 %v1031, %v1070
        %v1072 = vpop.f32.mrf.mxu0
        %1073 = vmatprep.mubr.bf16.mxu0 0
        %1074 = vmatmul.mubr.bf16.gmra.mxu0 %v401
        %v1075 = vpop.f32.mrf.mxu0
        %v1076 = vadd.f32 %v1031, %v1075
        %v1077 = vpop.f32.mrf.mxu0
        %v1078 = vpop.f32.mrf.mxu0
        %v1079 = vpop.f32.mrf.mxu0
        %1080 = vdwg.mxu0
        %v1081 = vpack.c.bf16 %v441, %v438
        %v1082 = vpack.c.bf16 %v446, %v446
        %v1083 = vpack.c.bf16 %v501, %v498
        %v1084 = vpack.c.bf16 %v506, %v506
        %v1085 = vpack.c.bf16 %v558, %v555
        %v1086 = vpack.c.bf16 %v563, %v563
        %v1087 = vpack.c.bf16 %v615, %v612
        %v1088 = vpack.c.bf16 %v620, %v620
        %v1089 = vpack.c.bf16 %v672, %v669
        %v1090 = vpack.c.bf16 %v677, %v677
        %v1091 = vpack.c.bf16 %v729, %v726
        %v1092 = vpack.c.bf16 %v734, %v734
        %v1093 = vpack.c.bf16 %v786, %v783
        %v1094 = vpack.c.bf16 %v791, %v791
        %v1095 = vpack.c.bf16 %v843, %v840
        %v1096 = vpack.c.bf16 %v848, %v848
        %vm1097 = vcmask 64512
        %v1099 = vsel %vm1097, %v1081, 0
        %v1102 = vsel %vm1097, %v1082, 0
        %v1105 = vsel %vm1097, %v1089, 0
        %v1108 = vsel %vm1097, %v1090, 0
        %1110 = vmatprep.subr.bf16.mxu0 0
        %1111 = vmatpush1.bf16.xpose.msra.mxu0 0
        %1112 = vmatprep.subr.bf16.mxu0 0
        %1113 = vmatpush1.bf16.xpose.msra.mxu0 0
        %1114 = vmatprep.subr.bf16.mxu0 0
        %1115 = vmatpush1.bf16.xpose.msra.mxu0 0
        %1116 = vmatprep.subr.bf16.mxu0 0
        %1117 = vmatpush1.bf16.xpose.msra.mxu0 0
        %1118 = vmatprep.subr.bf16.mxu0 0
        %1119 = vmatpush1.bf16.xpose.msra.mxu0 0
        %1120 = vmatprep.subr.bf16.mxu0 0
        %1121 = vmatpush1.bf16.xpose.msra.mxu0 0
        %1122 = vmatprep.subr.bf16.mxu0 0
        %1123 = vmatpush1.bf16.xpose.msra.mxu0 %v1108
        %1124 = vmatprep.subr.bf16.mxu0 0
        %1125 = vmatpush1.bf16.xpose.msra.mxu0 %v1105
        %1126 = vmatprep.subr.bf16.mxu0 0
        %1127 = vmatpush2.bf16.xpose.msra.mxu0 0
        %1128 = vmatprep.subr.bf16.mxu0 0
        %1129 = vmatpush2.bf16.xpose.msra.mxu0 0
        %1130 = vmatprep.subr.bf16.mxu0 0
        %1131 = vmatpush2.bf16.xpose.msra.mxu0 0
        %1132 = vmatprep.subr.bf16.mxu0 0
        %1133 = vmatpush2.bf16.xpose.msra.mxu0 0
        %1134 = vmatprep.subr.bf16.mxu0 0
        %1135 = vmatpush2.bf16.xpose.msra.mxu0 0
        %1136 = vmatprep.subr.bf16.mxu0 0
        %1137 = vmatpush2.bf16.xpose.msra.mxu0 0
        %1138 = vmatprep.subr.bf16.mxu0 0
        %1139 = vmatpush2.bf16.xpose.msra.mxu0 0
        %1140 = vmatprep.subr.bf16.mxu0 0
        %1141 = vmatpush2.bf16.xpose.msra.mxu0 0
        %1142 = vmatprep.mubr.bf16.mxu0 0
        %1143 = vmatmul.mubr.bf16.gmra.mxu0 %v1099
        %v1144 = vpop.f32.mrf.mxu0
        %v1145 = vadd.f32 0.0, %v1144
        %v1146 = vpop.f32.mrf.mxu0
        %v1147 = vpop.f32.mrf.mxu0
        %v1148 = vadd.f32 0.0, %v1147
        %v1149 = vpop.f32.mrf.mxu0
        %1150 = vmatprep.mubr.bf16.mxu0 0
        %1151 = vmatmul.mubr.bf16.gmra.mxu0 %v1102
        %v1152 = vpop.f32.mrf.mxu0
        %v1153 = vadd.f32 0.0, %v1152
        %v1154 = vpop.f32.mrf.mxu0
        %v1155 = vpop.f32.mrf.mxu0
        %v1156 = vpop.f32.mrf.mxu0
        %1157 = vdwg.mxu0
        %v1159 = vsel %vm1097, %v1083, 0
        %v1162 = vsel %vm1097, %v1084, 0
        %v1165 = vsel %vm1097, %v1091, 0
        %v1168 = vsel %vm1097, %v1092, 0
        %1170 = vmatprep.subr.bf16.mxu0 0
        %1171 = vmatpush1.bf16.xpose.msra.mxu0 0
        %1172 = vmatprep.subr.bf16.mxu0 0
        %1173 = vmatpush1.bf16.xpose.msra.mxu0 0
        %1174 = vmatprep.subr.bf16.mxu0 0
        %1175 = vmatpush1.bf16.xpose.msra.mxu0 0
        %1176 = vmatprep.subr.bf16.mxu0 0
        %1177 = vmatpush1.bf16.xpose.msra.mxu0 0
        %1178 = vmatprep.subr.bf16.mxu0 0
        %1179 = vmatpush1.bf16.xpose.msra.mxu0 0
        %1180 = vmatprep.subr.bf16.mxu0 0
        %1181 = vmatpush1.bf16.xpose.msra.mxu0 0
        %1182 = vmatprep.subr.bf16.mxu0 0
        %1183 = vmatpush1.bf16.xpose.msra.mxu0 %v1168
        %1184 = vmatprep.subr.bf16.mxu0 0
        %1185 = vmatpush1.bf16.xpose.msra.mxu0 %v1165
        %1186 = vmatprep.subr.bf16.mxu0 0
        %1187 = vmatpush2.bf16.xpose.msra.mxu0 0
        %1188 = vmatprep.subr.bf16.mxu0 0
        %1189 = vmatpush2.bf16.xpose.msra.mxu0 0
        %1190 = vmatprep.subr.bf16.mxu0 0
        %1191 = vmatpush2.bf16.xpose.msra.mxu0 0
        %1192 = vmatprep.subr.bf16.mxu0 0
        %1193 = vmatpush2.bf16.xpose.msra.mxu0 0
        %1194 = vmatprep.subr.bf16.mxu0 0
        %1195 = vmatpush2.bf16.xpose.msra.mxu0 0
        %1196 = vmatprep.subr.bf16.mxu0 0
        %1197 = vmatpush2.bf16.xpose.msra.mxu0 0
        %1198 = vmatprep.subr.bf16.mxu0 0
        %1199 = vmatpush2.bf16.xpose.msra.mxu0 0
        %1200 = vmatprep.subr.bf16.mxu0 0
        %1201 = vmatpush2.bf16.xpose.msra.mxu0 0
        %1202 = vmatprep.mubr.bf16.mxu0 0
        %1203 = vmatmul.mubr.bf16.gmra.mxu0 %v1159
        %v1204 = vpop.f32.mrf.mxu0
        %v1205 = vadd.f32 0.0, %v1204
        %v1206 = vpop.f32.mrf.mxu0
        %v1207 = vpop.f32.mrf.mxu0
        %v1208 = vadd.f32 0.0, %v1207
        %v1209 = vpop.f32.mrf.mxu0
        %1210 = vmatprep.mubr.bf16.mxu0 0
        %1211 = vmatmul.mubr.bf16.gmra.mxu0 %v1162
        %v1212 = vpop.f32.mrf.mxu0
        %v1213 = vadd.f32 0.0, %v1212
        %v1214 = vpop.f32.mrf.mxu0
        %v1215 = vpop.f32.mrf.mxu0
        %v1216 = vpop.f32.mrf.mxu0
        %1217 = vdwg.mxu0
        %v1219 = vsel %vm1097, %v1085, 0
        %v1222 = vsel %vm1097, %v1086, 0
        %v1225 = vsel %vm1097, %v1093, 0
        %v1228 = vsel %vm1097, %v1094, 0
        %1230 = vmatprep.subr.bf16.mxu0 0
        %1231 = vmatpush1.bf16.xpose.msra.mxu0 0
        %1232 = vmatprep.subr.bf16.mxu0 0
        %1233 = vmatpush1.bf16.xpose.msra.mxu0 0
        %1234 = vmatprep.subr.bf16.mxu0 0
        %1235 = vmatpush1.bf16.xpose.msra.mxu0 0
        %1236 = vmatprep.subr.bf16.mxu0 0
        %1237 = vmatpush1.bf16.xpose.msra.mxu0 0
        %1238 = vmatprep.subr.bf16.mxu0 0
        %1239 = vmatpush1.bf16.xpose.msra.mxu0 0
        %1240 = vmatprep.subr.bf16.mxu0 0
        %1241 = vmatpush1.bf16.xpose.msra.mxu0 0
        %1242 = vmatprep.subr.bf16.mxu0 0
        %1243 = vmatpush1.bf16.xpose.msra.mxu0 %v1228
        %1244 = vmatprep.subr.bf16.mxu0 0
        %1245 = vmatpush1.bf16.xpose.msra.mxu0 %v1225
        %1246 = vmatprep.subr.bf16.mxu0 0
        %1247 = vmatpush2.bf16.xpose.msra.mxu0 0
        %1248 = vmatprep.subr.bf16.mxu0 0
        %1249 = vmatpush2.bf16.xpose.msra.mxu0 0
        %1250 = vmatprep.subr.bf16.mxu0 0
        %1251 = vmatpush2.bf16.xpose.msra.mxu0 0
        %1252 = vmatprep.subr.bf16.mxu0 0
        %1253 = vmatpush2.bf16.xpose.msra.mxu0 0
        %1254 = vmatprep.subr.bf16.mxu0 0
        %1255 = vmatpush2.bf16.xpose.msra.mxu0 0
        %1256 = vmatprep.subr.bf16.mxu0 0
        %1257 = vmatpush2.bf16.xpose.msra.mxu0 0
        %1258 = vmatprep.subr.bf16.mxu0 0
        %1259 = vmatpush2.bf16.xpose.msra.mxu0 0
        %1260 = vmatprep.subr.bf16.mxu0 0
        %1261 = vmatpush2.bf16.xpose.msra.mxu0 0
        %1262 = vmatprep.mubr.bf16.mxu0 0
        %1263 = vmatmul.mubr.bf16.gmra.mxu0 %v1219
        %v1264 = vpop.f32.mrf.mxu0
        %v1265 = vadd.f32 0.0, %v1264
        %v1266 = vpop.f32.mrf.mxu0
        %v1267 = vpop.f32.mrf.mxu0
        %v1268 = vadd.f32 0.0, %v1267
        %v1269 = vpop.f32.mrf.mxu0
        %1270 = vmatprep.mubr.bf16.mxu0 0
        %1271 = vmatmul.mubr.bf16.gmra.mxu0 %v1222
        %v1272 = vpop.f32.mrf.mxu0
        %v1273 = vadd.f32 0.0, %v1272
        %v1274 = vpop.f32.mrf.mxu0
        %v1275 = vpop.f32.mrf.mxu0
        %v1276 = vpop.f32.mrf.mxu0
        %1277 = vdwg.mxu0
        %v1279 = vsel %vm1097, %v1087, 0
        %v1282 = vsel %vm1097, %v1088, 0
        %v1285 = vsel %vm1097, %v1095, 0
        %v1288 = vsel %vm1097, %v1096, 0
        %1290 = vmatprep.subr.bf16.mxu0 0
        %1291 = vmatpush1.bf16.xpose.msra.mxu0 0
        %1292 = vmatprep.subr.bf16.mxu0 0
        %1293 = vmatpush1.bf16.xpose.msra.mxu0 0
        %1294 = vmatprep.subr.bf16.mxu0 0
        %1295 = vmatpush1.bf16.xpose.msra.mxu0 0
        %1296 = vmatprep.subr.bf16.mxu0 0
        %1297 = vmatpush1.bf16.xpose.msra.mxu0 0
        %1298 = vmatprep.subr.bf16.mxu0 0
        %1299 = vmatpush1.bf16.xpose.msra.mxu0 0
        %1300 = vmatprep.subr.bf16.mxu0 0
        %1301 = vmatpush1.bf16.xpose.msra.mxu0 0
        %1302 = vmatprep.subr.bf16.mxu0 0
        %1303 = vmatpush1.bf16.xpose.msra.mxu0 %v1288
        %1304 = vmatprep.subr.bf16.mxu0 0
        %1305 = vmatpush1.bf16.xpose.msra.mxu0 %v1285
        %1306 = vmatprep.subr.bf16.mxu0 0
        %1307 = vmatpush2.bf16.xpose.msra.mxu0 0
        %1308 = vmatprep.subr.bf16.mxu0 0
        %1309 = vmatpush2.bf16.xpose.msra.mxu0 0
        %1310 = vmatprep.subr.bf16.mxu0 0
        %1311 = vmatpush2.bf16.xpose.msra.mxu0 0
        %1312 = vmatprep.subr.bf16.mxu0 0
        %1313 = vmatpush2.bf16.xpose.msra.mxu0 0
        %1314 = vmatprep.subr.bf16.mxu0 0
        %1315 = vmatpush2.bf16.xpose.msra.mxu0 0
        %1316 = vmatprep.subr.bf16.mxu0 0
        %1317 = vmatpush2.bf16.xpose.msra.mxu0 0
        %1318 = vmatprep.subr.bf16.mxu0 0
        %1319 = vmatpush2.bf16.xpose.msra.mxu0 0
        %1320 = vmatprep.subr.bf16.mxu0 0
        %1321 = vmatpush2.bf16.xpose.msra.mxu0 0
        %1322 = vmatprep.mubr.bf16.mxu0 0
        %1323 = vmatmul.mubr.bf16.gmra.mxu0 %v1279
        %v1324 = vpop.f32.mrf.mxu0
        %v1325 = vadd.f32 0.0, %v1324
        %v1326 = vpop.f32.mrf.mxu0
        %v1327 = vpop.f32.mrf.mxu0
        %v1328 = vadd.f32 0.0, %v1327
        %v1329 = vpop.f32.mrf.mxu0
        %1330 = vmatprep.mubr.bf16.mxu0 0
        %1331 = vmatmul.mubr.bf16.gmra.mxu0 %v1282
        %v1332 = vpop.f32.mrf.mxu0
        %v1333 = vadd.f32 0.0, %v1332
        %v1334 = vpop.f32.mrf.mxu0
        %v1335 = vpop.f32.mrf.mxu0
        %v1336 = vpop.f32.mrf.mxu0
        %1337 = vdwg.mxu0
        %v1338 = vmul.f32 %v1145, 0.35355338
        %v1339 = vmul.f32 %v1148, 0.35355338
        %v1340 = vmul.f32 %v1153, 0.35355338
        %v1341 = vmul.f32 %v1205, 0.35355338
        %v1342 = vmul.f32 %v1208, 0.35355338
        %v1343 = vmul.f32 %v1213, 0.35355338
        %v1344 = vmul.f32 %v1265, 0.35355338
        %v1345 = vmul.f32 %v1268, 0.35355338
        %v1346 = vmul.f32 %v1273, 0.35355338
        %v1347 = vmul.f32 %v1325, 0.35355338
        %v1348 = vmul.f32 %v1328, 0.35355338
        %v1349 = vmul.f32 %v1333, 0.35355338
        %vm1350 = vcmask 138240
        %v1351 = vsel %vm1350, %v1338, -inf
        %1352 = vmax.xlane.f32.xlu0 %v1351
        %v1353 = vpop.xlane.xlu0 %1352
        %v1354 = vsel %vm1350, %v1339, -inf
        %1355 = vmax.xlane.f32.xlu0 %v1354
        %v1356 = vpop.xlane.xlu0 %1355
        %vm1357 = vcmask 131072
        %v1358 = vsel %vm1357, %v1340, -inf
        %1359 = vmax.xlane.f32.xlu0 %v1358
        %v1360 = vpop.xlane.xlu0 %1359
        %v1361 = vsel %vm1350, %v1341, -inf
        %1362 = vmax.xlane.f32.xlu0 %v1361
        %v1363 = vpop.xlane.xlu0 %1362
        %v1364 = vsel %vm1350, %v1342, -inf
        %1365 = vmax.xlane.f32.xlu0 %v1364
        %v1366 = vpop.xlane.xlu0 %1365
        %v1367 = vsel %vm1357, %v1343, -inf
        %1368 = vmax.xlane.f32.xlu0 %v1367
        %v1369 = vpop.xlane.xlu0 %1368
        %v1370 = vsel %vm1350, %v1344, -inf
        %1371 = vmax.xlane.f32.xlu0 %v1370
        %v1372 = vpop.xlane.xlu0 %1371
        %v1373 = vsel %vm1350, %v1345, -inf
        %1374 = vmax.xlane.f32.xlu0 %v1373
        %v1375 = vpop.xlane.xlu0 %1374
        %v1376 = vsel %vm1357, %v1346, -inf
        %1377 = vmax.xlane.f32.xlu0 %v1376
        %v1378 = vpop.xlane.xlu0 %1377
        %v1379 = vsel %vm1350, %v1347, -inf
        %1380 = vmax.xlane.f32.xlu0 %v1379
        %v1381 = vpop.xlane.xlu0 %1380
        %v1382 = vsel %vm1350, %v1348, -inf
        %1383 = vmax.xlane.f32.xlu0 %v1382
        %v1384 = vpop.xlane.xlu0 %1383
        %v1385 = vsel %vm1357, %v1349, -inf
        %1386 = vmax.xlane.f32.xlu0 %v1385
        %v1387 = vpop.xlane.xlu0 %1386
        %v1388 = vsub.f32 %v1338, %v1353
        %v1389 = vsub.f32 %v1339, %v1356
        %v1390 = vsub.f32 %v1340, %v1360
        %v1391 = vsub.f32 %v1341, %v1363
        %v1392 = vsub.f32 %v1342, %v1366
        %v1393 = vsub.f32 %v1343, %v1369
        %v1394 = vsub.f32 %v1344, %v1372
        %v1395 = vsub.f32 %v1345, %v1375
        %v1396 = vsub.f32 %v1346, %v1378
        %v1397 = vsub.f32 %v1347, %v1381
        %v1398 = vsub.f32 %v1348, %v1384
        %v1399 = vsub.f32 %v1349, %v1387
        %v1400 = vmul.f32 %v1388, 1.442695
        %v1401 = vpow.pop %v1400
        %v1402 = vmul.f32 %v1389, 1.442695
        %v1403 = vpow.pop %v1402
        %v1404 = vmul.f32 %v1390, 1.442695
        %v1405 = vpow.pop %v1404
        %v1406 = vmul.f32 %v1391, 1.442695
        %v1407 = vpow.pop %v1406
        %v1408 = vmul.f32 %v1392, 1.442695
        %v1409 = vpow.pop %v1408
        %v1410 = vmul.f32 %v1393, 1.442695
        %v1411 = vpow.pop %v1410
        %v1412 = vmul.f32 %v1394, 1.442695
        %v1413 = vpow.pop %v1412
        %v1414 = vmul.f32 %v1395, 1.442695
        %v1415 = vpow.pop %v1414
        %v1416 = vmul.f32 %v1396, 1.442695
        %v1417 = vpow.pop %v1416
        %v1418 = vmul.f32 %v1397, 1.442695
        %v1419 = vpow.pop %v1418
        %v1420 = vmul.f32 %v1398, 1.442695
        %v1421 = vpow.pop %v1420
        %v1422 = vmul.f32 %v1399, 1.442695
        %v1423 = vpow.pop %v1422
        %v1424 = vsel %vm1350, %v1401, 0.0
        %1425 = vadd.xlane.f32.xlu0 %v1424
        %v1426 = vpop.xlane.xlu0 %1425
        %v1427 = vsel %vm1350, %v1403, 0.0
        %1428 = vadd.xlane.f32.xlu0 %v1427
        %v1429 = vpop.xlane.xlu0 %1428
        %v1430 = vsel %vm1357, %v1405, 0.0
        %1431 = vadd.xlane.f32.xlu0 %v1430
        %v1432 = vpop.xlane.xlu0 %1431
        %v1433 = vsel %vm1350, %v1407, 0.0
        %1434 = vadd.xlane.f32.xlu0 %v1433
        %v1435 = vpop.xlane.xlu0 %1434
        %v1436 = vsel %vm1350, %v1409, 0.0
        %1437 = vadd.xlane.f32.xlu0 %v1436
        %v1438 = vpop.xlane.xlu0 %1437
        %v1439 = vsel %vm1357, %v1411, 0.0
        %1440 = vadd.xlane.f32.xlu0 %v1439
        %v1441 = vpop.xlane.xlu0 %1440
        %v1442 = vsel %vm1350, %v1413, 0.0
        %1443 = vadd.xlane.f32.xlu0 %v1442
        %v1444 = vpop.xlane.xlu0 %1443
        %v1445 = vsel %vm1350, %v1415, 0.0
        %1446 = vadd.xlane.f32.xlu0 %v1445
        %v1447 = vpop.xlane.xlu0 %1446
        %v1448 = vsel %vm1357, %v1417, 0.0
        %1449 = vadd.xlane.f32.xlu0 %v1448
        %v1450 = vpop.xlane.xlu0 %1449
        %v1451 = vsel %vm1350, %v1419, 0.0
        %1452 = vadd.xlane.f32.xlu0 %v1451
        %v1453 = vpop.xlane.xlu0 %1452
        %v1454 = vsel %vm1350, %v1421, 0.0
        %1455 = vadd.xlane.f32.xlu0 %v1454
        %v1456 = vpop.xlane.xlu0 %1455
        %v1457 = vsel %vm1357, %v1423, 0.0
        %1458 = vadd.xlane.f32.xlu0 %v1457
        %v1459 = vpop.xlane.xlu0 %1458
        %v1460 = vrcp.pop %v1426
        %v1461 = vrcp.pop %v1429
        %v1462 = vrcp.pop %v1432
        %v1463 = vrcp.pop %v1435
        %v1464 = vrcp.pop %v1438
        %v1465 = vrcp.pop %v1441
        %v1466 = vrcp.pop %v1444
        %v1467 = vrcp.pop %v1447
        %v1468 = vrcp.pop %v1450
        %v1469 = vrcp.pop %v1453
        %v1470 = vrcp.pop %v1456
        %v1471 = vrcp.pop %v1459
        %v1472 = vmul.f32 %v1401, %v1460
        %v1473 = vmul.f32 %v1403, %v1461
        %v1474 = vmul.f32 %v1405, %v1462
        %v1475 = vmul.f32 %v1407, %v1463
        %v1476 = vmul.f32 %v1409, %v1464
        %v1477 = vmul.f32 %v1411, %v1465
        %v1478 = vmul.f32 %v1413, %v1466
        %v1479 = vmul.f32 %v1415, %v1467
        %v1480 = vmul.f32 %v1417, %v1468
        %v1481 = vmul.f32 %v1419, %v1469
        %v1482 = vmul.f32 %v1421, %v1470
        %v1483 = vmul.f32 %v1423, %v1471
        %v1484 = vpack.c.bf16 %v1473, %v1472
        %v1485 = vpack.c.bf16 %v1474, %v1474
        %v1486 = vpack.c.bf16 %v1476, %v1475
        %v1487 = vpack.c.bf16 %v1477, %v1477
        %v1488 = vpack.c.bf16 %v1479, %v1478
        %v1489 = vpack.c.bf16 %v1480, %v1480
        %v1490 = vpack.c.bf16 %v1482, %v1481
        %v1491 = vpack.c.bf16 %v1483, %v1483
        %v1492 = vpack.c.bf16 %v900, %v897
        %v1493 = vpack.c.bf16 %v905, %v905
        %v1494 = vpack.c.bf16 %v957, %v954
        %v1495 = vpack.c.bf16 %v962, %v962
        %v1496 = vpack.c.bf16 %v1014, %v1011
        %v1497 = vpack.c.bf16 %v1019, %v1019
        %v1498 = vpack.c.bf16 %v1071, %v1068
        %v1499 = vpack.c.bf16 %v1076, %v1076
        %v1501 = vsel %vm1350, %v1484, 0
        %v1504 = vsel %vm1350, %v1485, 0
        %vm1506 = vcmask 1040384
        %v1507 = vsel 0, 4294967295, 65535
        %v1508 = vsel %vm1506, %v1507, 0
        %v1510 = vand.u32 %v1493, %v1508
        %1512 = vmatprep.subr.bf16.mxu0 0
        %1513 = vmatpush1.bf16.msra.mxu0 0
        %1514 = vmatprep.subr.bf16.mxu0 0
        %1515 = vmatpush1.bf16.msra.mxu0 0
        %1516 = vmatprep.subr.bf16.mxu0 0
        %1517 = vmatpush1.bf16.msra.mxu0 0
        %1518 = vmatprep.subr.bf16.mxu0 0
        %1519 = vmatpush1.bf16.msra.mxu0 0
        %1520 = vmatprep.subr.bf16.mxu0 0
        %1521 = vmatpush1.bf16.msra.mxu0 0
        %1522 = vmatprep.subr.bf16.mxu0 0
        %1523 = vmatpush1.bf16.msra.mxu0 0
        %1524 = vmatprep.subr.bf16.mxu0 0
        %1525 = vmatpush1.bf16.msra.mxu0 %v1510
        %1526 = vmatprep.subr.bf16.mxu0 0
        %1527 = vmatpush1.bf16.msra.mxu0 %v1492
        %1528 = vmatprep.subr.bf16.mxu0 0
        %1529 = vmatpush2.bf16.msra.mxu0 0
        %1530 = vmatprep.subr.bf16.mxu0 0
        %1531 = vmatpush2.bf16.msra.mxu0 0
        %1532 = vmatprep.subr.bf16.mxu0 0
        %1533 = vmatpush2.bf16.msra.mxu0 0
        %1534 = vmatprep.subr.bf16.mxu0 0
        %1535 = vmatpush2.bf16.msra.mxu0 0
        %1536 = vmatprep.subr.bf16.mxu0 0
        %1537 = vmatpush2.bf16.msra.mxu0 0
        %1538 = vmatprep.subr.bf16.mxu0 0
        %1539 = vmatpush2.bf16.msra.mxu0 0
        %1540 = vmatprep.subr.bf16.mxu0 0
        %1541 = vmatpush2.bf16.msra.mxu0 0
        %1542 = vmatprep.subr.bf16.mxu0 0
        %1543 = vmatpush2.bf16.msra.mxu0 0
        %1544 = vmatprep.mubr.bf16.mxu0 0
        %1545 = vmatmul.mubr.bf16.gmra.mxu0 %v1501
        %v1546 = vpop.f32.mrf.mxu0
        %v1547 = vadd.f32 0.0, %v1546
        %v1548 = vpop.f32.mrf.mxu0
        %v1549 = vpop.f32.mrf.mxu0
        %v1550 = vadd.f32 0.0, %v1549
        %v1551 = vpop.f32.mrf.mxu0
        %1552 = vmatprep.mubr.bf16.mxu0 0
        %1553 = vmatmul.mubr.bf16.gmra.mxu0 %v1504
        %v1554 = vpop.f32.mrf.mxu0
        %v1555 = vadd.f32 0.0, %v1554
        %v1556 = vpop.f32.mrf.mxu0
        %v1557 = vpop.f32.mrf.mxu0
        %v1558 = vpop.f32.mrf.mxu0
        %1559 = vdwg.mxu0
        %v1561 = vsel %vm1350, %v1486, 0
        %v1564 = vsel %vm1350, %v1487, 0
        %v1567 = vand.u32 %v1495, %v1508
        %1569 = vmatprep.subr.bf16.mxu0 0
        %1570 = vmatpush1.bf16.msra.mxu0 0
        %1571 = vmatprep.subr.bf16.mxu0 0
        %1572 = vmatpush1.bf16.msra.mxu0 0
        %1573 = vmatprep.subr.bf16.mxu0 0
        %1574 = vmatpush1.bf16.msra.mxu0 0
        %1575 = vmatprep.subr.bf16.mxu0 0
        %1576 = vmatpush1.bf16.msra.mxu0 0
        %1577 = vmatprep.subr.bf16.mxu0 0
        %1578 = vmatpush1.bf16.msra.mxu0 0
        %1579 = vmatprep.subr.bf16.mxu0 0
        %1580 = vmatpush1.bf16.msra.mxu0 0
        %1581 = vmatprep.subr.bf16.mxu0 0
        %1582 = vmatpush1.bf16.msra.mxu0 %v1567
        %1583 = vmatprep.subr.bf16.mxu0 0
        %1584 = vmatpush1.bf16.msra.mxu0 %v1494
        %1585 = vmatprep.subr.bf16.mxu0 0
        %1586 = vmatpush2.bf16.msra.mxu0 0
        %1587 = vmatprep.subr.bf16.mxu0 0
        %1588 = vmatpush2.bf16.msra.mxu0 0
        %1589 = vmatprep.subr.bf16.mxu0 0
        %1590 = vmatpush2.bf16.msra.mxu0 0
        %1591 = vmatprep.subr.bf16.mxu0 0
        %1592 = vmatpush2.bf16.msra.mxu0 0
        %1593 = vmatprep.subr.bf16.mxu0 0
        %1594 = vmatpush2.bf16.msra.mxu0 0
        %1595 = vmatprep.subr.bf16.mxu0 0
        %1596 = vmatpush2.bf16.msra.mxu0 0
        %1597 = vmatprep.subr.bf16.mxu0 0
        %1598 = vmatpush2.bf16.msra.mxu0 0
        %1599 = vmatprep.subr.bf16.mxu0 0
        %1600 = vmatpush2.bf16.msra.mxu0 0
        %1601 = vmatprep.mubr.bf16.mxu0 0
        %1602 = vmatmul.mubr.bf16.gmra.mxu0 %v1561
        %v1603 = vpop.f32.mrf.mxu0
        %v1604 = vadd.f32 0.0, %v1603
        %v1605 = vpop.f32.mrf.mxu0
        %v1606 = vpop.f32.mrf.mxu0
        %v1607 = vadd.f32 0.0, %v1606
        %v1608 = vpop.f32.mrf.mxu0
        %1609 = vmatprep.mubr.bf16.mxu0 0
        %1610 = vmatmul.mubr.bf16.gmra.mxu0 %v1564
        %v1611 = vpop.f32.mrf.mxu0
        %v1612 = vadd.f32 0.0, %v1611
        %v1613 = vpop.f32.mrf.mxu0
        %v1614 = vpop.f32.mrf.mxu0
        %v1615 = vpop.f32.mrf.mxu0
        %1616 = vdwg.mxu0
        %v1618 = vsel %vm1350, %v1488, 0
        %v1621 = vsel %vm1350, %v1489, 0
        %v1624 = vand.u32 %v1497, %v1508
        %1626 = vmatprep.subr.bf16.mxu0 0
        %1627 = vmatpush1.bf16.msra.mxu0 0
        %1628 = vmatprep.subr.bf16.mxu0 0
        %1629 = vmatpush1.bf16.msra.mxu0 0
        %1630 = vmatprep.subr.bf16.mxu0 0
        %1631 = vmatpush1.bf16.msra.mxu0 0
        %1632 = vmatprep.subr.bf16.mxu0 0
        %1633 = vmatpush1.bf16.msra.mxu0 0
        %1634 = vmatprep.subr.bf16.mxu0 0
        %1635 = vmatpush1.bf16.msra.mxu0 0
        %1636 = vmatprep.subr.bf16.mxu0 0
        %1637 = vmatpush1.bf16.msra.mxu0 0
        %1638 = vmatprep.subr.bf16.mxu0 0
        %1639 = vmatpush1.bf16.msra.mxu0 %v1624
        %1640 = vmatprep.subr.bf16.mxu0 0
        %1641 = vmatpush1.bf16.msra.mxu0 %v1496
        %1642 = vmatprep.subr.bf16.mxu0 0
        %1643 = vmatpush2.bf16.msra.mxu0 0
        %1644 = vmatprep.subr.bf16.mxu0 0
        %1645 = vmatpush2.bf16.msra.mxu0 0
        %1646 = vmatprep.subr.bf16.mxu0 0
        %1647 = vmatpush2.bf16.msra.mxu0 0
        %1648 = vmatprep.subr.bf16.mxu0 0
        %1649 = vmatpush2.bf16.msra.mxu0 0
        %1650 = vmatprep.subr.bf16.mxu0 0
        %1651 = vmatpush2.bf16.msra.mxu0 0
        %1652 = vmatprep.subr.bf16.mxu0 0
        %1653 = vmatpush2.bf16.msra.mxu0 0
        %1654 = vmatprep.subr.bf16.mxu0 0
        %1655 = vmatpush2.bf16.msra.mxu0 0
        %1656 = vmatprep.subr.bf16.mxu0 0
        %1657 = vmatpush2.bf16.msra.mxu0 0
        %1658 = vmatprep.mubr.bf16.mxu0 0
        %1659 = vmatmul.mubr.bf16.gmra.mxu0 %v1618
        %v1660 = vpop.f32.mrf.mxu0
        %v1661 = vadd.f32 0.0, %v1660
        %v1662 = vpop.f32.mrf.mxu0
        %v1663 = vpop.f32.mrf.mxu0
        %v1664 = vadd.f32 0.0, %v1663
        %v1665 = vpop.f32.mrf.mxu0
        %1666 = vmatprep.mubr.bf16.mxu0 0
        %1667 = vmatmul.mubr.bf16.gmra.mxu0 %v1621
        %v1668 = vpop.f32.mrf.mxu0
        %v1669 = vadd.f32 0.0, %v1668
        %v1670 = vpop.f32.mrf.mxu0
        %v1671 = vpop.f32.mrf.mxu0
        %v1672 = vpop.f32.mrf.mxu0
        %1673 = vdwg.mxu0
        %v1675 = vsel %vm1350, %v1490, 0
        %v1678 = vsel %vm1350, %v1491, 0
        %v1681 = vand.u32 %v1499, %v1508
        %1683 = vmatprep.subr.bf16.mxu0 0
        %1684 = vmatpush1.bf16.msra.mxu0 0
        %1685 = vmatprep.subr.bf16.mxu0 0
        %1686 = vmatpush1.bf16.msra.mxu0 0
        %1687 = vmatprep.subr.bf16.mxu0 0
        %1688 = vmatpush1.bf16.msra.mxu0 0
        %1689 = vmatprep.subr.bf16.mxu0 0
        %1690 = vmatpush1.bf16.msra.mxu0 0
        %1691 = vmatprep.subr.bf16.mxu0 0
        %1692 = vmatpush1.bf16.msra.mxu0 0
        %1693 = vmatprep.subr.bf16.mxu0 0
        %1694 = vmatpush1.bf16.msra.mxu0 0
        %1695 = vmatprep.subr.bf16.mxu0 0
        %1696 = vmatpush1.bf16.msra.mxu0 %v1681
        %1697 = vmatprep.subr.bf16.mxu0 0
        %1698 = vmatpush1.bf16.msra.mxu0 %v1498
        %1699 = vmatprep.subr.bf16.mxu0 0
        %1700 = vmatpush2.bf16.msra.mxu0 0
        %1701 = vmatprep.subr.bf16.mxu0 0
        %1702 = vmatpush2.bf16.msra.mxu0 0
        %1703 = vmatprep.subr.bf16.mxu0 0
        %1704 = vmatpush2.bf16.msra.mxu0 0
        %1705 = vmatprep.subr.bf16.mxu0 0
        %1706 = vmatpush2.bf16.msra.mxu0 0
        %1707 = vmatprep.subr.bf16.mxu0 0
        %1708 = vmatpush2.bf16.msra.mxu0 0
        %1709 = vmatprep.subr.bf16.mxu0 0
        %1710 = vmatpush2.bf16.msra.mxu0 0
        %1711 = vmatprep.subr.bf16.mxu0 0
        %1712 = vmatpush2.bf16.msra.mxu0 0
        %1713 = vmatprep.subr.bf16.mxu0 0
        %1714 = vmatpush2.bf16.msra.mxu0 0
        %1715 = vmatprep.mubr.bf16.mxu0 0
        %1716 = vmatmul.mubr.bf16.gmra.mxu0 %v1675
        %v1717 = vpop.f32.mrf.mxu0
        %v1718 = vadd.f32 0.0, %v1717
        %v1719 = vpop.f32.mrf.mxu0
        %v1720 = vpop.f32.mrf.mxu0
        %v1721 = vadd.f32 0.0, %v1720
        %v1722 = vpop.f32.mrf.mxu0
        %1723 = vmatprep.mubr.bf16.mxu0 0
        %1724 = vmatmul.mubr.bf16.gmra.mxu0 %v1678
        %v1725 = vpop.f32.mrf.mxu0
        %v1726 = vadd.f32 0.0, %v1725
        %v1727 = vpop.f32.mrf.mxu0
        %v1728 = vpop.f32.mrf.mxu0
        %v1729 = vpop.f32.mrf.mxu0
        %1730 = vdwg.mxu0
        %v1731 = vld [vmem:[%s4 + $0x30] sm:$0xff]
        %v1732 = vld [vmem:[%s4 + $0x38] sm:$0xff]
        %v1733 = vld [vmem:[%s4 + $0x40] sm:$0xff]
        %v1734 = vld [vmem:[%s4 + $0x48] sm:$0xff]
        %v1735 = vpack.c.bf16 %v1550, %v1547
        %v1736 = vpack.c.bf16 %v1555, %v1555
        %v1737 = vpack.c.bf16 %v1607, %v1604
        %v1738 = vpack.c.bf16 %v1612, %v1612
        %v1739 = vpack.c.bf16 %v1664, %v1661
        %v1740 = vpack.c.bf16 %v1669, %v1669
        %v1741 = vpack.c.bf16 %v1721, %v1718
        %v1742 = vpack.c.bf16 %v1726, %v1726
        %v1743 = vpack.c.bf16 %v1731, %v1731
        %v1744 = vpack.c.bf16 %v1732, %v1732
        %v1745 = vpack.c.bf16 %v1733, %v1733
        %v1746 = vpack.c.bf16 %v1734, %v1734
        %v1748 = vsel %vm1097, %v1735, 0
        %v1751 = vsel %vm1097, %v1736, 0
        %vm1753 = vcmask 1043456
        %v1755 = vsel %vm1753, %v1743, 0
        %1757 = vmatprep.subr.bf16.mxu0 0
        %1758 = vmatpush1.bf16.msra.mxu0 0
        %1759 = vmatprep.subr.bf16.mxu0 0
        %1760 = vmatpush1.bf16.msra.mxu0 0
        %1761 = vmatprep.subr.bf16.mxu0 0
        %1762 = vmatpush1.bf16.msra.mxu0 0
        %1763 = vmatprep.subr.bf16.mxu0 0
        %1764 = vmatpush1.bf16.msra.mxu0 0
        %1765 = vmatprep.subr.bf16.mxu0 0
        %1766 = vmatpush1.bf16.msra.mxu0 0
        %1767 = vmatprep.subr.bf16.mxu0 0
        %1768 = vmatpush1.bf16.msra.mxu0 0
        %1769 = vmatprep.subr.bf16.mxu0 0
        %1770 = vmatpush1.bf16.msra.mxu0 0
        %1771 = vmatprep.subr.bf16.mxu0 0
        %1772 = vmatpush1.bf16.msra.mxu0 %v1755
        %1773 = vmatprep.subr.bf16.mxu0 0
        %1774 = vmatpush2.bf16.msra.mxu0 0
        %1775 = vmatprep.subr.bf16.mxu0 0
        %1776 = vmatpush2.bf16.msra.mxu0 0
        %1777 = vmatprep.subr.bf16.mxu0 0
        %1778 = vmatpush2.bf16.msra.mxu0 0
        %1779 = vmatprep.subr.bf16.mxu0 0
        %1780 = vmatpush2.bf16.msra.mxu0 0
        %1781 = vmatprep.subr.bf16.mxu0 0
        %1782 = vmatpush2.bf16.msra.mxu0 0
        %1783 = vmatprep.subr.bf16.mxu0 0
        %1784 = vmatpush2.bf16.msra.mxu0 0
        %1785 = vmatprep.subr.bf16.mxu0 0
        %1786 = vmatpush2.bf16.msra.mxu0 0
        %1787 = vmatprep.subr.bf16.mxu0 0
        %1788 = vmatpush2.bf16.msra.mxu0 0
        %1789 = vmatprep.mubr.bf16.mxu0 0
        %1790 = vmatmul.mubr.bf16.gmra.mxu0 %v1748
        %v1791 = vpop.f32.mrf.mxu0
        %v1792 = vadd.f32 0.0, %v1791
        %v1793 = vpop.f32.mrf.mxu0
        %v1794 = vpop.f32.mrf.mxu0
        %v1795 = vadd.f32 0.0, %v1794
        %v1796 = vpop.f32.mrf.mxu0
        %1797 = vmatprep.mubr.bf16.mxu0 0
        %1798 = vmatmul.mubr.bf16.gmra.mxu0 %v1751
        %v1799 = vpop.f32.mrf.mxu0
        %v1800 = vadd.f32 0.0, %v1799
        %v1801 = vpop.f32.mrf.mxu0
        %v1802 = vpop.f32.mrf.mxu0
        %v1803 = vpop.f32.mrf.mxu0
        %1804 = vdwg.mxu0
        %v1806 = vsel %vm1097, %v1737, 0
        %v1809 = vsel %vm1097, %v1738, 0
        %v1812 = vsel %vm1753, %v1744, 0
        %1814 = vmatprep.subr.bf16.mxu0 0
        %1815 = vmatpush1.bf16.msra.mxu0 0
        %1816 = vmatprep.subr.bf16.mxu0 0
        %1817 = vmatpush1.bf16.msra.mxu0 0
        %1818 = vmatprep.subr.bf16.mxu0 0
        %1819 = vmatpush1.bf16.msra.mxu0 0
        %1820 = vmatprep.subr.bf16.mxu0 0
        %1821 = vmatpush1.bf16.msra.mxu0 0
        %1822 = vmatprep.subr.bf16.mxu0 0
        %1823 = vmatpush1.bf16.msra.mxu0 0
        %1824 = vmatprep.subr.bf16.mxu0 0
        %1825 = vmatpush1.bf16.msra.mxu0 0
        %1826 = vmatprep.subr.bf16.mxu0 0
        %1827 = vmatpush1.bf16.msra.mxu0 0
        %1828 = vmatprep.subr.bf16.mxu0 0
        %1829 = vmatpush1.bf16.msra.mxu0 %v1812
        %1830 = vmatprep.subr.bf16.mxu0 0
        %1831 = vmatpush2.bf16.msra.mxu0 0
        %1832 = vmatprep.subr.bf16.mxu0 0
        %1833 = vmatpush2.bf16.msra.mxu0 0
        %1834 = vmatprep.subr.bf16.mxu0 0
        %1835 = vmatpush2.bf16.msra.mxu0 0
        %1836 = vmatprep.subr.bf16.mxu0 0
        %1837 = vmatpush2.bf16.msra.mxu0 0
        %1838 = vmatprep.subr.bf16.mxu0 0
        %1839 = vmatpush2.bf16.msra.mxu0 0
        %1840 = vmatprep.subr.bf16.mxu0 0
        %1841 = vmatpush2.bf16.msra.mxu0 0
        %1842 = vmatprep.subr.bf16.mxu0 0
        %1843 = vmatpush2.bf16.msra.mxu0 0
        %1844 = vmatprep.subr.bf16.mxu0 0
        %1845 = vmatpush2.bf16.msra.mxu0 0
        %1846 = vmatprep.mubr.bf16.mxu0 0
        %1847 = vmatmul.mubr.bf16.gmra.mxu0 %v1806
        %v1848 = vpop.f32.mrf.mxu0
        %v1849 = vadd.f32 0.0, %v1848
        %v1850 = vpop.f32.mrf.mxu0
        %v1851 = vpop.f32.mrf.mxu0
        %v1852 = vadd.f32 0.0, %v1851
        %v1853 = vpop.f32.mrf.mxu0
        %1854 = vmatprep.mubr.bf16.mxu0 0
        %1855 = vmatmul.mubr.bf16.gmra.mxu0 %v1809
        %v1856 = vpop.f32.mrf.mxu0
        %v1857 = vadd.f32 0.0, %v1856
        %v1858 = vpop.f32.mrf.mxu0
        %v1859 = vpop.f32.mrf.mxu0
        %v1860 = vpop.f32.mrf.mxu0
        %1861 = vdwg.mxu0
        %v1863 = vsel %vm1097, %v1739, 0
        %v1866 = vsel %vm1097, %v1740, 0
        %v1869 = vsel %vm1753, %v1745, 0
        %1871 = vmatprep.subr.bf16.mxu0 0
        %1872 = vmatpush1.bf16.msra.mxu0 0
        %1873 = vmatprep.subr.bf16.mxu0 0
        %1874 = vmatpush1.bf16.msra.mxu0 0
        %1875 = vmatprep.subr.bf16.mxu0 0
        %1876 = vmatpush1.bf16.msra.mxu0 0
        %1877 = vmatprep.subr.bf16.mxu0 0
        %1878 = vmatpush1.bf16.msra.mxu0 0
        %1879 = vmatprep.subr.bf16.mxu0 0
        %1880 = vmatpush1.bf16.msra.mxu0 0
        %1881 = vmatprep.subr.bf16.mxu0 0
        %1882 = vmatpush1.bf16.msra.mxu0 0
        %1883 = vmatprep.subr.bf16.mxu0 0
        %1884 = vmatpush1.bf16.msra.mxu0 0
        %1885 = vmatprep.subr.bf16.mxu0 0
        %1886 = vmatpush1.bf16.msra.mxu0 %v1869
        %1887 = vmatprep.subr.bf16.mxu0 0
        %1888 = vmatpush2.bf16.msra.mxu0 0
        %1889 = vmatprep.subr.bf16.mxu0 0
        %1890 = vmatpush2.bf16.msra.mxu0 0
        %1891 = vmatprep.subr.bf16.mxu0 0
        %1892 = vmatpush2.bf16.msra.mxu0 0
        %1893 = vmatprep.subr.bf16.mxu0 0
        %1894 = vmatpush2.bf16.msra.mxu0 0
        %1895 = vmatprep.subr.bf16.mxu0 0
        %1896 = vmatpush2.bf16.msra.mxu0 0
        %1897 = vmatprep.subr.bf16.mxu0 0
        %1898 = vmatpush2.bf16.msra.mxu0 0
        %1899 = vmatprep.subr.bf16.mxu0 0
        %1900 = vmatpush2.bf16.msra.mxu0 0
        %1901 = vmatprep.subr.bf16.mxu0 0
        %1902 = vmatpush2.bf16.msra.mxu0 0
        %1903 = vmatprep.mubr.bf16.mxu0 0
        %1904 = vmatmul.mubr.bf16.gmra.mxu0 %v1863
        %v1905 = vpop.f32.mrf.mxu0
        %v1906 = vadd.f32 0.0, %v1905
        %v1907 = vpop.f32.mrf.mxu0
        %v1908 = vpop.f32.mrf.mxu0
        %v1909 = vadd.f32 0.0, %v1908
        %v1910 = vpop.f32.mrf.mxu0
        %1911 = vmatprep.mubr.bf16.mxu0 0
        %1912 = vmatmul.mubr.bf16.gmra.mxu0 %v1866
        %v1913 = vpop.f32.mrf.mxu0
        %v1914 = vadd.f32 0.0, %v1913
        %v1915 = vpop.f32.mrf.mxu0
        %v1916 = vpop.f32.mrf.mxu0
        %v1917 = vpop.f32.mrf.mxu0
        %1918 = vdwg.mxu0
        %v1920 = vsel %vm1097, %v1741, 0
        %v1923 = vsel %vm1097, %v1742, 0
        %v1926 = vsel %vm1753, %v1746, 0
        %1928 = vmatprep.subr.bf16.mxu0 0
        %1929 = vmatpush1.bf16.msra.mxu0 0
        %1930 = vmatprep.subr.bf16.mxu0 0
        %1931 = vmatpush1.bf16.msra.mxu0 0
        %1932 = vmatprep.subr.bf16.mxu0 0
        %1933 = vmatpush1.bf16.msra.mxu0 0
        %1934 = vmatprep.subr.bf16.mxu0 0
        %1935 = vmatpush1.bf16.msra.mxu0 0
        %1936 = vmatprep.subr.bf16.mxu0 0
        %1937 = vmatpush1.bf16.msra.mxu0 0
        %1938 = vmatprep.subr.bf16.mxu0 0
        %1939 = vmatpush1.bf16.msra.mxu0 0
        %1940 = vmatprep.subr.bf16.mxu0 0
        %1941 = vmatpush1.bf16.msra.mxu0 0
        %1942 = vmatprep.subr.bf16.mxu0 0
        %1943 = vmatpush1.bf16.msra.mxu0 %v1926
        %1944 = vmatprep.subr.bf16.mxu0 0
        %1945 = vmatpush2.bf16.msra.mxu0 0
        %1946 = vmatprep.subr.bf16.mxu0 0
        %1947 = vmatpush2.bf16.msra.mxu0 0
        %1948 = vmatprep.subr.bf16.mxu0 0
        %1949 = vmatpush2.bf16.msra.mxu0 0
        %1950 = vmatprep.subr.bf16.mxu0 0
        %1951 = vmatpush2.bf16.msra.mxu0 0
        %1952 = vmatprep.subr.bf16.mxu0 0
        %1953 = vmatpush2.bf16.msra.mxu0 0
        %1954 = vmatprep.subr.bf16.mxu0 0
        %1955 = vmatpush2.bf16.msra.mxu0 0
        %1956 = vmatprep.subr.bf16.mxu0 0
        %1957 = vmatpush2.bf16.msra.mxu0 0
        %1958 = vmatprep.subr.bf16.mxu0 0
        %1959 = vmatpush2.bf16.msra.mxu0 0
        %1960 = vmatprep.mubr.bf16.mxu0 0
        %1961 = vmatmul.mubr.bf16.gmra.mxu0 %v1920
        %v1962 = vpop.f32.mrf.mxu0
        %v1963 = vadd.f32 0.0, %v1962
        %v1964 = vpop.f32.mrf.mxu0
        %v1965 = vpop.f32.mrf.mxu0
        %v1966 = vadd.f32 0.0, %v1965
        %v1967 = vpop.f32.mrf.mxu0
        %1968 = vmatprep.mubr.bf16.mxu0 0
        %1969 = vmatmul.mubr.bf16.gmra.mxu0 %v1923
        %v1970 = vpop.f32.mrf.mxu0
        %v1971 = vadd.f32 0.0, %v1970
        %v1972 = vpop.f32.mrf.mxu0
        %v1973 = vpop.f32.mrf.mxu0
        %v1974 = vpop.f32.mrf.mxu0
        %1975 = vdwg.mxu0
        %v1976 = vsel %vm316, %v1792, 0.0
        %v1977 = vsel %vm316, %v1849, 0.0
        %v1978 = vadd.f32 %v1976, %v1977
        %v1979 = vsel %vm316, %v1906, 0.0
        %v1980 = vadd.f32 %v1978, %v1979
        %v1981 = vsel %vm316, %v1963, 0.0
        %v1982 = vadd.f32 %v1980, %v1981
        %v1983 = vsel %vm316, %v1795, 0.0
        %v1984 = vsel %vm316, %v1852, 0.0
        %v1985 = vadd.f32 %v1983, %v1984
        %v1986 = vsel %vm316, %v1909, 0.0
        %v1987 = vadd.f32 %v1985, %v1986
        %v1988 = vsel %vm316, %v1966, 0.0
        %v1989 = vadd.f32 %v1987, %v1988
        %v1990 = vsel %vm310, %v1800, 0.0
        %v1991 = vsel %vm310, %v1857, 0.0
        %v1992 = vadd.f32 %v1990, %v1991
        %v1993 = vsel %vm310, %v1914, 0.0
        %v1994 = vadd.f32 %v1992, %v1993
        %v1995 = vsel %vm310, %v1971, 0.0
        %v1996 = vadd.f32 %v1994, %v1995
        %v1997 = vld [vmem:[%s5 + $0x3] sm:$0x1]
        %v1998 = vlaneseq
        %v1999 = vshrl.u32 %v1998, 7
        %v2000 = vsub.s32 0, %v1999
        %v2001 = vrot.slane %v1997, %v2000
        %v2002 = vadd.f32 %v1982, %v2001
        %v2003 = vadd.f32 %v1989, %v2001
        %v2004 = vadd.f32 %v1996, %v2001
        %v2005 = vadd.f32 %v319, %v2002
        %v2006 = vadd.f32 %v320, %v2003
        %v2007 = vadd.f32 %v321, %v2004
        %v2008 = vld [vmem:[%s5 + $0x4] sm:$0x1]
        %v2009 = vld [vmem:[%s5 + $0x5] sm:$0x1]
        %v2010 = vsel %vm316, %v2005, 0.0
        %2011 = vadd.xlane.f32.xlu0 %v2010
        %v2012 = vpop.xlane.xlu0 %2011
        %v2013 = vsel %vm316, %v2006, 0.0
        %2014 = vadd.xlane.f32.xlu0 %v2013
        %v2015 = vpop.xlane.xlu0 %2014
        %v2016 = vsel %vm310, %v2007, 0.0
        %2017 = vadd.xlane.f32.xlu0 %v2016
        %v2018 = vpop.xlane.xlu0 %2017
        %v2019 = vmul.f32 %v2012, %v333
        %v2020 = vmul.f32 %v2015, %v333
        %v2021 = vmul.f32 %v2018, %v333
        %v2022 = vmul.f32 %v2005, %v2005
        %v2023 = vmul.f32 %v2006, %v2006
        %v2024 = vmul.f32 %v2007, %v2007
        %v2025 = vsel %vm316, %v2022, 0.0
        %2026 = vadd.xlane.f32.xlu0 %v2025
        %v2027 = vpop.xlane.xlu0 %2026
        %v2028 = vsel %vm316, %v2023, 0.0
        %2029 = vadd.xlane.f32.xlu0 %v2028
        %v2030 = vpop.xlane.xlu0 %2029
        %v2031 = vsel %vm310, %v2024, 0.0
        %2032 = vadd.xlane.f32.xlu0 %v2031
        %v2033 = vpop.xlane.xlu0 %2032
        %v2034 = vmul.f32 %v2027, %v333
        %v2035 = vmul.f32 %v2030, %v333
        %v2036 = vmul.f32 %v2033, %v333
        %v2037 = vmul.f32 %v2019, %v2019
        %v2038 = vmul.f32 %v2020, %v2020
        %v2039 = vmul.f32 %v2021, %v2021
        %v2040 = vsub.f32 %v2034, %v2037
        %v2041 = vsub.f32 %v2035, %v2038
        %v2042 = vsub.f32 %v2036, %v2039
        %v2043 = vsub.f32 %v2005, %v2019
        %v2044 = vsub.f32 %v2006, %v2020
        %v2045 = vsub.f32 %v2007, %v2021
        %v2046 = vadd.f32 %v2040, 1e-05
        %v2047 = vadd.f32 %v2041, 1e-05
        %v2048 = vadd.f32 %v2042, 1e-05
        %v2049 = vrsqrt.pop %v2046
        %v2050 = vrsqrt.pop %v2047
        %v2051 = vrsqrt.pop %v2048
        %v2052 = vmul.f32 %v2043, %v2049
        %v2053 = vmul.f32 %v2044, %v2050
        %v2054 = vmul.f32 %v2045, %v2051
        %v2055 = vlaneseq
        %v2056 = vshrl.u32 %v2055, 7
        %v2057 = vsub.s32 0, %v2056
        %v2058 = vrot.slane %v2008, %v2057
        %v2059 = vmul.f32 %v2052, %v2058
        %v2060 = vmul.f32 %v2053, %v2058
        %v2061 = vmul.f32 %v2054, %v2058
        %v2062 = vlaneseq
        %v2063 = vshrl.u32 %v2062, 7
        %v2064 = vsub.s32 0, %v2063
        %v2065 = vrot.slane %v2009, %v2064
        %v2066 = vadd.f32 %v2059, %v2065
        %v2067 = vadd.f32 %v2060, %v2065
        %v2068 = vadd.f32 %v2061, %v2065
        %v2069 = vld [vmem:[%s3 + $0x10] sm:$0xff]
        %v2070 = vld [vmem:[%s3 + $0x30] sm:$0xff]
        %v2071 = vld [vmem:[%s3 + $0x50] sm:$0xff]
        %v2072 = vld [vmem:[%s3 + $0x70] sm:$0xff]
        %v2073 = vpack.c.bf16 %v2067, %v2066
        %v2074 = vpack.c.bf16 %v2068, %v2068
        %v2075 = vpack.c.bf16 %v2070, %v2069
        %v2076 = vpack.c.bf16 %v2072, %v2071
        %v2077 = vld [vmem:[%s5 + $0x6] sm:$0x1]
        %v2078 = vlaneseq
        %v2079 = vshrl.u32 %v2078, 7
        %v2080 = vsub.s32 0, %v2079
        %v2081 = vrot.slane %v2077, %v2080
        %2084 = vrot.lane.b32.xlu0 %v2075, 96
        %v2085 = vpop.permute.xlu0 %2084
        %2086 = vrot.lane.b32.xlu0 %v2076, 96
        %v2087 = vpop.permute.xlu0 %2086
        %v2091 = vsel %vm316, %v2073, 0
        %v2094 = vsel %vm316, %v2074, 0
        %2096 = vmatprep.subr.bf16.mxu0 0
        %2097 = vmatpush1.bf16.msra.mxu0 0
        %2098 = vmatprep.subr.bf16.mxu0 0
        %2099 = vmatpush1.bf16.msra.mxu0 0
        %2100 = vmatprep.subr.bf16.mxu0 0
        %2101 = vmatpush1.bf16.msra.mxu0 0
        %2102 = vmatprep.subr.bf16.mxu0 0
        %2103 = vmatpush1.bf16.msra.mxu0 0
        %2104 = vmatprep.subr.bf16.mxu0 0
        %2105 = vmatpush1.bf16.msra.mxu0 0
        %2106 = vmatprep.subr.bf16.mxu0 0
        %2107 = vmatpush1.bf16.msra.mxu0 0
        %2108 = vmatprep.subr.bf16.mxu0 0
        %2109 = vmatpush1.bf16.msra.mxu0 %v2087
        %2110 = vmatprep.subr.bf16.mxu0 0
        %2111 = vmatpush1.bf16.msra.mxu0 %v2085
        %2112 = vmatprep.subr.bf16.mxu0 0
        %2113 = vmatpush2.bf16.msra.mxu0 0
        %2114 = vmatprep.subr.bf16.mxu0 0
        %2115 = vmatpush2.bf16.msra.mxu0 0
        %2116 = vmatprep.subr.bf16.mxu0 0
        %2117 = vmatpush2.bf16.msra.mxu0 0
        %2118 = vmatprep.subr.bf16.mxu0 0
        %2119 = vmatpush2.bf16.msra.mxu0 0
        %2120 = vmatprep.subr.bf16.mxu0 0
        %2121 = vmatpush2.bf16.msra.mxu0 0
        %2122 = vmatprep.subr.bf16.mxu0 0
        %2123 = vmatpush2.bf16.msra.mxu0 0
        %2124 = vmatprep.subr.bf16.mxu0 0
        %2125 = vmatpush2.bf16.msra.mxu0 0
        %2126 = vmatprep.subr.bf16.mxu0 0
        %2127 = vmatpush2.bf16.msra.mxu0 0
        %2128 = vmatprep.mubr.bf16.mxu0 0
        %2129 = vmatmul.mubr.bf16.gmra.mxu0 %v2091
        %v2130 = vpop.f32.mrf.mxu0
        %v2131 = vadd.f32 %v2081, %v2130
        %v2132 = vpop.f32.mrf.mxu0
        %v2133 = vpop.f32.mrf.mxu0
        %v2134 = vadd.f32 %v2081, %v2133
        %v2135 = vpop.f32.mrf.mxu0
        %2136 = vmatprep.mubr.bf16.mxu0 0
        %2137 = vmatmul.mubr.bf16.gmra.mxu0 %v2094
        %v2138 = vpop.f32.mrf.mxu0
        %v2139 = vadd.f32 %v2081, %v2138
        %v2140 = vpop.f32.mrf.mxu0
        %v2141 = vpop.f32.mrf.mxu0
        %v2142 = vpop.f32.mrf.mxu0
        %2143 = vdwg.mxu0
        %v2144 = vmul.f32 %v2131, %v2131
        %v2145 = vmul.f32 %v2134, %v2134
        %v2146 = vmul.f32 %v2139, %v2139
        %v2147 = vmul.f32 %v2131, %v2144
        %v2148 = vmul.f32 %v2134, %v2145
        %v2149 = vmul.f32 %v2139, %v2146
        %v2150 = vmul.f32 %v2147, 0.044715
        %v2151 = vmul.f32 %v2148, 0.044715
        %v2152 = vmul.f32 %v2149, 0.044715
        %v2153 = vadd.f32 %v2131, %v2150
        %v2154 = vadd.f32 %v2134, %v2151
        %v2155 = vadd.f32 %v2139, %v2152
        %v2156 = vmul.f32 %v2153, 0.7978846
        %v2157 = vmul.f32 %v2154, 0.7978846
        %v2158 = vmul.f32 %v2155, 0.7978846
        %v2159 = vtanh.pop %v2156
        %v2160 = vtanh.pop %v2157
        %v2161 = vtanh.pop %v2158
        %v2162 = vadd.f32 %v2159, 1.0
        %v2163 = vadd.f32 %v2160, 1.0
        %v2164 = vadd.f32 %v2161, 1.0
        %v2165 = vmul.f32 %v2162, 0.5
        %v2166 = vmul.f32 %v2163, 0.5
        %v2167 = vmul.f32 %v2164, 0.5
        %v2168 = vmul.f32 %v2131, %v2165
        %v2169 = vmul.f32 %v2134, %v2166
        %v2170 = vmul.f32 %v2139, %v2167
        %v2171 = vld [vmem:[%s4 + $0x50] sm:$0xff]
        %v2172 = vld [vmem:[%s4 + $0x58] sm:$0xff]
        %v2173 = vld [vmem:[%s4 + $0x60] sm:$0xff]
        %v2174 = vld [vmem:[%s4 + $0x68] sm:$0xff]
        %v2175 = vld [vmem:[%s4 + $0x70] sm:$0xff]
        %v2176 = vld [vmem:[%s4 + $0x78] sm:$0xff]
        %v2177 = vld [vmem:[%s4 + $0x80] sm:$0xff]
        %v2178 = vld [vmem:[%s4 + $0x88] sm:$0xff]
        %v2179 = vpack.c.bf16 %v2169, %v2168
        %v2180 = vpack.c.bf16 %v2170, %v2170
        %v2181 = vpack.c.bf16 %v2172, %v2171
        %v2182 = vpack.c.bf16 %v2174, %v2173
        %v2183 = vpack.c.bf16 %v2176, %v2175
        %v2184 = vpack.c.bf16 %v2178, %v2177
        %vm2185 = vcmask 523264
        %v2187 = vsel %vm2185, %v2179, 0
        %v2190 = vsel %vm2185, %v2180, 0
        %2192 = vmatprep.subr.bf16.mxu0 0
        %2193 = vmatpush1.bf16.msra.mxu0 0
        %2194 = vmatprep.subr.bf16.mxu0 0
        %2195 = vmatpush1.bf16.msra.mxu0 0
        %2196 = vmatprep.subr.bf16.mxu0 0
        %2197 = vmatpush1.bf16.msra.mxu0 0
        %2198 = vmatprep.subr.bf16.mxu0 0
        %2199 = vmatpush1.bf16.msra.mxu0 0
        %2200 = vmatprep.subr.bf16.mxu0 0
        %2201 = vmatpush1.bf16.msra.mxu0 %v2184
        %2202 = vmatprep.subr.bf16.mxu0 0
        %2203 = vmatpush1.bf16.msra.mxu0 %v2183
        %2204 = vmatprep.subr.bf16.mxu0 0
        %2205 = vmatpush1.bf16.msra.mxu0 %v2182
        %2206 = vmatprep.subr.bf16.mxu0 0
        %2207 = vmatpush1.bf16.msra.mxu0 %v2181
        %2208 = vmatprep.subr.bf16.mxu0 0
        %2209 = vmatpush2.bf16.msra.mxu0 0
        %2210 = vmatprep.subr.bf16.mxu0 0
        %2211 = vmatpush2.bf16.msra.mxu0 0
        %2212 = vmatprep.subr.bf16.mxu0 0
        %2213 = vmatpush2.bf16.msra.mxu0 0
        %2214 = vmatprep.subr.bf16.mxu0 0
        %2215 = vmatpush2.bf16.msra.mxu0 0
        %2216 = vmatprep.subr.bf16.mxu0 0
        %2217 = vmatpush2.bf16.msra.mxu0 0
        %2218 = vmatprep.subr.bf16.mxu0 0
        %2219 = vmatpush2.bf16.msra.mxu0 0
        %2220 = vmatprep.subr.bf16.mxu0 0
        %2221 = vmatpush2.bf16.msra.mxu0 0
        %2222 = vmatprep.subr.bf16.mxu0 0
        %2223 = vmatpush2.bf16.msra.mxu0 0
        %2224 = vmatprep.mubr.bf16.mxu0 0
        %2225 = vmatmul.mubr.bf16.gmra.mxu0 %v2187
        %v2226 = vpop.f32.mrf.mxu0
        %v2227 = vadd.f32 0.0, %v2226
        %v2228 = vpop.f32.mrf.mxu0
        %v2229 = vpop.f32.mrf.mxu0
        %v2230 = vadd.f32 0.0, %v2229
        %v2231 = vpop.f32.mrf.mxu0
        %2232 = vmatprep.mubr.bf16.mxu0 0
        %2233 = vmatmul.mubr.bf16.gmra.mxu0 %v2190
        %v2234 = vpop.f32.mrf.mxu0
        %v2235 = vadd.f32 0.0, %v2234
        %v2236 = vpop.f32.mrf.mxu0
        %v2237 = vpop.f32.mrf.mxu0
        %v2238 = vpop.f32.mrf.mxu0
        %2239 = vdwg.mxu0
        %v2240 = vadd.f32 %v2005, %v2227
        %v2241 = vadd.f32 %v2006, %v2230
        %v2242 = vadd.f32 %v2007, %v2235
        %v2243 = vld [vmem:[%s5 + $0x7] sm:$0x1]
        %v2244 = vlaneseq
        %v2245 = vshrl.u32 %v2244, 7
        %v2246 = vsub.s32 0, %v2245
        %v2247 = vrot.slane %v2243, %v2246
        %v2248 = vadd.f32 %v2240, %v2247
        %v2249 = vadd.f32 %v2241, %v2247
        %v2250 = vadd.f32 %v2242, %v2247
        %v2251 = vld [vmem:[%s5 + $0x8] sm:$0x1]
        %v2252 = vld [vmem:[%s5 + $0x9] sm:$0x1]
        %v2253 = vsel %vm316, %v2248, 0.0
        %2254 = vadd.xlane.f32.xlu0 %v2253
        %v2255 = vpop.xlane.xlu0 %2254
        %v2256 = vsel %vm316, %v2249, 0.0
        %2257 = vadd.xlane.f32.xlu0 %v2256
        %v2258 = vpop.xlane.xlu0 %2257
        %v2259 = vsel %vm310, %v2250, 0.0
        %2260 = vadd.xlane.f32.xlu0 %v2259
        %v2261 = vpop.xlane.xlu0 %2260
        %v2262 = vmul.f32 %v2255, %v333
        %v2263 = vmul.f32 %v2258, %v333
        %v2264 = vmul.f32 %v2261, %v333
        %v2265 = vmul.f32 %v2248, %v2248
        %v2266 = vmul.f32 %v2249, %v2249
        %v2267 = vmul.f32 %v2250, %v2250
        %v2268 = vsel %vm316, %v2265, 0.0
        %2269 = vadd.xlane.f32.xlu0 %v2268
        %v2270 = vpop.xlane.xlu0 %2269
        %v2271 = vsel %vm316, %v2266, 0.0
        %2272 = vadd.xlane.f32.xlu0 %v2271
        %v2273 = vpop.xlane.xlu0 %2272
        %v2274 = vsel %vm310, %v2267, 0.0
        %2275 = vadd.xlane.f32.xlu0 %v2274
        %v2276 = vpop.xlane.xlu0 %2275
        %v2277 = vmul.f32 %v2270, %v333
        %v2278 = vmul.f32 %v2273, %v333
        %v2279 = vmul.f32 %v2276, %v333
        %v2280 = vmul.f32 %v2262, %v2262
        %v2281 = vmul.f32 %v2263, %v2263
        %v2282 = vmul.f32 %v2264, %v2264
        %v2283 = vsub.f32 %v2277, %v2280
        %v2284 = vsub.f32 %v2278, %v2281
        %v2285 = vsub.f32 %v2279, %v2282
        %v2286 = vsub.f32 %v2248, %v2262
        %v2287 = vsub.f32 %v2249, %v2263
        %v2288 = vsub.f32 %v2250, %v2264
        %v2289 = vadd.f32 %v2283, 1e-05
        %v2290 = vadd.f32 %v2284, 1e-05
        %v2291 = vadd.f32 %v2285, 1e-05
        %v2292 = vrsqrt.pop %v2289
        %v2293 = vrsqrt.pop %v2290
        %v2294 = vrsqrt.pop %v2291
        %v2295 = vmul.f32 %v2286, %v2292
        %v2296 = vmul.f32 %v2287, %v2293
        %v2297 = vmul.f32 %v2288, %v2294
        %v2298 = vlaneseq
        %v2299 = vshrl.u32 %v2298, 7
        %v2300 = vsub.s32 0, %v2299
        %v2301 = vrot.slane %v2251, %v2300
        %v2302 = vmul.f32 %v2295, %v2301
        %v2303 = vmul.f32 %v2296, %v2301
        %v2304 = vmul.f32 %v2297, %v2301
        %v2305 = vlaneseq
        %v2306 = vshrl.u32 %v2305, 7
        %v2307 = vsub.s32 0, %v2306
        %v2308 = vrot.slane %v2252, %v2307
        %v2309 = vadd.f32 %v2302, %v2308
        %v2310 = vadd.f32 %v2303, %v2308
        %v2311 = vadd.f32 %v2304, %v2308
        %v2312 = vld [vmem:[%s4 + $0x178] sm:$0xf]
        %vm2313 = vcmask 257024
        %2314 = vst.msk [vmem:[#allocation3] sm:$0xf] %vm2313, %v2312
        %2315 = vst.msk [vmem:[#allocation3 + $0x4] sm:$0xff] %vm316, %v2309
        %2316 = vst.msk [vmem:[#allocation3 + $0xc] sm:$0xff] %vm316, %v2310
        %2317 = vst.msk [vmem:[#allocation3 + $0x14] sm:$0x1] %vm310, %v2311
        %v2318 = vld [vmem:[#allocation3] sm:$0xff]
        %v2319 = vld [vmem:[#allocation3 + $0x8] sm:$0xff]
        %v2320 = vld [vmem:[#allocation3 + $0x10] sm:$0x1f]
        %s2321 = smul.u32 %s26, 128
        %s2322 = sld [smem:[#allocation6 + %s2321]]
        %s2323 = sadd.s32 %s2322, 272
        %s2324 = scalar_lea.vmem %s4, %s2323
        %v2325 = vld [vmem:[%s2324] sm:$0x1]
        %v2326 = vld [vmem:[%s4 + $0x150] sm:$0x1]
        %v2327 = vadd.f32 %v2325, %v2326
        %2328 = vst.msk [vmem:[#allocation4] sm:$0x1] %vm310, %v2327
        %s2329 = sadd.s32 %s2321, 1
        %s2330 = sld [smem:[#allocation6 + %s2329]]
        %s2331 = sadd.s32 %s2330, 272
        %s2332 = scalar_lea.vmem %s4, %s2331
        %v2333 = vld [vmem:[%s2332] sm:$0x1]
        %v2334 = vld [vmem:[%s4 + $0x151] sm:$0x1]
        %v2335 = vadd.f32 %v2333, %v2334
        %2336 = vst.msk [vmem:[#allocation4 + $0x1] sm:$0x1] %vm310, %v2335
        %s2337 = sadd.s32 %s2321, 2
        %s2338 = sld [smem:[#allocation6 + %s2337]]
        %s2339 = sadd.s32 %s2338, 272
        %s2340 = scalar_lea.vmem %s4, %s2339
        %v2341 = vld [vmem:[%s2340] sm:$0x1]
        %v2342 = vld [vmem:[%s4 + $0x152] sm:$0x1]
        %v2343 = vadd.f32 %v2341, %v2342
        %2344 = vst.msk [vmem:[#allocation4 + $0x2] sm:$0x1] %vm310, %v2343
        %s2345 = sadd.s32 %s2321, 3
        %s2346 = sld [smem:[#allocation6 + %s2345]]
        %s2347 = sadd.s32 %s2346, 272
        %s2348 = scalar_lea.vmem %s4, %s2347
        %v2349 = vld [vmem:[%s2348] sm:$0x1]
        %v2350 = vld [vmem:[%s4 + $0x153] sm:$0x1]
        %v2351 = vadd.f32 %v2349, %v2350
        %2352 = vst.msk [vmem:[#allocation4 + $0x3] sm:$0x1] %vm310, %v2351
        %s2353 = sadd.s32 %s2321, 4
        %s2354 = sld [smem:[#allocation6 + %s2353]]
        %s2355 = sadd.s32 %s2354, 272
        %s2356 = scalar_lea.vmem %s4, %s2355
        %v2357 = vld [vmem:[%s2356] sm:$0x1]
        %v2358 = vld [vmem:[%s4 + $0x154] sm:$0x1]
        %v2359 = vadd.f32 %v2357, %v2358
        %2360 = vst.msk [vmem:[#allocation4 + $0x4] sm:$0x1] %vm310, %v2359
        %s2361 = sadd.s32 %s2321, 5
        %s2362 = sld [smem:[#allocation6 + %s2361]]
        %s2363 = sadd.s32 %s2362, 272
        %s2364 = scalar_lea.vmem %s4, %s2363
        %v2365 = vld [vmem:[%s2364] sm:$0x1]
        %v2366 = vld [vmem:[%s4 + $0x155] sm:$0x1]
        %v2367 = vadd.f32 %v2365, %v2366
        %2368 = vst.msk [vmem:[#allocation4 + $0x5] sm:$0x1] %vm310, %v2367
        %s2369 = sadd.s32 %s2321, 6
        %s2370 = sld [smem:[#allocation6 + %s2369]]
        %s2371 = sadd.s32 %s2370, 272
        %s2372 = scalar_lea.vmem %s4, %s2371
        %v2373 = vld [vmem:[%s2372] sm:$0x1]
        %v2374 = vld [vmem:[%s4 + $0x156] sm:$0x1]
        %v2375 = vadd.f32 %v2373, %v2374
        %2376 = vst.msk [vmem:[#allocation4 + $0x6] sm:$0x1] %vm310, %v2375
        %s2377 = sadd.s32 %s2321, 7
        %s2378 = sld [smem:[#allocation6 + %s2377]]
        %s2379 = sadd.s32 %s2378, 272
        %s2380 = scalar_lea.vmem %s4, %s2379
        %v2381 = vld [vmem:[%s2380] sm:$0x1]
        %v2382 = vld [vmem:[%s4 + $0x157] sm:$0x1]
        %v2383 = vadd.f32 %v2381, %v2382
        %2384 = vst.msk [vmem:[#allocation4 + $0x7] sm:$0x1] %vm310, %v2383
        %v2385 = vld [vmem:[#allocation4] sm:$0xff]
        %v2386 = vlaneseq
        %v2387 = vshrl.u32 %v2386, 7
        %v2388 = vlaneseq
        %v2389 = vand.u32 %v2388, 127
        %vm2390 = vcmp.le.s32.totalorder %v2389, %v2387
        %v2391 = vld [vmem:[%s243] sm:$0x1]
        %vm2392 = vcmp.gt.f32.partialorder %v2391, 0.5
        %v2393 = vsel %vm2392, 1, 0
        %v2394 = vlaneseq
        %v2395 = vshrl.u32 %v2394, 7
        %v2396 = vsub.s32 0, %v2395
        %v2397 = vrot.slane %v2393, %v2396
        %vm2398 = vcmp.eq.s32.totalorder %v2397, 1
        %vm2399 = vmand %vm2390, %vm2398
        %v2400 = vsel %vm2399, 0.0, -1e+09
        %v2401 = vld [vmem:[%s5 + $0xb] sm:$0x1]
        %v2402 = vld [vmem:[%s5 + $0xc] sm:$0x1]
        %v2403 = vsel %vm316, %v2385, 0.0
        %2404 = vadd.xlane.f32.xlu0 %v2403
        %v2405 = vpop.xlane.xlu0 %2404
        %v2406 = vmul.f32 %v2405, %v333
        %v2407 = vmul.f32 %v2385, %v2385
        %v2408 = vsel %vm316, %v2407, 0.0
        %2409 = vadd.xlane.f32.xlu0 %v2408
        %v2410 = vpop.xlane.xlu0 %2409
        %v2411 = vmul.f32 %v2410, %v333
        %v2412 = vmul.f32 %v2406, %v2406
        %v2413 = vsub.f32 %v2411, %v2412
        %v2414 = vsub.f32 %v2385, %v2406
        %v2415 = vadd.f32 %v2413, 1e-05
        %v2416 = vrsqrt.pop %v2415
        %v2417 = vmul.f32 %v2414, %v2416
        %v2418 = vlaneseq
        %v2419 = vshrl.u32 %v2418, 7
        %v2420 = vsub.s32 0, %v2419
        %v2421 = vrot.slane %v2401, %v2420
        %v2422 = vmul.f32 %v2417, %v2421
        %v2423 = vlaneseq
        %v2424 = vshrl.u32 %v2423, 7
        %v2425 = vsub.s32 0, %v2424
        %v2426 = vrot.slane %v2402, %v2425
        %v2427 = vadd.f32 %v2422, %v2426
        %v2428 = vpack.c.bf16 %v2427, %v2427
        %v2429 = vld [vmem:[%s3] sm:$0xff]
        %v2430 = vld [vmem:[%s3 + $0x20] sm:$0xff]
        %v2431 = vld [vmem:[%s3 + $0x40] sm:$0xff]
        %v2432 = vld [vmem:[%s3 + $0x60] sm:$0xff]
        %v2433 = vld [vmem:[%s5 + $0xd] sm:$0x1]
        %v2434 = vpack.c.bf16 %v2430, %v2429
        %v2435 = vpack.c.bf16 %v2432, %v2431
        %v2436 = vlaneseq
        %v2437 = vshrl.u32 %v2436, 7
        %v2438 = vsub.s32 0, %v2437
        %v2439 = vrot.slane %v2433, %v2438
        %2442 = vrot.lane.b32.xlu0 %v2434, 32
        %v2443 = vpop.permute.xlu0 %2442
        %2444 = vrot.lane.b32.xlu0 %v2435, 32
        %v2445 = vpop.permute.xlu0 %2444
        %v2449 = vsel %vm316, %v2428, 0
        %2451 = vmatprep.subr.bf16.mxu0 0
        %2452 = vmatpush1.bf16.msra.mxu0 0
        %2453 = vmatprep.subr.bf16.mxu0 0
        %2454 = vmatpush1.bf16.msra.mxu0 0
        %2455 = vmatprep.subr.bf16.mxu0 0
        %2456 = vmatpush1.bf16.msra.mxu0 0
        %2457 = vmatprep.subr.bf16.mxu0 0
        %2458 = vmatpush1.bf16.msra.mxu0 0
        %2459 = vmatprep.subr.bf16.mxu0 0
        %2460 = vmatpush1.bf16.msra.mxu0 0
        %2461 = vmatprep.subr.bf16.mxu0 0
        %2462 = vmatpush1.bf16.msra.mxu0 0
        %2463 = vmatprep.subr.bf16.mxu0 0
        %2464 = vmatpush1.bf16.msra.mxu0 %v2445
        %2465 = vmatprep.subr.bf16.mxu0 0
        %2466 = vmatpush1.bf16.msra.mxu0 %v2443
        %2467 = vmatprep.subr.bf16.mxu0 0
        %2468 = vmatpush2.bf16.msra.mxu0 0
        %2469 = vmatprep.subr.bf16.mxu0 0
        %2470 = vmatpush2.bf16.msra.mxu0 0
        %2471 = vmatprep.subr.bf16.mxu0 0
        %2472 = vmatpush2.bf16.msra.mxu0 0
        %2473 = vmatprep.subr.bf16.mxu0 0
        %2474 = vmatpush2.bf16.msra.mxu0 0
        %2475 = vmatprep.subr.bf16.mxu0 0
        %2476 = vmatpush2.bf16.msra.mxu0 0
        %2477 = vmatprep.subr.bf16.mxu0 0
        %2478 = vmatpush2.bf16.msra.mxu0 0
        %2479 = vmatprep.subr.bf16.mxu0 0
        %2480 = vmatpush2.bf16.msra.mxu0 0
        %2481 = vmatprep.subr.bf16.mxu0 0
        %2482 = vmatpush2.bf16.msra.mxu0 0
        %2483 = vmatprep.mubr.bf16.mxu0 0
        %2484 = vmatmul.mubr.bf16.gmra.mxu0 %v2449
        %v2485 = vpop.f32.mrf.mxu0
        %v2486 = vadd.f32 %v2439, %v2485
        %v2487 = vpop.f32.mrf.mxu0
        %v2488 = vpop.f32.mrf.mxu0
        %v2489 = vpop.f32.mrf.mxu0
        %2490 = vdwg.mxu0
        %2491 = vrot.lane.b32.xlu0 %v2434, 24
        %v2492 = vpop.permute.xlu0 %2491
        %2493 = vrot.lane.b32.xlu0 %v2435, 24
        %v2494 = vpop.permute.xlu0 %2493
        %2498 = vrot.lane.b32.xlu0 %v2439, 120
        %v2499 = vpop.permute.xlu0 %2498
        %2501 = vmatprep.subr.bf16.mxu0 0
        %2502 = vmatpush1.bf16.msra.mxu0 0
        %2503 = vmatprep.subr.bf16.mxu0 0
        %2504 = vmatpush1.bf16.msra.mxu0 0
        %2505 = vmatprep.subr.bf16.mxu0 0
        %2506 = vmatpush1.bf16.msra.mxu0 0
        %2507 = vmatprep.subr.bf16.mxu0 0
        %2508 = vmatpush1.bf16.msra.mxu0 0
        %2509 = vmatprep.subr.bf16.mxu0 0
        %2510 = vmatpush1.bf16.msra.mxu0 0
        %2511 = vmatprep.subr.bf16.mxu0 0
        %2512 = vmatpush1.bf16.msra.mxu0 0
        %2513 = vmatprep.subr.bf16.mxu0 0
        %2514 = vmatpush1.bf16.msra.mxu0 %v2494
        %2515 = vmatprep.subr.bf16.mxu0 0
        %2516 = vmatpush1.bf16.msra.mxu0 %v2492
        %2517 = vmatprep.subr.bf16.mxu0 0
        %2518 = vmatpush2.bf16.msra.mxu0 0
        %2519 = vmatprep.subr.bf16.mxu0 0
        %2520 = vmatpush2.bf16.msra.mxu0 0
        %2521 = vmatprep.subr.bf16.mxu0 0
        %2522 = vmatpush2.bf16.msra.mxu0 0
        %2523 = vmatprep.subr.bf16.mxu0 0
        %2524 = vmatpush2.bf16.msra.mxu0 0
        %2525 = vmatprep.subr.bf16.mxu0 0
        %2526 = vmatpush2.bf16.msra.mxu0 0
        %2527 = vmatprep.subr.bf16.mxu0 0
        %2528 = vmatpush2.bf16.msra.mxu0 0
        %2529 = vmatprep.subr.bf16.mxu0 0
        %2530 = vmatpush2.bf16.msra.mxu0 0
        %2531 = vmatprep.subr.bf16.mxu0 0
        %2532 = vmatpush2.bf16.msra.mxu0 0
        %2533 = vmatprep.mubr.bf16.mxu0 0
        %2534 = vmatmul.mubr.bf16.gmra.mxu0 %v2449
        %v2535 = vpop.f32.mrf.mxu0
        %v2536 = vadd.f32 %v2499, %v2535
        %v2537 = vpop.f32.mrf.mxu0
        %v2538 = vpop.f32.mrf.mxu0
        %v2539 = vpop.f32.mrf.mxu0
        %2540 = vdwg.mxu0
        %2541 = vrot.lane.b32.xlu0 %v2434, 16
        %v2542 = vpop.permute.xlu0 %2541
        %2543 = vrot.lane.b32.xlu0 %v2435, 16
        %v2544 = vpop.permute.xlu0 %2543
        %2547 = vrot.lane.b32.xlu0 %v2439, 112
        %v2548 = vpop.permute.xlu0 %2547
        %2550 = vmatprep.subr.bf16.mxu0 0
        %2551 = vmatpush1.bf16.msra.mxu0 0
        %2552 = vmatprep.subr.bf16.mxu0 0
        %2553 = vmatpush1.bf16.msra.mxu0 0
        %2554 = vmatprep.subr.bf16.mxu0 0
        %2555 = vmatpush1.bf16.msra.mxu0 0
        %2556 = vmatprep.subr.bf16.mxu0 0
        %2557 = vmatpush1.bf16.msra.mxu0 0
        %2558 = vmatprep.subr.bf16.mxu0 0
        %2559 = vmatpush1.bf16.msra.mxu0 0
        %2560 = vmatprep.subr.bf16.mxu0 0
        %2561 = vmatpush1.bf16.msra.mxu0 0
        %2562 = vmatprep.subr.bf16.mxu0 0
        %2563 = vmatpush1.bf16.msra.mxu0 %v2544
        %2564 = vmatprep.subr.bf16.mxu0 0
        %2565 = vmatpush1.bf16.msra.mxu0 %v2542
        %2566 = vmatprep.subr.bf16.mxu0 0
        %2567 = vmatpush2.bf16.msra.mxu0 0
        %2568 = vmatprep.subr.bf16.mxu0 0
        %2569 = vmatpush2.bf16.msra.mxu0 0
        %2570 = vmatprep.subr.bf16.mxu0 0
        %2571 = vmatpush2.bf16.msra.mxu0 0
        %2572 = vmatprep.subr.bf16.mxu0 0
        %2573 = vmatpush2.bf16.msra.mxu0 0
        %2574 = vmatprep.subr.bf16.mxu0 0
        %2575 = vmatpush2.bf16.msra.mxu0 0
        %2576 = vmatprep.subr.bf16.mxu0 0
        %2577 = vmatpush2.bf16.msra.mxu0 0
        %2578 = vmatprep.subr.bf16.mxu0 0
        %2579 = vmatpush2.bf16.msra.mxu0 0
        %2580 = vmatprep.subr.bf16.mxu0 0
        %2581 = vmatpush2.bf16.msra.mxu0 0
        %2582 = vmatprep.mubr.bf16.mxu0 0
        %2583 = vmatmul.mubr.bf16.gmra.mxu0 %v2449
        %v2584 = vpop.f32.mrf.mxu0
        %v2585 = vadd.f32 %v2548, %v2584
        %v2586 = vpop.f32.mrf.mxu0
        %v2587 = vpop.f32.mrf.mxu0
        %v2588 = vpop.f32.mrf.mxu0
        %2589 = vdwg.mxu0
        %2590 = vrot.lane.b32.xlu0 %v2434, 8
        %v2591 = vpop.permute.xlu0 %2590
        %2592 = vrot.lane.b32.xlu0 %v2435, 8
        %v2593 = vpop.permute.xlu0 %2592
        %2596 = vrot.lane.b32.xlu0 %v2439, 104
        %v2597 = vpop.permute.xlu0 %2596
        %2599 = vmatprep.subr.bf16.mxu0 0
        %2600 = vmatpush1.bf16.msra.mxu0 0
        %2601 = vmatprep.subr.bf16.mxu0 0
        %2602 = vmatpush1.bf16.msra.mxu0 0
        %2603 = vmatprep.subr.bf16.mxu0 0
        %2604 = vmatpush1.bf16.msra.mxu0 0
        %2605 = vmatprep.subr.bf16.mxu0 0
        %2606 = vmatpush1.bf16.msra.mxu0 0
        %2607 = vmatprep.subr.bf16.mxu0 0
        %2608 = vmatpush1.bf16.msra.mxu0 0
        %2609 = vmatprep.subr.bf16.mxu0 0
        %2610 = vmatpush1.bf16.msra.mxu0 0
        %2611 = vmatprep.subr.bf16.mxu0 0
        %2612 = vmatpush1.bf16.msra.mxu0 %v2593
        %2613 = vmatprep.subr.bf16.mxu0 0
        %2614 = vmatpush1.bf16.msra.mxu0 %v2591
        %2615 = vmatprep.subr.bf16.mxu0 0
        %2616 = vmatpush2.bf16.msra.mxu0 0
        %2617 = vmatprep.subr.bf16.mxu0 0
        %2618 = vmatpush2.bf16.msra.mxu0 0
        %2619 = vmatprep.subr.bf16.mxu0 0
        %2620 = vmatpush2.bf16.msra.mxu0 0
        %2621 = vmatprep.subr.bf16.mxu0 0
        %2622 = vmatpush2.bf16.msra.mxu0 0
        %2623 = vmatprep.subr.bf16.mxu0 0
        %2624 = vmatpush2.bf16.msra.mxu0 0
        %2625 = vmatprep.subr.bf16.mxu0 0
        %2626 = vmatpush2.bf16.msra.mxu0 0
        %2627 = vmatprep.subr.bf16.mxu0 0
        %2628 = vmatpush2.bf16.msra.mxu0 0
        %2629 = vmatprep.subr.bf16.mxu0 0
        %2630 = vmatpush2.bf16.msra.mxu0 0
        %2631 = vmatprep.mubr.bf16.mxu0 0
        %2632 = vmatmul.mubr.bf16.gmra.mxu0 %v2449
        %v2633 = vpop.f32.mrf.mxu0
        %v2634 = vadd.f32 %v2597, %v2633
        %v2635 = vpop.f32.mrf.mxu0
        %v2636 = vpop.f32.mrf.mxu0
        %v2637 = vpop.f32.mrf.mxu0
        %2638 = vdwg.mxu0
        %v2639 = vld [vmem:[%s3 + $0x8] sm:$0xff]
        %v2640 = vld [vmem:[%s3 + $0x28] sm:$0xff]
        %v2641 = vld [vmem:[%s3 + $0x48] sm:$0xff]
        %v2642 = vld [vmem:[%s3 + $0x68] sm:$0xff]
        %v2643 = vpack.c.bf16 %v2640, %v2639
        %v2644 = vpack.c.bf16 %v2642, %v2641
        %2645 = vrot.lane.b32.xlu0 %v2439, 96
        %v2646 = vpop.permute.xlu0 %2645
        %2648 = vmatprep.subr.bf16.mxu0 0
        %2649 = vmatpush1.bf16.msra.mxu0 0
        %2650 = vmatprep.subr.bf16.mxu0 0
        %2651 = vmatpush1.bf16.msra.mxu0 0
        %2652 = vmatprep.subr.bf16.mxu0 0
        %2653 = vmatpush1.bf16.msra.mxu0 0
        %2654 = vmatprep.subr.bf16.mxu0 0
        %2655 = vmatpush1.bf16.msra.mxu0 0
        %2656 = vmatprep.subr.bf16.mxu0 0
        %2657 = vmatpush1.bf16.msra.mxu0 0
        %2658 = vmatprep.subr.bf16.mxu0 0
        %2659 = vmatpush1.bf16.msra.mxu0 0
        %2660 = vmatprep.subr.bf16.mxu0 0
        %2661 = vmatpush1.bf16.msra.mxu0 %v2644
        %2662 = vmatprep.subr.bf16.mxu0 0
        %2663 = vmatpush1.bf16.msra.mxu0 %v2643
        %2664 = vmatprep.subr.bf16.mxu0 0
        %2665 = vmatpush2.bf16.msra.mxu0 0
        %2666 = vmatprep.subr.bf16.mxu0 0
        %2667 = vmatpush2.bf16.msra.mxu0 0
        %2668 = vmatprep.subr.bf16.mxu0 0
        %2669 = vmatpush2.bf16.msra.mxu0 0
        %2670 = vmatprep.subr.bf16.mxu0 0
        %2671 = vmatpush2.bf16.msra.mxu0 0
        %2672 = vmatprep.subr.bf16.mxu0 0
        %2673 = vmatpush2.bf16.msra.mxu0 0
        %2674 = vmatprep.subr.bf16.mxu0 0
        %2675 = vmatpush2.bf16.msra.mxu0 0
        %2676 = vmatprep.subr.bf16.mxu0 0
        %2677 = vmatpush2.bf16.msra.mxu0 0
        %2678 = vmatprep.subr.bf16.mxu0 0
        %2679 = vmatpush2.bf16.msra.mxu0 0
        %2680 = vmatprep.mubr.bf16.mxu0 0
        %2681 = vmatmul.mubr.bf16.gmra.mxu0 %v2449
        %v2682 = vpop.f32.mrf.mxu0
        %v2683 = vadd.f32 %v2646, %v2682
        %v2684 = vpop.f32.mrf.mxu0
        %v2685 = vpop.f32.mrf.mxu0
        %v2686 = vpop.f32.mrf.mxu0
        %2687 = vdwg.mxu0
        %2690 = vrot.lane.b32.xlu0 %v2643, 120
        %v2691 = vpop.permute.xlu0 %2690
        %2692 = vrot.lane.b32.xlu0 %v2644, 120
        %v2693 = vpop.permute.xlu0 %2692
        %2696 = vrot.lane.b32.xlu0 %v2439, 88
        %v2697 = vpop.permute.xlu0 %2696
        %2699 = vmatprep.subr.bf16.mxu0 0
        %2700 = vmatpush1.bf16.msra.mxu0 0
        %2701 = vmatprep.subr.bf16.mxu0 0
        %2702 = vmatpush1.bf16.msra.mxu0 0
        %2703 = vmatprep.subr.bf16.mxu0 0
        %2704 = vmatpush1.bf16.msra.mxu0 0
        %2705 = vmatprep.subr.bf16.mxu0 0
        %2706 = vmatpush1.bf16.msra.mxu0 0
        %2707 = vmatprep.subr.bf16.mxu0 0
        %2708 = vmatpush1.bf16.msra.mxu0 0
        %2709 = vmatprep.subr.bf16.mxu0 0
        %2710 = vmatpush1.bf16.msra.mxu0 0
        %2711 = vmatprep.subr.bf16.mxu0 0
        %2712 = vmatpush1.bf16.msra.mxu0 %v2693
        %2713 = vmatprep.subr.bf16.mxu0 0
        %2714 = vmatpush1.bf16.msra.mxu0 %v2691
        %2715 = vmatprep.subr.bf16.mxu0 0
        %2716 = vmatpush2.bf16.msra.mxu0 0
        %2717 = vmatprep.subr.bf16.mxu0 0
        %2718 = vmatpush2.bf16.msra.mxu0 0
        %2719 = vmatprep.subr.bf16.mxu0 0
        %2720 = vmatpush2.bf16.msra.mxu0 0
        %2721 = vmatprep.subr.bf16.mxu0 0
        %2722 = vmatpush2.bf16.msra.mxu0 0
        %2723 = vmatprep.subr.bf16.mxu0 0
        %2724 = vmatpush2.bf16.msra.mxu0 0
        %2725 = vmatprep.subr.bf16.mxu0 0
        %2726 = vmatpush2.bf16.msra.mxu0 0
        %2727 = vmatprep.subr.bf16.mxu0 0
        %2728 = vmatpush2.bf16.msra.mxu0 0
        %2729 = vmatprep.subr.bf16.mxu0 0
        %2730 = vmatpush2.bf16.msra.mxu0 0
        %2731 = vmatprep.mubr.bf16.mxu0 0
        %2732 = vmatmul.mubr.bf16.gmra.mxu0 %v2449
        %v2733 = vpop.f32.mrf.mxu0
        %v2734 = vadd.f32 %v2697, %v2733
        %v2735 = vpop.f32.mrf.mxu0
        %v2736 = vpop.f32.mrf.mxu0
        %v2737 = vpop.f32.mrf.mxu0
        %2738 = vdwg.mxu0
        %2739 = vrot.lane.b32.xlu0 %v2643, 112
        %v2740 = vpop.permute.xlu0 %2739
        %2741 = vrot.lane.b32.xlu0 %v2644, 112
        %v2742 = vpop.permute.xlu0 %2741
        %2745 = vrot.lane.b32.xlu0 %v2439, 80
        %v2746 = vpop.permute.xlu0 %2745
        %2748 = vmatprep.subr.bf16.mxu0 0
        %2749 = vmatpush1.bf16.msra.mxu0 0
        %2750 = vmatprep.subr.bf16.mxu0 0
        %2751 = vmatpush1.bf16.msra.mxu0 0
        %2752 = vmatprep.subr.bf16.mxu0 0
        %2753 = vmatpush1.bf16.msra.mxu0 0
        %2754 = vmatprep.subr.bf16.mxu0 0
        %2755 = vmatpush1.bf16.msra.mxu0 0
        %2756 = vmatprep.subr.bf16.mxu0 0
        %2757 = vmatpush1.bf16.msra.mxu0 0
        %2758 = vmatprep.subr.bf16.mxu0 0
        %2759 = vmatpush1.bf16.msra.mxu0 0
        %2760 = vmatprep.subr.bf16.mxu0 0
        %2761 = vmatpush1.bf16.msra.mxu0 %v2742
        %2762 = vmatprep.subr.bf16.mxu0 0
        %2763 = vmatpush1.bf16.msra.mxu0 %v2740
        %2764 = vmatprep.subr.bf16.mxu0 0
        %2765 = vmatpush2.bf16.msra.mxu0 0
        %2766 = vmatprep.subr.bf16.mxu0 0
        %2767 = vmatpush2.bf16.msra.mxu0 0
        %2768 = vmatprep.subr.bf16.mxu0 0
        %2769 = vmatpush2.bf16.msra.mxu0 0
        %2770 = vmatprep.subr.bf16.mxu0 0
        %2771 = vmatpush2.bf16.msra.mxu0 0
        %2772 = vmatprep.subr.bf16.mxu0 0
        %2773 = vmatpush2.bf16.msra.mxu0 0
        %2774 = vmatprep.subr.bf16.mxu0 0
        %2775 = vmatpush2.bf16.msra.mxu0 0
        %2776 = vmatprep.subr.bf16.mxu0 0
        %2777 = vmatpush2.bf16.msra.mxu0 0
        %2778 = vmatprep.subr.bf16.mxu0 0
        %2779 = vmatpush2.bf16.msra.mxu0 0
        %2780 = vmatprep.mubr.bf16.mxu0 0
        %2781 = vmatmul.mubr.bf16.gmra.mxu0 %v2449
        %v2782 = vpop.f32.mrf.mxu0
        %v2783 = vadd.f32 %v2746, %v2782
        %v2784 = vpop.f32.mrf.mxu0
        %v2785 = vpop.f32.mrf.mxu0
        %v2786 = vpop.f32.mrf.mxu0
        %2787 = vdwg.mxu0
        %2788 = vrot.lane.b32.xlu0 %v2643, 104
        %v2789 = vpop.permute.xlu0 %2788
        %2790 = vrot.lane.b32.xlu0 %v2644, 104
        %v2791 = vpop.permute.xlu0 %2790
        %2794 = vrot.lane.b32.xlu0 %v2439, 72
        %v2795 = vpop.permute.xlu0 %2794
        %2797 = vmatprep.subr.bf16.mxu0 0
        %2798 = vmatpush1.bf16.msra.mxu0 0
        %2799 = vmatprep.subr.bf16.mxu0 0
        %2800 = vmatpush1.bf16.msra.mxu0 0
        %2801 = vmatprep.subr.bf16.mxu0 0
        %2802 = vmatpush1.bf16.msra.mxu0 0
        %2803 = vmatprep.subr.bf16.mxu0 0
        %2804 = vmatpush1.bf16.msra.mxu0 0
        %2805 = vmatprep.subr.bf16.mxu0 0
        %2806 = vmatpush1.bf16.msra.mxu0 0
        %2807 = vmatprep.subr.bf16.mxu0 0
        %2808 = vmatpush1.bf16.msra.mxu0 0
        %2809 = vmatprep.subr.bf16.mxu0 0
        %2810 = vmatpush1.bf16.msra.mxu0 %v2791
        %2811 = vmatprep.subr.bf16.mxu0 0
        %2812 = vmatpush1.bf16.msra.mxu0 %v2789
        %2813 = vmatprep.subr.bf16.mxu0 0
        %2814 = vmatpush2.bf16.msra.mxu0 0
        %2815 = vmatprep.subr.bf16.mxu0 0
        %2816 = vmatpush2.bf16.msra.mxu0 0
        %2817 = vmatprep.subr.bf16.mxu0 0
        %2818 = vmatpush2.bf16.msra.mxu0 0
        %2819 = vmatprep.subr.bf16.mxu0 0
        %2820 = vmatpush2.bf16.msra.mxu0 0
        %2821 = vmatprep.subr.bf16.mxu0 0
        %2822 = vmatpush2.bf16.msra.mxu0 0
        %2823 = vmatprep.subr.bf16.mxu0 0
        %2824 = vmatpush2.bf16.msra.mxu0 0
        %2825 = vmatprep.subr.bf16.mxu0 0
        %2826 = vmatpush2.bf16.msra.mxu0 0
        %2827 = vmatprep.subr.bf16.mxu0 0
        %2828 = vmatpush2.bf16.msra.mxu0 0
        %2829 = vmatprep.mubr.bf16.mxu0 0
        %2830 = vmatmul.mubr.bf16.gmra.mxu0 %v2449
        %v2831 = vpop.f32.mrf.mxu0
        %v2832 = vadd.f32 %v2795, %v2831
        %v2833 = vpop.f32.mrf.mxu0
        %v2834 = vpop.f32.mrf.mxu0
        %v2835 = vpop.f32.mrf.mxu0
        %2836 = vdwg.mxu0
        %2837 = vrot.lane.b32.xlu0 %v2643, 96
        %v2838 = vpop.permute.xlu0 %2837
        %2839 = vrot.lane.b32.xlu0 %v2644, 96
        %v2840 = vpop.permute.xlu0 %2839
        %2843 = vrot.lane.b32.xlu0 %v2439, 64
        %v2844 = vpop.permute.xlu0 %2843
        %2846 = vmatprep.subr.bf16.mxu0 0
        %2847 = vmatpush1.bf16.msra.mxu0 0
        %2848 = vmatprep.subr.bf16.mxu0 0
        %2849 = vmatpush1.bf16.msra.mxu0 0
        %2850 = vmatprep.subr.bf16.mxu0 0
        %2851 = vmatpush1.bf16.msra.mxu0 0
        %2852 = vmatprep.subr.bf16.mxu0 0
        %2853 = vmatpush1.bf16.msra.mxu0 0
        %2854 = vmatprep.subr.bf16.mxu0 0
        %2855 = vmatpush1.bf16.msra.mxu0 0
        %2856 = vmatprep.subr.bf16.mxu0 0
        %2857 = vmatpush1.bf16.msra.mxu0 0
        %2858 = vmatprep.subr.bf16.mxu0 0
        %2859 = vmatpush1.bf16.msra.mxu0 %v2840
        %2860 = vmatprep.subr.bf16.mxu0 0
        %2861 = vmatpush1.bf16.msra.mxu0 %v2838
        %2862 = vmatprep.subr.bf16.mxu0 0
        %2863 = vmatpush2.bf16.msra.mxu0 0
        %2864 = vmatprep.subr.bf16.mxu0 0
        %2865 = vmatpush2.bf16.msra.mxu0 0
        %2866 = vmatprep.subr.bf16.mxu0 0
        %2867 = vmatpush2.bf16.msra.mxu0 0
        %2868 = vmatprep.subr.bf16.mxu0 0
        %2869 = vmatpush2.bf16.msra.mxu0 0
        %2870 = vmatprep.subr.bf16.mxu0 0
        %2871 = vmatpush2.bf16.msra.mxu0 0
        %2872 = vmatprep.subr.bf16.mxu0 0
        %2873 = vmatpush2.bf16.msra.mxu0 0
        %2874 = vmatprep.subr.bf16.mxu0 0
        %2875 = vmatpush2.bf16.msra.mxu0 0
        %2876 = vmatprep.subr.bf16.mxu0 0
        %2877 = vmatpush2.bf16.msra.mxu0 0
        %2878 = vmatprep.mubr.bf16.mxu0 0
        %2879 = vmatmul.mubr.bf16.gmra.mxu0 %v2449
        %v2880 = vpop.f32.mrf.mxu0
        %v2881 = vadd.f32 %v2844, %v2880
        %v2882 = vpop.f32.mrf.mxu0
        %v2883 = vpop.f32.mrf.mxu0
        %v2884 = vpop.f32.mrf.mxu0
        %2885 = vdwg.mxu0
        %2886 = vrot.lane.b32.xlu0 %v2643, 88
        %v2887 = vpop.permute.xlu0 %2886
        %2888 = vrot.lane.b32.xlu0 %v2644, 88
        %v2889 = vpop.permute.xlu0 %2888
        %2892 = vrot.lane.b32.xlu0 %v2439, 56
        %v2893 = vpop.permute.xlu0 %2892
        %2895 = vmatprep.subr.bf16.mxu0 0
        %2896 = vmatpush1.bf16.msra.mxu0 0
        %2897 = vmatprep.subr.bf16.mxu0 0
        %2898 = vmatpush1.bf16.msra.mxu0 0
        %2899 = vmatprep.subr.bf16.mxu0 0
        %2900 = vmatpush1.bf16.msra.mxu0 0
        %2901 = vmatprep.subr.bf16.mxu0 0
        %2902 = vmatpush1.bf16.msra.mxu0 0
        %2903 = vmatprep.subr.bf16.mxu0 0
        %2904 = vmatpush1.bf16.msra.mxu0 0
        %2905 = vmatprep.subr.bf16.mxu0 0
        %2906 = vmatpush1.bf16.msra.mxu0 0
        %2907 = vmatprep.subr.bf16.mxu0 0
        %2908 = vmatpush1.bf16.msra.mxu0 %v2889
        %2909 = vmatprep.subr.bf16.mxu0 0
        %2910 = vmatpush1.bf16.msra.mxu0 %v2887
        %2911 = vmatprep.subr.bf16.mxu0 0
        %2912 = vmatpush2.bf16.msra.mxu0 0
        %2913 = vmatprep.subr.bf16.mxu0 0
        %2914 = vmatpush2.bf16.msra.mxu0 0
        %2915 = vmatprep.subr.bf16.mxu0 0
        %2916 = vmatpush2.bf16.msra.mxu0 0
        %2917 = vmatprep.subr.bf16.mxu0 0
        %2918 = vmatpush2.bf16.msra.mxu0 0
        %2919 = vmatprep.subr.bf16.mxu0 0
        %2920 = vmatpush2.bf16.msra.mxu0 0
        %2921 = vmatprep.subr.bf16.mxu0 0
        %2922 = vmatpush2.bf16.msra.mxu0 0
        %2923 = vmatprep.subr.bf16.mxu0 0
        %2924 = vmatpush2.bf16.msra.mxu0 0
        %2925 = vmatprep.subr.bf16.mxu0 0
        %2926 = vmatpush2.bf16.msra.mxu0 0
        %2927 = vmatprep.mubr.bf16.mxu0 0
        %2928 = vmatmul.mubr.bf16.gmra.mxu0 %v2449
        %v2929 = vpop.f32.mrf.mxu0
        %v2930 = vadd.f32 %v2893, %v2929
        %v2931 = vpop.f32.mrf.mxu0
        %v2932 = vpop.f32.mrf.mxu0
        %v2933 = vpop.f32.mrf.mxu0
        %2934 = vdwg.mxu0
        %2935 = vrot.lane.b32.xlu0 %v2643, 80
        %v2936 = vpop.permute.xlu0 %2935
        %2937 = vrot.lane.b32.xlu0 %v2644, 80
        %v2938 = vpop.permute.xlu0 %2937
        %2941 = vrot.lane.b32.xlu0 %v2439, 48
        %v2942 = vpop.permute.xlu0 %2941
        %2944 = vmatprep.subr.bf16.mxu0 0
        %2945 = vmatpush1.bf16.msra.mxu0 0
        %2946 = vmatprep.subr.bf16.mxu0 0
        %2947 = vmatpush1.bf16.msra.mxu0 0
        %2948 = vmatprep.subr.bf16.mxu0 0
        %2949 = vmatpush1.bf16.msra.mxu0 0
        %2950 = vmatprep.subr.bf16.mxu0 0
        %2951 = vmatpush1.bf16.msra.mxu0 0
        %2952 = vmatprep.subr.bf16.mxu0 0
        %2953 = vmatpush1.bf16.msra.mxu0 0
        %2954 = vmatprep.subr.bf16.mxu0 0
        %2955 = vmatpush1.bf16.msra.mxu0 0
        %2956 = vmatprep.subr.bf16.mxu0 0
        %2957 = vmatpush1.bf16.msra.mxu0 %v2938
        %2958 = vmatprep.subr.bf16.mxu0 0
        %2959 = vmatpush1.bf16.msra.mxu0 %v2936
        %2960 = vmatprep.subr.bf16.mxu0 0
        %2961 = vmatpush2.bf16.msra.mxu0 0
        %2962 = vmatprep.subr.bf16.mxu0 0
        %2963 = vmatpush2.bf16.msra.mxu0 0
        %2964 = vmatprep.subr.bf16.mxu0 0
        %2965 = vmatpush2.bf16.msra.mxu0 0
        %2966 = vmatprep.subr.bf16.mxu0 0
        %2967 = vmatpush2.bf16.msra.mxu0 0
        %2968 = vmatprep.subr.bf16.mxu0 0
        %2969 = vmatpush2.bf16.msra.mxu0 0
        %2970 = vmatprep.subr.bf16.mxu0 0
        %2971 = vmatpush2.bf16.msra.mxu0 0
        %2972 = vmatprep.subr.bf16.mxu0 0
        %2973 = vmatpush2.bf16.msra.mxu0 0
        %2974 = vmatprep.subr.bf16.mxu0 0
        %2975 = vmatpush2.bf16.msra.mxu0 0
        %2976 = vmatprep.mubr.bf16.mxu0 0
        %2977 = vmatmul.mubr.bf16.gmra.mxu0 %v2449
        %v2978 = vpop.f32.mrf.mxu0
        %v2979 = vadd.f32 %v2942, %v2978
        %v2980 = vpop.f32.mrf.mxu0
        %v2981 = vpop.f32.mrf.mxu0
        %v2982 = vpop.f32.mrf.mxu0
        %2983 = vdwg.mxu0
        %2984 = vrot.lane.b32.xlu0 %v2643, 72
        %v2985 = vpop.permute.xlu0 %2984
        %2986 = vrot.lane.b32.xlu0 %v2644, 72
        %v2987 = vpop.permute.xlu0 %2986
        %2990 = vrot.lane.b32.xlu0 %v2439, 40
        %v2991 = vpop.permute.xlu0 %2990
        %2993 = vmatprep.subr.bf16.mxu0 0
        %2994 = vmatpush1.bf16.msra.mxu0 0
        %2995 = vmatprep.subr.bf16.mxu0 0
        %2996 = vmatpush1.bf16.msra.mxu0 0
        %2997 = vmatprep.subr.bf16.mxu0 0
        %2998 = vmatpush1.bf16.msra.mxu0 0
        %2999 = vmatprep.subr.bf16.mxu0 0
        %3000 = vmatpush1.bf16.msra.mxu0 0
        %3001 = vmatprep.subr.bf16.mxu0 0
        %3002 = vmatpush1.bf16.msra.mxu0 0
        %3003 = vmatprep.subr.bf16.mxu0 0
        %3004 = vmatpush1.bf16.msra.mxu0 0
        %3005 = vmatprep.subr.bf16.mxu0 0
        %3006 = vmatpush1.bf16.msra.mxu0 %v2987
        %3007 = vmatprep.subr.bf16.mxu0 0
        %3008 = vmatpush1.bf16.msra.mxu0 %v2985
        %3009 = vmatprep.subr.bf16.mxu0 0
        %3010 = vmatpush2.bf16.msra.mxu0 0
        %3011 = vmatprep.subr.bf16.mxu0 0
        %3012 = vmatpush2.bf16.msra.mxu0 0
        %3013 = vmatprep.subr.bf16.mxu0 0
        %3014 = vmatpush2.bf16.msra.mxu0 0
        %3015 = vmatprep.subr.bf16.mxu0 0
        %3016 = vmatpush2.bf16.msra.mxu0 0
        %3017 = vmatprep.subr.bf16.mxu0 0
        %3018 = vmatpush2.bf16.msra.mxu0 0
        %3019 = vmatprep.subr.bf16.mxu0 0
        %3020 = vmatpush2.bf16.msra.mxu0 0
        %3021 = vmatprep.subr.bf16.mxu0 0
        %3022 = vmatpush2.bf16.msra.mxu0 0
        %3023 = vmatprep.subr.bf16.mxu0 0
        %3024 = vmatpush2.bf16.msra.mxu0 0
        %3025 = vmatprep.mubr.bf16.mxu0 0
        %3026 = vmatmul.mubr.bf16.gmra.mxu0 %v2449
        %v3027 = vpop.f32.mrf.mxu0
        %v3028 = vadd.f32 %v2991, %v3027
        %v3029 = vpop.f32.mrf.mxu0
        %v3030 = vpop.f32.mrf.mxu0
        %v3031 = vpop.f32.mrf.mxu0
        %3032 = vdwg.mxu0
        %v3033 = vpack.c.bf16 %v2486, %v2486
        %v3034 = vpack.c.bf16 %v2536, %v2536
        %v3035 = vpack.c.bf16 %v2585, %v2585
        %v3036 = vpack.c.bf16 %v2634, %v2634
        %v3037 = vpack.c.bf16 %v2683, %v2683
        %v3038 = vpack.c.bf16 %v2734, %v2734
        %v3039 = vpack.c.bf16 %v2783, %v2783
        %v3040 = vpack.c.bf16 %v2832, %v2832
        %v3042 = vsel %vm1097, %v3033, 0
        %v3045 = vsel %vm1097, %v3037, 0
        %3047 = vmatprep.subr.bf16.mxu0 0
        %3048 = vmatpush1.bf16.xpose.msra.mxu0 0
        %3049 = vmatprep.subr.bf16.mxu0 0
        %3050 = vmatpush1.bf16.xpose.msra.mxu0 0
        %3051 = vmatprep.subr.bf16.mxu0 0
        %3052 = vmatpush1.bf16.xpose.msra.mxu0 0
        %3053 = vmatprep.subr.bf16.mxu0 0
        %3054 = vmatpush1.bf16.xpose.msra.mxu0 0
        %3055 = vmatprep.subr.bf16.mxu0 0
        %3056 = vmatpush1.bf16.xpose.msra.mxu0 0
        %3057 = vmatprep.subr.bf16.mxu0 0
        %3058 = vmatpush1.bf16.xpose.msra.mxu0 0
        %3059 = vmatprep.subr.bf16.mxu0 0
        %3060 = vmatpush1.bf16.xpose.msra.mxu0 0
        %3061 = vmatprep.subr.bf16.mxu0 0
        %3062 = vmatpush1.bf16.xpose.msra.mxu0 %v3045
        %3063 = vmatprep.subr.bf16.mxu0 0
        %3064 = vmatpush2.bf16.xpose.msra.mxu0 0
        %3065 = vmatprep.subr.bf16.mxu0 0
        %3066 = vmatpush2.bf16.xpose.msra.mxu0 0
        %3067 = vmatprep.subr.bf16.mxu0 0
        %3068 = vmatpush2.bf16.xpose.msra.mxu0 0
        %3069 = vmatprep.subr.bf16.mxu0 0
        %3070 = vmatpush2.bf16.xpose.msra.mxu0 0
        %3071 = vmatprep.subr.bf16.mxu0 0
        %3072 = vmatpush2.bf16.xpose.msra.mxu0 0
        %3073 = vmatprep.subr.bf16.mxu0 0
        %3074 = vmatpush2.bf16.xpose.msra.mxu0 0
        %3075 = vmatprep.subr.bf16.mxu0 0
        %3076 = vmatpush2.bf16.xpose.msra.mxu0 0
        %3077 = vmatprep.subr.bf16.mxu0 0
        %3078 = vmatpush2.bf16.xpose.msra.mxu0 0
        %3079 = vmatprep.mubr.bf16.mxu0 0
        %3080 = vmatmul.mubr.bf16.gmra.mxu0 %v3042
        %v3081 = vpop.f32.mrf.mxu0
        %v3082 = vadd.f32 0.0, %v3081
        %v3083 = vpop.f32.mrf.mxu0
        %v3084 = vpop.f32.mrf.mxu0
        %v3085 = vpop.f32.mrf.mxu0
        %3086 = vdwg.mxu0
        %v3088 = vsel %vm1097, %v3034, 0
        %v3091 = vsel %vm1097, %v3038, 0
        %3093 = vmatprep.subr.bf16.mxu0 0
        %3094 = vmatpush1.bf16.xpose.msra.mxu0 0
        %3095 = vmatprep.subr.bf16.mxu0 0
        %3096 = vmatpush1.bf16.xpose.msra.mxu0 0
        %3097 = vmatprep.subr.bf16.mxu0 0
        %3098 = vmatpush1.bf16.xpose.msra.mxu0 0
        %3099 = vmatprep.subr.bf16.mxu0 0
        %3100 = vmatpush1.bf16.xpose.msra.mxu0 0
        %3101 = vmatprep.subr.bf16.mxu0 0
        %3102 = vmatpush1.bf16.xpose.msra.mxu0 0
        %3103 = vmatprep.subr.bf16.mxu0 0
        %3104 = vmatpush1.bf16.xpose.msra.mxu0 0
        %3105 = vmatprep.subr.bf16.mxu0 0
        %3106 = vmatpush1.bf16.xpose.msra.mxu0 0
        %3107 = vmatprep.subr.bf16.mxu0 0
        %3108 = vmatpush1.bf16.xpose.msra.mxu0 %v3091
        %3109 = vmatprep.subr.bf16.mxu0 0
        %3110 = vmatpush2.bf16.xpose.msra.mxu0 0
        %3111 = vmatprep.subr.bf16.mxu0 0
        %3112 = vmatpush2.bf16.xpose.msra.mxu0 0
        %3113 = vmatprep.subr.bf16.mxu0 0
        %3114 = vmatpush2.bf16.xpose.msra.mxu0 0
        %3115 = vmatprep.subr.bf16.mxu0 0
        %3116 = vmatpush2.bf16.xpose.msra.mxu0 0
        %3117 = vmatprep.subr.bf16.mxu0 0
        %3118 = vmatpush2.bf16.xpose.msra.mxu0 0
        %3119 = vmatprep.subr.bf16.mxu0 0
        %3120 = vmatpush2.bf16.xpose.msra.mxu0 0
        %3121 = vmatprep.subr.bf16.mxu0 0
        %3122 = vmatpush2.bf16.xpose.msra.mxu0 0
        %3123 = vmatprep.subr.bf16.mxu0 0
        %3124 = vmatpush2.bf16.xpose.msra.mxu0 0
        %3125 = vmatprep.mubr.bf16.mxu0 0
        %3126 = vmatmul.mubr.bf16.gmra.mxu0 %v3088
        %v3127 = vpop.f32.mrf.mxu0
        %v3128 = vadd.f32 0.0, %v3127
        %v3129 = vpop.f32.mrf.mxu0
        %v3130 = vpop.f32.mrf.mxu0
        %v3131 = vpop.f32.mrf.mxu0
        %3132 = vdwg.mxu0
        %v3134 = vsel %vm1097, %v3035, 0
        %v3137 = vsel %vm1097, %v3039, 0
        %3139 = vmatprep.subr.bf16.mxu0 0
        %3140 = vmatpush1.bf16.xpose.msra.mxu0 0
        %3141 = vmatprep.subr.bf16.mxu0 0
        %3142 = vmatpush1.bf16.xpose.msra.mxu0 0
        %3143 = vmatprep.subr.bf16.mxu0 0
        %3144 = vmatpush1.bf16.xpose.msra.mxu0 0
        %3145 = vmatprep.subr.bf16.mxu0 0
        %3146 = vmatpush1.bf16.xpose.msra.mxu0 0
        %3147 = vmatprep.subr.bf16.mxu0 0
        %3148 = vmatpush1.bf16.xpose.msra.mxu0 0
        %3149 = vmatprep.subr.bf16.mxu0 0
        %3150 = vmatpush1.bf16.xpose.msra.mxu0 0
        %3151 = vmatprep.subr.bf16.mxu0 0
        %3152 = vmatpush1.bf16.xpose.msra.mxu0 0
        %3153 = vmatprep.subr.bf16.mxu0 0
        %3154 = vmatpush1.bf16.xpose.msra.mxu0 %v3137
        %3155 = vmatprep.subr.bf16.mxu0 0
        %3156 = vmatpush2.bf16.xpose.msra.mxu0 0
        %3157 = vmatprep.subr.bf16.mxu0 0
        %3158 = vmatpush2.bf16.xpose.msra.mxu0 0
        %3159 = vmatprep.subr.bf16.mxu0 0
        %3160 = vmatpush2.bf16.xpose.msra.mxu0 0
        %3161 = vmatprep.subr.bf16.mxu0 0
        %3162 = vmatpush2.bf16.xpose.msra.mxu0 0
        %3163 = vmatprep.subr.bf16.mxu0 0
        %3164 = vmatpush2.bf16.xpose.msra.mxu0 0
        %3165 = vmatprep.subr.bf16.mxu0 0
        %3166 = vmatpush2.bf16.xpose.msra.mxu0 0
        %3167 = vmatprep.subr.bf16.mxu0 0
        %3168 = vmatpush2.bf16.xpose.msra.mxu0 0
        %3169 = vmatprep.subr.bf16.mxu0 0
        %3170 = vmatpush2.bf16.xpose.msra.mxu0 0
        %3171 = vmatprep.mubr.bf16.mxu0 0
        %3172 = vmatmul.mubr.bf16.gmra.mxu0 %v3134
        %v3173 = vpop.f32.mrf.mxu0
        %v3174 = vadd.f32 0.0, %v3173
        %v3175 = vpop.f32.mrf.mxu0
        %v3176 = vpop.f32.mrf.mxu0
        %v3177 = vpop.f32.mrf.mxu0
        %3178 = vdwg.mxu0
        %v3180 = vsel %vm1097, %v3036, 0
        %v3183 = vsel %vm1097, %v3040, 0
        %3185 = vmatprep.subr.bf16.mxu0 0
        %3186 = vmatpush1.bf16.xpose.msra.mxu0 0
        %3187 = vmatprep.subr.bf16.mxu0 0
        %3188 = vmatpush1.bf16.xpose.msra.mxu0 0
        %3189 = vmatprep.subr.bf16.mxu0 0
        %3190 = vmatpush1.bf16.xpose.msra.mxu0 0
        %3191 = vmatprep.subr.bf16.mxu0 0
        %3192 = vmatpush1.bf16.xpose.msra.mxu0 0
        %3193 = vmatprep.subr.bf16.mxu0 0
        %3194 = vmatpush1.bf16.xpose.msra.mxu0 0
        %3195 = vmatprep.subr.bf16.mxu0 0
        %3196 = vmatpush1.bf16.xpose.msra.mxu0 0
        %3197 = vmatprep.subr.bf16.mxu0 0
        %3198 = vmatpush1.bf16.xpose.msra.mxu0 0
        %3199 = vmatprep.subr.bf16.mxu0 0
        %3200 = vmatpush1.bf16.xpose.msra.mxu0 %v3183
        %3201 = vmatprep.subr.bf16.mxu0 0
        %3202 = vmatpush2.bf16.xpose.msra.mxu0 0
        %3203 = vmatprep.subr.bf16.mxu0 0
        %3204 = vmatpush2.bf16.xpose.msra.mxu0 0
        %3205 = vmatprep.subr.bf16.mxu0 0
        %3206 = vmatpush2.bf16.xpose.msra.mxu0 0
        %3207 = vmatprep.subr.bf16.mxu0 0
        %3208 = vmatpush2.bf16.xpose.msra.mxu0 0
        %3209 = vmatprep.subr.bf16.mxu0 0
        %3210 = vmatpush2.bf16.xpose.msra.mxu0 0
        %3211 = vmatprep.subr.bf16.mxu0 0
        %3212 = vmatpush2.bf16.xpose.msra.mxu0 0
        %3213 = vmatprep.subr.bf16.mxu0 0
        %3214 = vmatpush2.bf16.xpose.msra.mxu0 0
        %3215 = vmatprep.subr.bf16.mxu0 0
        %3216 = vmatpush2.bf16.xpose.msra.mxu0 0
        %3217 = vmatprep.mubr.bf16.mxu0 0
        %3218 = vmatmul.mubr.bf16.gmra.mxu0 %v3180
        %v3219 = vpop.f32.mrf.mxu0
        %v3220 = vadd.f32 0.0, %v3219
        %v3221 = vpop.f32.mrf.mxu0
        %v3222 = vpop.f32.mrf.mxu0
        %v3223 = vpop.f32.mrf.mxu0
        %3224 = vdwg.mxu0
        %v3225 = vmul.f32 %v3082, 0.35355338
        %v3226 = vmul.f32 %v3128, 0.35355338
        %v3227 = vmul.f32 %v3174, 0.35355338
        %v3228 = vmul.f32 %v3220, 0.35355338
        %v3229 = vadd.f32 %v3225, %v2400
        %v3230 = vadd.f32 %v3226, %v2400
        %v3231 = vadd.f32 %v3227, %v2400
        %v3232 = vadd.f32 %v3228, %v2400
        %v3233 = vsel %vm1097, %v3229, -inf
        %3234 = vmax.xlane.f32.xlu0 %v3233
        %v3235 = vpop.xlane.xlu0 %3234
        %v3236 = vsel %vm1097, %v3230, -inf
        %3237 = vmax.xlane.f32.xlu0 %v3236
        %v3238 = vpop.xlane.xlu0 %3237
        %v3239 = vsel %vm1097, %v3231, -inf
        %3240 = vmax.xlane.f32.xlu0 %v3239
        %v3241 = vpop.xlane.xlu0 %3240
        %v3242 = vsel %vm1097, %v3232, -inf
        %3243 = vmax.xlane.f32.xlu0 %v3242
        %v3244 = vpop.xlane.xlu0 %3243
        %v3245 = vsub.f32 %v3229, %v3235
        %v3246 = vsub.f32 %v3230, %v3238
        %v3247 = vsub.f32 %v3231, %v3241
        %v3248 = vsub.f32 %v3232, %v3244
        %v3249 = vmul.f32 %v3245, 1.442695
        %v3250 = vpow.pop %v3249
        %v3251 = vmul.f32 %v3246, 1.442695
        %v3252 = vpow.pop %v3251
        %v3253 = vmul.f32 %v3247, 1.442695
        %v3254 = vpow.pop %v3253
        %v3255 = vmul.f32 %v3248, 1.442695
        %v3256 = vpow.pop %v3255
        %v3257 = vsel %vm1097, %v3250, 0.0
        %3258 = vadd.xlane.f32.xlu0 %v3257
        %v3259 = vpop.xlane.xlu0 %3258
        %v3260 = vsel %vm1097, %v3252, 0.0
        %3261 = vadd.xlane.f32.xlu0 %v3260
        %v3262 = vpop.xlane.xlu0 %3261
        %v3263 = vsel %vm1097, %v3254, 0.0
        %3264 = vadd.xlane.f32.xlu0 %v3263
        %v3265 = vpop.xlane.xlu0 %3264
        %v3266 = vsel %vm1097, %v3256, 0.0
        %3267 = vadd.xlane.f32.xlu0 %v3266
        %v3268 = vpop.xlane.xlu0 %3267
        %v3269 = vrcp.pop %v3259
        %v3270 = vrcp.pop %v3262
        %v3271 = vrcp.pop %v3265
        %v3272 = vrcp.pop %v3268
        %v3273 = vmul.f32 %v3250, %v3269
        %v3274 = vmul.f32 %v3252, %v3270
        %v3275 = vmul.f32 %v3254, %v3271
        %v3276 = vmul.f32 %v3256, %v3272
        %v3277 = vpack.c.bf16 %v3273, %v3273
        %v3278 = vpack.c.bf16 %v3274, %v3274
        %v3279 = vpack.c.bf16 %v3275, %v3275
        %v3280 = vpack.c.bf16 %v3276, %v3276
        %v3281 = vpack.c.bf16 %v2881, %v2881
        %v3282 = vpack.c.bf16 %v2930, %v2930
        %v3283 = vpack.c.bf16 %v2979, %v2979
        %v3284 = vpack.c.bf16 %v3028, %v3028
        %v3286 = vsel %vm1097, %v3277, 0
        %v3289 = vsel %vm1753, %v3281, 0
        %3291 = vmatprep.subr.bf16.mxu0 0
        %3292 = vmatpush1.bf16.msra.mxu0 0
        %3293 = vmatprep.subr.bf16.mxu0 0
        %3294 = vmatpush1.bf16.msra.mxu0 0
        %3295 = vmatprep.subr.bf16.mxu0 0
        %3296 = vmatpush1.bf16.msra.mxu0 0
        %3297 = vmatprep.subr.bf16.mxu0 0
        %3298 = vmatpush1.bf16.msra.mxu0 0
        %3299 = vmatprep.subr.bf16.mxu0 0
        %3300 = vmatpush1.bf16.msra.mxu0 0
        %3301 = vmatprep.subr.bf16.mxu0 0
        %3302 = vmatpush1.bf16.msra.mxu0 0
        %3303 = vmatprep.subr.bf16.mxu0 0
        %3304 = vmatpush1.bf16.msra.mxu0 0
        %3305 = vmatprep.subr.bf16.mxu0 0
        %3306 = vmatpush1.bf16.msra.mxu0 %v3289
        %3307 = vmatprep.subr.bf16.mxu0 0
        %3308 = vmatpush2.bf16.msra.mxu0 0
        %3309 = vmatprep.subr.bf16.mxu0 0
        %3310 = vmatpush2.bf16.msra.mxu0 0
        %3311 = vmatprep.subr.bf16.mxu0 0
        %3312 = vmatpush2.bf16.msra.mxu0 0
        %3313 = vmatprep.subr.bf16.mxu0 0
        %3314 = vmatpush2.bf16.msra.mxu0 0
        %3315 = vmatprep.subr.bf16.mxu0 0
        %3316 = vmatpush2.bf16.msra.mxu0 0
        %3317 = vmatprep.subr.bf16.mxu0 0
        %3318 = vmatpush2.bf16.msra.mxu0 0
        %3319 = vmatprep.subr.bf16.mxu0 0
        %3320 = vmatpush2.bf16.msra.mxu0 0
        %3321 = vmatprep.subr.bf16.mxu0 0
        %3322 = vmatpush2.bf16.msra.mxu0 0
        %3323 = vmatprep.mubr.bf16.mxu0 0
        %3324 = vmatmul.mubr.bf16.gmra.mxu0 %v3286
        %v3325 = vpop.f32.mrf.mxu0
        %v3326 = vadd.f32 0.0, %v3325
        %v3327 = vpop.f32.mrf.mxu0
        %v3328 = vpop.f32.mrf.mxu0
        %v3329 = vpop.f32.mrf.mxu0
        %3330 = vdwg.mxu0
        %v3332 = vsel %vm1097, %v3278, 0
        %v3335 = vsel %vm1753, %v3282, 0
        %3337 = vmatprep.subr.bf16.mxu0 0
        %3338 = vmatpush1.bf16.msra.mxu0 0
        %3339 = vmatprep.subr.bf16.mxu0 0
        %3340 = vmatpush1.bf16.msra.mxu0 0
        %3341 = vmatprep.subr.bf16.mxu0 0
        %3342 = vmatpush1.bf16.msra.mxu0 0
        %3343 = vmatprep.subr.bf16.mxu0 0
        %3344 = vmatpush1.bf16.msra.mxu0 0
        %3345 = vmatprep.subr.bf16.mxu0 0
        %3346 = vmatpush1.bf16.msra.mxu0 0
        %3347 = vmatprep.subr.bf16.mxu0 0
        %3348 = vmatpush1.bf16.msra.mxu0 0
        %3349 = vmatprep.subr.bf16.mxu0 0
        %3350 = vmatpush1.bf16.msra.mxu0 0
        %3351 = vmatprep.subr.bf16.mxu0 0
        %3352 = vmatpush1.bf16.msra.mxu0 %v3335
        %3353 = vmatprep.subr.bf16.mxu0 0
        %3354 = vmatpush2.bf16.msra.mxu0 0
        %3355 = vmatprep.subr.bf16.mxu0 0
        %3356 = vmatpush2.bf16.msra.mxu0 0
        %3357 = vmatprep.subr.bf16.mxu0 0
        %3358 = vmatpush2.bf16.msra.mxu0 0
        %3359 = vmatprep.subr.bf16.mxu0 0
        %3360 = vmatpush2.bf16.msra.mxu0 0
        %3361 = vmatprep.subr.bf16.mxu0 0
        %3362 = vmatpush2.bf16.msra.mxu0 0
        %3363 = vmatprep.subr.bf16.mxu0 0
        %3364 = vmatpush2.bf16.msra.mxu0 0
        %3365 = vmatprep.subr.bf16.mxu0 0
        %3366 = vmatpush2.bf16.msra.mxu0 0
        %3367 = vmatprep.subr.bf16.mxu0 0
        %3368 = vmatpush2.bf16.msra.mxu0 0
        %3369 = vmatprep.mubr.bf16.mxu0 0
        %3370 = vmatmul.mubr.bf16.gmra.mxu0 %v3332
        %v3371 = vpop.f32.mrf.mxu0
        %v3372 = vadd.f32 0.0, %v3371
        %v3373 = vpop.f32.mrf.mxu0
        %v3374 = vpop.f32.mrf.mxu0
        %v3375 = vpop.f32.mrf.mxu0
        %3376 = vdwg.mxu0
        %v3378 = vsel %vm1097, %v3279, 0
        %v3381 = vsel %vm1753, %v3283, 0
        %3383 = vmatprep.subr.bf16.mxu0 0
        %3384 = vmatpush1.bf16.msra.mxu0 0
        %3385 = vmatprep.subr.bf16.mxu0 0
        %3386 = vmatpush1.bf16.msra.mxu0 0
        %3387 = vmatprep.subr.bf16.mxu0 0
        %3388 = vmatpush1.bf16.msra.mxu0 0
        %3389 = vmatprep.subr.bf16.mxu0 0
        %3390 = vmatpush1.bf16.msra.mxu0 0
        %3391 = vmatprep.subr.bf16.mxu0 0
        %3392 = vmatpush1.bf16.msra.mxu0 0
        %3393 = vmatprep.subr.bf16.mxu0 0
        %3394 = vmatpush1.bf16.msra.mxu0 0
        %3395 = vmatprep.subr.bf16.mxu0 0
        %3396 = vmatpush1.bf16.msra.mxu0 0
        %3397 = vmatprep.subr.bf16.mxu0 0
        %3398 = vmatpush1.bf16.msra.mxu0 %v3381
        %3399 = vmatprep.subr.bf16.mxu0 0
        %3400 = vmatpush2.bf16.msra.mxu0 0
        %3401 = vmatprep.subr.bf16.mxu0 0
        %3402 = vmatpush2.bf16.msra.mxu0 0
        %3403 = vmatprep.subr.bf16.mxu0 0
        %3404 = vmatpush2.bf16.msra.mxu0 0
        %3405 = vmatprep.subr.bf16.mxu0 0
        %3406 = vmatpush2.bf16.msra.mxu0 0
        %3407 = vmatprep.subr.bf16.mxu0 0
        %3408 = vmatpush2.bf16.msra.mxu0 0
        %3409 = vmatprep.subr.bf16.mxu0 0
        %3410 = vmatpush2.bf16.msra.mxu0 0
        %3411 = vmatprep.subr.bf16.mxu0 0
        %3412 = vmatpush2.bf16.msra.mxu0 0
        %3413 = vmatprep.subr.bf16.mxu0 0
        %3414 = vmatpush2.bf16.msra.mxu0 0
        %3415 = vmatprep.mubr.bf16.mxu0 0
        %3416 = vmatmul.mubr.bf16.gmra.mxu0 %v3378
        %v3417 = vpop.f32.mrf.mxu0
        %v3418 = vadd.f32 0.0, %v3417
        %v3419 = vpop.f32.mrf.mxu0
        %v3420 = vpop.f32.mrf.mxu0
        %v3421 = vpop.f32.mrf.mxu0
        %3422 = vdwg.mxu0
        %v3424 = vsel %vm1097, %v3280, 0
        %v3427 = vsel %vm1753, %v3284, 0
        %3429 = vmatprep.subr.bf16.mxu0 0
        %3430 = vmatpush1.bf16.msra.mxu0 0
        %3431 = vmatprep.subr.bf16.mxu0 0
        %3432 = vmatpush1.bf16.msra.mxu0 0
        %3433 = vmatprep.subr.bf16.mxu0 0
        %3434 = vmatpush1.bf16.msra.mxu0 0
        %3435 = vmatprep.subr.bf16.mxu0 0
        %3436 = vmatpush1.bf16.msra.mxu0 0
        %3437 = vmatprep.subr.bf16.mxu0 0
        %3438 = vmatpush1.bf16.msra.mxu0 0
        %3439 = vmatprep.subr.bf16.mxu0 0
        %3440 = vmatpush1.bf16.msra.mxu0 0
        %3441 = vmatprep.subr.bf16.mxu0 0
        %3442 = vmatpush1.bf16.msra.mxu0 0
        %3443 = vmatprep.subr.bf16.mxu0 0
        %3444 = vmatpush1.bf16.msra.mxu0 %v3427
        %3445 = vmatprep.subr.bf16.mxu0 0
        %3446 = vmatpush2.bf16.msra.mxu0 0
        %3447 = vmatprep.subr.bf16.mxu0 0
        %3448 = vmatpush2.bf16.msra.mxu0 0
        %3449 = vmatprep.subr.bf16.mxu0 0
        %3450 = vmatpush2.bf16.msra.mxu0 0
        %3451 = vmatprep.subr.bf16.mxu0 0
        %3452 = vmatpush2.bf16.msra.mxu0 0
        %3453 = vmatprep.subr.bf16.mxu0 0
        %3454 = vmatpush2.bf16.msra.mxu0 0
        %3455 = vmatprep.subr.bf16.mxu0 0
        %3456 = vmatpush2.bf16.msra.mxu0 0
        %3457 = vmatprep.subr.bf16.mxu0 0
        %3458 = vmatpush2.bf16.msra.mxu0 0
        %3459 = vmatprep.subr.bf16.mxu0 0
        %3460 = vmatpush2.bf16.msra.mxu0 0
        %3461 = vmatprep.mubr.bf16.mxu0 0
        %3462 = vmatmul.mubr.bf16.gmra.mxu0 %v3424
        %v3463 = vpop.f32.mrf.mxu0
        %v3464 = vadd.f32 0.0, %v3463
        %v3465 = vpop.f32.mrf.mxu0
        %v3466 = vpop.f32.mrf.mxu0
        %v3467 = vpop.f32.mrf.mxu0
        %3468 = vdwg.mxu0
        %v3469 = vld [vmem:[%s4 + $0x90] sm:$0xff]
        %v3470 = vld [vmem:[%s4 + $0x98] sm:$0xff]
        %v3471 = vld [vmem:[%s4 + $0xa0] sm:$0xff]
        %v3472 = vld [vmem:[%s4 + $0xa8] sm:$0xff]
        %v3473 = vpack.c.bf16 %v3326, %v3326
        %v3474 = vpack.c.bf16 %v3372, %v3372
        %v3475 = vpack.c.bf16 %v3418, %v3418
        %v3476 = vpack.c.bf16 %v3464, %v3464
        %v3477 = vpack.c.bf16 %v3469, %v3469
        %v3478 = vpack.c.bf16 %v3470, %v3470
        %v3479 = vpack.c.bf16 %v3471, %v3471
        %v3480 = vpack.c.bf16 %v3472, %v3472
        %v3482 = vsel %vm1097, %v3473, 0
        %v3485 = vsel %vm1753, %v3477, 0
        %3487 = vmatprep.subr.bf16.mxu0 0
        %3488 = vmatpush1.bf16.msra.mxu0 0
        %3489 = vmatprep.subr.bf16.mxu0 0
        %3490 = vmatpush1.bf16.msra.mxu0 0
        %3491 = vmatprep.subr.bf16.mxu0 0
        %3492 = vmatpush1.bf16.msra.mxu0 0
        %3493 = vmatprep.subr.bf16.mxu0 0
        %3494 = vmatpush1.bf16.msra.mxu0 0
        %3495 = vmatprep.subr.bf16.mxu0 0
        %3496 = vmatpush1.bf16.msra.mxu0 0
        %3497 = vmatprep.subr.bf16.mxu0 0
        %3498 = vmatpush1.bf16.msra.mxu0 0
        %3499 = vmatprep.subr.bf16.mxu0 0
        %3500 = vmatpush1.bf16.msra.mxu0 0
        %3501 = vmatprep.subr.bf16.mxu0 0
        %3502 = vmatpush1.bf16.msra.mxu0 %v3485
        %3503 = vmatprep.subr.bf16.mxu0 0
        %3504 = vmatpush2.bf16.msra.mxu0 0
        %3505 = vmatprep.subr.bf16.mxu0 0
        %3506 = vmatpush2.bf16.msra.mxu0 0
        %3507 = vmatprep.subr.bf16.mxu0 0
        %3508 = vmatpush2.bf16.msra.mxu0 0
        %3509 = vmatprep.subr.bf16.mxu0 0
        %3510 = vmatpush2.bf16.msra.mxu0 0
        %3511 = vmatprep.subr.bf16.mxu0 0
        %3512 = vmatpush2.bf16.msra.mxu0 0
        %3513 = vmatprep.subr.bf16.mxu0 0
        %3514 = vmatpush2.bf16.msra.mxu0 0
        %3515 = vmatprep.subr.bf16.mxu0 0
        %3516 = vmatpush2.bf16.msra.mxu0 0
        %3517 = vmatprep.subr.bf16.mxu0 0
        %3518 = vmatpush2.bf16.msra.mxu0 0
        %3519 = vmatprep.mubr.bf16.mxu0 0
        %3520 = vmatmul.mubr.bf16.gmra.mxu0 %v3482
        %v3521 = vpop.f32.mrf.mxu0
        %v3522 = vadd.f32 0.0, %v3521
        %v3523 = vpop.f32.mrf.mxu0
        %v3524 = vpop.f32.mrf.mxu0
        %v3525 = vpop.f32.mrf.mxu0
        %3526 = vdwg.mxu0
        %v3528 = vsel %vm1097, %v3474, 0
        %v3531 = vsel %vm1753, %v3478, 0
        %3533 = vmatprep.subr.bf16.mxu0 0
        %3534 = vmatpush1.bf16.msra.mxu0 0
        %3535 = vmatprep.subr.bf16.mxu0 0
        %3536 = vmatpush1.bf16.msra.mxu0 0
        %3537 = vmatprep.subr.bf16.mxu0 0
        %3538 = vmatpush1.bf16.msra.mxu0 0
        %3539 = vmatprep.subr.bf16.mxu0 0
        %3540 = vmatpush1.bf16.msra.mxu0 0
        %3541 = vmatprep.subr.bf16.mxu0 0
        %3542 = vmatpush1.bf16.msra.mxu0 0
        %3543 = vmatprep.subr.bf16.mxu0 0
        %3544 = vmatpush1.bf16.msra.mxu0 0
        %3545 = vmatprep.subr.bf16.mxu0 0
        %3546 = vmatpush1.bf16.msra.mxu0 0
        %3547 = vmatprep.subr.bf16.mxu0 0
        %3548 = vmatpush1.bf16.msra.mxu0 %v3531
        %3549 = vmatprep.subr.bf16.mxu0 0
        %3550 = vmatpush2.bf16.msra.mxu0 0
        %3551 = vmatprep.subr.bf16.mxu0 0
        %3552 = vmatpush2.bf16.msra.mxu0 0
        %3553 = vmatprep.subr.bf16.mxu0 0
        %3554 = vmatpush2.bf16.msra.mxu0 0
        %3555 = vmatprep.subr.bf16.mxu0 0
        %3556 = vmatpush2.bf16.msra.mxu0 0
        %3557 = vmatprep.subr.bf16.mxu0 0
        %3558 = vmatpush2.bf16.msra.mxu0 0
        %3559 = vmatprep.subr.bf16.mxu0 0
        %3560 = vmatpush2.bf16.msra.mxu0 0
        %3561 = vmatprep.subr.bf16.mxu0 0
        %3562 = vmatpush2.bf16.msra.mxu0 0
        %3563 = vmatprep.subr.bf16.mxu0 0
        %3564 = vmatpush2.bf16.msra.mxu0 0
        %3565 = vmatprep.mubr.bf16.mxu0 0
        %3566 = vmatmul.mubr.bf16.gmra.mxu0 %v3528
        %v3567 = vpop.f32.mrf.mxu0
        %v3568 = vadd.f32 0.0, %v3567
        %v3569 = vpop.f32.mrf.mxu0
        %v3570 = vpop.f32.mrf.mxu0
        %v3571 = vpop.f32.mrf.mxu0
        %3572 = vdwg.mxu0
        %v3574 = vsel %vm1097, %v3475, 0
        %v3577 = vsel %vm1753, %v3479, 0
        %3579 = vmatprep.subr.bf16.mxu0 0
        %3580 = vmatpush1.bf16.msra.mxu0 0
        %3581 = vmatprep.subr.bf16.mxu0 0
        %3582 = vmatpush1.bf16.msra.mxu0 0
        %3583 = vmatprep.subr.bf16.mxu0 0
        %3584 = vmatpush1.bf16.msra.mxu0 0
        %3585 = vmatprep.subr.bf16.mxu0 0
        %3586 = vmatpush1.bf16.msra.mxu0 0
        %3587 = vmatprep.subr.bf16.mxu0 0
        %3588 = vmatpush1.bf16.msra.mxu0 0
        %3589 = vmatprep.subr.bf16.mxu0 0
        %3590 = vmatpush1.bf16.msra.mxu0 0
        %3591 = vmatprep.subr.bf16.mxu0 0
        %3592 = vmatpush1.bf16.msra.mxu0 0
        %3593 = vmatprep.subr.bf16.mxu0 0
        %3594 = vmatpush1.bf16.msra.mxu0 %v3577
        %3595 = vmatprep.subr.bf16.mxu0 0
        %3596 = vmatpush2.bf16.msra.mxu0 0
        %3597 = vmatprep.subr.bf16.mxu0 0
        %3598 = vmatpush2.bf16.msra.mxu0 0
        %3599 = vmatprep.subr.bf16.mxu0 0
        %3600 = vmatpush2.bf16.msra.mxu0 0
        %3601 = vmatprep.subr.bf16.mxu0 0
        %3602 = vmatpush2.bf16.msra.mxu0 0
        %3603 = vmatprep.subr.bf16.mxu0 0
        %3604 = vmatpush2.bf16.msra.mxu0 0
        %3605 = vmatprep.subr.bf16.mxu0 0
        %3606 = vmatpush2.bf16.msra.mxu0 0
        %3607 = vmatprep.subr.bf16.mxu0 0
        %3608 = vmatpush2.bf16.msra.mxu0 0
        %3609 = vmatprep.subr.bf16.mxu0 0
        %3610 = vmatpush2.bf16.msra.mxu0 0
        %3611 = vmatprep.mubr.bf16.mxu0 0
        %3612 = vmatmul.mubr.bf16.gmra.mxu0 %v3574
        %v3613 = vpop.f32.mrf.mxu0
        %v3614 = vadd.f32 0.0, %v3613
        %v3615 = vpop.f32.mrf.mxu0
        %v3616 = vpop.f32.mrf.mxu0
        %v3617 = vpop.f32.mrf.mxu0
        %3618 = vdwg.mxu0
        %v3620 = vsel %vm1097, %v3476, 0
        %v3623 = vsel %vm1753, %v3480, 0
        %3625 = vmatprep.subr.bf16.mxu0 0
        %3626 = vmatpush1.bf16.msra.mxu0 0
        %3627 = vmatprep.subr.bf16.mxu0 0
        %3628 = vmatpush1.bf16.msra.mxu0 0
        %3629 = vmatprep.subr.bf16.mxu0 0
        %3630 = vmatpush1.bf16.msra.mxu0 0
        %3631 = vmatprep.subr.bf16.mxu0 0
        %3632 = vmatpush1.bf16.msra.mxu0 0
        %3633 = vmatprep.subr.bf16.mxu0 0
        %3634 = vmatpush1.bf16.msra.mxu0 0
        %3635 = vmatprep.subr.bf16.mxu0 0
        %3636 = vmatpush1.bf16.msra.mxu0 0
        %3637 = vmatprep.subr.bf16.mxu0 0
        %3638 = vmatpush1.bf16.msra.mxu0 0
        %3639 = vmatprep.subr.bf16.mxu0 0
        %3640 = vmatpush1.bf16.msra.mxu0 %v3623
        %3641 = vmatprep.subr.bf16.mxu0 0
        %3642 = vmatpush2.bf16.msra.mxu0 0
        %3643 = vmatprep.subr.bf16.mxu0 0
        %3644 = vmatpush2.bf16.msra.mxu0 0
        %3645 = vmatprep.subr.bf16.mxu0 0
        %3646 = vmatpush2.bf16.msra.mxu0 0
        %3647 = vmatprep.subr.bf16.mxu0 0
        %3648 = vmatpush2.bf16.msra.mxu0 0
        %3649 = vmatprep.subr.bf16.mxu0 0
        %3650 = vmatpush2.bf16.msra.mxu0 0
        %3651 = vmatprep.subr.bf16.mxu0 0
        %3652 = vmatpush2.bf16.msra.mxu0 0
        %3653 = vmatprep.subr.bf16.mxu0 0
        %3654 = vmatpush2.bf16.msra.mxu0 0
        %3655 = vmatprep.subr.bf16.mxu0 0
        %3656 = vmatpush2.bf16.msra.mxu0 0
        %3657 = vmatprep.mubr.bf16.mxu0 0
        %3658 = vmatmul.mubr.bf16.gmra.mxu0 %v3620
        %v3659 = vpop.f32.mrf.mxu0
        %v3660 = vadd.f32 0.0, %v3659
        %v3661 = vpop.f32.mrf.mxu0
        %v3662 = vpop.f32.mrf.mxu0
        %v3663 = vpop.f32.mrf.mxu0
        %3664 = vdwg.mxu0
        %v3665 = vsel %vm316, %v3522, 0.0
        %v3666 = vsel %vm316, %v3568, 0.0
        %v3667 = vadd.f32 %v3665, %v3666
        %v3668 = vsel %vm316, %v3614, 0.0
        %v3669 = vadd.f32 %v3667, %v3668
        %v3670 = vsel %vm316, %v3660, 0.0
        %v3671 = vadd.f32 %v3669, %v3670
        %v3672 = vld [vmem:[%s5 + $0xe] sm:$0x1]
        %v3673 = vlaneseq
        %v3674 = vshrl.u32 %v3673, 7
        %v3675 = vsub.s32 0, %v3674
        %v3676 = vrot.slane %v3672, %v3675
        %v3677 = vadd.f32 %v3671, %v3676
        %v3678 = vadd.f32 %v2385, %v3677
        %v3679 = vld [vmem:[%s5 + $0xf] sm:$0x1]
        %v3680 = vld [vmem:[%s5 + $0x10] sm:$0x1]
        %v3681 = vsel %vm316, %v3678, 0.0
        %3682 = vadd.xlane.f32.xlu0 %v3681
        %v3683 = vpop.xlane.xlu0 %3682
        %v3684 = vmul.f32 %v3683, %v333
        %v3685 = vmul.f32 %v3678, %v3678
        %v3686 = vsel %vm316, %v3685, 0.0
        %3687 = vadd.xlane.f32.xlu0 %v3686
        %v3688 = vpop.xlane.xlu0 %3687
        %v3689 = vmul.f32 %v3688, %v333
        %v3690 = vmul.f32 %v3684, %v3684
        %v3691 = vsub.f32 %v3689, %v3690
        %v3692 = vsub.f32 %v3678, %v3684
        %v3693 = vadd.f32 %v3691, 1e-05
        %v3694 = vrsqrt.pop %v3693
        %v3695 = vmul.f32 %v3692, %v3694
        %v3696 = vlaneseq
        %v3697 = vshrl.u32 %v3696, 7
        %v3698 = vsub.s32 0, %v3697
        %v3699 = vrot.slane %v3679, %v3698
        %v3700 = vmul.f32 %v3695, %v3699
        %v3701 = vlaneseq
        %v3702 = vshrl.u32 %v3701, 7
        %v3703 = vsub.s32 0, %v3702
        %v3704 = vrot.slane %v3680, %v3703
        %v3705 = vadd.f32 %v3700, %v3704
        %v3706 = vpack.c.bf16 %v3705, %v3705
        %v3707 = vld [vmem:[%s5 + $0x11] sm:$0x1]
        %v3708 = vlaneseq
        %v3709 = vshrl.u32 %v3708, 7
        %v3710 = vsub.s32 0, %v3709
        %v3711 = vrot.slane %v3707, %v3710
        %3712 = vrot.lane.b32.xlu0 %v2643, 64
        %v3713 = vpop.permute.xlu0 %3712
        %3714 = vrot.lane.b32.xlu0 %v2644, 64
        %v3715 = vpop.permute.xlu0 %3714
        %v3719 = vsel %vm316, %v3706, 0
        %3721 = vmatprep.subr.bf16.mxu0 0
        %3722 = vmatpush1.bf16.msra.mxu0 0
        %3723 = vmatprep.subr.bf16.mxu0 0
        %3724 = vmatpush1.bf16.msra.mxu0 0
        %3725 = vmatprep.subr.bf16.mxu0 0
        %3726 = vmatpush1.bf16.msra.mxu0 0
        %3727 = vmatprep.subr.bf16.mxu0 0
        %3728 = vmatpush1.bf16.msra.mxu0 0
        %3729 = vmatprep.subr.bf16.mxu0 0
        %3730 = vmatpush1.bf16.msra.mxu0 0
        %3731 = vmatprep.subr.bf16.mxu0 0
        %3732 = vmatpush1.bf16.msra.mxu0 0
        %3733 = vmatprep.subr.bf16.mxu0 0
        %3734 = vmatpush1.bf16.msra.mxu0 %v3715
        %3735 = vmatprep.subr.bf16.mxu0 0
        %3736 = vmatpush1.bf16.msra.mxu0 %v3713
        %3737 = vmatprep.subr.bf16.mxu0 0
        %3738 = vmatpush2.bf16.msra.mxu0 0
        %3739 = vmatprep.subr.bf16.mxu0 0
        %3740 = vmatpush2.bf16.msra.mxu0 0
        %3741 = vmatprep.subr.bf16.mxu0 0
        %3742 = vmatpush2.bf16.msra.mxu0 0
        %3743 = vmatprep.subr.bf16.mxu0 0
        %3744 = vmatpush2.bf16.msra.mxu0 0
        %3745 = vmatprep.subr.bf16.mxu0 0
        %3746 = vmatpush2.bf16.msra.mxu0 0
        %3747 = vmatprep.subr.bf16.mxu0 0
        %3748 = vmatpush2.bf16.msra.mxu0 0
        %3749 = vmatprep.subr.bf16.mxu0 0
        %3750 = vmatpush2.bf16.msra.mxu0 0
        %3751 = vmatprep.subr.bf16.mxu0 0
        %3752 = vmatpush2.bf16.msra.mxu0 0
        %3753 = vmatprep.mubr.bf16.mxu0 0
        %3754 = vmatmul.mubr.bf16.gmra.mxu0 %v3719
        %v3755 = vpop.f32.mrf.mxu0
        %v3756 = vadd.f32 %v3711, %v3755
        %v3757 = vpop.f32.mrf.mxu0
        %v3758 = vpop.f32.mrf.mxu0
        %v3759 = vpop.f32.mrf.mxu0
        %3760 = vdwg.mxu0
        %3761 = vrot.lane.b32.xlu0 %v2643, 56
        %v3762 = vpop.permute.xlu0 %3761
        %3763 = vrot.lane.b32.xlu0 %v2644, 56
        %v3764 = vpop.permute.xlu0 %3763
        %3768 = vrot.lane.b32.xlu0 %v3711, 120
        %v3769 = vpop.permute.xlu0 %3768
        %3771 = vmatprep.subr.bf16.mxu0 0
        %3772 = vmatpush1.bf16.msra.mxu0 0
        %3773 = vmatprep.subr.bf16.mxu0 0
        %3774 = vmatpush1.bf16.msra.mxu0 0
        %3775 = vmatprep.subr.bf16.mxu0 0
        %3776 = vmatpush1.bf16.msra.mxu0 0
        %3777 = vmatprep.subr.bf16.mxu0 0
        %3778 = vmatpush1.bf16.msra.mxu0 0
        %3779 = vmatprep.subr.bf16.mxu0 0
        %3780 = vmatpush1.bf16.msra.mxu0 0
        %3781 = vmatprep.subr.bf16.mxu0 0
        %3782 = vmatpush1.bf16.msra.mxu0 0
        %3783 = vmatprep.subr.bf16.mxu0 0
        %3784 = vmatpush1.bf16.msra.mxu0 %v3764
        %3785 = vmatprep.subr.bf16.mxu0 0
        %3786 = vmatpush1.bf16.msra.mxu0 %v3762
        %3787 = vmatprep.subr.bf16.mxu0 0
        %3788 = vmatpush2.bf16.msra.mxu0 0
        %3789 = vmatprep.subr.bf16.mxu0 0
        %3790 = vmatpush2.bf16.msra.mxu0 0
        %3791 = vmatprep.subr.bf16.mxu0 0
        %3792 = vmatpush2.bf16.msra.mxu0 0
        %3793 = vmatprep.subr.bf16.mxu0 0
        %3794 = vmatpush2.bf16.msra.mxu0 0
        %3795 = vmatprep.subr.bf16.mxu0 0
        %3796 = vmatpush2.bf16.msra.mxu0 0
        %3797 = vmatprep.subr.bf16.mxu0 0
        %3798 = vmatpush2.bf16.msra.mxu0 0
        %3799 = vmatprep.subr.bf16.mxu0 0
        %3800 = vmatpush2.bf16.msra.mxu0 0
        %3801 = vmatprep.subr.bf16.mxu0 0
        %3802 = vmatpush2.bf16.msra.mxu0 0
        %3803 = vmatprep.mubr.bf16.mxu0 0
        %3804 = vmatmul.mubr.bf16.gmra.mxu0 %v3719
        %v3805 = vpop.f32.mrf.mxu0
        %v3806 = vadd.f32 %v3769, %v3805
        %v3807 = vpop.f32.mrf.mxu0
        %v3808 = vpop.f32.mrf.mxu0
        %v3809 = vpop.f32.mrf.mxu0
        %3810 = vdwg.mxu0
        %3811 = vrot.lane.b32.xlu0 %v2643, 48
        %v3812 = vpop.permute.xlu0 %3811
        %3813 = vrot.lane.b32.xlu0 %v2644, 48
        %v3814 = vpop.permute.xlu0 %3813
        %3817 = vrot.lane.b32.xlu0 %v3711, 112
        %v3818 = vpop.permute.xlu0 %3817
        %3820 = vmatprep.subr.bf16.mxu0 0
        %3821 = vmatpush1.bf16.msra.mxu0 0
        %3822 = vmatprep.subr.bf16.mxu0 0
        %3823 = vmatpush1.bf16.msra.mxu0 0
        %3824 = vmatprep.subr.bf16.mxu0 0
        %3825 = vmatpush1.bf16.msra.mxu0 0
        %3826 = vmatprep.subr.bf16.mxu0 0
        %3827 = vmatpush1.bf16.msra.mxu0 0
        %3828 = vmatprep.subr.bf16.mxu0 0
        %3829 = vmatpush1.bf16.msra.mxu0 0
        %3830 = vmatprep.subr.bf16.mxu0 0
        %3831 = vmatpush1.bf16.msra.mxu0 0
        %3832 = vmatprep.subr.bf16.mxu0 0
        %3833 = vmatpush1.bf16.msra.mxu0 %v3814
        %3834 = vmatprep.subr.bf16.mxu0 0
        %3835 = vmatpush1.bf16.msra.mxu0 %v3812
        %3836 = vmatprep.subr.bf16.mxu0 0
        %3837 = vmatpush2.bf16.msra.mxu0 0
        %3838 = vmatprep.subr.bf16.mxu0 0
        %3839 = vmatpush2.bf16.msra.mxu0 0
        %3840 = vmatprep.subr.bf16.mxu0 0
        %3841 = vmatpush2.bf16.msra.mxu0 0
        %3842 = vmatprep.subr.bf16.mxu0 0
        %3843 = vmatpush2.bf16.msra.mxu0 0
        %3844 = vmatprep.subr.bf16.mxu0 0
        %3845 = vmatpush2.bf16.msra.mxu0 0
        %3846 = vmatprep.subr.bf16.mxu0 0
        %3847 = vmatpush2.bf16.msra.mxu0 0
        %3848 = vmatprep.subr.bf16.mxu0 0
        %3849 = vmatpush2.bf16.msra.mxu0 0
        %3850 = vmatprep.subr.bf16.mxu0 0
        %3851 = vmatpush2.bf16.msra.mxu0 0
        %3852 = vmatprep.mubr.bf16.mxu0 0
        %3853 = vmatmul.mubr.bf16.gmra.mxu0 %v3719
        %v3854 = vpop.f32.mrf.mxu0
        %v3855 = vadd.f32 %v3818, %v3854
        %v3856 = vpop.f32.mrf.mxu0
        %v3857 = vpop.f32.mrf.mxu0
        %v3858 = vpop.f32.mrf.mxu0
        %3859 = vdwg.mxu0
        %3860 = vrot.lane.b32.xlu0 %v2643, 40
        %v3861 = vpop.permute.xlu0 %3860
        %3862 = vrot.lane.b32.xlu0 %v2644, 40
        %v3863 = vpop.permute.xlu0 %3862
        %3866 = vrot.lane.b32.xlu0 %v3711, 104
        %v3867 = vpop.permute.xlu0 %3866
        %3869 = vmatprep.subr.bf16.mxu0 0
        %3870 = vmatpush1.bf16.msra.mxu0 0
        %3871 = vmatprep.subr.bf16.mxu0 0
        %3872 = vmatpush1.bf16.msra.mxu0 0
        %3873 = vmatprep.subr.bf16.mxu0 0
        %3874 = vmatpush1.bf16.msra.mxu0 0
        %3875 = vmatprep.subr.bf16.mxu0 0
        %3876 = vmatpush1.bf16.msra.mxu0 0
        %3877 = vmatprep.subr.bf16.mxu0 0
        %3878 = vmatpush1.bf16.msra.mxu0 0
        %3879 = vmatprep.subr.bf16.mxu0 0
        %3880 = vmatpush1.bf16.msra.mxu0 0
        %3881 = vmatprep.subr.bf16.mxu0 0
        %3882 = vmatpush1.bf16.msra.mxu0 %v3863
        %3883 = vmatprep.subr.bf16.mxu0 0
        %3884 = vmatpush1.bf16.msra.mxu0 %v3861
        %3885 = vmatprep.subr.bf16.mxu0 0
        %3886 = vmatpush2.bf16.msra.mxu0 0
        %3887 = vmatprep.subr.bf16.mxu0 0
        %3888 = vmatpush2.bf16.msra.mxu0 0
        %3889 = vmatprep.subr.bf16.mxu0 0
        %3890 = vmatpush2.bf16.msra.mxu0 0
        %3891 = vmatprep.subr.bf16.mxu0 0
        %3892 = vmatpush2.bf16.msra.mxu0 0
        %3893 = vmatprep.subr.bf16.mxu0 0
        %3894 = vmatpush2.bf16.msra.mxu0 0
        %3895 = vmatprep.subr.bf16.mxu0 0
        %3896 = vmatpush2.bf16.msra.mxu0 0
        %3897 = vmatprep.subr.bf16.mxu0 0
        %3898 = vmatpush2.bf16.msra.mxu0 0
        %3899 = vmatprep.subr.bf16.mxu0 0
        %3900 = vmatpush2.bf16.msra.mxu0 0
        %3901 = vmatprep.mubr.bf16.mxu0 0
        %3902 = vmatmul.mubr.bf16.gmra.mxu0 %v3719
        %v3903 = vpop.f32.mrf.mxu0
        %v3904 = vadd.f32 %v3867, %v3903
        %v3905 = vpop.f32.mrf.mxu0
        %v3906 = vpop.f32.mrf.mxu0
        %v3907 = vpop.f32.mrf.mxu0
        %3908 = vdwg.mxu0
        %v3909 = vpack.c.bf16 %v2319, %v2318
        %v3910 = vpack.c.bf16 %v2320, %v2320
        %v3911 = vld [vmem:[%s5 + $0x12] sm:$0x1]
        %v3912 = vlaneseq
        %v3913 = vshrl.u32 %v3912, 7
        %v3914 = vsub.s32 0, %v3913
        %v3915 = vrot.slane %v3911, %v3914
        %3916 = vrot.lane.b32.xlu0 %v2643, 32
        %v3917 = vpop.permute.xlu0 %3916
        %3918 = vrot.lane.b32.xlu0 %v2644, 32
        %v3919 = vpop.permute.xlu0 %3918
        %v3923 = vsel %vm316, %v3909, 0
        %v3926 = vsel %vm316, %v3910, 0
        %3928 = vmatprep.subr.bf16.mxu0 0
        %3929 = vmatpush1.bf16.msra.mxu0 0
        %3930 = vmatprep.subr.bf16.mxu0 0
        %3931 = vmatpush1.bf16.msra.mxu0 0
        %3932 = vmatprep.subr.bf16.mxu0 0
        %3933 = vmatpush1.bf16.msra.mxu0 0
        %3934 = vmatprep.subr.bf16.mxu0 0
        %3935 = vmatpush1.bf16.msra.mxu0 0
        %3936 = vmatprep.subr.bf16.mxu0 0
        %3937 = vmatpush1.bf16.msra.mxu0 0
        %3938 = vmatprep.subr.bf16.mxu0 0
        %3939 = vmatpush1.bf16.msra.mxu0 0
        %3940 = vmatprep.subr.bf16.mxu0 0
        %3941 = vmatpush1.bf16.msra.mxu0 %v3919
        %3942 = vmatprep.subr.bf16.mxu0 0
        %3943 = vmatpush1.bf16.msra.mxu0 %v3917
        %3944 = vmatprep.subr.bf16.mxu0 0
        %3945 = vmatpush2.bf16.msra.mxu0 0
        %3946 = vmatprep.subr.bf16.mxu0 0
        %3947 = vmatpush2.bf16.msra.mxu0 0
        %3948 = vmatprep.subr.bf16.mxu0 0
        %3949 = vmatpush2.bf16.msra.mxu0 0
        %3950 = vmatprep.subr.bf16.mxu0 0
        %3951 = vmatpush2.bf16.msra.mxu0 0
        %3952 = vmatprep.subr.bf16.mxu0 0
        %3953 = vmatpush2.bf16.msra.mxu0 0
        %3954 = vmatprep.subr.bf16.mxu0 0
        %3955 = vmatpush2.bf16.msra.mxu0 0
        %3956 = vmatprep.subr.bf16.mxu0 0
        %3957 = vmatpush2.bf16.msra.mxu0 0
        %3958 = vmatprep.subr.bf16.mxu0 0
        %3959 = vmatpush2.bf16.msra.mxu0 0
        %3960 = vmatprep.mubr.bf16.mxu0 0
        %3961 = vmatmul.mubr.bf16.gmra.mxu0 %v3923
        %v3962 = vpop.f32.mrf.mxu0
        %v3963 = vadd.f32 %v3915, %v3962
        %v3964 = vpop.f32.mrf.mxu0
        %v3965 = vpop.f32.mrf.mxu0
        %v3966 = vadd.f32 %v3915, %v3965
        %v3967 = vpop.f32.mrf.mxu0
        %3968 = vmatprep.mubr.bf16.mxu0 0
        %3969 = vmatmul.mubr.bf16.gmra.mxu0 %v3926
        %v3970 = vpop.f32.mrf.mxu0
        %v3971 = vadd.f32 %v3915, %v3970
        %v3972 = vpop.f32.mrf.mxu0
        %v3973 = vpop.f32.mrf.mxu0
        %v3974 = vpop.f32.mrf.mxu0
        %3975 = vdwg.mxu0
        %3976 = vrot.lane.b32.xlu0 %v2643, 24
        %v3977 = vpop.permute.xlu0 %3976
        %3978 = vrot.lane.b32.xlu0 %v2644, 24
        %v3979 = vpop.permute.xlu0 %3978
        %3983 = vrot.lane.b32.xlu0 %v3915, 120
        %v3984 = vpop.permute.xlu0 %3983
        %3986 = vmatprep.subr.bf16.mxu0 0
        %3987 = vmatpush1.bf16.msra.mxu0 0
        %3988 = vmatprep.subr.bf16.mxu0 0
        %3989 = vmatpush1.bf16.msra.mxu0 0
        %3990 = vmatprep.subr.bf16.mxu0 0
        %3991 = vmatpush1.bf16.msra.mxu0 0
        %3992 = vmatprep.subr.bf16.mxu0 0
        %3993 = vmatpush1.bf16.msra.mxu0 0
        %3994 = vmatprep.subr.bf16.mxu0 0
        %3995 = vmatpush1.bf16.msra.mxu0 0
        %3996 = vmatprep.subr.bf16.mxu0 0
        %3997 = vmatpush1.bf16.msra.mxu0 0
        %3998 = vmatprep.subr.bf16.mxu0 0
        %3999 = vmatpush1.bf16.msra.mxu0 %v3979
        %4000 = vmatprep.subr.bf16.mxu0 0
        %4001 = vmatpush1.bf16.msra.mxu0 %v3977
        %4002 = vmatprep.subr.bf16.mxu0 0
        %4003 = vmatpush2.bf16.msra.mxu0 0
        %4004 = vmatprep.subr.bf16.mxu0 0
        %4005 = vmatpush2.bf16.msra.mxu0 0
        %4006 = vmatprep.subr.bf16.mxu0 0
        %4007 = vmatpush2.bf16.msra.mxu0 0
        %4008 = vmatprep.subr.bf16.mxu0 0
        %4009 = vmatpush2.bf16.msra.mxu0 0
        %4010 = vmatprep.subr.bf16.mxu0 0
        %4011 = vmatpush2.bf16.msra.mxu0 0
        %4012 = vmatprep.subr.bf16.mxu0 0
        %4013 = vmatpush2.bf16.msra.mxu0 0
        %4014 = vmatprep.subr.bf16.mxu0 0
        %4015 = vmatpush2.bf16.msra.mxu0 0
        %4016 = vmatprep.subr.bf16.mxu0 0
        %4017 = vmatpush2.bf16.msra.mxu0 0
        %4018 = vmatprep.mubr.bf16.mxu0 0
        %4019 = vmatmul.mubr.bf16.gmra.mxu0 %v3923
        %v4020 = vpop.f32.mrf.mxu0
        %v4021 = vadd.f32 %v3984, %v4020
        %v4022 = vpop.f32.mrf.mxu0
        %v4023 = vpop.f32.mrf.mxu0
        %v4024 = vadd.f32 %v3984, %v4023
        %v4025 = vpop.f32.mrf.mxu0
        %4026 = vmatprep.mubr.bf16.mxu0 0
        %4027 = vmatmul.mubr.bf16.gmra.mxu0 %v3926
        %v4028 = vpop.f32.mrf.mxu0
        %v4029 = vadd.f32 %v3984, %v4028
        %v4030 = vpop.f32.mrf.mxu0
        %v4031 = vpop.f32.mrf.mxu0
        %v4032 = vpop.f32.mrf.mxu0
        %4033 = vdwg.mxu0
        %4034 = vrot.lane.b32.xlu0 %v2643, 16
        %v4035 = vpop.permute.xlu0 %4034
        %4036 = vrot.lane.b32.xlu0 %v2644, 16
        %v4037 = vpop.permute.xlu0 %4036
        %4040 = vrot.lane.b32.xlu0 %v3915, 112
        %v4041 = vpop.permute.xlu0 %4040
        %4043 = vmatprep.subr.bf16.mxu0 0
        %4044 = vmatpush1.bf16.msra.mxu0 0
        %4045 = vmatprep.subr.bf16.mxu0 0
        %4046 = vmatpush1.bf16.msra.mxu0 0
        %4047 = vmatprep.subr.bf16.mxu0 0
        %4048 = vmatpush1.bf16.msra.mxu0 0
        %4049 = vmatprep.subr.bf16.mxu0 0
        %4050 = vmatpush1.bf16.msra.mxu0 0
        %4051 = vmatprep.subr.bf16.mxu0 0
        %4052 = vmatpush1.bf16.msra.mxu0 0
        %4053 = vmatprep.subr.bf16.mxu0 0
        %4054 = vmatpush1.bf16.msra.mxu0 0
        %4055 = vmatprep.subr.bf16.mxu0 0
        %4056 = vmatpush1.bf16.msra.mxu0 %v4037
        %4057 = vmatprep.subr.bf16.mxu0 0
        %4058 = vmatpush1.bf16.msra.mxu0 %v4035
        %4059 = vmatprep.subr.bf16.mxu0 0
        %4060 = vmatpush2.bf16.msra.mxu0 0
        %4061 = vmatprep.subr.bf16.mxu0 0
        %4062 = vmatpush2.bf16.msra.mxu0 0
        %4063 = vmatprep.subr.bf16.mxu0 0
        %4064 = vmatpush2.bf16.msra.mxu0 0
        %4065 = vmatprep.subr.bf16.mxu0 0
        %4066 = vmatpush2.bf16.msra.mxu0 0
        %4067 = vmatprep.subr.bf16.mxu0 0
        %4068 = vmatpush2.bf16.msra.mxu0 0
        %4069 = vmatprep.subr.bf16.mxu0 0
        %4070 = vmatpush2.bf16.msra.mxu0 0
        %4071 = vmatprep.subr.bf16.mxu0 0
        %4072 = vmatpush2.bf16.msra.mxu0 0
        %4073 = vmatprep.subr.bf16.mxu0 0
        %4074 = vmatpush2.bf16.msra.mxu0 0
        %4075 = vmatprep.mubr.bf16.mxu0 0
        %4076 = vmatmul.mubr.bf16.gmra.mxu0 %v3923
        %v4077 = vpop.f32.mrf.mxu0
        %v4078 = vadd.f32 %v4041, %v4077
        %v4079 = vpop.f32.mrf.mxu0
        %v4080 = vpop.f32.mrf.mxu0
        %v4081 = vadd.f32 %v4041, %v4080
        %v4082 = vpop.f32.mrf.mxu0
        %4083 = vmatprep.mubr.bf16.mxu0 0
        %4084 = vmatmul.mubr.bf16.gmra.mxu0 %v3926
        %v4085 = vpop.f32.mrf.mxu0
        %v4086 = vadd.f32 %v4041, %v4085
        %v4087 = vpop.f32.mrf.mxu0
        %v4088 = vpop.f32.mrf.mxu0
        %v4089 = vpop.f32.mrf.mxu0
        %4090 = vdwg.mxu0
        %4091 = vrot.lane.b32.xlu0 %v2643, 8
        %v4092 = vpop.permute.xlu0 %4091
        %4093 = vrot.lane.b32.xlu0 %v2644, 8
        %v4094 = vpop.permute.xlu0 %4093
        %4097 = vrot.lane.b32.xlu0 %v3915, 104
        %v4098 = vpop.permute.xlu0 %4097
        %4100 = vmatprep.subr.bf16.mxu0 0
        %4101 = vmatpush1.bf16.msra.mxu0 0
        %4102 = vmatprep.subr.bf16.mxu0 0
        %4103 = vmatpush1.bf16.msra.mxu0 0
        %4104 = vmatprep.subr.bf16.mxu0 0
        %4105 = vmatpush1.bf16.msra.mxu0 0
        %4106 = vmatprep.subr.bf16.mxu0 0
        %4107 = vmatpush1.bf16.msra.mxu0 0
        %4108 = vmatprep.subr.bf16.mxu0 0
        %4109 = vmatpush1.bf16.msra.mxu0 0
        %4110 = vmatprep.subr.bf16.mxu0 0
        %4111 = vmatpush1.bf16.msra.mxu0 0
        %4112 = vmatprep.subr.bf16.mxu0 0
        %4113 = vmatpush1.bf16.msra.mxu0 %v4094
        %4114 = vmatprep.subr.bf16.mxu0 0
        %4115 = vmatpush1.bf16.msra.mxu0 %v4092
        %4116 = vmatprep.subr.bf16.mxu0 0
        %4117 = vmatpush2.bf16.msra.mxu0 0
        %4118 = vmatprep.subr.bf16.mxu0 0
        %4119 = vmatpush2.bf16.msra.mxu0 0
        %4120 = vmatprep.subr.bf16.mxu0 0
        %4121 = vmatpush2.bf16.msra.mxu0 0
        %4122 = vmatprep.subr.bf16.mxu0 0
        %4123 = vmatpush2.bf16.msra.mxu0 0
        %4124 = vmatprep.subr.bf16.mxu0 0
        %4125 = vmatpush2.bf16.msra.mxu0 0
        %4126 = vmatprep.subr.bf16.mxu0 0
        %4127 = vmatpush2.bf16.msra.mxu0 0
        %4128 = vmatprep.subr.bf16.mxu0 0
        %4129 = vmatpush2.bf16.msra.mxu0 0
        %4130 = vmatprep.subr.bf16.mxu0 0
        %4131 = vmatpush2.bf16.msra.mxu0 0
        %4132 = vmatprep.mubr.bf16.mxu0 0
        %4133 = vmatmul.mubr.bf16.gmra.mxu0 %v3923
        %v4134 = vpop.f32.mrf.mxu0
        %v4135 = vadd.f32 %v4098, %v4134
        %v4136 = vpop.f32.mrf.mxu0
        %v4137 = vpop.f32.mrf.mxu0
        %v4138 = vadd.f32 %v4098, %v4137
        %v4139 = vpop.f32.mrf.mxu0
        %4140 = vmatprep.mubr.bf16.mxu0 0
        %4141 = vmatmul.mubr.bf16.gmra.mxu0 %v3926
        %v4142 = vpop.f32.mrf.mxu0
        %v4143 = vadd.f32 %v4098, %v4142
        %v4144 = vpop.f32.mrf.mxu0
        %v4145 = vpop.f32.mrf.mxu0
        %v4146 = vpop.f32.mrf.mxu0
        %4147 = vdwg.mxu0
        %v4148 = vld [vmem:[%s3 + $0x10] sm:$0xff]
        %v4149 = vld [vmem:[%s3 + $0x30] sm:$0xff]
        %v4150 = vld [vmem:[%s3 + $0x50] sm:$0xff]
        %v4151 = vld [vmem:[%s3 + $0x70] sm:$0xff]
        %v4152 = vpack.c.bf16 %v4149, %v4148
        %v4153 = vpack.c.bf16 %v4151, %v4150
        %4154 = vrot.lane.b32.xlu0 %v3915, 96
        %v4155 = vpop.permute.xlu0 %4154
        %4157 = vmatprep.subr.bf16.mxu0 0
        %4158 = vmatpush1.bf16.msra.mxu0 0
        %4159 = vmatprep.subr.bf16.mxu0 0
        %4160 = vmatpush1.bf16.msra.mxu0 0
        %4161 = vmatprep.subr.bf16.mxu0 0
        %4162 = vmatpush1.bf16.msra.mxu0 0
        %4163 = vmatprep.subr.bf16.mxu0 0
        %4164 = vmatpush1.bf16.msra.mxu0 0
        %4165 = vmatprep.subr.bf16.mxu0 0
        %4166 = vmatpush1.bf16.msra.mxu0 0
        %4167 = vmatprep.subr.bf16.mxu0 0
        %4168 = vmatpush1.bf16.msra.mxu0 0
        %4169 = vmatprep.subr.bf16.mxu0 0
        %4170 = vmatpush1.bf16.msra.mxu0 %v4153
        %4171 = vmatprep.subr.bf16.mxu0 0
        %4172 = vmatpush1.bf16.msra.mxu0 %v4152
        %4173 = vmatprep.subr.bf16.mxu0 0
        %4174 = vmatpush2.bf16.msra.mxu0 0
        %4175 = vmatprep.subr.bf16.mxu0 0
        %4176 = vmatpush2.bf16.msra.mxu0 0
        %4177 = vmatprep.subr.bf16.mxu0 0
        %4178 = vmatpush2.bf16.msra.mxu0 0
        %4179 = vmatprep.subr.bf16.mxu0 0
        %4180 = vmatpush2.bf16.msra.mxu0 0
        %4181 = vmatprep.subr.bf16.mxu0 0
        %4182 = vmatpush2.bf16.msra.mxu0 0
        %4183 = vmatprep.subr.bf16.mxu0 0
        %4184 = vmatpush2.bf16.msra.mxu0 0
        %4185 = vmatprep.subr.bf16.mxu0 0
        %4186 = vmatpush2.bf16.msra.mxu0 0
        %4187 = vmatprep.subr.bf16.mxu0 0
        %4188 = vmatpush2.bf16.msra.mxu0 0
        %4189 = vmatprep.mubr.bf16.mxu0 0
        %4190 = vmatmul.mubr.bf16.gmra.mxu0 %v3923
        %v4191 = vpop.f32.mrf.mxu0
        %v4192 = vadd.f32 %v4155, %v4191
        %v4193 = vpop.f32.mrf.mxu0
        %v4194 = vpop.f32.mrf.mxu0
        %v4195 = vadd.f32 %v4155, %v4194
        %v4196 = vpop.f32.mrf.mxu0
        %4197 = vmatprep.mubr.bf16.mxu0 0
        %4198 = vmatmul.mubr.bf16.gmra.mxu0 %v3926
        %v4199 = vpop.f32.mrf.mxu0
        %v4200 = vadd.f32 %v4155, %v4199
        %v4201 = vpop.f32.mrf.mxu0
        %v4202 = vpop.f32.mrf.mxu0
        %v4203 = vpop.f32.mrf.mxu0
        %4204 = vdwg.mxu0
        %4207 = vrot.lane.b32.xlu0 %v4152, 120
        %v4208 = vpop.permute.xlu0 %4207
        %4209 = vrot.lane.b32.xlu0 %v4153, 120
        %v4210 = vpop.permute.xlu0 %4209
        %4213 = vrot.lane.b32.xlu0 %v3915, 88
        %v4214 = vpop.permute.xlu0 %4213
        %4216 = vmatprep.subr.bf16.mxu0 0
        %4217 = vmatpush1.bf16.msra.mxu0 0
        %4218 = vmatprep.subr.bf16.mxu0 0
        %4219 = vmatpush1.bf16.msra.mxu0 0
        %4220 = vmatprep.subr.bf16.mxu0 0
        %4221 = vmatpush1.bf16.msra.mxu0 0
        %4222 = vmatprep.subr.bf16.mxu0 0
        %4223 = vmatpush1.bf16.msra.mxu0 0
        %4224 = vmatprep.subr.bf16.mxu0 0
        %4225 = vmatpush1.bf16.msra.mxu0 0
        %4226 = vmatprep.subr.bf16.mxu0 0
        %4227 = vmatpush1.bf16.msra.mxu0 0
        %4228 = vmatprep.subr.bf16.mxu0 0
        %4229 = vmatpush1.bf16.msra.mxu0 %v4210
        %4230 = vmatprep.subr.bf16.mxu0 0
        %4231 = vmatpush1.bf16.msra.mxu0 %v4208
        %4232 = vmatprep.subr.bf16.mxu0 0
        %4233 = vmatpush2.bf16.msra.mxu0 0
        %4234 = vmatprep.subr.bf16.mxu0 0
        %4235 = vmatpush2.bf16.msra.mxu0 0
        %4236 = vmatprep.subr.bf16.mxu0 0
        %4237 = vmatpush2.bf16.msra.mxu0 0
        %4238 = vmatprep.subr.bf16.mxu0 0
        %4239 = vmatpush2.bf16.msra.mxu0 0
        %4240 = vmatprep.subr.bf16.mxu0 0
        %4241 = vmatpush2.bf16.msra.mxu0 0
        %4242 = vmatprep.subr.bf16.mxu0 0
        %4243 = vmatpush2.bf16.msra.mxu0 0
        %4244 = vmatprep.subr.bf16.mxu0 0
        %4245 = vmatpush2.bf16.msra.mxu0 0
        %4246 = vmatprep.subr.bf16.mxu0 0
        %4247 = vmatpush2.bf16.msra.mxu0 0
        %4248 = vmatprep.mubr.bf16.mxu0 0
        %4249 = vmatmul.mubr.bf16.gmra.mxu0 %v3923
        %v4250 = vpop.f32.mrf.mxu0
        %v4251 = vadd.f32 %v4214, %v4250
        %v4252 = vpop.f32.mrf.mxu0
        %v4253 = vpop.f32.mrf.mxu0
        %v4254 = vadd.f32 %v4214, %v4253
        %v4255 = vpop.f32.mrf.mxu0
        %4256 = vmatprep.mubr.bf16.mxu0 0
        %4257 = vmatmul.mubr.bf16.gmra.mxu0 %v3926
        %v4258 = vpop.f32.mrf.mxu0
        %v4259 = vadd.f32 %v4214, %v4258
        %v4260 = vpop.f32.mrf.mxu0
        %v4261 = vpop.f32.mrf.mxu0
        %v4262 = vpop.f32.mrf.mxu0
        %4263 = vdwg.mxu0
        %4264 = vrot.lane.b32.xlu0 %v4152, 112
        %v4265 = vpop.permute.xlu0 %4264
        %4266 = vrot.lane.b32.xlu0 %v4153, 112
        %v4267 = vpop.permute.xlu0 %4266
        %4270 = vrot.lane.b32.xlu0 %v3915, 80
        %v4271 = vpop.permute.xlu0 %4270
        %4273 = vmatprep.subr.bf16.mxu0 0
        %4274 = vmatpush1.bf16.msra.mxu0 0
        %4275 = vmatprep.subr.bf16.mxu0 0
        %4276 = vmatpush1.bf16.msra.mxu0 0
        %4277 = vmatprep.subr.bf16.mxu0 0
        %4278 = vmatpush1.bf16.msra.mxu0 0
        %4279 = vmatprep.subr.bf16.mxu0 0
        %4280 = vmatpush1.bf16.msra.mxu0 0
        %4281 = vmatprep.subr.bf16.mxu0 0
        %4282 = vmatpush1.bf16.msra.mxu0 0
        %4283 = vmatprep.subr.bf16.mxu0 0
        %4284 = vmatpush1.bf16.msra.mxu0 0
        %4285 = vmatprep.subr.bf16.mxu0 0
        %4286 = vmatpush1.bf16.msra.mxu0 %v4267
        %4287 = vmatprep.subr.bf16.mxu0 0
        %4288 = vmatpush1.bf16.msra.mxu0 %v4265
        %4289 = vmatprep.subr.bf16.mxu0 0
        %4290 = vmatpush2.bf16.msra.mxu0 0
        %4291 = vmatprep.subr.bf16.mxu0 0
        %4292 = vmatpush2.bf16.msra.mxu0 0
        %4293 = vmatprep.subr.bf16.mxu0 0
        %4294 = vmatpush2.bf16.msra.mxu0 0
        %4295 = vmatprep.subr.bf16.mxu0 0
        %4296 = vmatpush2.bf16.msra.mxu0 0
        %4297 = vmatprep.subr.bf16.mxu0 0
        %4298 = vmatpush2.bf16.msra.mxu0 0
        %4299 = vmatprep.subr.bf16.mxu0 0
        %4300 = vmatpush2.bf16.msra.mxu0 0
        %4301 = vmatprep.subr.bf16.mxu0 0
        %4302 = vmatpush2.bf16.msra.mxu0 0
        %4303 = vmatprep.subr.bf16.mxu0 0
        %4304 = vmatpush2.bf16.msra.mxu0 0
        %4305 = vmatprep.mubr.bf16.mxu0 0
        %4306 = vmatmul.mubr.bf16.gmra.mxu0 %v3923
        %v4307 = vpop.f32.mrf.mxu0
        %v4308 = vadd.f32 %v4271, %v4307
        %v4309 = vpop.f32.mrf.mxu0
        %v4310 = vpop.f32.mrf.mxu0
        %v4311 = vadd.f32 %v4271, %v4310
        %v4312 = vpop.f32.mrf.mxu0
        %4313 = vmatprep.mubr.bf16.mxu0 0
        %4314 = vmatmul.mubr.bf16.gmra.mxu0 %v3926
        %v4315 = vpop.f32.mrf.mxu0
        %v4316 = vadd.f32 %v4271, %v4315
        %v4317 = vpop.f32.mrf.mxu0
        %v4318 = vpop.f32.mrf.mxu0
        %v4319 = vpop.f32.mrf.mxu0
        %4320 = vdwg.mxu0
        %4321 = vrot.lane.b32.xlu0 %v4152, 104
        %v4322 = vpop.permute.xlu0 %4321
        %4323 = vrot.lane.b32.xlu0 %v4153, 104
        %v4324 = vpop.permute.xlu0 %4323
        %4327 = vrot.lane.b32.xlu0 %v3915, 72
        %v4328 = vpop.permute.xlu0 %4327
        %4330 = vmatprep.subr.bf16.mxu0 0
        %4331 = vmatpush1.bf16.msra.mxu0 0
        %4332 = vmatprep.subr.bf16.mxu0 0
        %4333 = vmatpush1.bf16.msra.mxu0 0
        %4334 = vmatprep.subr.bf16.mxu0 0
        %4335 = vmatpush1.bf16.msra.mxu0 0
        %4336 = vmatprep.subr.bf16.mxu0 0
        %4337 = vmatpush1.bf16.msra.mxu0 0
        %4338 = vmatprep.subr.bf16.mxu0 0
        %4339 = vmatpush1.bf16.msra.mxu0 0
        %4340 = vmatprep.subr.bf16.mxu0 0
        %4341 = vmatpush1.bf16.msra.mxu0 0
        %4342 = vmatprep.subr.bf16.mxu0 0
        %4343 = vmatpush1.bf16.msra.mxu0 %v4324
        %4344 = vmatprep.subr.bf16.mxu0 0
        %4345 = vmatpush1.bf16.msra.mxu0 %v4322
        %4346 = vmatprep.subr.bf16.mxu0 0
        %4347 = vmatpush2.bf16.msra.mxu0 0
        %4348 = vmatprep.subr.bf16.mxu0 0
        %4349 = vmatpush2.bf16.msra.mxu0 0
        %4350 = vmatprep.subr.bf16.mxu0 0
        %4351 = vmatpush2.bf16.msra.mxu0 0
        %4352 = vmatprep.subr.bf16.mxu0 0
        %4353 = vmatpush2.bf16.msra.mxu0 0
        %4354 = vmatprep.subr.bf16.mxu0 0
        %4355 = vmatpush2.bf16.msra.mxu0 0
        %4356 = vmatprep.subr.bf16.mxu0 0
        %4357 = vmatpush2.bf16.msra.mxu0 0
        %4358 = vmatprep.subr.bf16.mxu0 0
        %4359 = vmatpush2.bf16.msra.mxu0 0
        %4360 = vmatprep.subr.bf16.mxu0 0
        %4361 = vmatpush2.bf16.msra.mxu0 0
        %4362 = vmatprep.mubr.bf16.mxu0 0
        %4363 = vmatmul.mubr.bf16.gmra.mxu0 %v3923
        %v4364 = vpop.f32.mrf.mxu0
        %v4365 = vadd.f32 %v4328, %v4364
        %v4366 = vpop.f32.mrf.mxu0
        %v4367 = vpop.f32.mrf.mxu0
        %v4368 = vadd.f32 %v4328, %v4367
        %v4369 = vpop.f32.mrf.mxu0
        %4370 = vmatprep.mubr.bf16.mxu0 0
        %4371 = vmatmul.mubr.bf16.gmra.mxu0 %v3926
        %v4372 = vpop.f32.mrf.mxu0
        %v4373 = vadd.f32 %v4328, %v4372
        %v4374 = vpop.f32.mrf.mxu0
        %v4375 = vpop.f32.mrf.mxu0
        %v4376 = vpop.f32.mrf.mxu0
        %4377 = vdwg.mxu0
        %v4378 = vpack.c.bf16 %v3756, %v3756
        %v4379 = vpack.c.bf16 %v3806, %v3806
        %v4380 = vpack.c.bf16 %v3855, %v3855
        %v4381 = vpack.c.bf16 %v3904, %v3904
        %v4382 = vpack.c.bf16 %v3966, %v3963
        %v4383 = vpack.c.bf16 %v3971, %v3971
        %v4384 = vpack.c.bf16 %v4024, %v4021
        %v4385 = vpack.c.bf16 %v4029, %v4029
        %v4386 = vpack.c.bf16 %v4081, %v4078
        %v4387 = vpack.c.bf16 %v4086, %v4086
        %v4388 = vpack.c.bf16 %v4138, %v4135
        %v4389 = vpack.c.bf16 %v4143, %v4143
        %v4391 = vsel %vm1097, %v4378, 0
        %v4394 = vsel %vm1097, %v4382, 0
        %v4397 = vsel %vm1097, %v4383, 0
        %4399 = vmatprep.subr.bf16.mxu0 0
        %4400 = vmatpush1.bf16.xpose.msra.mxu0 0
        %4401 = vmatprep.subr.bf16.mxu0 0
        %4402 = vmatpush1.bf16.xpose.msra.mxu0 0
        %4403 = vmatprep.subr.bf16.mxu0 0
        %4404 = vmatpush1.bf16.xpose.msra.mxu0 0
        %4405 = vmatprep.subr.bf16.mxu0 0
        %4406 = vmatpush1.bf16.xpose.msra.mxu0 0
        %4407 = vmatprep.subr.bf16.mxu0 0
        %4408 = vmatpush1.bf16.xpose.msra.mxu0 0
        %4409 = vmatprep.subr.bf16.mxu0 0
        %4410 = vmatpush1.bf16.xpose.msra.mxu0 0
        %4411 = vmatprep.subr.bf16.mxu0 0
        %4412 = vmatpush1.bf16.xpose.msra.mxu0 %v4397
        %4413 = vmatprep.subr.bf16.mxu0 0
        %4414 = vmatpush1.bf16.xpose.msra.mxu0 %v4394
        %4415 = vmatprep.subr.bf16.mxu0 0
        %4416 = vmatpush2.bf16.xpose.msra.mxu0 0
        %4417 = vmatprep.subr.bf16.mxu0 0
        %4418 = vmatpush2.bf16.xpose.msra.mxu0 0
        %4419 = vmatprep.subr.bf16.mxu0 0
        %4420 = vmatpush2.bf16.xpose.msra.mxu0 0
        %4421 = vmatprep.subr.bf16.mxu0 0
        %4422 = vmatpush2.bf16.xpose.msra.mxu0 0
        %4423 = vmatprep.subr.bf16.mxu0 0
        %4424 = vmatpush2.bf16.xpose.msra.mxu0 0
        %4425 = vmatprep.subr.bf16.mxu0 0
        %4426 = vmatpush2.bf16.xpose.msra.mxu0 0
        %4427 = vmatprep.subr.bf16.mxu0 0
        %4428 = vmatpush2.bf16.xpose.msra.mxu0 0
        %4429 = vmatprep.subr.bf16.mxu0 0
        %4430 = vmatpush2.bf16.xpose.msra.mxu0 0
        %4431 = vmatprep.mubr.bf16.mxu0 0
        %4432 = vmatmul.mubr.bf16.gmra.mxu0 %v4391
        %v4433 = vpop.f32.mrf.mxu0
        %v4434 = vadd.f32 0.0, %v4433
        %v4435 = vpop.f32.mrf.mxu0
        %v4436 = vpop.f32.mrf.mxu0
        %v4437 = vpop.f32.mrf.mxu0
        %4438 = vdwg.mxu0
        %v4440 = vsel %vm1097, %v4379, 0
        %v4443 = vsel %vm1097, %v4384, 0
        %v4446 = vsel %vm1097, %v4385, 0
        %4448 = vmatprep.subr.bf16.mxu0 0
        %4449 = vmatpush1.bf16.xpose.msra.mxu0 0
        %4450 = vmatprep.subr.bf16.mxu0 0
        %4451 = vmatpush1.bf16.xpose.msra.mxu0 0
        %4452 = vmatprep.subr.bf16.mxu0 0
        %4453 = vmatpush1.bf16.xpose.msra.mxu0 0
        %4454 = vmatprep.subr.bf16.mxu0 0
        %4455 = vmatpush1.bf16.xpose.msra.mxu0 0
        %4456 = vmatprep.subr.bf16.mxu0 0
        %4457 = vmatpush1.bf16.xpose.msra.mxu0 0
        %4458 = vmatprep.subr.bf16.mxu0 0
        %4459 = vmatpush1.bf16.xpose.msra.mxu0 0
        %4460 = vmatprep.subr.bf16.mxu0 0
        %4461 = vmatpush1.bf16.xpose.msra.mxu0 %v4446
        %4462 = vmatprep.subr.bf16.mxu0 0
        %4463 = vmatpush1.bf16.xpose.msra.mxu0 %v4443
        %4464 = vmatprep.subr.bf16.mxu0 0
        %4465 = vmatpush2.bf16.xpose.msra.mxu0 0
        %4466 = vmatprep.subr.bf16.mxu0 0
        %4467 = vmatpush2.bf16.xpose.msra.mxu0 0
        %4468 = vmatprep.subr.bf16.mxu0 0
        %4469 = vmatpush2.bf16.xpose.msra.mxu0 0
        %4470 = vmatprep.subr.bf16.mxu0 0
        %4471 = vmatpush2.bf16.xpose.msra.mxu0 0
        %4472 = vmatprep.subr.bf16.mxu0 0
        %4473 = vmatpush2.bf16.xpose.msra.mxu0 0
        %4474 = vmatprep.subr.bf16.mxu0 0
        %4475 = vmatpush2.bf16.xpose.msra.mxu0 0
        %4476 = vmatprep.subr.bf16.mxu0 0
        %4477 = vmatpush2.bf16.xpose.msra.mxu0 0
        %4478 = vmatprep.subr.bf16.mxu0 0
        %4479 = vmatpush2.bf16.xpose.msra.mxu0 0
        %4480 = vmatprep.mubr.bf16.mxu0 0
        %4481 = vmatmul.mubr.bf16.gmra.mxu0 %v4440
        %v4482 = vpop.f32.mrf.mxu0
        %v4483 = vadd.f32 0.0, %v4482
        %v4484 = vpop.f32.mrf.mxu0
        %v4485 = vpop.f32.mrf.mxu0
        %v4486 = vpop.f32.mrf.mxu0
        %4487 = vdwg.mxu0
        %v4489 = vsel %vm1097, %v4380, 0
        %v4492 = vsel %vm1097, %v4386, 0
        %v4495 = vsel %vm1097, %v4387, 0
        %4497 = vmatprep.subr.bf16.mxu0 0
        %4498 = vmatpush1.bf16.xpose.msra.mxu0 0
        %4499 = vmatprep.subr.bf16.mxu0 0
        %4500 = vmatpush1.bf16.xpose.msra.mxu0 0
        %4501 = vmatprep.subr.bf16.mxu0 0
        %4502 = vmatpush1.bf16.xpose.msra.mxu0 0
        %4503 = vmatprep.subr.bf16.mxu0 0
        %4504 = vmatpush1.bf16.xpose.msra.mxu0 0
        %4505 = vmatprep.subr.bf16.mxu0 0
        %4506 = vmatpush1.bf16.xpose.msra.mxu0 0
        %4507 = vmatprep.subr.bf16.mxu0 0
        %4508 = vmatpush1.bf16.xpose.msra.mxu0 0
        %4509 = vmatprep.subr.bf16.mxu0 0
        %4510 = vmatpush1.bf16.xpose.msra.mxu0 %v4495
        %4511 = vmatprep.subr.bf16.mxu0 0
        %4512 = vmatpush1.bf16.xpose.msra.mxu0 %v4492
        %4513 = vmatprep.subr.bf16.mxu0 0
        %4514 = vmatpush2.bf16.xpose.msra.mxu0 0
        %4515 = vmatprep.subr.bf16.mxu0 0
        %4516 = vmatpush2.bf16.xpose.msra.mxu0 0
        %4517 = vmatprep.subr.bf16.mxu0 0
        %4518 = vmatpush2.bf16.xpose.msra.mxu0 0
        %4519 = vmatprep.subr.bf16.mxu0 0
        %4520 = vmatpush2.bf16.xpose.msra.mxu0 0
        %4521 = vmatprep.subr.bf16.mxu0 0
        %4522 = vmatpush2.bf16.xpose.msra.mxu0 0
        %4523 = vmatprep.subr.bf16.mxu0 0
        %4524 = vmatpush2.bf16.xpose.msra.mxu0 0
        %4525 = vmatprep.subr.bf16.mxu0 0
        %4526 = vmatpush2.bf16.xpose.msra.mxu0 0
        %4527 = vmatprep.subr.bf16.mxu0 0
        %4528 = vmatpush2.bf16.xpose.msra.mxu0 0
        %4529 = vmatprep.mubr.bf16.mxu0 0
        %4530 = vmatmul.mubr.bf16.gmra.mxu0 %v4489
        %v4531 = vpop.f32.mrf.mxu0
        %v4532 = vadd.f32 0.0, %v4531
        %v4533 = vpop.f32.mrf.mxu0
        %v4534 = vpop.f32.mrf.mxu0
        %v4535 = vpop.f32.mrf.mxu0
        %4536 = vdwg.mxu0
        %v4538 = vsel %vm1097, %v4381, 0
        %v4541 = vsel %vm1097, %v4388, 0
        %v4544 = vsel %vm1097, %v4389, 0
        %4546 = vmatprep.subr.bf16.mxu0 0
        %4547 = vmatpush1.bf16.xpose.msra.mxu0 0
        %4548 = vmatprep.subr.bf16.mxu0 0
        %4549 = vmatpush1.bf16.xpose.msra.mxu0 0
        %4550 = vmatprep.subr.bf16.mxu0 0
        %4551 = vmatpush1.bf16.xpose.msra.mxu0 0
        %4552 = vmatprep.subr.bf16.mxu0 0
        %4553 = vmatpush1.bf16.xpose.msra.mxu0 0
        %4554 = vmatprep.subr.bf16.mxu0 0
        %4555 = vmatpush1.bf16.xpose.msra.mxu0 0
        %4556 = vmatprep.subr.bf16.mxu0 0
        %4557 = vmatpush1.bf16.xpose.msra.mxu0 0
        %4558 = vmatprep.subr.bf16.mxu0 0
        %4559 = vmatpush1.bf16.xpose.msra.mxu0 %v4544
        %4560 = vmatprep.subr.bf16.mxu0 0
        %4561 = vmatpush1.bf16.xpose.msra.mxu0 %v4541
        %4562 = vmatprep.subr.bf16.mxu0 0
        %4563 = vmatpush2.bf16.xpose.msra.mxu0 0
        %4564 = vmatprep.subr.bf16.mxu0 0
        %4565 = vmatpush2.bf16.xpose.msra.mxu0 0
        %4566 = vmatprep.subr.bf16.mxu0 0
        %4567 = vmatpush2.bf16.xpose.msra.mxu0 0
        %4568 = vmatprep.subr.bf16.mxu0 0
        %4569 = vmatpush2.bf16.xpose.msra.mxu0 0
        %4570 = vmatprep.subr.bf16.mxu0 0
        %4571 = vmatpush2.bf16.xpose.msra.mxu0 0
        %4572 = vmatprep.subr.bf16.mxu0 0
        %4573 = vmatpush2.bf16.xpose.msra.mxu0 0
        %4574 = vmatprep.subr.bf16.mxu0 0
        %4575 = vmatpush2.bf16.xpose.msra.mxu0 0
        %4576 = vmatprep.subr.bf16.mxu0 0
        %4577 = vmatpush2.bf16.xpose.msra.mxu0 0
        %4578 = vmatprep.mubr.bf16.mxu0 0
        %4579 = vmatmul.mubr.bf16.gmra.mxu0 %v4538
        %v4580 = vpop.f32.mrf.mxu0
        %v4581 = vadd.f32 0.0, %v4580
        %v4582 = vpop.f32.mrf.mxu0
        %v4583 = vpop.f32.mrf.mxu0
        %v4584 = vpop.f32.mrf.mxu0
        %4585 = vdwg.mxu0
        %v4586 = vmul.f32 %v4434, 0.35355338
        %v4587 = vmul.f32 %v4483, 0.35355338
        %v4588 = vmul.f32 %v4532, 0.35355338
        %v4589 = vmul.f32 %v4581, 0.35355338
        %vm4590 = vcmask 171008
        %v4591 = vsel %vm4590, %v4586, -inf
        %4592 = vmax.xlane.f32.xlu0 %v4591
        %v4593 = vpop.xlane.xlu0 %4592
        %v4594 = vsel %vm4590, %v4587, -inf
        %4595 = vmax.xlane.f32.xlu0 %v4594
        %v4596 = vpop.xlane.xlu0 %4595
        %v4597 = vsel %vm4590, %v4588, -inf
        %4598 = vmax.xlane.f32.xlu0 %v4597
        %v4599 = vpop.xlane.xlu0 %4598
        %v4600 = vsel %vm4590, %v4589, -inf
        %4601 = vmax.xlane.f32.xlu0 %v4600
        %v4602 = vpop.xlane.xlu0 %4601
        %v4603 = vsub.f32 %v4586, %v4593
        %v4604 = vsub.f32 %v4587, %v4596
        %v4605 = vsub.f32 %v4588, %v4599
        %v4606 = vsub.f32 %v4589, %v4602
        %v4607 = vmul.f32 %v4603, 1.442695
        %v4608 = vpow.pop %v4607
        %v4609 = vmul.f32 %v4604, 1.442695
        %v4610 = vpow.pop %v4609
        %v4611 = vmul.f32 %v4605, 1.442695
        %v4612 = vpow.pop %v4611
        %v4613 = vmul.f32 %v4606, 1.442695
        %v4614 = vpow.pop %v4613
        %v4615 = vsel %vm4590, %v4608, 0.0
        %4616 = vadd.xlane.f32.xlu0 %v4615
        %v4617 = vpop.xlane.xlu0 %4616
        %v4618 = vsel %vm4590, %v4610, 0.0
        %4619 = vadd.xlane.f32.xlu0 %v4618
        %v4620 = vpop.xlane.xlu0 %4619
        %v4621 = vsel %vm4590, %v4612, 0.0
        %4622 = vadd.xlane.f32.xlu0 %v4621
        %v4623 = vpop.xlane.xlu0 %4622
        %v4624 = vsel %vm4590, %v4614, 0.0
        %4625 = vadd.xlane.f32.xlu0 %v4624
        %v4626 = vpop.xlane.xlu0 %4625
        %v4627 = vrcp.pop %v4617
        %v4628 = vrcp.pop %v4620
        %v4629 = vrcp.pop %v4623
        %v4630 = vrcp.pop %v4626
        %v4631 = vmul.f32 %v4608, %v4627
        %v4632 = vmul.f32 %v4610, %v4628
        %v4633 = vmul.f32 %v4612, %v4629
        %v4634 = vmul.f32 %v4614, %v4630
        %v4635 = vpack.c.bf16 %v4631, %v4631
        %v4636 = vpack.c.bf16 %v4632, %v4632
        %v4637 = vpack.c.bf16 %v4633, %v4633
        %v4638 = vpack.c.bf16 %v4634, %v4634
        %v4639 = vpack.c.bf16 %v4195, %v4192
        %v4640 = vpack.c.bf16 %v4200, %v4200
        %v4641 = vpack.c.bf16 %v4254, %v4251
        %v4642 = vpack.c.bf16 %v4259, %v4259
        %v4643 = vpack.c.bf16 %v4311, %v4308
        %v4644 = vpack.c.bf16 %v4316, %v4316
        %v4645 = vpack.c.bf16 %v4368, %v4365
        %v4646 = vpack.c.bf16 %v4373, %v4373
        %v4648 = vsel %vm4590, %v4635, 0
        %vm4650 = vcmask 1041408
        %vm4651 = vcmask 1042432
        %v4652 = vsel %vm4650, 4294967295, 65535
        %v4653 = vsel %vm4651, %v4652, 0
        %v4655 = vand.u32 %v4640, %v4653
        %4657 = vmatprep.subr.bf16.mxu0 0
        %4658 = vmatpush1.bf16.msra.mxu0 0
        %4659 = vmatprep.subr.bf16.mxu0 0
        %4660 = vmatpush1.bf16.msra.mxu0 0
        %4661 = vmatprep.subr.bf16.mxu0 0
        %4662 = vmatpush1.bf16.msra.mxu0 0
        %4663 = vmatprep.subr.bf16.mxu0 0
        %4664 = vmatpush1.bf16.msra.mxu0 0
        %4665 = vmatprep.subr.bf16.mxu0 0
        %4666 = vmatpush1.bf16.msra.mxu0 0
        %4667 = vmatprep.subr.bf16.mxu0 0
        %4668 = vmatpush1.bf16.msra.mxu0 0
        %4669 = vmatprep.subr.bf16.mxu0 0
        %4670 = vmatpush1.bf16.msra.mxu0 %v4655
        %4671 = vmatprep.subr.bf16.mxu0 0
        %4672 = vmatpush1.bf16.msra.mxu0 %v4639
        %4673 = vmatprep.subr.bf16.mxu0 0
        %4674 = vmatpush2.bf16.msra.mxu0 0
        %4675 = vmatprep.subr.bf16.mxu0 0
        %4676 = vmatpush2.bf16.msra.mxu0 0
        %4677 = vmatprep.subr.bf16.mxu0 0
        %4678 = vmatpush2.bf16.msra.mxu0 0
        %4679 = vmatprep.subr.bf16.mxu0 0
        %4680 = vmatpush2.bf16.msra.mxu0 0
        %4681 = vmatprep.subr.bf16.mxu0 0
        %4682 = vmatpush2.bf16.msra.mxu0 0
        %4683 = vmatprep.subr.bf16.mxu0 0
        %4684 = vmatpush2.bf16.msra.mxu0 0
        %4685 = vmatprep.subr.bf16.mxu0 0
        %4686 = vmatpush2.bf16.msra.mxu0 0
        %4687 = vmatprep.subr.bf16.mxu0 0
        %4688 = vmatpush2.bf16.msra.mxu0 0
        %4689 = vmatprep.mubr.bf16.mxu0 0
        %4690 = vmatmul.mubr.bf16.gmra.mxu0 %v4648
        %v4691 = vpop.f32.mrf.mxu0
        %v4692 = vadd.f32 0.0, %v4691
        %v4693 = vpop.f32.mrf.mxu0
        %v4694 = vpop.f32.mrf.mxu0
        %v4695 = vpop.f32.mrf.mxu0
        %4696 = vdwg.mxu0
        %v4698 = vsel %vm4590, %v4636, 0
        %v4701 = vand.u32 %v4642, %v4653
        %4703 = vmatprep.subr.bf16.mxu0 0
        %4704 = vmatpush1.bf16.msra.mxu0 0
        %4705 = vmatprep.subr.bf16.mxu0 0
        %4706 = vmatpush1.bf16.msra.mxu0 0
        %4707 = vmatprep.subr.bf16.mxu0 0
        %4708 = vmatpush1.bf16.msra.mxu0 0
        %4709 = vmatprep.subr.bf16.mxu0 0
        %4710 = vmatpush1.bf16.msra.mxu0 0
        %4711 = vmatprep.subr.bf16.mxu0 0
        %4712 = vmatpush1.bf16.msra.mxu0 0
        %4713 = vmatprep.subr.bf16.mxu0 0
        %4714 = vmatpush1.bf16.msra.mxu0 0
        %4715 = vmatprep.subr.bf16.mxu0 0
        %4716 = vmatpush1.bf16.msra.mxu0 %v4701
        %4717 = vmatprep.subr.bf16.mxu0 0
        %4718 = vmatpush1.bf16.msra.mxu0 %v4641
        %4719 = vmatprep.subr.bf16.mxu0 0
        %4720 = vmatpush2.bf16.msra.mxu0 0
        %4721 = vmatprep.subr.bf16.mxu0 0
        %4722 = vmatpush2.bf16.msra.mxu0 0
        %4723 = vmatprep.subr.bf16.mxu0 0
        %4724 = vmatpush2.bf16.msra.mxu0 0
        %4725 = vmatprep.subr.bf16.mxu0 0
        %4726 = vmatpush2.bf16.msra.mxu0 0
        %4727 = vmatprep.subr.bf16.mxu0 0
        %4728 = vmatpush2.bf16.msra.mxu0 0
        %4729 = vmatprep.subr.bf16.mxu0 0
        %4730 = vmatpush2.bf16.msra.mxu0 0
        %4731 = vmatprep.subr.bf16.mxu0 0
        %4732 = vmatpush2.bf16.msra.mxu0 0
        %4733 = vmatprep.subr.bf16.mxu0 0
        %4734 = vmatpush2.bf16.msra.mxu0 0
        %4735 = vmatprep.mubr.bf16.mxu0 0
        %4736 = vmatmul.mubr.bf16.gmra.mxu0 %v4698
        %v4737 = vpop.f32.mrf.mxu0
        %v4738 = vadd.f32 0.0, %v4737
        %v4739 = vpop.f32.mrf.mxu0
        %v4740 = vpop.f32.mrf.mxu0
        %v4741 = vpop.f32.mrf.mxu0
        %4742 = vdwg.mxu0
        %v4744 = vsel %vm4590, %v4637, 0
        %v4747 = vand.u32 %v4644, %v4653
        %4749 = vmatprep.subr.bf16.mxu0 0
        %4750 = vmatpush1.bf16.msra.mxu0 0
        %4751 = vmatprep.subr.bf16.mxu0 0
        %4752 = vmatpush1.bf16.msra.mxu0 0
        %4753 = vmatprep.subr.bf16.mxu0 0
        %4754 = vmatpush1.bf16.msra.mxu0 0
        %4755 = vmatprep.subr.bf16.mxu0 0
        %4756 = vmatpush1.bf16.msra.mxu0 0
        %4757 = vmatprep.subr.bf16.mxu0 0
        %4758 = vmatpush1.bf16.msra.mxu0 0
        %4759 = vmatprep.subr.bf16.mxu0 0
        %4760 = vmatpush1.bf16.msra.mxu0 0
        %4761 = vmatprep.subr.bf16.mxu0 0
        %4762 = vmatpush1.bf16.msra.mxu0 %v4747
        %4763 = vmatprep.subr.bf16.mxu0 0
        %4764 = vmatpush1.bf16.msra.mxu0 %v4643
        %4765 = vmatprep.subr.bf16.mxu0 0
        %4766 = vmatpush2.bf16.msra.mxu0 0
        %4767 = vmatprep.subr.bf16.mxu0 0
        %4768 = vmatpush2.bf16.msra.mxu0 0
        %4769 = vmatprep.subr.bf16.mxu0 0
        %4770 = vmatpush2.bf16.msra.mxu0 0
        %4771 = vmatprep.subr.bf16.mxu0 0
        %4772 = vmatpush2.bf16.msra.mxu0 0
        %4773 = vmatprep.subr.bf16.mxu0 0
        %4774 = vmatpush2.bf16.msra.mxu0 0
        %4775 = vmatprep.subr.bf16.mxu0 0
        %4776 = vmatpush2.bf16.msra.mxu0 0
        %4777 = vmatprep.subr.bf16.mxu0 0
        %4778 = vmatpush2.bf16.msra.mxu0 0
        %4779 = vmatprep.subr.bf16.mxu0 0
        %4780 = vmatpush2.bf16.msra.mxu0 0
        %4781 = vmatprep.mubr.bf16.mxu0 0
        %4782 = vmatmul.mubr.bf16.gmra.mxu0 %v4744
        %v4783 = vpop.f32.mrf.mxu0
        %v4784 = vadd.f32 0.0, %v4783
        %v4785 = vpop.f32.mrf.mxu0
        %v4786 = vpop.f32.mrf.mxu0
        %v4787 = vpop.f32.mrf.mxu0
        %4788 = vdwg.mxu0
        %v4790 = vsel %vm4590, %v4638, 0
        %v4793 = vand.u32 %v4646, %v4653
        %4795 = vmatprep.subr.bf16.mxu0 0
        %4796 = vmatpush1.bf16.msra.mxu0 0
        %4797 = vmatprep.subr.bf16.mxu0 0
        %4798 = vmatpush1.bf16.msra.mxu0 0
        %4799 = vmatprep.subr.bf16.mxu0 0
        %4800 = vmatpush1.bf16.msra.mxu0 0
        %4801 = vmatprep.subr.bf16.mxu0 0
        %4802 = vmatpush1.bf16.msra.mxu0 0
        %4803 = vmatprep.subr.bf16.mxu0 0
        %4804 = vmatpush1.bf16.msra.mxu0 0
        %4805 = vmatprep.subr.bf16.mxu0 0
        %4806 = vmatpush1.bf16.msra.mxu0 0
        %4807 = vmatprep.subr.bf16.mxu0 0
        %4808 = vmatpush1.bf16.msra.mxu0 %v4793
        %4809 = vmatprep.subr.bf16.mxu0 0
        %4810 = vmatpush1.bf16.msra.mxu0 %v4645
        %4811 = vmatprep.subr.bf16.mxu0 0
        %4812 = vmatpush2.bf16.msra.mxu0 0
        %4813 = vmatprep.subr.bf16.mxu0 0
        %4814 = vmatpush2.bf16.msra.mxu0 0
        %4815 = vmatprep.subr.bf16.mxu0 0
        %4816 = vmatpush2.bf16.msra.mxu0 0
        %4817 = vmatprep.subr.bf16.mxu0 0
        %4818 = vmatpush2.bf16.msra.mxu0 0
        %4819 = vmatprep.subr.bf16.mxu0 0
        %4820 = vmatpush2.bf16.msra.mxu0 0
        %4821 = vmatprep.subr.bf16.mxu0 0
        %4822 = vmatpush2.bf16.msra.mxu0 0
        %4823 = vmatprep.subr.bf16.mxu0 0
        %4824 = vmatpush2.bf16.msra.mxu0 0
        %4825 = vmatprep.subr.bf16.mxu0 0
        %4826 = vmatpush2.bf16.msra.mxu0 0
        %4827 = vmatprep.mubr.bf16.mxu0 0
        %4828 = vmatmul.mubr.bf16.gmra.mxu0 %v4790
        %v4829 = vpop.f32.mrf.mxu0
        %v4830 = vadd.f32 0.0, %v4829
        %v4831 = vpop.f32.mrf.mxu0
        %v4832 = vpop.f32.mrf.mxu0
        %v4833 = vpop.f32.mrf.mxu0
        %4834 = vdwg.mxu0
        %v4835 = vld [vmem:[%s4 + $0xb0] sm:$0xff]
        %v4836 = vld [vmem:[%s4 + $0xb8] sm:$0xff]
        %v4837 = vld [vmem:[%s4 + $0xc0] sm:$0xff]
        %v4838 = vld [vmem:[%s4 + $0xc8] sm:$0xff]
        %v4839 = vpack.c.bf16 %v4692, %v4692
        %v4840 = vpack.c.bf16 %v4738, %v4738
        %v4841 = vpack.c.bf16 %v4784, %v4784
        %v4842 = vpack.c.bf16 %v4830, %v4830
        %v4843 = vpack.c.bf16 %v4835, %v4835
        %v4844 = vpack.c.bf16 %v4836, %v4836
        %v4845 = vpack.c.bf16 %v4837, %v4837
        %v4846 = vpack.c.bf16 %v4838, %v4838
        %v4848 = vsel %vm1097, %v4839, 0
        %v4851 = vsel %vm1753, %v4843, 0
        %4853 = vmatprep.subr.bf16.mxu0 0
        %4854 = vmatpush1.bf16.msra.mxu0 0
        %4855 = vmatprep.subr.bf16.mxu0 0
        %4856 = vmatpush1.bf16.msra.mxu0 0
        %4857 = vmatprep.subr.bf16.mxu0 0
        %4858 = vmatpush1.bf16.msra.mxu0 0
        %4859 = vmatprep.subr.bf16.mxu0 0
        %4860 = vmatpush1.bf16.msra.mxu0 0
        %4861 = vmatprep.subr.bf16.mxu0 0
        %4862 = vmatpush1.bf16.msra.mxu0 0
        %4863 = vmatprep.subr.bf16.mxu0 0
        %4864 = vmatpush1.bf16.msra.mxu0 0
        %4865 = vmatprep.subr.bf16.mxu0 0
        %4866 = vmatpush1.bf16.msra.mxu0 0
        %4867 = vmatprep.subr.bf16.mxu0 0
        %4868 = vmatpush1.bf16.msra.mxu0 %v4851
        %4869 = vmatprep.subr.bf16.mxu0 0
        %4870 = vmatpush2.bf16.msra.mxu0 0
        %4871 = vmatprep.subr.bf16.mxu0 0
        %4872 = vmatpush2.bf16.msra.mxu0 0
        %4873 = vmatprep.subr.bf16.mxu0 0
        %4874 = vmatpush2.bf16.msra.mxu0 0
        %4875 = vmatprep.subr.bf16.mxu0 0
        %4876 = vmatpush2.bf16.msra.mxu0 0
        %4877 = vmatprep.subr.bf16.mxu0 0
        %4878 = vmatpush2.bf16.msra.mxu0 0
        %4879 = vmatprep.subr.bf16.mxu0 0
        %4880 = vmatpush2.bf16.msra.mxu0 0
        %4881 = vmatprep.subr.bf16.mxu0 0
        %4882 = vmatpush2.bf16.msra.mxu0 0
        %4883 = vmatprep.subr.bf16.mxu0 0
        %4884 = vmatpush2.bf16.msra.mxu0 0
        %4885 = vmatprep.mubr.bf16.mxu0 0
        %4886 = vmatmul.mubr.bf16.gmra.mxu0 %v4848
        %v4887 = vpop.f32.mrf.mxu0
        %v4888 = vadd.f32 0.0, %v4887
        %v4889 = vpop.f32.mrf.mxu0
        %v4890 = vpop.f32.mrf.mxu0
        %v4891 = vpop.f32.mrf.mxu0
        %4892 = vdwg.mxu0
        %v4894 = vsel %vm1097, %v4840, 0
        %v4897 = vsel %vm1753, %v4844, 0
        %4899 = vmatprep.subr.bf16.mxu0 0
        %4900 = vmatpush1.bf16.msra.mxu0 0
        %4901 = vmatprep.subr.bf16.mxu0 0
        %4902 = vmatpush1.bf16.msra.mxu0 0
        %4903 = vmatprep.subr.bf16.mxu0 0
        %4904 = vmatpush1.bf16.msra.mxu0 0
        %4905 = vmatprep.subr.bf16.mxu0 0
        %4906 = vmatpush1.bf16.msra.mxu0 0
        %4907 = vmatprep.subr.bf16.mxu0 0
        %4908 = vmatpush1.bf16.msra.mxu0 0
        %4909 = vmatprep.subr.bf16.mxu0 0
        %4910 = vmatpush1.bf16.msra.mxu0 0
        %4911 = vmatprep.subr.bf16.mxu0 0
        %4912 = vmatpush1.bf16.msra.mxu0 0
        %4913 = vmatprep.subr.bf16.mxu0 0
        %4914 = vmatpush1.bf16.msra.mxu0 %v4897
        %4915 = vmatprep.subr.bf16.mxu0 0
        %4916 = vmatpush2.bf16.msra.mxu0 0
        %4917 = vmatprep.subr.bf16.mxu0 0
        %4918 = vmatpush2.bf16.msra.mxu0 0
        %4919 = vmatprep.subr.bf16.mxu0 0
        %4920 = vmatpush2.bf16.msra.mxu0 0
        %4921 = vmatprep.subr.bf16.mxu0 0
        %4922 = vmatpush2.bf16.msra.mxu0 0
        %4923 = vmatprep.subr.bf16.mxu0 0
        %4924 = vmatpush2.bf16.msra.mxu0 0
        %4925 = vmatprep.subr.bf16.mxu0 0
        %4926 = vmatpush2.bf16.msra.mxu0 0
        %4927 = vmatprep.subr.bf16.mxu0 0
        %4928 = vmatpush2.bf16.msra.mxu0 0
        %4929 = vmatprep.subr.bf16.mxu0 0
        %4930 = vmatpush2.bf16.msra.mxu0 0
        %4931 = vmatprep.mubr.bf16.mxu0 0
        %4932 = vmatmul.mubr.bf16.gmra.mxu0 %v4894
        %v4933 = vpop.f32.mrf.mxu0
        %v4934 = vadd.f32 0.0, %v4933
        %v4935 = vpop.f32.mrf.mxu0
        %v4936 = vpop.f32.mrf.mxu0
        %v4937 = vpop.f32.mrf.mxu0
        %4938 = vdwg.mxu0
        %v4940 = vsel %vm1097, %v4841, 0
        %v4943 = vsel %vm1753, %v4845, 0
        %4945 = vmatprep.subr.bf16.mxu0 0
        %4946 = vmatpush1.bf16.msra.mxu0 0
        %4947 = vmatprep.subr.bf16.mxu0 0
        %4948 = vmatpush1.bf16.msra.mxu0 0
        %4949 = vmatprep.subr.bf16.mxu0 0
        %4950 = vmatpush1.bf16.msra.mxu0 0
        %4951 = vmatprep.subr.bf16.mxu0 0
        %4952 = vmatpush1.bf16.msra.mxu0 0
        %4953 = vmatprep.subr.bf16.mxu0 0
        %4954 = vmatpush1.bf16.msra.mxu0 0
        %4955 = vmatprep.subr.bf16.mxu0 0
        %4956 = vmatpush1.bf16.msra.mxu0 0
        %4957 = vmatprep.subr.bf16.mxu0 0
        %4958 = vmatpush1.bf16.msra.mxu0 0
        %4959 = vmatprep.subr.bf16.mxu0 0
        %4960 = vmatpush1.bf16.msra.mxu0 %v4943
        %4961 = vmatprep.subr.bf16.mxu0 0
        %4962 = vmatpush2.bf16.msra.mxu0 0
        %4963 = vmatprep.subr.bf16.mxu0 0
        %4964 = vmatpush2.bf16.msra.mxu0 0
        %4965 = vmatprep.subr.bf16.mxu0 0
        %4966 = vmatpush2.bf16.msra.mxu0 0
        %4967 = vmatprep.subr.bf16.mxu0 0
        %4968 = vmatpush2.bf16.msra.mxu0 0
        %4969 = vmatprep.subr.bf16.mxu0 0
        %4970 = vmatpush2.bf16.msra.mxu0 0
        %4971 = vmatprep.subr.bf16.mxu0 0
        %4972 = vmatpush2.bf16.msra.mxu0 0
        %4973 = vmatprep.subr.bf16.mxu0 0
        %4974 = vmatpush2.bf16.msra.mxu0 0
        %4975 = vmatprep.subr.bf16.mxu0 0
        %4976 = vmatpush2.bf16.msra.mxu0 0
        %4977 = vmatprep.mubr.bf16.mxu0 0
        %4978 = vmatmul.mubr.bf16.gmra.mxu0 %v4940
        %v4979 = vpop.f32.mrf.mxu0
        %v4980 = vadd.f32 0.0, %v4979
        %v4981 = vpop.f32.mrf.mxu0
        %v4982 = vpop.f32.mrf.mxu0
        %v4983 = vpop.f32.mrf.mxu0
        %4984 = vdwg.mxu0
        %v4986 = vsel %vm1097, %v4842, 0
        %v4989 = vsel %vm1753, %v4846, 0
        %4991 = vmatprep.subr.bf16.mxu0 0
        %4992 = vmatpush1.bf16.msra.mxu0 0
        %4993 = vmatprep.subr.bf16.mxu0 0
        %4994 = vmatpush1.bf16.msra.mxu0 0
        %4995 = vmatprep.subr.bf16.mxu0 0
        %4996 = vmatpush1.bf16.msra.mxu0 0
        %4997 = vmatprep.subr.bf16.mxu0 0
        %4998 = vmatpush1.bf16.msra.mxu0 0
        %4999 = vmatprep.subr.bf16.mxu0 0
        %5000 = vmatpush1.bf16.msra.mxu0 0
        %5001 = vmatprep.subr.bf16.mxu0 0
        %5002 = vmatpush1.bf16.msra.mxu0 0
        %5003 = vmatprep.subr.bf16.mxu0 0
        %5004 = vmatpush1.bf16.msra.mxu0 0
        %5005 = vmatprep.subr.bf16.mxu0 0
        %5006 = vmatpush1.bf16.msra.mxu0 %v4989
        %5007 = vmatprep.subr.bf16.mxu0 0
        %5008 = vmatpush2.bf16.msra.mxu0 0
        %5009 = vmatprep.subr.bf16.mxu0 0
        %5010 = vmatpush2.bf16.msra.mxu0 0
        %5011 = vmatprep.subr.bf16.mxu0 0
        %5012 = vmatpush2.bf16.msra.mxu0 0
        %5013 = vmatprep.subr.bf16.mxu0 0
        %5014 = vmatpush2.bf16.msra.mxu0 0
        %5015 = vmatprep.subr.bf16.mxu0 0
        %5016 = vmatpush2.bf16.msra.mxu0 0
        %5017 = vmatprep.subr.bf16.mxu0 0
        %5018 = vmatpush2.bf16.msra.mxu0 0
        %5019 = vmatprep.subr.bf16.mxu0 0
        %5020 = vmatpush2.bf16.msra.mxu0 0
        %5021 = vmatprep.subr.bf16.mxu0 0
        %5022 = vmatpush2.bf16.msra.mxu0 0
        %5023 = vmatprep.mubr.bf16.mxu0 0
        %5024 = vmatmul.mubr.bf16.gmra.mxu0 %v4986
        %v5025 = vpop.f32.mrf.mxu0
        %v5026 = vadd.f32 0.0, %v5025
        %v5027 = vpop.f32.mrf.mxu0
        %v5028 = vpop.f32.mrf.mxu0
        %v5029 = vpop.f32.mrf.mxu0
        %5030 = vdwg.mxu0
        %v5031 = vsel %vm316, %v4888, 0.0
        %v5032 = vsel %vm316, %v4934, 0.0
        %v5033 = vadd.f32 %v5031, %v5032
        %v5034 = vsel %vm316, %v4980, 0.0
        %v5035 = vadd.f32 %v5033, %v5034
        %v5036 = vsel %vm316, %v5026, 0.0
        %v5037 = vadd.f32 %v5035, %v5036
        %v5038 = vld [vmem:[%s5 + $0x13] sm:$0x1]
        %v5039 = vlaneseq
        %v5040 = vshrl.u32 %v5039, 7
        %v5041 = vsub.s32 0, %v5040
        %v5042 = vrot.slane %v5038, %v5041
        %v5043 = vadd.f32 %v5037, %v5042
        %v5044 = vadd.f32 %v3678, %v5043
        %v5045 = vld [vmem:[%s5 + $0x14] sm:$0x1]
        %v5046 = vld [vmem:[%s5 + $0x15] sm:$0x1]
        %v5047 = vsel %vm316, %v5044, 0.0
        %5048 = vadd.xlane.f32.xlu0 %v5047
        %v5049 = vpop.xlane.xlu0 %5048
        %v5050 = vmul.f32 %v5049, %v333
        %v5051 = vmul.f32 %v5044, %v5044
        %v5052 = vsel %vm316, %v5051, 0.0
        %5053 = vadd.xlane.f32.xlu0 %v5052
        %v5054 = vpop.xlane.xlu0 %5053
        %v5055 = vmul.f32 %v5054, %v333
        %v5056 = vmul.f32 %v5050, %v5050
        %v5057 = vsub.f32 %v5055, %v5056
        %v5058 = vsub.f32 %v5044, %v5050
        %v5059 = vadd.f32 %v5057, 1e-05
        %v5060 = vrsqrt.pop %v5059
        %v5061 = vmul.f32 %v5058, %v5060
        %v5062 = vlaneseq
        %v5063 = vshrl.u32 %v5062, 7
        %v5064 = vsub.s32 0, %v5063
        %v5065 = vrot.slane %v5045, %v5064
        %v5066 = vmul.f32 %v5061, %v5065
        %v5067 = vlaneseq
        %v5068 = vshrl.u32 %v5067, 7
        %v5069 = vsub.s32 0, %v5068
        %v5070 = vrot.slane %v5046, %v5069
        %v5071 = vadd.f32 %v5066, %v5070
        %v5072 = vld [vmem:[%s3 + $0x10] sm:$0xff]
        %v5073 = vld [vmem:[%s3 + $0x18] sm:$0xff]
        %v5074 = vld [vmem:[%s3 + $0x30] sm:$0xff]
        %v5075 = vld [vmem:[%s3 + $0x38] sm:$0xff]
        %v5076 = vld [vmem:[%s3 + $0x50] sm:$0xff]
        %v5077 = vld [vmem:[%s3 + $0x58] sm:$0xff]
        %v5078 = vld [vmem:[%s3 + $0x70] sm:$0xff]
        %v5079 = vld [vmem:[%s3 + $0x78] sm:$0xff]
        %v5080 = vpack.c.bf16 %v5071, %v5071
        %v5081 = vpack.c.bf16 %v5074, %v5072
        %v5082 = vpack.c.bf16 %v5075, %v5073
        %v5083 = vpack.c.bf16 %v5078, %v5076
        %v5084 = vpack.c.bf16 %v5079, %v5077
        %v5085 = vld [vmem:[%s5 + $0x16] sm:$0x1]
        %v5086 = vlaneseq
        %v5087 = vshrl.u32 %v5086, 7
        %v5088 = vsub.s32 0, %v5087
        %v5089 = vrot.slane %v5085, %v5088
        %5094 = vrot.lane.b32.xlu0 %v5081, 32
        %v5095 = vpop.permute.xlu0 %5094
        %5096 = vrot.lane.b32.xlu0 %v5082, 32
        %v5097 = vpop.permute.xlu0 %5096
        %5098 = vrot.lane.b32.xlu0 %v5083, 32
        %v5099 = vpop.permute.xlu0 %5098
        %5100 = vrot.lane.b32.xlu0 %v5084, 32
        %v5101 = vpop.permute.xlu0 %5100
        %vm5102 = vcmask 261120
        %v5103 = vsel %vm5102, %v5095, %v5097
        %v5104 = vsel %vm5102, %v5099, %v5101
        %v5108 = vsel %vm316, %v5080, 0
        %5110 = vmatprep.subr.bf16.mxu0 0
        %5111 = vmatpush1.bf16.msra.mxu0 0
        %5112 = vmatprep.subr.bf16.mxu0 0
        %5113 = vmatpush1.bf16.msra.mxu0 0
        %5114 = vmatprep.subr.bf16.mxu0 0
        %5115 = vmatpush1.bf16.msra.mxu0 0
        %5116 = vmatprep.subr.bf16.mxu0 0
        %5117 = vmatpush1.bf16.msra.mxu0 0
        %5118 = vmatprep.subr.bf16.mxu0 0
        %5119 = vmatpush1.bf16.msra.mxu0 0
        %5120 = vmatprep.subr.bf16.mxu0 0
        %5121 = vmatpush1.bf16.msra.mxu0 0
        %5122 = vmatprep.subr.bf16.mxu0 0
        %5123 = vmatpush1.bf16.msra.mxu0 %v5104
        %5124 = vmatprep.subr.bf16.mxu0 0
        %5125 = vmatpush1.bf16.msra.mxu0 %v5103
        %5126 = vmatprep.subr.bf16.mxu0 0
        %5127 = vmatpush2.bf16.msra.mxu0 0
        %5128 = vmatprep.subr.bf16.mxu0 0
        %5129 = vmatpush2.bf16.msra.mxu0 0
        %5130 = vmatprep.subr.bf16.mxu0 0
        %5131 = vmatpush2.bf16.msra.mxu0 0
        %5132 = vmatprep.subr.bf16.mxu0 0
        %5133 = vmatpush2.bf16.msra.mxu0 0
        %5134 = vmatprep.subr.bf16.mxu0 0
        %5135 = vmatpush2.bf16.msra.mxu0 0
        %5136 = vmatprep.subr.bf16.mxu0 0
        %5137 = vmatpush2.bf16.msra.mxu0 0
        %5138 = vmatprep.subr.bf16.mxu0 0
        %5139 = vmatpush2.bf16.msra.mxu0 0
        %5140 = vmatprep.subr.bf16.mxu0 0
        %5141 = vmatpush2.bf16.msra.mxu0 0
        %5142 = vmatprep.mubr.bf16.mxu0 0
        %5143 = vmatmul.mubr.bf16.gmra.mxu0 %v5108
        %v5144 = vpop.f32.mrf.mxu0
        %v5145 = vadd.f32 %v5089, %v5144
        %v5146 = vpop.f32.mrf.mxu0
        %v5147 = vpop.f32.mrf.mxu0
        %v5148 = vpop.f32.mrf.mxu0
        %5149 = vdwg.mxu0
        %v5150 = vmul.f32 %v5145, %v5145
        %v5151 = vmul.f32 %v5145, %v5150
        %v5152 = vmul.f32 %v5151, 0.044715
        %v5153 = vadd.f32 %v5145, %v5152
        %v5154 = vmul.f32 %v5153, 0.7978846
        %v5155 = vtanh.pop %v5154
        %v5156 = vadd.f32 %v5155, 1.0
        %v5157 = vmul.f32 %v5156, 0.5
        %v5158 = vmul.f32 %v5145, %v5157
        %v5159 = vld [vmem:[%s4 + $0xd0] sm:$0xff]
        %v5160 = vld [vmem:[%s4 + $0xd8] sm:$0xff]
        %v5161 = vld [vmem:[%s4 + $0xe0] sm:$0xff]
        %v5162 = vld [vmem:[%s4 + $0xe8] sm:$0xff]
        %v5163 = vld [vmem:[%s4 + $0xf0] sm:$0xff]
        %v5164 = vld [vmem:[%s4 + $0xf8] sm:$0xff]
        %v5165 = vld [vmem:[%s4 + $0x100] sm:$0xff]
        %v5166 = vld [vmem:[%s4 + $0x108] sm:$0xff]
        %v5167 = vpack.c.bf16 %v5158, %v5158
        %v5168 = vpack.c.bf16 %v5160, %v5159
        %v5169 = vpack.c.bf16 %v5162, %v5161
        %v5170 = vpack.c.bf16 %v5164, %v5163
        %v5171 = vpack.c.bf16 %v5166, %v5165
        %v5173 = vsel %vm2185, %v5167, 0
        %5175 = vmatprep.subr.bf16.mxu0 0
        %5176 = vmatpush1.bf16.msra.mxu0 0
        %5177 = vmatprep.subr.bf16.mxu0 0
        %5178 = vmatpush1.bf16.msra.mxu0 0
        %5179 = vmatprep.subr.bf16.mxu0 0
        %5180 = vmatpush1.bf16.msra.mxu0 0
        %5181 = vmatprep.subr.bf16.mxu0 0
        %5182 = vmatpush1.bf16.msra.mxu0 0
        %5183 = vmatprep.subr.bf16.mxu0 0
        %5184 = vmatpush1.bf16.msra.mxu0 %v5171
        %5185 = vmatprep.subr.bf16.mxu0 0
        %5186 = vmatpush1.bf16.msra.mxu0 %v5170
        %5187 = vmatprep.subr.bf16.mxu0 0
        %5188 = vmatpush1.bf16.msra.mxu0 %v5169
        %5189 = vmatprep.subr.bf16.mxu0 0
        %5190 = vmatpush1.bf16.msra.mxu0 %v5168
        %5191 = vmatprep.subr.bf16.mxu0 0
        %5192 = vmatpush2.bf16.msra.mxu0 0
        %5193 = vmatprep.subr.bf16.mxu0 0
        %5194 = vmatpush2.bf16.msra.mxu0 0
        %5195 = vmatprep.subr.bf16.mxu0 0
        %5196 = vmatpush2.bf16.msra.mxu0 0
        %5197 = vmatprep.subr.bf16.mxu0 0
        %5198 = vmatpush2.bf16.msra.mxu0 0
        %5199 = vmatprep.subr.bf16.mxu0 0
        %5200 = vmatpush2.bf16.msra.mxu0 0
        %5201 = vmatprep.subr.bf16.mxu0 0
        %5202 = vmatpush2.bf16.msra.mxu0 0
        %5203 = vmatprep.subr.bf16.mxu0 0
        %5204 = vmatpush2.bf16.msra.mxu0 0
        %5205 = vmatprep.subr.bf16.mxu0 0
        %5206 = vmatpush2.bf16.msra.mxu0 0
        %5207 = vmatprep.mubr.bf16.mxu0 0
        %5208 = vmatmul.mubr.bf16.gmra.mxu0 %v5173
        %v5209 = vpop.f32.mrf.mxu0
        %v5210 = vadd.f32 0.0, %v5209
        %v5211 = vpop.f32.mrf.mxu0
        %v5212 = vpop.f32.mrf.mxu0
        %v5213 = vpop.f32.mrf.mxu0
        %5214 = vdwg.mxu0
        %v5215 = vadd.f32 %v5044, %v5210
        %v5216 = vld [vmem:[%s5 + $0x17] sm:$0x1]
        %v5217 = vlaneseq
        %v5218 = vshrl.u32 %v5217, 7
        %v5219 = vsub.s32 0, %v5218
        %v5220 = vrot.slane %v5216, %v5219
        %v5221 = vadd.f32 %v5215, %v5220
        %v5222 = vld [vmem:[%s5 + $0x18] sm:$0x1]
        %v5223 = vld [vmem:[%s5 + $0x19] sm:$0x1]
        %v5224 = vsel %vm316, %v5221, 0.0
        %5225 = vadd.xlane.f32.xlu0 %v5224
        %v5226 = vpop.xlane.xlu0 %5225
        %v5227 = vmul.f32 %v5226, %v333
        %v5228 = vmul.f32 %v5221, %v5221
        %v5229 = vsel %vm316, %v5228, 0.0
        %5230 = vadd.xlane.f32.xlu0 %v5229
        %v5231 = vpop.xlane.xlu0 %5230
        %v5232 = vmul.f32 %v5231, %v333
        %v5233 = vmul.f32 %v5227, %v5227
        %v5234 = vsub.f32 %v5232, %v5233
        %v5235 = vsub.f32 %v5221, %v5227
        %v5236 = vadd.f32 %v5234, 1e-05
        %v5237 = vrsqrt.pop %v5236
        %v5238 = vmul.f32 %v5235, %v5237
        %v5239 = vlaneseq
        %v5240 = vshrl.u32 %v5239, 7
        %v5241 = vsub.s32 0, %v5240
        %v5242 = vrot.slane %v5222, %v5241
        %v5243 = vmul.f32 %v5238, %v5242
        %v5244 = vlaneseq
        %v5245 = vshrl.u32 %v5244, 7
        %v5246 = vsub.s32 0, %v5245
        %v5247 = vrot.slane %v5223, %v5246
        %v5248 = vadd.f32 %v5243, %v5247
        %5249 = vst.msk [vmem:[%s235] sm:$0xff] %vm316, %v5248
        %s5250 = sand.u32 %s149, 1
        %s5251 = scalar_lea.sflag [#allocation8], %s5250
        %s5252 = sand.u32 %s149, 1
        %s5253 = smul.addr %s5252, 8
        %s5254 = scalar_lea.vmem [#allocation7], %s5253
        // Predicated region
        $region41: #{forward.1} parent=39 // pred_check
          %p5255 = pneg %p159
        $region42: #{forward.1} parent=39 // pred_check_branch
          %5257 = sbr.rel (%p5255) target = $region44
        $region43: #{forward.1} parent=39 // pred_region
          %s5259 = ssub.s32 128, 128
          %5260 = vsyncadd %s5251, %s5259
          %s5261 = smul.addr %s26, 128
          %s5262 = scalar_lea.hbm %s6, %s5261
          %s5264 = sshll.u32 %s5254, 4
          %s5265 = int_to_ptr.vmem [resolvable:$true] %s5264
          %5267 = dma.vmem_to_hbm [thread:$0]  %s5265, 128, %s5262, %s5251
        $region44: #{forward.1} parent=39 // pred_fallthru
          _
      $region40: #{forward.1} parent=5 // pred_fallthru
        _
      %p5268 = scmp.le.s32.totalorder 2, %s21
      // Predicated region
      $region45: #{forward.1} parent=5 // pred_check
        %p5269 = pneg %p5268
      $region46: #{forward.1} parent=5 // pred_check_branch
        %5271 = sbr.rel (%p5269) target = $region48
      $region47: #{forward.1} parent=5 // pred_region
        %s5272 = ssub.s32 %s21, 2
        // Predicated region
        $region49: #{forward.1} parent=47 // pred_check
          %p5273 = pneg %p165
        $region50: #{forward.1} parent=47 // pred_check_branch
          %5275 = sbr.rel (%p5273) target = $region52
        $region51: #{forward.1} parent=47 // pred_region
          %s5276 = sand.u32 %s150, 1
          %s5277 = scalar_lea.sflag [#allocation8], %s5276
          %s5278 = sand.u32 %s150, 1
          %s5279 = smul.addr %s5278, 8
          %s5280 = scalar_lea.vmem [#allocation7], %s5279
          %5281 = dma.done %s5277, 128
        $region52: #{forward.1} parent=47 // pred_fallthru
          _
      $region48: #{forward.1} parent=5 // pred_fallthru
        _
    $region6: #{forward.1} parent=1 // loop_footer
      %s25 = sadd.s32 1, %s21
    $region7: #{forward.1} parent=1 // loop_footer_branch
      %20 = sbr.rel target = $region3
    $region8: #{forward.1} parent=1 // loop_exit
      _
    %5282 = vsyncpa [#allocation8], 1
    %s5283 = scalar_lea.sflag [#allocation8], 1
    %5284 = vsyncpa %s5283, 1

</llo_original>
